<compile_context>
chip_gen: v5e
topology: v5e:2x2
jax: 0.10.0
libtpu: 0.0.40
codegen_flags: <defaults>
</compile_context>

<pallas_src>
import jax
import jax.numpy as jnp
import numpy as np
from jax.experimental import pallas as pl
from jax.experimental.pallas import tpu as pltpu

F32 = jnp.float32
BF16 = jnp.bfloat16
LANE = 128


def _round_up(v, m):
    return (v + m - 1) // m * m


def _pack_lanes(mats):
    """Concatenate 2D arrays along lanes; each segment starts at a 128-aligned offset.

    Consolidates many tiny pallas_call operands into one VMEM slab (one DMA descriptor
    instead of a dozen). Returns (slab, per-segment lane offsets)."""
    rows, dtype = mats[0].shape[0], mats[0].dtype
    offs, total = [], 0
    for m in mats:
        assert m.shape[0] == rows and m.dtype == dtype
        offs.append(total)
        total += _round_up(m.shape[1], LANE)
    slab = jnp.zeros((rows, total), dtype)
    for m, o in zip(mats, offs):
        slab = slab.at[:, o:o + m.shape[1]].set(m)
    return slab, offs


def gnn_forward(x, edge_index, edge_attr, batch, num_graphs, p):
    N, Fdim = x.shape
    E, EF = edge_attr.shape
    H = p['root1'].shape[1]
    Kmlp = p['m1_w1'].shape[1]
    T = p['fc2_w'].shape[1]
    G = int(num_graphs)

    # Lane-dense padding of node/edge counts and the output feature dim.
    Npad = _round_up(max(N, LANE), LANE)
    Epad = _round_up(max(E, LANE), LANE)
    Tpad = _round_up(max(T, LANE), LANE)

    bf = lambda a: a.astype(BF16)

    x_pad = jnp.zeros((Npad, Fdim), BF16).at[:N].set(bf(x))
    ea_pad = jnp.zeros((Epad, EF), BF16).at[:E].set(bf(edge_attr))
    # Padded edges: src=0 (harmless gather), dst=N. If nodes are padded, node N is a dummy node
    # excluded from pooling; if N == Npad the scatter one-hot never matches and the msg drops.
    src_pad = jnp.zeros((Epad, 1), jnp.int32).at[:E, 0].set(edge_index[0].astype(jnp.int32))
    dst_pad = jnp.full((1, Epad), N, jnp.int32).at[0, :E].set(edge_index[1].astype(jnp.int32))
    # Padded nodes: batch id = num_graphs (out of range) -> excluded from global_mean_pool.
    b_pad = jnp.full((1, Npad), G, jnp.int32).at[0, :N].set(batch.astype(jnp.int32))

    fc2_w_pad = jnp.zeros((H, Tpad), F32).at[:, :T].set(p['fc2_w'])
    fc2_b_pad = jnp.zeros((1, Tpad), F32).at[:, :T].set(p['fc2_b'])

    # Consolidated parameter slabs (bf16 weights, f32 bias/scale rows).
    we1, we1_off = _pack_lanes([bf(p['m1_w1']), bf(p['m2_w1'])])                 # [EF, *]
    we2, we2_off = _pack_lanes([bf(p['m1_w2']), bf(p['m2_w2'])])                 # [Kmlp, *]
    wh, wh_off = _pack_lanes([bf(p['root2']), bf(p['fc1_w']), bf(fc2_w_pad)])    # [H, *]
    rvs, rv_off = _pack_lanes([p['m1_b1'], p['bias1'], p['m2_b1'], p['bias2'],
                               p['bn1_s'], p['bn1_b'], p['bn2_s'], p['bn2_b'],
                               p['fc1_b'], fc2_b_pad, p['m1_b2'], p['m2_b2']])   # [1, *] f32
    root1 = bf(p['root1'])                                                       # [Fdim, H]

    def kernel(x_ref, src_ref, dst_ref, batch_ref, eattr_ref,
               root1_ref, we1_ref, we2_ref, wh_ref, rv_ref, out_ref):
        x_n = x_ref[...]            # [Npad, Fdim] bf16
        e_attr = eattr_ref[...]     # [Epad, EF]   bf16
        src = src_ref[...]          # [Epad, 1]    int32
        dst = dst_ref[...]          # [1, Epad]    int32
        gid = batch_ref[...]        # [1, Npad]    int32

        def rvec(k, w):             # packed [1, w] f32 bias/scale row
            o = rv_off[k]
            return rv_ref[:, o:o + w]

        # ---- one-hot selectors, exact 0/1 directly in bf16 ----
        oh_src = (jax.lax.broadcasted_iota(jnp.int32, (Epad, Npad), 1) == src).astype(BF16)
        oh_dst = (jax.lax.broadcasted_iota(jnp.int32, (Npad, Epad), 0) == dst).astype(BF16)
        oh_g = (jax.lax.broadcasted_iota(jnp.int32, (G, Npad), 0) == gid).astype(BF16)

        # Degrees / pool counts via MXU dot against a bf16 ones column (f32 accumulate);
        # the reciprocals run on the EUP and are applied to the f32 results post-matmul.
        ones_e = jnp.ones((Epad, 1), BF16)
        ones_n = jnp.ones((Npad, 1), BF16)
        deg = jnp.dot(oh_dst, ones_e, preferred_element_type=F32)        # [Npad, 1]
        cnt = jnp.dot(oh_g, ones_n, preferred_element_type=F32)          # [G, 1]
        inv_deg = pl.reciprocal(jnp.maximum(deg, 1.0), approx=True)
        inv_cnt = pl.reciprocal(jnp.maximum(cnt, 1.0), approx=True)

        def edge_mlp(w1, b1, w2, b2):
            # PyG MLP([EF, 32, in*out]) eval mode: Linear -> (BN folded) -> ReLU -> Linear.
            hid = jnp.maximum(jnp.dot(e_attr, w1, preferred_element_type=F32) + b1, 0.0)
            return jnp.dot(hid.astype(BF16), w2, preferred_element_type=F32) + b2

        def edge_contract(h_src, w_flat, in_dim):
            # msg[e, o] = sum_i h_src[e, i] * W[e, i, o]  (W flattened i-major, [Epad, in*H]).
            # Unrolled VPU broadcast-MACs in f32: no expansion matmul, no [E, in*H] replicate.
            msg = h_src[:, 0:1] * w_flat[:, 0:H]
            for i in range(1, in_dim):
                msg = msg + h_src[:, i:i + 1] * w_flat[:, i * H:(i + 1) * H]
            return msg                                                    # [Epad, H] f32

        def nnconv(h, in_dim, w1, b1, w2, b2, root, bias):
            # NNConv(aggr='mean'): scatter_mean(x_src @ W_e) + h @ root + bias
            w_flat = edge_mlp(w1, b1, w2, b2)                              # [Epad, in*H] f32
            h_src = jnp.dot(oh_src, h, preferred_element_type=F32)        # gather x[src]
            msg = edge_contract(h_src, w_flat, in_dim)                     # [Epad, H]
            agg = jnp.dot(oh_dst, msg.astype(BF16),
                          preferred_element_type=F32) * inv_deg            # scatter-sum, then mean
            return agg + jnp.dot(h, root, preferred_element_type=F32) + bias

        # ---- conv1 -> BatchNorm1d(eval, folded) -> ReLU -> Dropout(identity) ----
        h1 = nnconv(x_n, Fdim,
                    we1_ref[:, we1_off[0]:we1_off[0] + Kmlp], rvec(0, Kmlp),
                    we2_ref[:, we2_off[0]:we2_off[0] + Fdim * H], rvec(10, Fdim * H),
                    root1_ref[...], rvec(1, H))
        h1 = jnp.maximum(h1 * rvec(4, H) + rvec(5, H), 0.0).astype(BF16)

        # ---- conv2 -> BatchNorm1d(eval, folded) -> ReLU -> Dropout(identity) ----
        h2 = nnconv(h1, H,
                    we1_ref[:, we1_off[1]:we1_off[1] + Kmlp], rvec(2, Kmlp),
                    we2_ref[:, we2_off[1]:we2_off[1] + H * H], rvec(11, H * H),
                    wh_ref[:, wh_off[0]:wh_off[0] + H], rvec(3, H))
        h2 = jnp.maximum(h2 * rvec(6, H) + rvec(7, H), 0.0)

        # ---- global mean pool over `batch` (normalize the f32 result post-matmul) ----
        pooled = jnp.dot(oh_g, h2.astype(BF16), preferred_element_type=F32) * inv_cnt

        # ---- head: Linear -> ReLU -> Dropout(identity) -> Linear, lane-dense [G, Tpad] store ----
        z = jnp.maximum(jnp.dot(pooled.astype(BF16), wh_ref[:, wh_off[1]:wh_off[1] + H],
                                preferred_element_type=F32) + rvec(8, H), 0.0)
        out_ref[...] = jnp.dot(z.astype(BF16), wh_ref[:, wh_off[2]:wh_off[2] + Tpad],
                               preferred_element_type=F32) + rvec(9, Tpad)

    args = (x_pad, src_pad, dst_pad, b_pad, ea_pad, root1, we1, we2, wh, rvs)

    flops = 2 * (Epad * Npad * (Fdim + H)               # one-hot gathers
                 + 2 * Npad * Epad * H                   # scatter-sums (+ deg/cnt dots)
                 + 2 * Epad * EF * Kmlp                  # edge MLP layer 1 (both convs)
                 + Epad * Kmlp * (Fdim * H + H * H)      # edge MLP layer 2
                 + Epad * (Fdim * H + H * H)             # per-edge contraction (VPU)
                 + Npad * (Fdim * H + H * H)             # root terms
                 + G * (Npad * H + H * H + H * Tpad))    # pool + head
    bytes_accessed = int(sum(int(a.size) * a.dtype.itemsize for a in args) + G * Tpad * 4)

    out = pl.pallas_call(
        kernel,
        out_shape=jax.ShapeDtypeStruct((G, Tpad), jnp.float32),
        in_specs=[pl.BlockSpec(memory_space=pltpu.MemorySpace.VMEM) for _ in args],
        out_specs=pl.BlockSpec(memory_space=pltpu.MemorySpace.VMEM),
        compiler_params=pltpu.CompilerParams(vmem_limit_bytes=32 * 1024 * 1024),
        cost_estimate=pl.CostEstimate(flops=int(flops), transcendentals=int(Npad + G),
                                      bytes_accessed=bytes_accessed),
    )(*args)
    return out[:, :T]


def init_params(key, node_features, edge_features, hidden_dim, num_targets, mlp_hidden=32):
    eps = 1e-5
    ks = iter(jax.random.split(key, 32))

    def dense(fan_in, fan_out):
        w = jax.random.normal(next(ks), (fan_in, fan_out), jnp.float32) / jnp.sqrt(float(fan_in))
        b = 0.1 * jax.random.normal(next(ks), (1, fan_out), jnp.float32)
        return w, b

    def bn_fold(dim):
        # eval-mode BatchNorm with fresh running stats (mean=0, var=1) folded to scale/shift
        gamma = 1.0 + 0.1 * jax.random.normal(next(ks), (1, dim), jnp.float32)
        beta = 0.1 * jax.random.normal(next(ks), (1, dim), jnp.float32)
        return gamma / jnp.sqrt(1.0 + eps), beta

    p = {}
    # conv1 edge nn: MLP([EF, 32, F*H])
    w1, b1 = dense(edge_features, mlp_hidden)
    s, sh = bn_fold(mlp_hidden)
    p['m1_w1'], p['m1_b1'] = w1 * s, b1 * s + sh
    p['m1_w2'], p['m1_b2'] = dense(mlp_hidden, node_features * hidden_dim)
    p['root1'], p['bias1'] = dense(node_features, hidden_dim)
    # conv2 edge nn: MLP([EF, 32, H*H])
    w1, b1 = dense(edge_features, mlp_hidden)
    s, sh = bn_fold(mlp_hidden)
    p['m2_w1'], p['m2_b1'] = w1 * s, b1 * s + sh
    p['m2_w2'], p['m2_b2'] = dense(mlp_hidden, hidden_dim * hidden_dim)
    p['root2'], p['bias2'] = dense(hidden_dim, hidden_dim)
    # outer BatchNorm1d layers (eval)
    p['bn1_s'], p['bn1_b'] = bn_fold(hidden_dim)
    p['bn2_s'], p['bn2_b'] = bn_fold(hidden_dim)
    # head
    p['fc1_w'], p['fc1_b'] = dense(hidden_dim, hidden_dim)
    p['fc2_w'], p['fc2_b'] = dense(hidden_dim, num_targets)
    return p


def gnn_reference(x, edge_index, edge_attr, batch, num_graphs, p):
    """Pure-JAX f32 reference mirroring the PyTorch forward (eval mode)."""
    src, dst = edge_index[0], edge_index[1]
    N = x.shape[0]

    def edge_mlp(w1, b1, w2, b2):
        h = jnp.maximum(edge_attr @ w1 + b1, 0.0)
        return h @ w2 + b2

    def nnconv(h, in_dim, out_dim, w1, b1, w2, b2, root, bias):
        w_e = edge_mlp(w1, b1, w2, b2).reshape(-1, in_dim, out_dim)
        msg = jnp.einsum('ei,eio->eo', h[src], w_e)
        summed = jax.ops.segment_sum(msg, dst, num_segments=N)
        cnt = jax.ops.segment_sum(jnp.ones((msg.shape[0],), jnp.float32), dst, num_segments=N)
        agg = summed / jnp.maximum(cnt, 1.0)[:, None]
        return agg + h @ root + bias

    F = x.shape[1]
    H = p['root1'].shape[1]
    h1 = nnconv(x, F, H, p['m1_w1'], p['m1_b1'], p['m1_w2'], p['m1_b2'],
                p['root1'], p['bias1'])
    h1 = jnp.maximum(h1 * p['bn1_s'] + p['bn1_b'], 0.0)
    h2 = nnconv(h1, H, H, p['m2_w1'], p['m2_b1'], p['m2_w2'], p['m2_b2'],
                p['root2'], p['bias2'])
    h2 = jnp.maximum(h2 * p['bn2_s'] + p['bn2_b'], 0.0)
    summed = jax.ops.segment_sum(h2, batch, num_segments=num_graphs)
    cnt = jax.ops.segment_sum(jnp.ones((N,), jnp.float32), batch, num_segments=num_graphs)
    pooled = summed / jnp.maximum(cnt, 1.0)[:, None]
    z = jnp.maximum(pooled @ p['fc1_w'] + p['fc1_b'], 0.0)
    return z @ p['fc2_w'] + p['fc2_b']


if __name__ == "__main__":
    node_features, edge_features, hidden_dim, num_targets = 8, 8, 32, 4
    N, E, G = 32, 64, 2

    key = jax.random.PRNGKey(0)
    k_x, k_e, k_s, k_d, k_p = jax.random.split(key, 5)

    x = jax.random.normal(k_x, (N, node_features), jnp.float32)
    edge_attr = jax.random.normal(k_e, (E, edge_features), jnp.float32)

    # Two graphs: nodes [0, 16) -> graph 0, nodes [16, 32) -> graph 1; edges stay in-graph.
    half = E // 2
    src0 = jax.random.randint(k_s, (half,), 0, N // 2)
    dst0 = jax.random.randint(k_d, (half,), 0, N // 2)
    src1 = jax.random.randint(jax.random.fold_in(k_s, 1), (half,), N // 2, N)
    dst1 = jax.random.randint(jax.random.fold_in(k_d, 1), (half,), N // 2, N)
    edge_index = jnp.stack([jnp.concatenate([src0, src1]),
                            jnp.concatenate([dst0, dst1])]).astype(jnp.int32)
    batch = jnp.concatenate([jnp.zeros(N // 2, jnp.int32),
                             jnp.ones(N // 2, jnp.int32)])

    params = init_params(k_p, node_features, edge_features, hidden_dim, num_targets)

    out = gnn_forward(x, edge_index, edge_attr, batch, G, params)
    out = jax.block_until_ready(out)
    assert out.shape == (G, num_targets)

    ref = gnn_reference(x, edge_index, edge_attr, batch, G, params)
    np.testing.assert_allclose(np.asarray(out), np.asarray(ref), rtol=5e-2, atol=5e-2)

    print("KERNEL_OK")
</pallas_src>

<mosaic_0001>
module attributes {stable_mosaic.version = 11 : i64} {
  func.func @kernel(%arg0: memref<128x8xbf16, #tpu.memory_space<vmem>>, %arg1: memref<128x1xi32, #tpu.memory_space<vmem>>, %arg2: memref<1x128xi32, #tpu.memory_space<vmem>>, %arg3: memref<1x128xi32, #tpu.memory_space<vmem>>, %arg4: memref<128x8xbf16, #tpu.memory_space<vmem>>, %arg5: memref<8x32xbf16, #tpu.memory_space<vmem>>, %arg6: memref<8x256xbf16, #tpu.memory_space<vmem>>, %arg7: memref<32x1280xbf16, #tpu.memory_space<vmem>>, %arg8: memref<32x384xbf16, #tpu.memory_space<vmem>>, %arg9: memref<1x2560xf32, #tpu.memory_space<vmem>>, %arg10: memref<2x128xf32, #tpu.memory_space<vmem>>) attributes {dimension_semantics = [], scalar_prefetch = 0 : i64, scratch_operands = 0 : i64, tpu.core_type = #tpu.core_type<tc>} {
    %c0 = arith.constant 0 : index
    %c0_0 = arith.constant 0 : index
    %0 = vector.load %arg0[%c0, %c0_0] : memref<128x8xbf16, #tpu.memory_space<vmem>>, vector<128x8xbf16>
    %c0_1 = arith.constant 0 : index
    %c0_2 = arith.constant 0 : index
    %1 = vector.load %arg4[%c0_1, %c0_2] : memref<128x8xbf16, #tpu.memory_space<vmem>>, vector<128x8xbf16>
    %c0_3 = arith.constant 0 : index
    %c0_4 = arith.constant 0 : index
    %2 = vector.load %arg1[%c0_3, %c0_4] : memref<128x1xi32, #tpu.memory_space<vmem>>, vector<128x1xi32>
    %c0_5 = arith.constant 0 : index
    %c0_6 = arith.constant 0 : index
    %3 = vector.load %arg2[%c0_5, %c0_6] : memref<1x128xi32, #tpu.memory_space<vmem>>, vector<1x128xi32>
    %c0_7 = arith.constant 0 : index
    %c0_8 = arith.constant 0 : index
    %4 = vector.load %arg3[%c0_7, %c0_8] : memref<1x128xi32, #tpu.memory_space<vmem>>, vector<1x128xi32>
    %5 = tpu.iota {dimensions = array<i32: 1>} : vector<128x128xi32>
    %6 = vector.broadcast %2 : vector<128x1xi32> to vector<128x128xi32>
    %7 = arith.cmpi eq, %5, %6 : vector<128x128xi32>
    %8 = arith.extui %7 : vector<128x128xi1> to vector<128x128xi32>
    %9 = arith.sitofp %8 : vector<128x128xi32> to vector<128x128xf32>
    %10 = arith.truncf %9 : vector<128x128xf32> to vector<128x128xbf16>
    %11 = tpu.iota {dimensions = array<i32: 0>} : vector<128x128xi32>
    %12 = vector.broadcast %3 : vector<1x128xi32> to vector<128x128xi32>
    %13 = arith.cmpi eq, %11, %12 : vector<128x128xi32>
    %14 = arith.extui %13 : vector<128x128xi1> to vector<128x128xi32>
    %15 = arith.sitofp %14 : vector<128x128xi32> to vector<128x128xf32>
    %16 = arith.truncf %15 : vector<128x128xf32> to vector<128x128xbf16>
    %17 = tpu.iota {dimensions = array<i32: 0>} : vector<2x128xi32>
    %18 = vector.broadcast %4 : vector<1x128xi32> to vector<2x128xi32>
    %19 = arith.cmpi eq, %17, %18 : vector<2x128xi32>
    %20 = arith.extui %19 : vector<2x128xi1> to vector<2x128xi32>
    %21 = arith.sitofp %20 : vector<2x128xi32> to vector<2x128xf32>
    %22 = arith.truncf %21 : vector<2x128xf32> to vector<2x128xbf16>
    %cst = arith.constant 1.000000e+00 : bf16
    %23 = vector.broadcast %cst : bf16 to vector<128x1xbf16>
    %cst_9 = arith.constant 1.000000e+00 : bf16
    %24 = vector.broadcast %cst_9 : bf16 to vector<128x1xbf16>
    %cst_10 = arith.constant dense<0.000000e+00> : vector<128x1xf32>
    %25 = tpu.matmul %16, %23, %cst_10 {dimension_numbers = #tpu.dot_dimension_numbers<[1], [0], [0], [1], [0, 0, 1, 1], [], []>} : vector<128x128xbf16>, vector<128x1xbf16>, vector<128x1xf32> -> vector<128x1xf32>
    %cst_11 = arith.constant dense<0.000000e+00> : vector<2x1xf32>
    %26 = tpu.matmul %22, %24, %cst_11 {dimension_numbers = #tpu.dot_dimension_numbers<[1], [0], [0], [1], [0, 0, 1, 1], [], []>} : vector<2x128xbf16>, vector<128x1xbf16>, vector<2x1xf32> -> vector<2x1xf32>
    %cst_12 = arith.constant 1.000000e+00 : f32
    %27 = vector.broadcast %cst_12 : f32 to vector<128x1xf32>
    %28 = arith.maximumf %25, %27 : vector<128x1xf32>
    %29 = tpu.reciprocal %28 {approx = true} : vector<128x1xf32> -> vector<128x1xf32>
    %cst_13 = arith.constant 1.000000e+00 : f32
    %30 = vector.broadcast %cst_13 : f32 to vector<2x1xf32>
    %31 = arith.maximumf %26, %30 : vector<2x1xf32>
    %32 = tpu.reciprocal %31 {approx = true} : vector<2x1xf32> -> vector<2x1xf32>
    %c0_14 = arith.constant 0 : index
    %c0_15 = arith.constant 0 : index
    %33 = vector.load %arg6[%c0_14, %c0_15] : memref<8x256xbf16, #tpu.memory_space<vmem>>, vector<8x32xbf16>
    %c0_16 = arith.constant 0 : index
    %c0_17 = arith.constant 0 : index
    %34 = vector.load %arg9[%c0_16, %c0_17] : memref<1x2560xf32, #tpu.memory_space<vmem>>, vector<1x32xf32>
    %c0_18 = arith.constant 0 : index
    %c0_19 = arith.constant 0 : index
    %35 = vector.load %arg7[%c0_18, %c0_19] : memref<32x1280xbf16, #tpu.memory_space<vmem>>, vector<32x256xbf16>
    %c0_20 = arith.constant 0 : index
    %c1280 = arith.constant 1280 : index
    %36 = vector.load %arg9[%c0_20, %c1280] : memref<1x2560xf32, #tpu.memory_space<vmem>>, vector<1x256xf32>
    %c0_21 = arith.constant 0 : index
    %c0_22 = arith.constant 0 : index
    %37 = vector.load %arg5[%c0_21, %c0_22] : memref<8x32xbf16, #tpu.memory_space<vmem>>, vector<8x32xbf16>
    %c0_23 = arith.constant 0 : index
    %c128 = arith.constant 128 : index
    %38 = vector.load %arg9[%c0_23, %c128] : memref<1x2560xf32, #tpu.memory_space<vmem>>, vector<1x32xf32>
    %cst_24 = arith.constant dense<0.000000e+00> : vector<128x32xf32>
    %39 = tpu.matmul %1, %33, %cst_24 {dimension_numbers = #tpu.dot_dimension_numbers<[1], [0], [0], [1], [0, 0, 1, 1], [], []>} : vector<128x8xbf16>, vector<8x32xbf16>, vector<128x32xf32> -> vector<128x32xf32>
    %40 = vector.broadcast %34 : vector<1x32xf32> to vector<128x32xf32>
    %41 = arith.addf %39, %40 : vector<128x32xf32>
    %cst_25 = arith.constant 0.000000e+00 : f32
    %42 = vector.broadcast %cst_25 : f32 to vector<128x32xf32>
    %43 = arith.maximumf %41, %42 : vector<128x32xf32>
    %44 = arith.truncf %43 : vector<128x32xf32> to vector<128x32xbf16>
    %cst_26 = arith.constant dense<0.000000e+00> : vector<128x256xf32>
    %45 = tpu.matmul %44, %35, %cst_26 {dimension_numbers = #tpu.dot_dimension_numbers<[1], [0], [0], [1], [0, 0, 1, 1], [], []>} : vector<128x32xbf16>, vector<32x256xbf16>, vector<128x256xf32> -> vector<128x256xf32>
    %46 = vector.broadcast %36 : vector<1x256xf32> to vector<128x256xf32>
    %47 = arith.addf %45, %46 : vector<128x256xf32>
    %cst_27 = arith.constant dense<0.000000e+00> : vector<128x8xf32>
    %48 = tpu.matmul %10, %0, %cst_27 {dimension_numbers = #tpu.dot_dimension_numbers<[1], [0], [0], [1], [0, 0, 1, 1], [], []>} : vector<128x128xbf16>, vector<128x8xbf16>, vector<128x8xf32> -> vector<128x8xf32>
    %49 = vector.extract_strided_slice %48 {offsets = [0, 0], sizes = [128, 1], strides = [1, 1]} : vector<128x8xf32> to vector<128x1xf32>
    %50 = vector.extract_strided_slice %47 {offsets = [0, 0], sizes = [128, 32], strides = [1, 1]} : vector<128x256xf32> to vector<128x32xf32>
    %51 = vector.broadcast %49 : vector<128x1xf32> to vector<128x32xf32>
    %52 = arith.mulf %51, %50 : vector<128x32xf32>
    %53 = vector.extract_strided_slice %48 {offsets = [0, 1], sizes = [128, 1], strides = [1, 1]} : vector<128x8xf32> to vector<128x1xf32>
    %54 = vector.extract_strided_slice %47 {offsets = [0, 32], sizes = [128, 32], strides = [1, 1]} : vector<128x256xf32> to vector<128x32xf32>
    %55 = vector.broadcast %53 : vector<128x1xf32> to vector<128x32xf32>
    %56 = arith.mulf %55, %54 : vector<128x32xf32>
    %57 = arith.addf %52, %56 : vector<128x32xf32>
    %58 = vector.extract_strided_slice %48 {offsets = [0, 2], sizes = [128, 1], strides = [1, 1]} : vector<128x8xf32> to vector<128x1xf32>
    %59 = vector.extract_strided_slice %47 {offsets = [0, 64], sizes = [128, 32], strides = [1, 1]} : vector<128x256xf32> to vector<128x32xf32>
    %60 = vector.broadcast %58 : vector<128x1xf32> to vector<128x32xf32>
    %61 = arith.mulf %60, %59 : vector<128x32xf32>
    %62 = arith.addf %57, %61 : vector<128x32xf32>
    %63 = vector.extract_strided_slice %48 {offsets = [0, 3], sizes = [128, 1], strides = [1, 1]} : vector<128x8xf32> to vector<128x1xf32>
    %64 = vector.extract_strided_slice %47 {offsets = [0, 96], sizes = [128, 32], strides = [1, 1]} : vector<128x256xf32> to vector<128x32xf32>
    %65 = vector.broadcast %63 : vector<128x1xf32> to vector<128x32xf32>
    %66 = arith.mulf %65, %64 : vector<128x32xf32>
    %67 = arith.addf %62, %66 : vector<128x32xf32>
    %68 = vector.extract_strided_slice %48 {offsets = [0, 4], sizes = [128, 1], strides = [1, 1]} : vector<128x8xf32> to vector<128x1xf32>
    %69 = vector.extract_strided_slice %47 {offsets = [0, 128], sizes = [128, 32], strides = [1, 1]} : vector<128x256xf32> to vector<128x32xf32>
    %70 = vector.broadcast %68 : vector<128x1xf32> to vector<128x32xf32>
    %71 = arith.mulf %70, %69 : vector<128x32xf32>
    %72 = arith.addf %67, %71 : vector<128x32xf32>
    %73 = vector.extract_strided_slice %48 {offsets = [0, 5], sizes = [128, 1], strides = [1, 1]} : vector<128x8xf32> to vector<128x1xf32>
    %74 = vector.extract_strided_slice %47 {offsets = [0, 160], sizes = [128, 32], strides = [1, 1]} : vector<128x256xf32> to vector<128x32xf32>
    %75 = vector.broadcast %73 : vector<128x1xf32> to vector<128x32xf32>
    %76 = arith.mulf %75, %74 : vector<128x32xf32>
    %77 = arith.addf %72, %76 : vector<128x32xf32>
    %78 = vector.extract_strided_slice %48 {offsets = [0, 6], sizes = [128, 1], strides = [1, 1]} : vector<128x8xf32> to vector<128x1xf32>
    %79 = vector.extract_strided_slice %47 {offsets = [0, 192], sizes = [128, 32], strides = [1, 1]} : vector<128x256xf32> to vector<128x32xf32>
    %80 = vector.broadcast %78 : vector<128x1xf32> to vector<128x32xf32>
    %81 = arith.mulf %80, %79 : vector<128x32xf32>
    %82 = arith.addf %77, %81 : vector<128x32xf32>
    %83 = vector.extract_strided_slice %48 {offsets = [0, 7], sizes = [128, 1], strides = [1, 1]} : vector<128x8xf32> to vector<128x1xf32>
    %84 = vector.extract_strided_slice %47 {offsets = [0, 224], sizes = [128, 32], strides = [1, 1]} : vector<128x256xf32> to vector<128x32xf32>
    %85 = vector.broadcast %83 : vector<128x1xf32> to vector<128x32xf32>
    %86 = arith.mulf %85, %84 : vector<128x32xf32>
    %87 = arith.addf %82, %86 : vector<128x32xf32>
    %88 = arith.truncf %87 : vector<128x32xf32> to vector<128x32xbf16>
    %cst_28 = arith.constant dense<0.000000e+00> : vector<128x32xf32>
    %89 = tpu.matmul %16, %88, %cst_28 {dimension_numbers = #tpu.dot_dimension_numbers<[1], [0], [0], [1], [0, 0, 1, 1], [], []>} : vector<128x128xbf16>, vector<128x32xbf16>, vector<128x32xf32> -> vector<128x32xf32>
    %90 = vector.broadcast %29 : vector<128x1xf32> to vector<128x32xf32>
    %91 = arith.mulf %89, %90 : vector<128x32xf32>
    %cst_29 = arith.constant dense<0.000000e+00> : vector<128x32xf32>
    %92 = tpu.matmul %0, %37, %cst_29 {dimension_numbers = #tpu.dot_dimension_numbers<[1], [0], [0], [1], [0, 0, 1, 1], [], []>} : vector<128x8xbf16>, vector<8x32xbf16>, vector<128x32xf32> -> vector<128x32xf32>
    %93 = arith.addf %91, %92 : vector<128x32xf32>
    %94 = vector.broadcast %38 : vector<1x32xf32> to vector<128x32xf32>
    %95 = arith.addf %93, %94 : vector<128x32xf32>
    %c0_30 = arith.constant 0 : index
    %c512 = arith.constant 512 : index
    %96 = vector.load %arg9[%c0_30, %c512] : memref<1x2560xf32, #tpu.memory_space<vmem>>, vector<1x32xf32>
    %97 = vector.broadcast %96 : vector<1x32xf32> to vector<128x32xf32>
    %98 = arith.mulf %95, %97 : vector<128x32xf32>
    %c0_31 = arith.constant 0 : index
    %c640 = arith.constant 640 : index
    %99 = vector.load %arg9[%c0_31, %c640] : memref<1x2560xf32, #tpu.memory_space<vmem>>, vector<1x32xf32>
    %100 = vector.broadcast %99 : vector<1x32xf32> to vector<128x32xf32>
    %101 = arith.addf %98, %100 : vector<128x32xf32>
    %cst_32 = arith.constant 0.000000e+00 : f32
    %102 = vector.broadcast %cst_32 : f32 to vector<128x32xf32>
    %103 = arith.maximumf %101, %102 : vector<128x32xf32>
    %104 = arith.truncf %103 : vector<128x32xf32> to vector<128x32xbf16>
    %c0_33 = arith.constant 0 : index
    %c128_34 = arith.constant 128 : index
    %105 = vector.load %arg6[%c0_33, %c128_34] : memref<8x256xbf16, #tpu.memory_space<vmem>>, vector<8x32xbf16>
    %c0_35 = arith.constant 0 : index
    %c256 = arith.constant 256 : index
    %106 = vector.load %arg9[%c0_35, %c256] : memref<1x2560xf32, #tpu.memory_space<vmem>>, vector<1x32xf32>
    %c0_36 = arith.constant 0 : index
    %c256_37 = arith.constant 256 : index
    %107 = vector.load %arg7[%c0_36, %c256_37] : memref<32x1280xbf16, #tpu.memory_space<vmem>>, vector<32x1024xbf16>
    %c0_38 = arith.constant 0 : index
    %c1536 = arith.constant 1536 : index
    %108 = vector.load %arg9[%c0_38, %c1536] : memref<1x2560xf32, #tpu.memory_space<vmem>>, vector<1x1024xf32>
    %c0_39 = arith.constant 0 : index
    %c0_40 = arith.constant 0 : index
    %109 = vector.load %arg8[%c0_39, %c0_40] : memref<32x384xbf16, #tpu.memory_space<vmem>>, vector<32x32xbf16>
    %c0_41 = arith.constant 0 : index
    %c384 = arith.constant 384 : index
    %110 = vector.load %arg9[%c0_41, %c384] : memref<1x2560xf32, #tpu.memory_space<vmem>>, vector<1x32xf32>
    %cst_42 = arith.constant dense<0.000000e+00> : vector<128x32xf32>
    %111 = tpu.matmul %1, %105, %cst_42 {dimension_numbers = #tpu.dot_dimension_numbers<[1], [0], [0], [1], [0, 0, 1, 1], [], []>} : vector<128x8xbf16>, vector<8x32xbf16>, vector<128x32xf32> -> vector<128x32xf32>
    %112 = vector.broadcast %106 : vector<1x32xf32> to vector<128x32xf32>
    %113 = arith.addf %111, %112 : vector<128x32xf32>
    %cst_43 = arith.constant 0.000000e+00 : f32
    %114 = vector.broadcast %cst_43 : f32 to vector<128x32xf32>
    %115 = arith.maximumf %113, %114 : vector<128x32xf32>
    %116 = arith.truncf %115 : vector<128x32xf32> to vector<128x32xbf16>
    %cst_44 = arith.constant dense<0.000000e+00> : vector<128x1024xf32>
    %117 = tpu.matmul %116, %107, %cst_44 {dimension_numbers = #tpu.dot_dimension_numbers<[1], [0], [0], [1], [0, 0, 1, 1], [], []>} : vector<128x32xbf16>, vector<32x1024xbf16>, vector<128x1024xf32> -> vector<128x1024xf32>
    %118 = vector.broadcast %108 : vector<1x1024xf32> to vector<128x1024xf32>
    %119 = arith.addf %117, %118 : vector<128x1024xf32>
    %cst_45 = arith.constant dense<0.000000e+00> : vector<128x32xf32>
    %120 = tpu.matmul %10, %104, %cst_45 {dimension_numbers = #tpu.dot_dimension_numbers<[1], [0], [0], [1], [0, 0, 1, 1], [], []>} : vector<128x128xbf16>, vector<128x32xbf16>, vector<128x32xf32> -> vector<128x32xf32>
    %121 = vector.extract_strided_slice %120 {offsets = [0, 0], sizes = [128, 1], strides = [1, 1]} : vector<128x32xf32> to vector<128x1xf32>
    %122 = vector.extract_strided_slice %119 {offsets = [0, 0], sizes = [128, 32], strides = [1, 1]} : vector<128x1024xf32> to vector<128x32xf32>
    %123 = vector.broadcast %121 : vector<128x1xf32> to vector<128x32xf32>
    %124 = arith.mulf %123, %122 : vector<128x32xf32>
    %125 = vector.extract_strided_slice %120 {offsets = [0, 1], sizes = [128, 1], strides = [1, 1]} : vector<128x32xf32> to vector<128x1xf32>
    %126 = vector.extract_strided_slice %119 {offsets = [0, 32], sizes = [128, 32], strides = [1, 1]} : vector<128x1024xf32> to vector<128x32xf32>
    %127 = vector.broadcast %125 : vector<128x1xf32> to vector<128x32xf32>
    %128 = arith.mulf %127, %126 : vector<128x32xf32>
    %129 = arith.addf %124, %128 : vector<128x32xf32>
    %130 = vector.extract_strided_slice %120 {offsets = [0, 2], sizes = [128, 1], strides = [1, 1]} : vector<128x32xf32> to vector<128x1xf32>
    %131 = vector.extract_strided_slice %119 {offsets = [0, 64], sizes = [128, 32], strides = [1, 1]} : vector<128x1024xf32> to vector<128x32xf32>
    %132 = vector.broadcast %130 : vector<128x1xf32> to vector<128x32xf32>
    %133 = arith.mulf %132, %131 : vector<128x32xf32>
    %134 = arith.addf %129, %133 : vector<128x32xf32>
    %135 = vector.extract_strided_slice %120 {offsets = [0, 3], sizes = [128, 1], strides = [1, 1]} : vector<128x32xf32> to vector<128x1xf32>
    %136 = vector.extract_strided_slice %119 {offsets = [0, 96], sizes = [128, 32], strides = [1, 1]} : vector<128x1024xf32> to vector<128x32xf32>
    %137 = vector.broadcast %135 : vector<128x1xf32> to vector<128x32xf32>
    %138 = arith.mulf %137, %136 : vector<128x32xf32>
    %139 = arith.addf %134, %138 : vector<128x32xf32>
    %140 = vector.extract_strided_slice %120 {offsets = [0, 4], sizes = [128, 1], strides = [1, 1]} : vector<128x32xf32> to vector<128x1xf32>
    %141 = vector.extract_strided_slice %119 {offsets = [0, 128], sizes = [128, 32], strides = [1, 1]} : vector<128x1024xf32> to vector<128x32xf32>
    %142 = vector.broadcast %140 : vector<128x1xf32> to vector<128x32xf32>
    %143 = arith.mulf %142, %141 : vector<128x32xf32>
    %144 = arith.addf %139, %143 : vector<128x32xf32>
    %145 = vector.extract_strided_slice %120 {offsets = [0, 5], sizes = [128, 1], strides = [1, 1]} : vector<128x32xf32> to vector<128x1xf32>
    %146 = vector.extract_strided_slice %119 {offsets = [0, 160], sizes = [128, 32], strides = [1, 1]} : vector<128x1024xf32> to vector<128x32xf32>
    %147 = vector.broadcast %145 : vector<128x1xf32> to vector<128x32xf32>
    %148 = arith.mulf %147, %146 : vector<128x32xf32>
    %149 = arith.addf %144, %148 : vector<128x32xf32>
    %150 = vector.extract_strided_slice %120 {offsets = [0, 6], sizes = [128, 1], strides = [1, 1]} : vector<128x32xf32> to vector<128x1xf32>
    %151 = vector.extract_strided_slice %119 {offsets = [0, 192], sizes = [128, 32], strides = [1, 1]} : vector<128x1024xf32> to vector<128x32xf32>
    %152 = vector.broadcast %150 : vector<128x1xf32> to vector<128x32xf32>
    %153 = arith.mulf %152, %151 : vector<128x32xf32>
    %154 = arith.addf %149, %153 : vector<128x32xf32>
    %155 = vector.extract_strided_slice %120 {offsets = [0, 7], sizes = [128, 1], strides = [1, 1]} : vector<128x32xf32> to vector<128x1xf32>
    %156 = vector.extract_strided_slice %119 {offsets = [0, 224], sizes = [128, 32], strides = [1, 1]} : vector<128x1024xf32> to vector<128x32xf32>
    %157 = vector.broadcast %155 : vector<128x1xf32> to vector<128x32xf32>
    %158 = arith.mulf %157, %156 : vector<128x32xf32>
    %159 = arith.addf %154, %158 : vector<128x32xf32>
    %160 = vector.extract_strided_slice %120 {offsets = [0, 8], sizes = [128, 1], strides = [1, 1]} : vector<128x32xf32> to vector<128x1xf32>
    %161 = vector.extract_strided_slice %119 {offsets = [0, 256], sizes = [128, 32], strides = [1, 1]} : vector<128x1024xf32> to vector<128x32xf32>
    %162 = vector.broadcast %160 : vector<128x1xf32> to vector<128x32xf32>
    %163 = arith.mulf %162, %161 : vector<128x32xf32>
    %164 = arith.addf %159, %163 : vector<128x32xf32>
    %165 = vector.extract_strided_slice %120 {offsets = [0, 9], sizes = [128, 1], strides = [1, 1]} : vector<128x32xf32> to vector<128x1xf32>
    %166 = vector.extract_strided_slice %119 {offsets = [0, 288], sizes = [128, 32], strides = [1, 1]} : vector<128x1024xf32> to vector<128x32xf32>
    %167 = vector.broadcast %165 : vector<128x1xf32> to vector<128x32xf32>
    %168 = arith.mulf %167, %166 : vector<128x32xf32>
    %169 = arith.addf %164, %168 : vector<128x32xf32>
    %170 = vector.extract_strided_slice %120 {offsets = [0, 10], sizes = [128, 1], strides = [1, 1]} : vector<128x32xf32> to vector<128x1xf32>
    %171 = vector.extract_strided_slice %119 {offsets = [0, 320], sizes = [128, 32], strides = [1, 1]} : vector<128x1024xf32> to vector<128x32xf32>
    %172 = vector.broadcast %170 : vector<128x1xf32> to vector<128x32xf32>
    %173 = arith.mulf %172, %171 : vector<128x32xf32>
    %174 = arith.addf %169, %173 : vector<128x32xf32>
    %175 = vector.extract_strided_slice %120 {offsets = [0, 11], sizes = [128, 1], strides = [1, 1]} : vector<128x32xf32> to vector<128x1xf32>
    %176 = vector.extract_strided_slice %119 {offsets = [0, 352], sizes = [128, 32], strides = [1, 1]} : vector<128x1024xf32> to vector<128x32xf32>
    %177 = vector.broadcast %175 : vector<128x1xf32> to vector<128x32xf32>
    %178 = arith.mulf %177, %176 : vector<128x32xf32>
    %179 = arith.addf %174, %178 : vector<128x32xf32>
    %180 = vector.extract_strided_slice %120 {offsets = [0, 12], sizes = [128, 1], strides = [1, 1]} : vector<128x32xf32> to vector<128x1xf32>
    %181 = vector.extract_strided_slice %119 {offsets = [0, 384], sizes = [128, 32], strides = [1, 1]} : vector<128x1024xf32> to vector<128x32xf32>
    %182 = vector.broadcast %180 : vector<128x1xf32> to vector<128x32xf32>
    %183 = arith.mulf %182, %181 : vector<128x32xf32>
    %184 = arith.addf %179, %183 : vector<128x32xf32>
    %185 = vector.extract_strided_slice %120 {offsets = [0, 13], sizes = [128, 1], strides = [1, 1]} : vector<128x32xf32> to vector<128x1xf32>
    %186 = vector.extract_strided_slice %119 {offsets = [0, 416], sizes = [128, 32], strides = [1, 1]} : vector<128x1024xf32> to vector<128x32xf32>
    %187 = vector.broadcast %185 : vector<128x1xf32> to vector<128x32xf32>
    %188 = arith.mulf %187, %186 : vector<128x32xf32>
    %189 = arith.addf %184, %188 : vector<128x32xf32>
    %190 = vector.extract_strided_slice %120 {offsets = [0, 14], sizes = [128, 1], strides = [1, 1]} : vector<128x32xf32> to vector<128x1xf32>
    %191 = vector.extract_strided_slice %119 {offsets = [0, 448], sizes = [128, 32], strides = [1, 1]} : vector<128x1024xf32> to vector<128x32xf32>
    %192 = vector.broadcast %190 : vector<128x1xf32> to vector<128x32xf32>
    %193 = arith.mulf %192, %191 : vector<128x32xf32>
    %194 = arith.addf %189, %193 : vector<128x32xf32>
    %195 = vector.extract_strided_slice %120 {offsets = [0, 15], sizes = [128, 1], strides = [1, 1]} : vector<128x32xf32> to vector<128x1xf32>
    %196 = vector.extract_strided_slice %119 {offsets = [0, 480], sizes = [128, 32], strides = [1, 1]} : vector<128x1024xf32> to vector<128x32xf32>
    %197 = vector.broadcast %195 : vector<128x1xf32> to vector<128x32xf32>
    %198 = arith.mulf %197, %196 : vector<128x32xf32>
    %199 = arith.addf %194, %198 : vector<128x32xf32>
    %200 = vector.extract_strided_slice %120 {offsets = [0, 16], sizes = [128, 1], strides = [1, 1]} : vector<128x32xf32> to vector<128x1xf32>
    %201 = vector.extract_strided_slice %119 {offsets = [0, 512], sizes = [128, 32], strides = [1, 1]} : vector<128x1024xf32> to vector<128x32xf32>
    %202 = vector.broadcast %200 : vector<128x1xf32> to vector<128x32xf32>
    %203 = arith.mulf %202, %201 : vector<128x32xf32>
    %204 = arith.addf %199, %203 : vector<128x32xf32>
    %205 = vector.extract_strided_slice %120 {offsets = [0, 17], sizes = [128, 1], strides = [1, 1]} : vector<128x32xf32> to vector<128x1xf32>
    %206 = vector.extract_strided_slice %119 {offsets = [0, 544], sizes = [128, 32], strides = [1, 1]} : vector<128x1024xf32> to vector<128x32xf32>
    %207 = vector.broadcast %205 : vector<128x1xf32> to vector<128x32xf32>
    %208 = arith.mulf %207, %206 : vector<128x32xf32>
    %209 = arith.addf %204, %208 : vector<128x32xf32>
    %210 = vector.extract_strided_slice %120 {offsets = [0, 18], sizes = [128, 1], strides = [1, 1]} : vector<128x32xf32> to vector<128x1xf32>
    %211 = vector.extract_strided_slice %119 {offsets = [0, 576], sizes = [128, 32], strides = [1, 1]} : vector<128x1024xf32> to vector<128x32xf32>
    %212 = vector.broadcast %210 : vector<128x1xf32> to vector<128x32xf32>
    %213 = arith.mulf %212, %211 : vector<128x32xf32>
    %214 = arith.addf %209, %213 : vector<128x32xf32>
    %215 = vector.extract_strided_slice %120 {offsets = [0, 19], sizes = [128, 1], strides = [1, 1]} : vector<128x32xf32> to vector<128x1xf32>
    %216 = vector.extract_strided_slice %119 {offsets = [0, 608], sizes = [128, 32], strides = [1, 1]} : vector<128x1024xf32> to vector<128x32xf32>
    %217 = vector.broadcast %215 : vector<128x1xf32> to vector<128x32xf32>
    %218 = arith.mulf %217, %216 : vector<128x32xf32>
    %219 = arith.addf %214, %218 : vector<128x32xf32>
    %220 = vector.extract_strided_slice %120 {offsets = [0, 20], sizes = [128, 1], strides = [1, 1]} : vector<128x32xf32> to vector<128x1xf32>
    %221 = vector.extract_strided_slice %119 {offsets = [0, 640], sizes = [128, 32], strides = [1, 1]} : vector<128x1024xf32> to vector<128x32xf32>
    %222 = vector.broadcast %220 : vector<128x1xf32> to vector<128x32xf32>
    %223 = arith.mulf %222, %221 : vector<128x32xf32>
    %224 = arith.addf %219, %223 : vector<128x32xf32>
    %225 = vector.extract_strided_slice %120 {offsets = [0, 21], sizes = [128, 1], strides = [1, 1]} : vector<128x32xf32> to vector<128x1xf32>
    %226 = vector.extract_strided_slice %119 {offsets = [0, 672], sizes = [128, 32], strides = [1, 1]} : vector<128x1024xf32> to vector<128x32xf32>
    %227 = vector.broadcast %225 : vector<128x1xf32> to vector<128x32xf32>
    %228 = arith.mulf %227, %226 : vector<128x32xf32>
    %229 = arith.addf %224, %228 : vector<128x32xf32>
    %230 = vector.extract_strided_slice %120 {offsets = [0, 22], sizes = [128, 1], strides = [1, 1]} : vector<128x32xf32> to vector<128x1xf32>
    %231 = vector.extract_strided_slice %119 {offsets = [0, 704], sizes = [128, 32], strides = [1, 1]} : vector<128x1024xf32> to vector<128x32xf32>
    %232 = vector.broadcast %230 : vector<128x1xf32> to vector<128x32xf32>
    %233 = arith.mulf %232, %231 : vector<128x32xf32>
    %234 = arith.addf %229, %233 : vector<128x32xf32>
    %235 = vector.extract_strided_slice %120 {offsets = [0, 23], sizes = [128, 1], strides = [1, 1]} : vector<128x32xf32> to vector<128x1xf32>
    %236 = vector.extract_strided_slice %119 {offsets = [0, 736], sizes = [128, 32], strides = [1, 1]} : vector<128x1024xf32> to vector<128x32xf32>
    %237 = vector.broadcast %235 : vector<128x1xf32> to vector<128x32xf32>
    %238 = arith.mulf %237, %236 : vector<128x32xf32>
    %239 = arith.addf %234, %238 : vector<128x32xf32>
    %240 = vector.extract_strided_slice %120 {offsets = [0, 24], sizes = [128, 1], strides = [1, 1]} : vector<128x32xf32> to vector<128x1xf32>
    %241 = vector.extract_strided_slice %119 {offsets = [0, 768], sizes = [128, 32], strides = [1, 1]} : vector<128x1024xf32> to vector<128x32xf32>
    %242 = vector.broadcast %240 : vector<128x1xf32> to vector<128x32xf32>
    %243 = arith.mulf %242, %241 : vector<128x32xf32>
    %244 = arith.addf %239, %243 : vector<128x32xf32>
    %245 = vector.extract_strided_slice %120 {offsets = [0, 25], sizes = [128, 1], strides = [1, 1]} : vector<128x32xf32> to vector<128x1xf32>
    %246 = vector.extract_strided_slice %119 {offsets = [0, 800], sizes = [128, 32], strides = [1, 1]} : vector<128x1024xf32> to vector<128x32xf32>
    %247 = vector.broadcast %245 : vector<128x1xf32> to vector<128x32xf32>
    %248 = arith.mulf %247, %246 : vector<128x32xf32>
    %249 = arith.addf %244, %248 : vector<128x32xf32>
    %250 = vector.extract_strided_slice %120 {offsets = [0, 26], sizes = [128, 1], strides = [1, 1]} : vector<128x32xf32> to vector<128x1xf32>
    %251 = vector.extract_strided_slice %119 {offsets = [0, 832], sizes = [128, 32], strides = [1, 1]} : vector<128x1024xf32> to vector<128x32xf32>
    %252 = vector.broadcast %250 : vector<128x1xf32> to vector<128x32xf32>
    %253 = arith.mulf %252, %251 : vector<128x32xf32>
    %254 = arith.addf %249, %253 : vector<128x32xf32>
    %255 = vector.extract_strided_slice %120 {offsets = [0, 27], sizes = [128, 1], strides = [1, 1]} : vector<128x32xf32> to vector<128x1xf32>
    %256 = vector.extract_strided_slice %119 {offsets = [0, 864], sizes = [128, 32], strides = [1, 1]} : vector<128x1024xf32> to vector<128x32xf32>
    %257 = vector.broadcast %255 : vector<128x1xf32> to vector<128x32xf32>
    %258 = arith.mulf %257, %256 : vector<128x32xf32>
    %259 = arith.addf %254, %258 : vector<128x32xf32>
    %260 = vector.extract_strided_slice %120 {offsets = [0, 28], sizes = [128, 1], strides = [1, 1]} : vector<128x32xf32> to vector<128x1xf32>
    %261 = vector.extract_strided_slice %119 {offsets = [0, 896], sizes = [128, 32], strides = [1, 1]} : vector<128x1024xf32> to vector<128x32xf32>
    %262 = vector.broadcast %260 : vector<128x1xf32> to vector<128x32xf32>
    %263 = arith.mulf %262, %261 : vector<128x32xf32>
    %264 = arith.addf %259, %263 : vector<128x32xf32>
    %265 = vector.extract_strided_slice %120 {offsets = [0, 29], sizes = [128, 1], strides = [1, 1]} : vector<128x32xf32> to vector<128x1xf32>
    %266 = vector.extract_strided_slice %119 {offsets = [0, 928], sizes = [128, 32], strides = [1, 1]} : vector<128x1024xf32> to vector<128x32xf32>
    %267 = vector.broadcast %265 : vector<128x1xf32> to vector<128x32xf32>
    %268 = arith.mulf %267, %266 : vector<128x32xf32>
    %269 = arith.addf %264, %268 : vector<128x32xf32>
    %270 = vector.extract_strided_slice %120 {offsets = [0, 30], sizes = [128, 1], strides = [1, 1]} : vector<128x32xf32> to vector<128x1xf32>
    %271 = vector.extract_strided_slice %119 {offsets = [0, 960], sizes = [128, 32], strides = [1, 1]} : vector<128x1024xf32> to vector<128x32xf32>
    %272 = vector.broadcast %270 : vector<128x1xf32> to vector<128x32xf32>
    %273 = arith.mulf %272, %271 : vector<128x32xf32>
    %274 = arith.addf %269, %273 : vector<128x32xf32>
    %275 = vector.extract_strided_slice %120 {offsets = [0, 31], sizes = [128, 1], strides = [1, 1]} : vector<128x32xf32> to vector<128x1xf32>
    %276 = vector.extract_strided_slice %119 {offsets = [0, 992], sizes = [128, 32], strides = [1, 1]} : vector<128x1024xf32> to vector<128x32xf32>
    %277 = vector.broadcast %275 : vector<128x1xf32> to vector<128x32xf32>
    %278 = arith.mulf %277, %276 : vector<128x32xf32>
    %279 = arith.addf %274, %278 : vector<128x32xf32>
    %280 = arith.truncf %279 : vector<128x32xf32> to vector<128x32xbf16>
    %cst_46 = arith.constant dense<0.000000e+00> : vector<128x32xf32>
    %281 = tpu.matmul %16, %280, %cst_46 {dimension_numbers = #tpu.dot_dimension_numbers<[1], [0], [0], [1], [0, 0, 1, 1], [], []>} : vector<128x128xbf16>, vector<128x32xbf16>, vector<128x32xf32> -> vector<128x32xf32>
    %282 = vector.broadcast %29 : vector<128x1xf32> to vector<128x32xf32>
    %283 = arith.mulf %281, %282 : vector<128x32xf32>
    %cst_47 = arith.constant dense<0.000000e+00> : vector<128x32xf32>
    %284 = tpu.matmul %104, %109, %cst_47 {dimension_numbers = #tpu.dot_dimension_numbers<[1], [0], [0], [1], [0, 0, 1, 1], [], []>} : vector<128x32xbf16>, vector<32x32xbf16>, vector<128x32xf32> -> vector<128x32xf32>
    %285 = arith.addf %283, %284 : vector<128x32xf32>
    %286 = vector.broadcast %110 : vector<1x32xf32> to vector<128x32xf32>
    %287 = arith.addf %285, %286 : vector<128x32xf32>
    %c0_48 = arith.constant 0 : index
    %c768 = arith.constant 768 : index
    %288 = vector.load %arg9[%c0_48, %c768] : memref<1x2560xf32, #tpu.memory_space<vmem>>, vector<1x32xf32>
    %289 = vector.broadcast %288 : vector<1x32xf32> to vector<128x32xf32>
    %290 = arith.mulf %287, %289 : vector<128x32xf32>
    %c0_49 = arith.constant 0 : index
    %c896 = arith.constant 896 : index
    %291 = vector.load %arg9[%c0_49, %c896] : memref<1x2560xf32, #tpu.memory_space<vmem>>, vector<1x32xf32>
    %292 = vector.broadcast %291 : vector<1x32xf32> to vector<128x32xf32>
    %293 = arith.addf %290, %292 : vector<128x32xf32>
    %cst_50 = arith.constant 0.000000e+00 : f32
    %294 = vector.broadcast %cst_50 : f32 to vector<128x32xf32>
    %295 = arith.maximumf %293, %294 : vector<128x32xf32>
    %296 = arith.truncf %295 : vector<128x32xf32> to vector<128x32xbf16>
    %cst_51 = arith.constant dense<0.000000e+00> : vector<2x32xf32>
    %297 = tpu.matmul %22, %296, %cst_51 {dimension_numbers = #tpu.dot_dimension_numbers<[1], [0], [0], [1], [0, 0, 1, 1], [], []>} : vector<2x128xbf16>, vector<128x32xbf16>, vector<2x32xf32> -> vector<2x32xf32>
    %298 = vector.broadcast %32 : vector<2x1xf32> to vector<2x32xf32>
    %299 = arith.mulf %297, %298 : vector<2x32xf32>
    %300 = arith.truncf %299 : vector<2x32xf32> to vector<2x32xbf16>
    %c0_52 = arith.constant 0 : index
    %c128_53 = arith.constant 128 : index
    %301 = vector.load %arg8[%c0_52, %c128_53] : memref<32x384xbf16, #tpu.memory_space<vmem>>, vector<32x32xbf16>
    %cst_54 = arith.constant dense<0.000000e+00> : vector<2x32xf32>
    %302 = tpu.matmul %300, %301, %cst_54 {dimension_numbers = #tpu.dot_dimension_numbers<[1], [0], [0], [1], [0, 0, 1, 1], [], []>} : vector<2x32xbf16>, vector<32x32xbf16>, vector<2x32xf32> -> vector<2x32xf32>
    %c0_55 = arith.constant 0 : index
    %c1024 = arith.constant 1024 : index
    %303 = vector.load %arg9[%c0_55, %c1024] : memref<1x2560xf32, #tpu.memory_space<vmem>>, vector<1x32xf32>
    %304 = vector.broadcast %303 : vector<1x32xf32> to vector<2x32xf32>
    %305 = arith.addf %302, %304 : vector<2x32xf32>
    %cst_56 = arith.constant 0.000000e+00 : f32
    %306 = vector.broadcast %cst_56 : f32 to vector<2x32xf32>
    %307 = arith.maximumf %305, %306 : vector<2x32xf32>
    %308 = arith.truncf %307 : vector<2x32xf32> to vector<2x32xbf16>
    %c0_57 = arith.constant 0 : index
    %c256_58 = arith.constant 256 : index
    %309 = vector.load %arg8[%c0_57, %c256_58] : memref<32x384xbf16, #tpu.memory_space<vmem>>, vector<32x128xbf16>
    %cst_59 = arith.constant dense<0.000000e+00> : vector<2x128xf32>
    %310 = tpu.matmul %308, %309, %cst_59 {dimension_numbers = #tpu.dot_dimension_numbers<[1], [0], [0], [1], [0, 0, 1, 1], [], []>} : vector<2x32xbf16>, vector<32x128xbf16>, vector<2x128xf32> -> vector<2x128xf32>
    %c0_60 = arith.constant 0 : index
    %c1152 = arith.constant 1152 : index
    %311 = vector.load %arg9[%c0_60, %c1152] : memref<1x2560xf32, #tpu.memory_space<vmem>>, vector<1x128xf32>
    %312 = vector.broadcast %311 : vector<1x128xf32> to vector<2x128xf32>
    %313 = arith.addf %310, %312 : vector<2x128xf32>
    %c0_61 = arith.constant 0 : index
    %c0_62 = arith.constant 0 : index
    %314 = vector.load %arg10[%c0_61, %c0_62] : memref<2x128xf32, #tpu.memory_space<vmem>>, vector<2x128xf32>
    tpu.vector_store %arg10[%c0_61, %c0_62], %313 {strides = array<i32>} : memref<2x128xf32, #tpu.memory_space<vmem>>, vector<2x128xf32>,
    return
  }
}

</mosaic_0001>

<llo_original>
// kernel: tpu_custom_call.1
$region0: #{tpu_custom_call.1}
  #allocation0 [shape = 'u32[]', space=smem, size = 0x4, offset = 0x4, fixed_abs, tag = 'smem constant byte address 0x4 - core index']
  #allocation1 [shape = 'u32[72,128]{1,0:T(1,128)}', space=vmem, size = 0x9000, scoped, tag = 'internal scratch']
  %s0 = inlined_call_operand.vmem [shape: bf16[128,8], index: 0, kind: input, shape index: {}]
  %s1 = inlined_call_operand.vmem [shape: s32[128,1], index: 1, kind: input, shape index: {}]
  %s2 = inlined_call_operand.vmem [shape: s32[1,128], index: 2, kind: input, shape index: {}]
  %s3 = inlined_call_operand.vmem [shape: s32[1,128], index: 3, kind: input, shape index: {}]
  %s4 = inlined_call_operand.vmem [shape: bf16[128,8], index: 4, kind: input, shape index: {}]
  %s5 = inlined_call_operand.vmem [shape: bf16[8,32], index: 5, kind: input, shape index: {}]
  %s6 = inlined_call_operand.vmem [shape: bf16[8,256], index: 6, kind: input, shape index: {}]
  %s7 = inlined_call_operand.vmem [shape: bf16[32,1280], index: 7, kind: input, shape index: {}]
  %s8 = inlined_call_operand.vmem [shape: bf16[32,384], index: 8, kind: input, shape index: {}]
  %s9 = inlined_call_operand.vmem [shape: f32[1,2560], index: 9, kind: input, shape index: {}]
  %s10 = inlined_call_operand.hbm [shape: f32[2,128], index: 10, kind: output, shape index: {}]
  %s11 = sld [smem:[#allocation0]]
  $region50: #{tpu_custom_call.1} parent=0
    _
  %s13 = ssub.s32 1, %s11
  %s14 = scalar_select 0, %s13, %s11
  $region1: #{tpu_custom_call.1} parent=0
    #allocation2 [shape = 'u8[1024]{0}', space=vmem, size = 0x400, scoped, tag = 'output window, operand 0, single buffered']
    #allocation3 [shape = 's32[1]{0}', space=sflag, size = 0x4, scoped, tag = 'scoped memory for tpu_custom_call.1']
    %15 = vsyncpa [#allocation3], 0
    // Predicated region
    $region2: #{tpu_custom_call.1} parent=1 // pred_check
      _
    $region3: #{tpu_custom_call.1} parent=1 // pred_check_branch
      %17 = sbr.rel (0) target = $region5
    $region4: #{tpu_custom_call.1} parent=1 // pred_region
      _
    $region5: #{tpu_custom_call.1} parent=1 // pred_fallthru
      _
    // Predicated region
    $region6: #{tpu_custom_call.1} parent=1 // pred_check
      _
    $region7: #{tpu_custom_call.1} parent=1 // pred_check_branch
      %19 = sbr.rel (0) target = $region9
    $region8: #{tpu_custom_call.1} parent=1 // pred_region
      _
    $region9: #{tpu_custom_call.1} parent=1 // pred_fallthru
      _
    // Predicated region
    $region10: #{tpu_custom_call.1} parent=1 // pred_check
      _
    $region11: #{tpu_custom_call.1} parent=1 // pred_check_branch
      %21 = sbr.rel (0) target = $region13
    $region12: #{tpu_custom_call.1} parent=1 // pred_region
      _
    $region13: #{tpu_custom_call.1} parent=1 // pred_fallthru
      _
    // Predicated region
    $region14: #{tpu_custom_call.1} parent=1 // pred_check
      _
    $region15: #{tpu_custom_call.1} parent=1 // pred_check_branch
      %23 = sbr.rel (0) target = $region17
    $region16: #{tpu_custom_call.1} parent=1 // pred_region
      _
    $region17: #{tpu_custom_call.1} parent=1 // pred_fallthru
      _
    // Predicated region
    $region18: #{tpu_custom_call.1} parent=1 // pred_check
      _
    $region19: #{tpu_custom_call.1} parent=1 // pred_check_branch
      %25 = sbr.rel (0) target = $region21
    $region20: #{tpu_custom_call.1} parent=1 // pred_region
      _
    $region21: #{tpu_custom_call.1} parent=1 // pred_fallthru
      _
    // Predicated region
    $region22: #{tpu_custom_call.1} parent=1 // pred_check
      _
    $region23: #{tpu_custom_call.1} parent=1 // pred_check_branch
      %27 = sbr.rel (0) target = $region25
    $region24: #{tpu_custom_call.1} parent=1 // pred_region
      _
    $region25: #{tpu_custom_call.1} parent=1 // pred_fallthru
      _
    // Predicated region
    $region26: #{tpu_custom_call.1} parent=1 // pred_check
      _
    $region27: #{tpu_custom_call.1} parent=1 // pred_check_branch
      %29 = sbr.rel (0) target = $region29
    $region28: #{tpu_custom_call.1} parent=1 // pred_region
      _
    $region29: #{tpu_custom_call.1} parent=1 // pred_fallthru
      _
    // Predicated region
    $region30: #{tpu_custom_call.1} parent=1 // pred_check
      _
    $region31: #{tpu_custom_call.1} parent=1 // pred_check_branch
      %31 = sbr.rel (0) target = $region33
    $region32: #{tpu_custom_call.1} parent=1 // pred_region
      _
    $region33: #{tpu_custom_call.1} parent=1 // pred_fallthru
      _
    // Predicated region
    $region34: #{tpu_custom_call.1} parent=1 // pred_check
      _
    $region35: #{tpu_custom_call.1} parent=1 // pred_check_branch
      %33 = sbr.rel (0) target = $region37
    $region36: #{tpu_custom_call.1} parent=1 // pred_region
      _
    $region37: #{tpu_custom_call.1} parent=1 // pred_fallthru
      _
    // Predicated region
    $region38: #{tpu_custom_call.1} parent=1 // pred_check
      _
    $region39: #{tpu_custom_call.1} parent=1 // pred_check_branch
      %35 = sbr.rel (0) target = $region41
    $region40: #{tpu_custom_call.1} parent=1 // pred_region
      _
    $region41: #{tpu_custom_call.1} parent=1 // pred_fallthru
      _
    %v38 = vld [vmem:[%s0] sm:$0xf]
    %v39 = vld [vmem:[%s0 + $0x4] sm:$0xf]
    %v40 = vld [vmem:[%s0 + $0x8] sm:$0xf]
    %v41 = vld [vmem:[%s0 + $0xc] sm:$0xf]
    %v42 = vld [vmem:[%s0 + $0x10] sm:$0xf]
    %v43 = vld [vmem:[%s0 + $0x14] sm:$0xf]
    %v44 = vld [vmem:[%s0 + $0x18] sm:$0xf]
    %v45 = vld [vmem:[%s0 + $0x1c] sm:$0xf]
    %v46 = vld [vmem:[%s0 + $0x20] sm:$0xf]
    %v47 = vld [vmem:[%s0 + $0x24] sm:$0xf]
    %v48 = vld [vmem:[%s0 + $0x28] sm:$0xf]
    %v49 = vld [vmem:[%s0 + $0x2c] sm:$0xf]
    %v50 = vld [vmem:[%s0 + $0x30] sm:$0xf]
    %v51 = vld [vmem:[%s0 + $0x34] sm:$0xf]
    %v52 = vld [vmem:[%s0 + $0x38] sm:$0xf]
    %v53 = vld [vmem:[%s0 + $0x3c] sm:$0xf]
    %v54 = vld [vmem:[%s4] sm:$0xf]
    %v55 = vld [vmem:[%s4 + $0x4] sm:$0xf]
    %v56 = vld [vmem:[%s4 + $0x8] sm:$0xf]
    %v57 = vld [vmem:[%s4 + $0xc] sm:$0xf]
    %v58 = vld [vmem:[%s4 + $0x10] sm:$0xf]
    %v59 = vld [vmem:[%s4 + $0x14] sm:$0xf]
    %v60 = vld [vmem:[%s4 + $0x18] sm:$0xf]
    %v61 = vld [vmem:[%s4 + $0x1c] sm:$0xf]
    %v62 = vld [vmem:[%s4 + $0x20] sm:$0xf]
    %v63 = vld [vmem:[%s4 + $0x24] sm:$0xf]
    %v64 = vld [vmem:[%s4 + $0x28] sm:$0xf]
    %v65 = vld [vmem:[%s4 + $0x2c] sm:$0xf]
    %v66 = vld [vmem:[%s4 + $0x30] sm:$0xf]
    %v67 = vld [vmem:[%s4 + $0x34] sm:$0xf]
    %v68 = vld [vmem:[%s4 + $0x38] sm:$0xf]
    %v69 = vld [vmem:[%s4 + $0x3c] sm:$0xf]
    %v70 = vld [vmem:[%s1] sm:$0xff]
    %v71 = vld [vmem:[%s1 + $0x8] sm:$0xff]
    %v72 = vld [vmem:[%s1 + $0x10] sm:$0xff]
    %v73 = vld [vmem:[%s1 + $0x18] sm:$0xff]
    %v74 = vld [vmem:[%s1 + $0x20] sm:$0xff]
    %v75 = vld [vmem:[%s1 + $0x28] sm:$0xff]
    %v76 = vld [vmem:[%s1 + $0x30] sm:$0xff]
    %v77 = vld [vmem:[%s1 + $0x38] sm:$0xff]
    %v78 = vld [vmem:[%s1 + $0x40] sm:$0xff]
    %v79 = vld [vmem:[%s1 + $0x48] sm:$0xff]
    %v80 = vld [vmem:[%s1 + $0x50] sm:$0xff]
    %v81 = vld [vmem:[%s1 + $0x58] sm:$0xff]
    %v82 = vld [vmem:[%s1 + $0x60] sm:$0xff]
    %v83 = vld [vmem:[%s1 + $0x68] sm:$0xff]
    %v84 = vld [vmem:[%s1 + $0x70] sm:$0xff]
    %v85 = vld [vmem:[%s1 + $0x78] sm:$0xff]
    %v86 = vld [vmem:[%s2] sm:$0x1]
    %v87 = vld [vmem:[%s3] sm:$0x1]
    %v88 = vlaneseq
    %v89 = vand.u32 %v88, 127
    %90 = vset.pattern.permute.xlu0 0
    %91 = vperm.xlu0 %90, %v70
    %v92 = vpop.permute.xlu0 %91
    %93 = vset.pattern.permute.xlu0 0
    %94 = vperm.xlu0 %93, %v71
    %v95 = vpop.permute.xlu0 %94
    %96 = vset.pattern.permute.xlu0 0
    %97 = vperm.xlu0 %96, %v72
    %v98 = vpop.permute.xlu0 %97
    %99 = vset.pattern.permute.xlu0 0
    %100 = vperm.xlu0 %99, %v73
    %v101 = vpop.permute.xlu0 %100
    %102 = vset.pattern.permute.xlu0 0
    %103 = vperm.xlu0 %102, %v74
    %v104 = vpop.permute.xlu0 %103
    %105 = vset.pattern.permute.xlu0 0
    %106 = vperm.xlu0 %105, %v75
    %v107 = vpop.permute.xlu0 %106
    %108 = vset.pattern.permute.xlu0 0
    %109 = vperm.xlu0 %108, %v76
    %v110 = vpop.permute.xlu0 %109
    %111 = vset.pattern.permute.xlu0 0
    %112 = vperm.xlu0 %111, %v77
    %v113 = vpop.permute.xlu0 %112
    %114 = vset.pattern.permute.xlu0 0
    %115 = vperm.xlu0 %114, %v78
    %v116 = vpop.permute.xlu0 %115
    %117 = vset.pattern.permute.xlu0 0
    %118 = vperm.xlu0 %117, %v79
    %v119 = vpop.permute.xlu0 %118
    %120 = vset.pattern.permute.xlu0 0
    %121 = vperm.xlu0 %120, %v80
    %v122 = vpop.permute.xlu0 %121
    %123 = vset.pattern.permute.xlu0 0
    %124 = vperm.xlu0 %123, %v81
    %v125 = vpop.permute.xlu0 %124
    %126 = vset.pattern.permute.xlu0 0
    %127 = vperm.xlu0 %126, %v82
    %v128 = vpop.permute.xlu0 %127
    %129 = vset.pattern.permute.xlu0 0
    %130 = vperm.xlu0 %129, %v83
    %v131 = vpop.permute.xlu0 %130
    %132 = vset.pattern.permute.xlu0 0
    %133 = vperm.xlu0 %132, %v84
    %v134 = vpop.permute.xlu0 %133
    %135 = vset.pattern.permute.xlu0 0
    %136 = vperm.xlu0 %135, %v85
    %v137 = vpop.permute.xlu0 %136
    %vm138 = vcmp.eq.s32.totalorder %v89, %v92
    %vm139 = vcmp.eq.s32.totalorder %v89, %v95
    %vm140 = vcmp.eq.s32.totalorder %v89, %v98
    %vm141 = vcmp.eq.s32.totalorder %v89, %v101
    %vm142 = vcmp.eq.s32.totalorder %v89, %v104
    %vm143 = vcmp.eq.s32.totalorder %v89, %v107
    %vm144 = vcmp.eq.s32.totalorder %v89, %v110
    %vm145 = vcmp.eq.s32.totalorder %v89, %v113
    %vm146 = vcmp.eq.s32.totalorder %v89, %v116
    %vm147 = vcmp.eq.s32.totalorder %v89, %v119
    %vm148 = vcmp.eq.s32.totalorder %v89, %v122
    %vm149 = vcmp.eq.s32.totalorder %v89, %v125
    %vm150 = vcmp.eq.s32.totalorder %v89, %v128
    %vm151 = vcmp.eq.s32.totalorder %v89, %v131
    %vm152 = vcmp.eq.s32.totalorder %v89, %v134
    %vm153 = vcmp.eq.s32.totalorder %v89, %v137
    %v154 = vsel %vm138, 1, 0
    %v155 = vsel %vm139, 1, 0
    %v156 = vsel %vm140, 1, 0
    %v157 = vsel %vm141, 1, 0
    %v158 = vsel %vm142, 1, 0
    %v159 = vsel %vm143, 1, 0
    %v160 = vsel %vm144, 1, 0
    %v161 = vsel %vm145, 1, 0
    %v162 = vsel %vm146, 1, 0
    %v163 = vsel %vm147, 1, 0
    %v164 = vsel %vm148, 1, 0
    %v165 = vsel %vm149, 1, 0
    %v166 = vsel %vm150, 1, 0
    %v167 = vsel %vm151, 1, 0
    %v168 = vsel %vm152, 1, 0
    %v169 = vsel %vm153, 1, 0
    %v170 = vcvt.s32.f32 %v154
    %v171 = vcvt.s32.f32 %v155
    %v172 = vcvt.s32.f32 %v156
    %v173 = vcvt.s32.f32 %v157
    %v174 = vcvt.s32.f32 %v158
    %v175 = vcvt.s32.f32 %v159
    %v176 = vcvt.s32.f32 %v160
    %v177 = vcvt.s32.f32 %v161
    %v178 = vcvt.s32.f32 %v162
    %v179 = vcvt.s32.f32 %v163
    %v180 = vcvt.s32.f32 %v164
    %v181 = vcvt.s32.f32 %v165
    %v182 = vcvt.s32.f32 %v166
    %v183 = vcvt.s32.f32 %v167
    %v184 = vcvt.s32.f32 %v168
    %v185 = vcvt.s32.f32 %v169
    %v186 = vpack.c.bf16 %v171, %v170
    %v187 = vpack.c.bf16 %v173, %v172
    %v188 = vpack.c.bf16 %v175, %v174
    %v189 = vpack.c.bf16 %v177, %v176
    %v190 = vpack.c.bf16 %v179, %v178
    %v191 = vpack.c.bf16 %v181, %v180
    %v192 = vpack.c.bf16 %v183, %v182
    %v193 = vpack.c.bf16 %v185, %v184
    %v194 = vlaneseq
    %v195 = vshrl.u32 %v194, 7
    %v196 = vadd.s32 %v195, 8
    %v197 = vadd.s32 %v195, 16
    %v198 = vadd.s32 %v195, 24
    %v199 = vadd.s32 %v195, 32
    %v200 = vadd.s32 %v195, 40
    %v201 = vadd.s32 %v195, 48
    %v202 = vadd.s32 %v195, 56
    %v203 = vadd.s32 %v195, 64
    %v204 = vadd.s32 %v195, 72
    %v205 = vadd.s32 %v195, 80
    %v206 = vadd.s32 %v195, 88
    %v207 = vadd.s32 %v195, 96
    %v208 = vadd.s32 %v195, 104
    %v209 = vadd.s32 %v195, 112
    %v210 = vadd.s32 %v195, 120
    %v211 = vperm.slane %v86, 0
    %vm212 = vcmp.eq.s32.totalorder %v195, %v211
    %vm213 = vcmp.eq.s32.totalorder %v196, %v211
    %vm214 = vcmp.eq.s32.totalorder %v197, %v211
    %vm215 = vcmp.eq.s32.totalorder %v198, %v211
    %vm216 = vcmp.eq.s32.totalorder %v199, %v211
    %vm217 = vcmp.eq.s32.totalorder %v200, %v211
    %vm218 = vcmp.eq.s32.totalorder %v201, %v211
    %vm219 = vcmp.eq.s32.totalorder %v202, %v211
    %vm220 = vcmp.eq.s32.totalorder %v203, %v211
    %vm221 = vcmp.eq.s32.totalorder %v204, %v211
    %vm222 = vcmp.eq.s32.totalorder %v205, %v211
    %vm223 = vcmp.eq.s32.totalorder %v206, %v211
    %vm224 = vcmp.eq.s32.totalorder %v207, %v211
    %vm225 = vcmp.eq.s32.totalorder %v208, %v211
    %vm226 = vcmp.eq.s32.totalorder %v209, %v211
    %vm227 = vcmp.eq.s32.totalorder %v210, %v211
    %v228 = vsel %vm212, 1, 0
    %v229 = vsel %vm213, 1, 0
    %v230 = vsel %vm214, 1, 0
    %v231 = vsel %vm215, 1, 0
    %v232 = vsel %vm216, 1, 0
    %v233 = vsel %vm217, 1, 0
    %v234 = vsel %vm218, 1, 0
    %v235 = vsel %vm219, 1, 0
    %v236 = vsel %vm220, 1, 0
    %v237 = vsel %vm221, 1, 0
    %v238 = vsel %vm222, 1, 0
    %v239 = vsel %vm223, 1, 0
    %v240 = vsel %vm224, 1, 0
    %v241 = vsel %vm225, 1, 0
    %v242 = vsel %vm226, 1, 0
    %v243 = vsel %vm227, 1, 0
    %v244 = vcvt.s32.f32 %v228
    %v245 = vcvt.s32.f32 %v229
    %v246 = vcvt.s32.f32 %v230
    %v247 = vcvt.s32.f32 %v231
    %v248 = vcvt.s32.f32 %v232
    %v249 = vcvt.s32.f32 %v233
    %v250 = vcvt.s32.f32 %v234
    %v251 = vcvt.s32.f32 %v235
    %v252 = vcvt.s32.f32 %v236
    %v253 = vcvt.s32.f32 %v237
    %v254 = vcvt.s32.f32 %v238
    %v255 = vcvt.s32.f32 %v239
    %v256 = vcvt.s32.f32 %v240
    %v257 = vcvt.s32.f32 %v241
    %v258 = vcvt.s32.f32 %v242
    %v259 = vcvt.s32.f32 %v243
    %v260 = vpack.c.bf16 %v245, %v244
    %v261 = vpack.c.bf16 %v247, %v246
    %v262 = vpack.c.bf16 %v249, %v248
    %v263 = vpack.c.bf16 %v251, %v250
    %v264 = vpack.c.bf16 %v253, %v252
    %v265 = vpack.c.bf16 %v255, %v254
    %v266 = vpack.c.bf16 %v257, %v256
    %v267 = vpack.c.bf16 %v259, %v258
    %v268 = vperm.slane %v87, 0
    %vm269 = vcmp.eq.s32.totalorder %v195, %v268
    %v270 = vsel %vm269, 1, 0
    %v271 = vcvt.s32.f32 %v270
    %v272 = vpack.c.bf16 %v271, %v271
    %273 = vmatpush.bf16.msra.mxu0 1065369472
    %274 = vmatpush.bf16.msra.mxu0 1065369472
    %275 = vmatpush.bf16.msra.mxu0 1065369472
    %276 = vmatpush.bf16.msra.mxu0 1065369472
    %277 = vmatpush.bf16.msra.mxu0 1065369472
    %278 = vmatpush.bf16.msra.mxu0 1065369472
    %279 = vmatpush.bf16.msra.mxu0 1065369472
    %280 = vmatpush.bf16.msra.mxu0 1065369472
    %281 = vmatmul.bf16.gmra.mxu0 %v260
    %v282 = vpop.f32.mrf.mxu0
    %v283 = vadd.f32 0.0, %v282
    %v284 = vpop.f32.mrf.mxu0
    %v285 = vadd.f32 0.0, %v284
    %286 = vmatmul.bf16.gmra.mxu0 %v261
    %v287 = vpop.f32.mrf.mxu0
    %v288 = vadd.f32 0.0, %v287
    %v289 = vpop.f32.mrf.mxu0
    %v290 = vadd.f32 0.0, %v289
    %291 = vmatmul.bf16.gmra.mxu0 %v262
    %v292 = vpop.f32.mrf.mxu0
    %v293 = vadd.f32 0.0, %v292
    %v294 = vpop.f32.mrf.mxu0
    %v295 = vadd.f32 0.0, %v294
    %296 = vmatmul.bf16.gmra.mxu0 %v263
    %v297 = vpop.f32.mrf.mxu0
    %v298 = vadd.f32 0.0, %v297
    %v299 = vpop.f32.mrf.mxu0
    %v300 = vadd.f32 0.0, %v299
    %301 = vmatmul.bf16.gmra.mxu0 %v264
    %v302 = vpop.f32.mrf.mxu0
    %v303 = vadd.f32 0.0, %v302
    %v304 = vpop.f32.mrf.mxu0
    %v305 = vadd.f32 0.0, %v304
    %306 = vmatmul.bf16.gmra.mxu0 %v265
    %v307 = vpop.f32.mrf.mxu0
    %v308 = vadd.f32 0.0, %v307
    %v309 = vpop.f32.mrf.mxu0
    %v310 = vadd.f32 0.0, %v309
    %311 = vmatmul.bf16.gmra.mxu0 %v266
    %v312 = vpop.f32.mrf.mxu0
    %v313 = vadd.f32 0.0, %v312
    %v314 = vpop.f32.mrf.mxu0
    %v315 = vadd.f32 0.0, %v314
    %316 = vmatmul.bf16.gmra.mxu0 %v267
    %v317 = vpop.f32.mrf.mxu0
    %v318 = vadd.f32 0.0, %v317
    %v319 = vpop.f32.mrf.mxu0
    %v320 = vadd.f32 0.0, %v319
    %321 = vdwg.mxu0
    %322 = vmatpush.bf16.msra.mxu0 1065369472
    %323 = vmatpush.bf16.msra.mxu0 1065369472
    %324 = vmatpush.bf16.msra.mxu0 1065369472
    %325 = vmatpush.bf16.msra.mxu0 1065369472
    %326 = vmatpush.bf16.msra.mxu0 1065369472
    %327 = vmatpush.bf16.msra.mxu0 1065369472
    %328 = vmatpush.bf16.msra.mxu0 1065369472
    %329 = vmatpush.bf16.msra.mxu0 1065369472
    %330 = vmatmul.bf16.gmra.mxu0 %v272
    %v331 = vpop.f32.mrf.mxu0
    %v332 = vadd.f32 0.0, %v331
    %v333 = vpop.f32.mrf.mxu0
    %334 = vdwg.mxu0
    %v335 = vmax.f32 %v283, 1.0
    %v336 = vmax.f32 %v285, 1.0
    %v337 = vmax.f32 %v288, 1.0
    %v338 = vmax.f32 %v290, 1.0
    %v339 = vmax.f32 %v293, 1.0
    %v340 = vmax.f32 %v295, 1.0
    %v341 = vmax.f32 %v298, 1.0
    %v342 = vmax.f32 %v300, 1.0
    %v343 = vmax.f32 %v303, 1.0
    %v344 = vmax.f32 %v305, 1.0
    %v345 = vmax.f32 %v308, 1.0
    %v346 = vmax.f32 %v310, 1.0
    %v347 = vmax.f32 %v313, 1.0
    %v348 = vmax.f32 %v315, 1.0
    %v349 = vmax.f32 %v318, 1.0
    %v350 = vmax.f32 %v320, 1.0
    %v351 = vrcp.pop %v335
    %v352 = vrcp.pop %v336
    %v353 = vrcp.pop %v337
    %v354 = vrcp.pop %v338
    %v355 = vrcp.pop %v339
    %v356 = vrcp.pop %v340
    %v357 = vrcp.pop %v341
    %v358 = vrcp.pop %v342
    %v359 = vrcp.pop %v343
    %v360 = vrcp.pop %v344
    %v361 = vrcp.pop %v345
    %v362 = vrcp.pop %v346
    %v363 = vrcp.pop %v347
    %v364 = vrcp.pop %v348
    %v365 = vrcp.pop %v349
    %v366 = vrcp.pop %v350
    %v367 = vmax.f32 %v332, 1.0
    %v368 = vrcp.pop %v367
    %v369 = vld [vmem:[%s6] sm:$0xf]
    %v370 = vld [vmem:[%s9] sm:$0x1]
    %v371 = vld [vmem:[%s7] sm:$0xff]
    %v372 = vld [vmem:[%s7 + $0x28] sm:$0xff]
    %v373 = vld [vmem:[%s7 + $0x50] sm:$0xff]
    %v374 = vld [vmem:[%s7 + $0x78] sm:$0xff]
    %v375 = vld [vmem:[%s9 + $0xa] sm:$0x3]
    %v376 = vld [vmem:[%s5] sm:$0xf]
    %v377 = vld [vmem:[%s9 + $0x1] sm:$0x1]
    %v379 = vperm.slane %v370, 0
    %v397 = vunpack.c.l.b16 %v54
    %v398 = vunpack.c.l.b16 %v55
    %v399 = vunpack.c.l.b16 %v56
    %v400 = vunpack.c.l.b16 %v57
    %v401 = vunpack.c.l.b16 %v58
    %v402 = vunpack.c.l.b16 %v59
    %v403 = vunpack.c.l.b16 %v60
    %v404 = vunpack.c.l.b16 %v61
    %v405 = vunpack.c.l.b16 %v62
    %v406 = vunpack.c.l.b16 %v63
    %v407 = vunpack.c.l.b16 %v64
    %v408 = vunpack.c.l.b16 %v65
    %v409 = vunpack.c.l.b16 %v66
    %v410 = vunpack.c.l.b16 %v67
    %v411 = vunpack.c.l.b16 %v68
    %v412 = vunpack.c.l.b16 %v69
    %v413 = vpack.c.b16 %v398, %v397
    %v414 = vpack.c.b16 %v400, %v399
    %v415 = vpack.c.b16 %v402, %v401
    %v416 = vpack.c.b16 %v404, %v403
    %v417 = vpack.c.b16 %v406, %v405
    %v418 = vpack.c.b16 %v408, %v407
    %v419 = vpack.c.b16 %v410, %v409
    %v420 = vpack.c.b16 %v412, %v411
    %vm421 = vcmask 64512
    %v423 = vsel %vm421, %v413, 0
    %v426 = vsel %vm421, %v414, 0
    %v429 = vsel %vm421, %v415, 0
    %v432 = vsel %vm421, %v416, 0
    %v435 = vsel %vm421, %v417, 0
    %v438 = vsel %vm421, %v418, 0
    %v441 = vsel %vm421, %v419, 0
    %v444 = vsel %vm421, %v420, 0
    %vm446 = vcmask 1043456
    %v448 = vsel %vm446, %v369, 0
    %450 = vmatpush.bf16.msra.mxu0 0
    %451 = vmatpush.bf16.msra.mxu0 0
    %452 = vmatpush.bf16.msra.mxu0 0
    %453 = vmatpush.bf16.msra.mxu0 0
    %454 = vmatpush.bf16.msra.mxu0 0
    %455 = vmatpush.bf16.msra.mxu0 0
    %456 = vmatpush.bf16.msra.mxu0 0
    %457 = vmatpush.bf16.msra.mxu0 %v448
    %458 = vmatmul.bf16.gmra.mxu0 %v423
    %v459 = vpop.f32.mrf.mxu0
    %v460 = vadd.f32 %v379, %v459
    %v461 = vpop.f32.mrf.mxu0
    %v462 = vadd.f32 %v379, %v461
    %463 = vmatmul.bf16.gmra.mxu0 %v426
    %v464 = vpop.f32.mrf.mxu0
    %v465 = vadd.f32 %v379, %v464
    %v466 = vpop.f32.mrf.mxu0
    %v467 = vadd.f32 %v379, %v466
    %468 = vmatmul.bf16.gmra.mxu0 %v429
    %v469 = vpop.f32.mrf.mxu0
    %v470 = vadd.f32 %v379, %v469
    %v471 = vpop.f32.mrf.mxu0
    %v472 = vadd.f32 %v379, %v471
    %473 = vmatmul.bf16.gmra.mxu0 %v432
    %v474 = vpop.f32.mrf.mxu0
    %v475 = vadd.f32 %v379, %v474
    %v476 = vpop.f32.mrf.mxu0
    %v477 = vadd.f32 %v379, %v476
    %478 = vmatmul.bf16.gmra.mxu0 %v435
    %v479 = vpop.f32.mrf.mxu0
    %v480 = vadd.f32 %v379, %v479
    %v481 = vpop.f32.mrf.mxu0
    %v482 = vadd.f32 %v379, %v481
    %483 = vmatmul.bf16.gmra.mxu0 %v438
    %v484 = vpop.f32.mrf.mxu0
    %v485 = vadd.f32 %v379, %v484
    %v486 = vpop.f32.mrf.mxu0
    %v487 = vadd.f32 %v379, %v486
    %488 = vmatmul.bf16.gmra.mxu0 %v441
    %v489 = vpop.f32.mrf.mxu0
    %v490 = vadd.f32 %v379, %v489
    %v491 = vpop.f32.mrf.mxu0
    %v492 = vadd.f32 %v379, %v491
    %493 = vmatmul.bf16.gmra.mxu0 %v444
    %v494 = vpop.f32.mrf.mxu0
    %v495 = vadd.f32 %v379, %v494
    %v496 = vpop.f32.mrf.mxu0
    %v497 = vadd.f32 %v379, %v496
    %498 = vdwg.mxu0
    %v499 = vmax.f32 %v460, 0.0
    %v500 = vmax.f32 %v462, 0.0
    %v501 = vmax.f32 %v465, 0.0
    %v502 = vmax.f32 %v467, 0.0
    %v503 = vmax.f32 %v470, 0.0
    %v504 = vmax.f32 %v472, 0.0
    %v505 = vmax.f32 %v475, 0.0
    %v506 = vmax.f32 %v477, 0.0
    %v507 = vmax.f32 %v480, 0.0
    %v508 = vmax.f32 %v482, 0.0
    %v509 = vmax.f32 %v485, 0.0
    %v510 = vmax.f32 %v487, 0.0
    %v511 = vmax.f32 %v490, 0.0
    %v512 = vmax.f32 %v492, 0.0
    %v513 = vmax.f32 %v495, 0.0
    %v514 = vmax.f32 %v497, 0.0
    %v515 = vpack.c.bf16 %v500, %v499
    %v516 = vpack.c.bf16 %v502, %v501
    %v517 = vpack.c.bf16 %v504, %v503
    %v518 = vpack.c.bf16 %v506, %v505
    %v519 = vpack.c.bf16 %v508, %v507
    %v520 = vpack.c.bf16 %v510, %v509
    %v521 = vpack.c.bf16 %v512, %v511
    %v522 = vpack.c.bf16 %v514, %v513
    %v524 = vperm.slane %v375, 0
    %v525 = vperm.slane %v375, 1
    %v532 = vunpack.c.l.b16 %v371
    %v533 = vunpack.c.h.b16 %v371
    %v534 = vunpack.c.l.b16 %v372
    %v535 = vunpack.c.h.b16 %v372
    %v536 = vunpack.c.l.b16 %v373
    %v537 = vunpack.c.h.b16 %v373
    %v538 = vunpack.c.l.b16 %v374
    %v539 = vunpack.c.h.b16 %v374
    %v540 = vpack.c.b16 %v534, %v532
    %v541 = vpack.c.b16 %v535, %v533
    %v542 = vpack.c.b16 %v538, %v536
    %v543 = vpack.c.b16 %v539, %v537
    %vm548 = vcmask 261120
    %v550 = vsel %vm548, %v515, 0
    %v553 = vsel %vm548, %v516, 0
    %v556 = vsel %vm548, %v517, 0
    %v559 = vsel %vm548, %v518, 0
    %v562 = vsel %vm548, %v519, 0
    %v565 = vsel %vm548, %v520, 0
    %v568 = vsel %vm548, %v521, 0
    %v571 = vsel %vm548, %v522, 0
    %573 = vmatpush.bf16.msra.mxu0 0
    %574 = vmatpush.bf16.msra.mxu0 0
    %575 = vmatpush.bf16.msra.mxu0 0
    %576 = vmatpush.bf16.msra.mxu0 0
    %577 = vmatpush.bf16.msra.mxu0 0
    %578 = vmatpush.bf16.msra.mxu0 0
    %579 = vmatpush.bf16.msra.mxu0 %v542
    %580 = vmatpush.bf16.msra.mxu0 %v540
    %581 = vmatmul.bf16.gmra.mxu0 %v550
    %v582 = vpop.f32.mrf.mxu0
    %v583 = vadd.f32 %v524, %v582
    %v584 = vpop.f32.mrf.mxu0
    %v585 = vadd.f32 %v524, %v584
    %586 = vmatmul.bf16.gmra.mxu0 %v553
    %v587 = vpop.f32.mrf.mxu0
    %v588 = vadd.f32 %v524, %v587
    %v589 = vpop.f32.mrf.mxu0
    %v590 = vadd.f32 %v524, %v589
    %591 = vmatmul.bf16.gmra.mxu0 %v556
    %v592 = vpop.f32.mrf.mxu0
    %v593 = vadd.f32 %v524, %v592
    %v594 = vpop.f32.mrf.mxu0
    %v595 = vadd.f32 %v524, %v594
    %596 = vmatmul.bf16.gmra.mxu0 %v559
    %v597 = vpop.f32.mrf.mxu0
    %v598 = vadd.f32 %v524, %v597
    %v599 = vpop.f32.mrf.mxu0
    %v600 = vadd.f32 %v524, %v599
    %601 = vmatmul.bf16.gmra.mxu0 %v562
    %v602 = vpop.f32.mrf.mxu0
    %v603 = vadd.f32 %v524, %v602
    %v604 = vpop.f32.mrf.mxu0
    %v605 = vadd.f32 %v524, %v604
    %606 = vmatmul.bf16.gmra.mxu0 %v565
    %v607 = vpop.f32.mrf.mxu0
    %v608 = vadd.f32 %v524, %v607
    %v609 = vpop.f32.mrf.mxu0
    %v610 = vadd.f32 %v524, %v609
    %611 = vmatmul.bf16.gmra.mxu0 %v568
    %v612 = vpop.f32.mrf.mxu0
    %v613 = vadd.f32 %v524, %v612
    %v614 = vpop.f32.mrf.mxu0
    %v615 = vadd.f32 %v524, %v614
    %616 = vmatmul.bf16.gmra.mxu0 %v571
    %v617 = vpop.f32.mrf.mxu0
    %v618 = vadd.f32 %v524, %v617
    %v619 = vpop.f32.mrf.mxu0
    %v620 = vadd.f32 %v524, %v619
    %621 = vdwg.mxu0
    %622 = vmatpush.bf16.msra.mxu0 0
    %623 = vmatpush.bf16.msra.mxu0 0
    %624 = vmatpush.bf16.msra.mxu0 0
    %625 = vmatpush.bf16.msra.mxu0 0
    %626 = vmatpush.bf16.msra.mxu0 0
    %627 = vmatpush.bf16.msra.mxu0 0
    %628 = vmatpush.bf16.msra.mxu0 %v543
    %629 = vmatpush.bf16.msra.mxu0 %v541
    %630 = vmatmul.bf16.gmra.mxu0 %v550
    %v631 = vpop.f32.mrf.mxu0
    %v632 = vadd.f32 %v525, %v631
    %v633 = vpop.f32.mrf.mxu0
    %v634 = vadd.f32 %v525, %v633
    %635 = vmatmul.bf16.gmra.mxu0 %v553
    %v636 = vpop.f32.mrf.mxu0
    %v637 = vadd.f32 %v525, %v636
    %v638 = vpop.f32.mrf.mxu0
    %v639 = vadd.f32 %v525, %v638
    %640 = vmatmul.bf16.gmra.mxu0 %v556
    %v641 = vpop.f32.mrf.mxu0
    %v642 = vadd.f32 %v525, %v641
    %v643 = vpop.f32.mrf.mxu0
    %v644 = vadd.f32 %v525, %v643
    %645 = vmatmul.bf16.gmra.mxu0 %v559
    %v646 = vpop.f32.mrf.mxu0
    %v647 = vadd.f32 %v525, %v646
    %v648 = vpop.f32.mrf.mxu0
    %v649 = vadd.f32 %v525, %v648
    %650 = vmatmul.bf16.gmra.mxu0 %v562
    %v651 = vpop.f32.mrf.mxu0
    %v652 = vadd.f32 %v525, %v651
    %v653 = vpop.f32.mrf.mxu0
    %v654 = vadd.f32 %v525, %v653
    %655 = vmatmul.bf16.gmra.mxu0 %v565
    %v656 = vpop.f32.mrf.mxu0
    %v657 = vadd.f32 %v525, %v656
    %v658 = vpop.f32.mrf.mxu0
    %v659 = vadd.f32 %v525, %v658
    %660 = vmatmul.bf16.gmra.mxu0 %v568
    %v661 = vpop.f32.mrf.mxu0
    %v662 = vadd.f32 %v525, %v661
    %v663 = vpop.f32.mrf.mxu0
    %v664 = vadd.f32 %v525, %v663
    %665 = vmatmul.bf16.gmra.mxu0 %v571
    %v666 = vpop.f32.mrf.mxu0
    %v667 = vadd.f32 %v525, %v666
    %v668 = vpop.f32.mrf.mxu0
    %v669 = vadd.f32 %v525, %v668
    %670 = vdwg.mxu0
    %v687 = vunpack.c.l.b16 %v38
    %v688 = vunpack.c.l.b16 %v39
    %v689 = vunpack.c.l.b16 %v40
    %v690 = vunpack.c.l.b16 %v41
    %v691 = vunpack.c.l.b16 %v42
    %v692 = vunpack.c.l.b16 %v43
    %v693 = vunpack.c.l.b16 %v44
    %v694 = vunpack.c.l.b16 %v45
    %v695 = vunpack.c.l.b16 %v46
    %v696 = vunpack.c.l.b16 %v47
    %v697 = vunpack.c.l.b16 %v48
    %v698 = vunpack.c.l.b16 %v49
    %v699 = vunpack.c.l.b16 %v50
    %v700 = vunpack.c.l.b16 %v51
    %v701 = vunpack.c.l.b16 %v52
    %v702 = vunpack.c.l.b16 %v53
    %v703 = vpack.c.b16 %v688, %v687
    %v704 = vpack.c.b16 %v690, %v689
    %v705 = vpack.c.b16 %v692, %v691
    %v706 = vpack.c.b16 %v694, %v693
    %v707 = vpack.c.b16 %v696, %v695
    %v708 = vpack.c.b16 %v698, %v697
    %v709 = vpack.c.b16 %v700, %v699
    %v710 = vpack.c.b16 %v702, %v701
    %719 = vmatpush.bf16.msra.mxu0 %v710
    %720 = vmatpush.bf16.msra.mxu0 %v709
    %721 = vmatpush.bf16.msra.mxu0 %v708
    %722 = vmatpush.bf16.msra.mxu0 %v707
    %723 = vmatpush.bf16.msra.mxu0 %v706
    %724 = vmatpush.bf16.msra.mxu0 %v705
    %725 = vmatpush.bf16.msra.mxu0 %v704
    %726 = vmatpush.bf16.msra.mxu0 %v703
    %727 = vmatmul.bf16.gmra.mxu0 %v186
    %v728 = vpop.f32.mrf.mxu0
    %v729 = vadd.f32 0.0, %v728
    %v730 = vpop.f32.mrf.mxu0
    %v731 = vadd.f32 0.0, %v730
    %732 = vmatmul.bf16.gmra.mxu0 %v187
    %v733 = vpop.f32.mrf.mxu0
    %v734 = vadd.f32 0.0, %v733
    %v735 = vpop.f32.mrf.mxu0
    %v736 = vadd.f32 0.0, %v735
    %737 = vmatmul.bf16.gmra.mxu0 %v188
    %v738 = vpop.f32.mrf.mxu0
    %v739 = vadd.f32 0.0, %v738
    %v740 = vpop.f32.mrf.mxu0
    %v741 = vadd.f32 0.0, %v740
    %742 = vmatmul.bf16.gmra.mxu0 %v189
    %v743 = vpop.f32.mrf.mxu0
    %v744 = vadd.f32 0.0, %v743
    %v745 = vpop.f32.mrf.mxu0
    %v746 = vadd.f32 0.0, %v745
    %747 = vmatmul.bf16.gmra.mxu0 %v190
    %v748 = vpop.f32.mrf.mxu0
    %v749 = vadd.f32 0.0, %v748
    %v750 = vpop.f32.mrf.mxu0
    %v751 = vadd.f32 0.0, %v750
    %752 = vmatmul.bf16.gmra.mxu0 %v191
    %v753 = vpop.f32.mrf.mxu0
    %v754 = vadd.f32 0.0, %v753
    %v755 = vpop.f32.mrf.mxu0
    %v756 = vadd.f32 0.0, %v755
    %757 = vmatmul.bf16.gmra.mxu0 %v192
    %v758 = vpop.f32.mrf.mxu0
    %v759 = vadd.f32 0.0, %v758
    %v760 = vpop.f32.mrf.mxu0
    %v761 = vadd.f32 0.0, %v760
    %762 = vmatmul.bf16.gmra.mxu0 %v193
    %v763 = vpop.f32.mrf.mxu0
    %v764 = vadd.f32 0.0, %v763
    %v765 = vpop.f32.mrf.mxu0
    %v766 = vadd.f32 0.0, %v765
    %767 = vdwg.mxu0
    %769 = vset.pattern.permute.xlu0 0
    %770 = vperm.xlu0 %769, %v729
    %v771 = vpop.permute.xlu0 %770
    %774 = vset.pattern.permute.xlu0 0
    %775 = vperm.xlu0 %774, %v731
    %v776 = vpop.permute.xlu0 %775
    %779 = vset.pattern.permute.xlu0 0
    %780 = vperm.xlu0 %779, %v734
    %v781 = vpop.permute.xlu0 %780
    %784 = vset.pattern.permute.xlu0 0
    %785 = vperm.xlu0 %784, %v736
    %v786 = vpop.permute.xlu0 %785
    %789 = vset.pattern.permute.xlu0 0
    %790 = vperm.xlu0 %789, %v739
    %v791 = vpop.permute.xlu0 %790
    %794 = vset.pattern.permute.xlu0 0
    %795 = vperm.xlu0 %794, %v741
    %v796 = vpop.permute.xlu0 %795
    %799 = vset.pattern.permute.xlu0 0
    %800 = vperm.xlu0 %799, %v744
    %v801 = vpop.permute.xlu0 %800
    %804 = vset.pattern.permute.xlu0 0
    %805 = vperm.xlu0 %804, %v746
    %v806 = vpop.permute.xlu0 %805
    %809 = vset.pattern.permute.xlu0 0
    %810 = vperm.xlu0 %809, %v749
    %v811 = vpop.permute.xlu0 %810
    %814 = vset.pattern.permute.xlu0 0
    %815 = vperm.xlu0 %814, %v751
    %v816 = vpop.permute.xlu0 %815
    %819 = vset.pattern.permute.xlu0 0
    %820 = vperm.xlu0 %819, %v754
    %v821 = vpop.permute.xlu0 %820
    %824 = vset.pattern.permute.xlu0 0
    %825 = vperm.xlu0 %824, %v756
    %v826 = vpop.permute.xlu0 %825
    %829 = vset.pattern.permute.xlu0 0
    %830 = vperm.xlu0 %829, %v759
    %v831 = vpop.permute.xlu0 %830
    %834 = vset.pattern.permute.xlu0 0
    %835 = vperm.xlu0 %834, %v761
    %v836 = vpop.permute.xlu0 %835
    %839 = vset.pattern.permute.xlu0 0
    %840 = vperm.xlu0 %839, %v764
    %v841 = vpop.permute.xlu0 %840
    %844 = vset.pattern.permute.xlu0 0
    %845 = vperm.xlu0 %844, %v766
    %v846 = vpop.permute.xlu0 %845
    %v848 = vmul.f32 %v771, %v583
    %v849 = vmul.f32 %v776, %v585
    %v850 = vmul.f32 %v781, %v588
    %v851 = vmul.f32 %v786, %v590
    %v852 = vmul.f32 %v791, %v593
    %v853 = vmul.f32 %v796, %v595
    %v854 = vmul.f32 %v801, %v598
    %v855 = vmul.f32 %v806, %v600
    %v856 = vmul.f32 %v811, %v603
    %v857 = vmul.f32 %v816, %v605
    %v858 = vmul.f32 %v821, %v608
    %v859 = vmul.f32 %v826, %v610
    %v860 = vmul.f32 %v831, %v613
    %v861 = vmul.f32 %v836, %v615
    %v862 = vmul.f32 %v841, %v618
    %v863 = vmul.f32 %v846, %v620
    %864 = vset.pattern.permute.xlu0 1
    %865 = vperm.xlu0 %864, %v729
    %v866 = vpop.permute.xlu0 %865
    %868 = vset.pattern.permute.xlu0 1
    %869 = vperm.xlu0 %868, %v731
    %v870 = vpop.permute.xlu0 %869
    %872 = vset.pattern.permute.xlu0 1
    %873 = vperm.xlu0 %872, %v734
    %v874 = vpop.permute.xlu0 %873
    %876 = vset.pattern.permute.xlu0 1
    %877 = vperm.xlu0 %876, %v736
    %v878 = vpop.permute.xlu0 %877
    %880 = vset.pattern.permute.xlu0 1
    %881 = vperm.xlu0 %880, %v739
    %v882 = vpop.permute.xlu0 %881
    %884 = vset.pattern.permute.xlu0 1
    %885 = vperm.xlu0 %884, %v741
    %v886 = vpop.permute.xlu0 %885
    %888 = vset.pattern.permute.xlu0 1
    %889 = vperm.xlu0 %888, %v744
    %v890 = vpop.permute.xlu0 %889
    %892 = vset.pattern.permute.xlu0 1
    %893 = vperm.xlu0 %892, %v746
    %v894 = vpop.permute.xlu0 %893
    %896 = vset.pattern.permute.xlu0 1
    %897 = vperm.xlu0 %896, %v749
    %v898 = vpop.permute.xlu0 %897
    %900 = vset.pattern.permute.xlu0 1
    %901 = vperm.xlu0 %900, %v751
    %v902 = vpop.permute.xlu0 %901
    %904 = vset.pattern.permute.xlu0 1
    %905 = vperm.xlu0 %904, %v754
    %v906 = vpop.permute.xlu0 %905
    %908 = vset.pattern.permute.xlu0 1
    %909 = vperm.xlu0 %908, %v756
    %v910 = vpop.permute.xlu0 %909
    %912 = vset.pattern.permute.xlu0 1
    %913 = vperm.xlu0 %912, %v759
    %v914 = vpop.permute.xlu0 %913
    %916 = vset.pattern.permute.xlu0 1
    %917 = vperm.xlu0 %916, %v761
    %v918 = vpop.permute.xlu0 %917
    %920 = vset.pattern.permute.xlu0 1
    %921 = vperm.xlu0 %920, %v764
    %v922 = vpop.permute.xlu0 %921
    %924 = vset.pattern.permute.xlu0 1
    %925 = vperm.xlu0 %924, %v766
    %v926 = vpop.permute.xlu0 %925
    %v928 = vmul.f32 %v866, %v583
    %v929 = vmul.f32 %v870, %v585
    %v930 = vmul.f32 %v874, %v588
    %v931 = vmul.f32 %v878, %v590
    %v932 = vmul.f32 %v882, %v593
    %v933 = vmul.f32 %v886, %v595
    %v934 = vmul.f32 %v890, %v598
    %v935 = vmul.f32 %v894, %v600
    %v936 = vmul.f32 %v898, %v603
    %v937 = vmul.f32 %v902, %v605
    %v938 = vmul.f32 %v906, %v608
    %v939 = vmul.f32 %v910, %v610
    %v940 = vmul.f32 %v914, %v613
    %v941 = vmul.f32 %v918, %v615
    %v942 = vmul.f32 %v922, %v618
    %v943 = vmul.f32 %v926, %v620
    %960 = vrot.lane.b32.xlu0 %v928, 96
    %v961 = vpop.permute.xlu0 %960
    %962 = vrot.lane.b32.xlu0 %v929, 96
    %v963 = vpop.permute.xlu0 %962
    %964 = vrot.lane.b32.xlu0 %v930, 96
    %v965 = vpop.permute.xlu0 %964
    %966 = vrot.lane.b32.xlu0 %v931, 96
    %v967 = vpop.permute.xlu0 %966
    %968 = vrot.lane.b32.xlu0 %v932, 96
    %v969 = vpop.permute.xlu0 %968
    %970 = vrot.lane.b32.xlu0 %v933, 96
    %v971 = vpop.permute.xlu0 %970
    %972 = vrot.lane.b32.xlu0 %v934, 96
    %v973 = vpop.permute.xlu0 %972
    %974 = vrot.lane.b32.xlu0 %v935, 96
    %v975 = vpop.permute.xlu0 %974
    %976 = vrot.lane.b32.xlu0 %v936, 96
    %v977 = vpop.permute.xlu0 %976
    %978 = vrot.lane.b32.xlu0 %v937, 96
    %v979 = vpop.permute.xlu0 %978
    %980 = vrot.lane.b32.xlu0 %v938, 96
    %v981 = vpop.permute.xlu0 %980
    %982 = vrot.lane.b32.xlu0 %v939, 96
    %v983 = vpop.permute.xlu0 %982
    %984 = vrot.lane.b32.xlu0 %v940, 96
    %v985 = vpop.permute.xlu0 %984
    %986 = vrot.lane.b32.xlu0 %v941, 96
    %v987 = vpop.permute.xlu0 %986
    %988 = vrot.lane.b32.xlu0 %v942, 96
    %v989 = vpop.permute.xlu0 %988
    %990 = vrot.lane.b32.xlu0 %v943, 96
    %v991 = vpop.permute.xlu0 %990
    %v1008 = vadd.f32 %v848, %v961
    %v1009 = vadd.f32 %v849, %v963
    %v1010 = vadd.f32 %v850, %v965
    %v1011 = vadd.f32 %v851, %v967
    %v1012 = vadd.f32 %v852, %v969
    %v1013 = vadd.f32 %v853, %v971
    %v1014 = vadd.f32 %v854, %v973
    %v1015 = vadd.f32 %v855, %v975
    %v1016 = vadd.f32 %v856, %v977
    %v1017 = vadd.f32 %v857, %v979
    %v1018 = vadd.f32 %v858, %v981
    %v1019 = vadd.f32 %v859, %v983
    %v1020 = vadd.f32 %v860, %v985
    %v1021 = vadd.f32 %v861, %v987
    %v1022 = vadd.f32 %v862, %v989
    %v1023 = vadd.f32 %v863, %v991
    %1024 = vset.pattern.permute.xlu0 2
    %1025 = vperm.xlu0 %1024, %v729
    %v1026 = vpop.permute.xlu0 %1025
    %1028 = vset.pattern.permute.xlu0 2
    %1029 = vperm.xlu0 %1028, %v731
    %v1030 = vpop.permute.xlu0 %1029
    %1032 = vset.pattern.permute.xlu0 2
    %1033 = vperm.xlu0 %1032, %v734
    %v1034 = vpop.permute.xlu0 %1033
    %1036 = vset.pattern.permute.xlu0 2
    %1037 = vperm.xlu0 %1036, %v736
    %v1038 = vpop.permute.xlu0 %1037
    %1040 = vset.pattern.permute.xlu0 2
    %1041 = vperm.xlu0 %1040, %v739
    %v1042 = vpop.permute.xlu0 %1041
    %1044 = vset.pattern.permute.xlu0 2
    %1045 = vperm.xlu0 %1044, %v741
    %v1046 = vpop.permute.xlu0 %1045
    %1048 = vset.pattern.permute.xlu0 2
    %1049 = vperm.xlu0 %1048, %v744
    %v1050 = vpop.permute.xlu0 %1049
    %1052 = vset.pattern.permute.xlu0 2
    %1053 = vperm.xlu0 %1052, %v746
    %v1054 = vpop.permute.xlu0 %1053
    %1056 = vset.pattern.permute.xlu0 2
    %1057 = vperm.xlu0 %1056, %v749
    %v1058 = vpop.permute.xlu0 %1057
    %1060 = vset.pattern.permute.xlu0 2
    %1061 = vperm.xlu0 %1060, %v751
    %v1062 = vpop.permute.xlu0 %1061
    %1064 = vset.pattern.permute.xlu0 2
    %1065 = vperm.xlu0 %1064, %v754
    %v1066 = vpop.permute.xlu0 %1065
    %1068 = vset.pattern.permute.xlu0 2
    %1069 = vperm.xlu0 %1068, %v756
    %v1070 = vpop.permute.xlu0 %1069
    %1072 = vset.pattern.permute.xlu0 2
    %1073 = vperm.xlu0 %1072, %v759
    %v1074 = vpop.permute.xlu0 %1073
    %1076 = vset.pattern.permute.xlu0 2
    %1077 = vperm.xlu0 %1076, %v761
    %v1078 = vpop.permute.xlu0 %1077
    %1080 = vset.pattern.permute.xlu0 2
    %1081 = vperm.xlu0 %1080, %v764
    %v1082 = vpop.permute.xlu0 %1081
    %1084 = vset.pattern.permute.xlu0 2
    %1085 = vperm.xlu0 %1084, %v766
    %v1086 = vpop.permute.xlu0 %1085
    %v1088 = vmul.f32 %v1026, %v583
    %v1089 = vmul.f32 %v1030, %v585
    %v1090 = vmul.f32 %v1034, %v588
    %v1091 = vmul.f32 %v1038, %v590
    %v1092 = vmul.f32 %v1042, %v593
    %v1093 = vmul.f32 %v1046, %v595
    %v1094 = vmul.f32 %v1050, %v598
    %v1095 = vmul.f32 %v1054, %v600
    %v1096 = vmul.f32 %v1058, %v603
    %v1097 = vmul.f32 %v1062, %v605
    %v1098 = vmul.f32 %v1066, %v608
    %v1099 = vmul.f32 %v1070, %v610
    %v1100 = vmul.f32 %v1074, %v613
    %v1101 = vmul.f32 %v1078, %v615
    %v1102 = vmul.f32 %v1082, %v618
    %v1103 = vmul.f32 %v1086, %v620
    %1120 = vrot.lane.b32.xlu0 %v1088, 64
    %v1121 = vpop.permute.xlu0 %1120
    %1122 = vrot.lane.b32.xlu0 %v1089, 64
    %v1123 = vpop.permute.xlu0 %1122
    %1124 = vrot.lane.b32.xlu0 %v1090, 64
    %v1125 = vpop.permute.xlu0 %1124
    %1126 = vrot.lane.b32.xlu0 %v1091, 64
    %v1127 = vpop.permute.xlu0 %1126
    %1128 = vrot.lane.b32.xlu0 %v1092, 64
    %v1129 = vpop.permute.xlu0 %1128
    %1130 = vrot.lane.b32.xlu0 %v1093, 64
    %v1131 = vpop.permute.xlu0 %1130
    %1132 = vrot.lane.b32.xlu0 %v1094, 64
    %v1133 = vpop.permute.xlu0 %1132
    %1134 = vrot.lane.b32.xlu0 %v1095, 64
    %v1135 = vpop.permute.xlu0 %1134
    %1136 = vrot.lane.b32.xlu0 %v1096, 64
    %v1137 = vpop.permute.xlu0 %1136
    %1138 = vrot.lane.b32.xlu0 %v1097, 64
    %v1139 = vpop.permute.xlu0 %1138
    %1140 = vrot.lane.b32.xlu0 %v1098, 64
    %v1141 = vpop.permute.xlu0 %1140
    %1142 = vrot.lane.b32.xlu0 %v1099, 64
    %v1143 = vpop.permute.xlu0 %1142
    %1144 = vrot.lane.b32.xlu0 %v1100, 64
    %v1145 = vpop.permute.xlu0 %1144
    %1146 = vrot.lane.b32.xlu0 %v1101, 64
    %v1147 = vpop.permute.xlu0 %1146
    %1148 = vrot.lane.b32.xlu0 %v1102, 64
    %v1149 = vpop.permute.xlu0 %1148
    %1150 = vrot.lane.b32.xlu0 %v1103, 64
    %v1151 = vpop.permute.xlu0 %1150
    %v1168 = vadd.f32 %v1008, %v1121
    %v1169 = vadd.f32 %v1009, %v1123
    %v1170 = vadd.f32 %v1010, %v1125
    %v1171 = vadd.f32 %v1011, %v1127
    %v1172 = vadd.f32 %v1012, %v1129
    %v1173 = vadd.f32 %v1013, %v1131
    %v1174 = vadd.f32 %v1014, %v1133
    %v1175 = vadd.f32 %v1015, %v1135
    %v1176 = vadd.f32 %v1016, %v1137
    %v1177 = vadd.f32 %v1017, %v1139
    %v1178 = vadd.f32 %v1018, %v1141
    %v1179 = vadd.f32 %v1019, %v1143
    %v1180 = vadd.f32 %v1020, %v1145
    %v1181 = vadd.f32 %v1021, %v1147
    %v1182 = vadd.f32 %v1022, %v1149
    %v1183 = vadd.f32 %v1023, %v1151
    %1184 = vset.pattern.permute.xlu0 3
    %1185 = vperm.xlu0 %1184, %v729
    %v1186 = vpop.permute.xlu0 %1185
    %1188 = vset.pattern.permute.xlu0 3
    %1189 = vperm.xlu0 %1188, %v731
    %v1190 = vpop.permute.xlu0 %1189
    %1192 = vset.pattern.permute.xlu0 3
    %1193 = vperm.xlu0 %1192, %v734
    %v1194 = vpop.permute.xlu0 %1193
    %1196 = vset.pattern.permute.xlu0 3
    %1197 = vperm.xlu0 %1196, %v736
    %v1198 = vpop.permute.xlu0 %1197
    %1200 = vset.pattern.permute.xlu0 3
    %1201 = vperm.xlu0 %1200, %v739
    %v1202 = vpop.permute.xlu0 %1201
    %1204 = vset.pattern.permute.xlu0 3
    %1205 = vperm.xlu0 %1204, %v741
    %v1206 = vpop.permute.xlu0 %1205
    %1208 = vset.pattern.permute.xlu0 3
    %1209 = vperm.xlu0 %1208, %v744
    %v1210 = vpop.permute.xlu0 %1209
    %1212 = vset.pattern.permute.xlu0 3
    %1213 = vperm.xlu0 %1212, %v746
    %v1214 = vpop.permute.xlu0 %1213
    %1216 = vset.pattern.permute.xlu0 3
    %1217 = vperm.xlu0 %1216, %v749
    %v1218 = vpop.permute.xlu0 %1217
    %1220 = vset.pattern.permute.xlu0 3
    %1221 = vperm.xlu0 %1220, %v751
    %v1222 = vpop.permute.xlu0 %1221
    %1224 = vset.pattern.permute.xlu0 3
    %1225 = vperm.xlu0 %1224, %v754
    %v1226 = vpop.permute.xlu0 %1225
    %1228 = vset.pattern.permute.xlu0 3
    %1229 = vperm.xlu0 %1228, %v756
    %v1230 = vpop.permute.xlu0 %1229
    %1232 = vset.pattern.permute.xlu0 3
    %1233 = vperm.xlu0 %1232, %v759
    %v1234 = vpop.permute.xlu0 %1233
    %1236 = vset.pattern.permute.xlu0 3
    %1237 = vperm.xlu0 %1236, %v761
    %v1238 = vpop.permute.xlu0 %1237
    %1240 = vset.pattern.permute.xlu0 3
    %1241 = vperm.xlu0 %1240, %v764
    %v1242 = vpop.permute.xlu0 %1241
    %1244 = vset.pattern.permute.xlu0 3
    %1245 = vperm.xlu0 %1244, %v766
    %v1246 = vpop.permute.xlu0 %1245
    %v1248 = vmul.f32 %v1186, %v583
    %v1249 = vmul.f32 %v1190, %v585
    %v1250 = vmul.f32 %v1194, %v588
    %v1251 = vmul.f32 %v1198, %v590
    %v1252 = vmul.f32 %v1202, %v593
    %v1253 = vmul.f32 %v1206, %v595
    %v1254 = vmul.f32 %v1210, %v598
    %v1255 = vmul.f32 %v1214, %v600
    %v1256 = vmul.f32 %v1218, %v603
    %v1257 = vmul.f32 %v1222, %v605
    %v1258 = vmul.f32 %v1226, %v608
    %v1259 = vmul.f32 %v1230, %v610
    %v1260 = vmul.f32 %v1234, %v613
    %v1261 = vmul.f32 %v1238, %v615
    %v1262 = vmul.f32 %v1242, %v618
    %v1263 = vmul.f32 %v1246, %v620
    %1280 = vrot.lane.b32.xlu0 %v1248, 32
    %v1281 = vpop.permute.xlu0 %1280
    %1282 = vrot.lane.b32.xlu0 %v1249, 32
    %v1283 = vpop.permute.xlu0 %1282
    %1284 = vrot.lane.b32.xlu0 %v1250, 32
    %v1285 = vpop.permute.xlu0 %1284
    %1286 = vrot.lane.b32.xlu0 %v1251, 32
    %v1287 = vpop.permute.xlu0 %1286
    %1288 = vrot.lane.b32.xlu0 %v1252, 32
    %v1289 = vpop.permute.xlu0 %1288
    %1290 = vrot.lane.b32.xlu0 %v1253, 32
    %v1291 = vpop.permute.xlu0 %1290
    %1292 = vrot.lane.b32.xlu0 %v1254, 32
    %v1293 = vpop.permute.xlu0 %1292
    %1294 = vrot.lane.b32.xlu0 %v1255, 32
    %v1295 = vpop.permute.xlu0 %1294
    %1296 = vrot.lane.b32.xlu0 %v1256, 32
    %v1297 = vpop.permute.xlu0 %1296
    %1298 = vrot.lane.b32.xlu0 %v1257, 32
    %v1299 = vpop.permute.xlu0 %1298
    %1300 = vrot.lane.b32.xlu0 %v1258, 32
    %v1301 = vpop.permute.xlu0 %1300
    %1302 = vrot.lane.b32.xlu0 %v1259, 32
    %v1303 = vpop.permute.xlu0 %1302
    %1304 = vrot.lane.b32.xlu0 %v1260, 32
    %v1305 = vpop.permute.xlu0 %1304
    %1306 = vrot.lane.b32.xlu0 %v1261, 32
    %v1307 = vpop.permute.xlu0 %1306
    %1308 = vrot.lane.b32.xlu0 %v1262, 32
    %v1309 = vpop.permute.xlu0 %1308
    %1310 = vrot.lane.b32.xlu0 %v1263, 32
    %v1311 = vpop.permute.xlu0 %1310
    %v1328 = vadd.f32 %v1168, %v1281
    %v1329 = vadd.f32 %v1169, %v1283
    %v1330 = vadd.f32 %v1170, %v1285
    %v1331 = vadd.f32 %v1171, %v1287
    %v1332 = vadd.f32 %v1172, %v1289
    %v1333 = vadd.f32 %v1173, %v1291
    %v1334 = vadd.f32 %v1174, %v1293
    %v1335 = vadd.f32 %v1175, %v1295
    %v1336 = vadd.f32 %v1176, %v1297
    %v1337 = vadd.f32 %v1177, %v1299
    %v1338 = vadd.f32 %v1178, %v1301
    %v1339 = vadd.f32 %v1179, %v1303
    %v1340 = vadd.f32 %v1180, %v1305
    %v1341 = vadd.f32 %v1181, %v1307
    %v1342 = vadd.f32 %v1182, %v1309
    %v1343 = vadd.f32 %v1183, %v1311
    %1344 = vset.pattern.permute.xlu0 4
    %1345 = vperm.xlu0 %1344, %v729
    %v1346 = vpop.permute.xlu0 %1345
    %1348 = vset.pattern.permute.xlu0 4
    %1349 = vperm.xlu0 %1348, %v731
    %v1350 = vpop.permute.xlu0 %1349
    %1352 = vset.pattern.permute.xlu0 4
    %1353 = vperm.xlu0 %1352, %v734
    %v1354 = vpop.permute.xlu0 %1353
    %1356 = vset.pattern.permute.xlu0 4
    %1357 = vperm.xlu0 %1356, %v736
    %v1358 = vpop.permute.xlu0 %1357
    %1360 = vset.pattern.permute.xlu0 4
    %1361 = vperm.xlu0 %1360, %v739
    %v1362 = vpop.permute.xlu0 %1361
    %1364 = vset.pattern.permute.xlu0 4
    %1365 = vperm.xlu0 %1364, %v741
    %v1366 = vpop.permute.xlu0 %1365
    %1368 = vset.pattern.permute.xlu0 4
    %1369 = vperm.xlu0 %1368, %v744
    %v1370 = vpop.permute.xlu0 %1369
    %1372 = vset.pattern.permute.xlu0 4
    %1373 = vperm.xlu0 %1372, %v746
    %v1374 = vpop.permute.xlu0 %1373
    %1376 = vset.pattern.permute.xlu0 4
    %1377 = vperm.xlu0 %1376, %v749
    %v1378 = vpop.permute.xlu0 %1377
    %1380 = vset.pattern.permute.xlu0 4
    %1381 = vperm.xlu0 %1380, %v751
    %v1382 = vpop.permute.xlu0 %1381
    %1384 = vset.pattern.permute.xlu0 4
    %1385 = vperm.xlu0 %1384, %v754
    %v1386 = vpop.permute.xlu0 %1385
    %1388 = vset.pattern.permute.xlu0 4
    %1389 = vperm.xlu0 %1388, %v756
    %v1390 = vpop.permute.xlu0 %1389
    %1392 = vset.pattern.permute.xlu0 4
    %1393 = vperm.xlu0 %1392, %v759
    %v1394 = vpop.permute.xlu0 %1393
    %1396 = vset.pattern.permute.xlu0 4
    %1397 = vperm.xlu0 %1396, %v761
    %v1398 = vpop.permute.xlu0 %1397
    %1400 = vset.pattern.permute.xlu0 4
    %1401 = vperm.xlu0 %1400, %v764
    %v1402 = vpop.permute.xlu0 %1401
    %1404 = vset.pattern.permute.xlu0 4
    %1405 = vperm.xlu0 %1404, %v766
    %v1406 = vpop.permute.xlu0 %1405
    %v1408 = vmul.f32 %v1346, %v632
    %v1409 = vmul.f32 %v1350, %v634
    %v1410 = vmul.f32 %v1354, %v637
    %v1411 = vmul.f32 %v1358, %v639
    %v1412 = vmul.f32 %v1362, %v642
    %v1413 = vmul.f32 %v1366, %v644
    %v1414 = vmul.f32 %v1370, %v647
    %v1415 = vmul.f32 %v1374, %v649
    %v1416 = vmul.f32 %v1378, %v652
    %v1417 = vmul.f32 %v1382, %v654
    %v1418 = vmul.f32 %v1386, %v657
    %v1419 = vmul.f32 %v1390, %v659
    %v1420 = vmul.f32 %v1394, %v662
    %v1421 = vmul.f32 %v1398, %v664
    %v1422 = vmul.f32 %v1402, %v667
    %v1423 = vmul.f32 %v1406, %v669
    %v1424 = vadd.f32 %v1328, %v1408
    %v1425 = vadd.f32 %v1329, %v1409
    %v1426 = vadd.f32 %v1330, %v1410
    %v1427 = vadd.f32 %v1331, %v1411
    %v1428 = vadd.f32 %v1332, %v1412
    %v1429 = vadd.f32 %v1333, %v1413
    %v1430 = vadd.f32 %v1334, %v1414
    %v1431 = vadd.f32 %v1335, %v1415
    %v1432 = vadd.f32 %v1336, %v1416
    %v1433 = vadd.f32 %v1337, %v1417
    %v1434 = vadd.f32 %v1338, %v1418
    %v1435 = vadd.f32 %v1339, %v1419
    %v1436 = vadd.f32 %v1340, %v1420
    %v1437 = vadd.f32 %v1341, %v1421
    %v1438 = vadd.f32 %v1342, %v1422
    %v1439 = vadd.f32 %v1343, %v1423
    %1440 = vset.pattern.permute.xlu0 5
    %1441 = vperm.xlu0 %1440, %v729
    %v1442 = vpop.permute.xlu0 %1441
    %1444 = vset.pattern.permute.xlu0 5
    %1445 = vperm.xlu0 %1444, %v731
    %v1446 = vpop.permute.xlu0 %1445
    %1448 = vset.pattern.permute.xlu0 5
    %1449 = vperm.xlu0 %1448, %v734
    %v1450 = vpop.permute.xlu0 %1449
    %1452 = vset.pattern.permute.xlu0 5
    %1453 = vperm.xlu0 %1452, %v736
    %v1454 = vpop.permute.xlu0 %1453
    %1456 = vset.pattern.permute.xlu0 5
    %1457 = vperm.xlu0 %1456, %v739
    %v1458 = vpop.permute.xlu0 %1457
    %1460 = vset.pattern.permute.xlu0 5
    %1461 = vperm.xlu0 %1460, %v741
    %v1462 = vpop.permute.xlu0 %1461
    %1464 = vset.pattern.permute.xlu0 5
    %1465 = vperm.xlu0 %1464, %v744
    %v1466 = vpop.permute.xlu0 %1465
    %1468 = vset.pattern.permute.xlu0 5
    %1469 = vperm.xlu0 %1468, %v746
    %v1470 = vpop.permute.xlu0 %1469
    %1472 = vset.pattern.permute.xlu0 5
    %1473 = vperm.xlu0 %1472, %v749
    %v1474 = vpop.permute.xlu0 %1473
    %1476 = vset.pattern.permute.xlu0 5
    %1477 = vperm.xlu0 %1476, %v751
    %v1478 = vpop.permute.xlu0 %1477
    %1480 = vset.pattern.permute.xlu0 5
    %1481 = vperm.xlu0 %1480, %v754
    %v1482 = vpop.permute.xlu0 %1481
    %1484 = vset.pattern.permute.xlu0 5
    %1485 = vperm.xlu0 %1484, %v756
    %v1486 = vpop.permute.xlu0 %1485
    %1488 = vset.pattern.permute.xlu0 5
    %1489 = vperm.xlu0 %1488, %v759
    %v1490 = vpop.permute.xlu0 %1489
    %1492 = vset.pattern.permute.xlu0 5
    %1493 = vperm.xlu0 %1492, %v761
    %v1494 = vpop.permute.xlu0 %1493
    %1496 = vset.pattern.permute.xlu0 5
    %1497 = vperm.xlu0 %1496, %v764
    %v1498 = vpop.permute.xlu0 %1497
    %1500 = vset.pattern.permute.xlu0 5
    %1501 = vperm.xlu0 %1500, %v766
    %v1502 = vpop.permute.xlu0 %1501
    %v1504 = vmul.f32 %v1442, %v632
    %v1505 = vmul.f32 %v1446, %v634
    %v1506 = vmul.f32 %v1450, %v637
    %v1507 = vmul.f32 %v1454, %v639
    %v1508 = vmul.f32 %v1458, %v642
    %v1509 = vmul.f32 %v1462, %v644
    %v1510 = vmul.f32 %v1466, %v647
    %v1511 = vmul.f32 %v1470, %v649
    %v1512 = vmul.f32 %v1474, %v652
    %v1513 = vmul.f32 %v1478, %v654
    %v1514 = vmul.f32 %v1482, %v657
    %v1515 = vmul.f32 %v1486, %v659
    %v1516 = vmul.f32 %v1490, %v662
    %v1517 = vmul.f32 %v1494, %v664
    %v1518 = vmul.f32 %v1498, %v667
    %v1519 = vmul.f32 %v1502, %v669
    %1536 = vrot.lane.b32.xlu0 %v1504, 96
    %v1537 = vpop.permute.xlu0 %1536
    %1538 = vrot.lane.b32.xlu0 %v1505, 96
    %v1539 = vpop.permute.xlu0 %1538
    %1540 = vrot.lane.b32.xlu0 %v1506, 96
    %v1541 = vpop.permute.xlu0 %1540
    %1542 = vrot.lane.b32.xlu0 %v1507, 96
    %v1543 = vpop.permute.xlu0 %1542
    %1544 = vrot.lane.b32.xlu0 %v1508, 96
    %v1545 = vpop.permute.xlu0 %1544
    %1546 = vrot.lane.b32.xlu0 %v1509, 96
    %v1547 = vpop.permute.xlu0 %1546
    %1548 = vrot.lane.b32.xlu0 %v1510, 96
    %v1549 = vpop.permute.xlu0 %1548
    %1550 = vrot.lane.b32.xlu0 %v1511, 96
    %v1551 = vpop.permute.xlu0 %1550
    %1552 = vrot.lane.b32.xlu0 %v1512, 96
    %v1553 = vpop.permute.xlu0 %1552
    %1554 = vrot.lane.b32.xlu0 %v1513, 96
    %v1555 = vpop.permute.xlu0 %1554
    %1556 = vrot.lane.b32.xlu0 %v1514, 96
    %v1557 = vpop.permute.xlu0 %1556
    %1558 = vrot.lane.b32.xlu0 %v1515, 96
    %v1559 = vpop.permute.xlu0 %1558
    %1560 = vrot.lane.b32.xlu0 %v1516, 96
    %v1561 = vpop.permute.xlu0 %1560
    %1562 = vrot.lane.b32.xlu0 %v1517, 96
    %v1563 = vpop.permute.xlu0 %1562
    %1564 = vrot.lane.b32.xlu0 %v1518, 96
    %v1565 = vpop.permute.xlu0 %1564
    %1566 = vrot.lane.b32.xlu0 %v1519, 96
    %v1567 = vpop.permute.xlu0 %1566
    %v1584 = vadd.f32 %v1424, %v1537
    %v1585 = vadd.f32 %v1425, %v1539
    %v1586 = vadd.f32 %v1426, %v1541
    %v1587 = vadd.f32 %v1427, %v1543
    %v1588 = vadd.f32 %v1428, %v1545
    %v1589 = vadd.f32 %v1429, %v1547
    %v1590 = vadd.f32 %v1430, %v1549
    %v1591 = vadd.f32 %v1431, %v1551
    %v1592 = vadd.f32 %v1432, %v1553
    %v1593 = vadd.f32 %v1433, %v1555
    %v1594 = vadd.f32 %v1434, %v1557
    %v1595 = vadd.f32 %v1435, %v1559
    %v1596 = vadd.f32 %v1436, %v1561
    %v1597 = vadd.f32 %v1437, %v1563
    %v1598 = vadd.f32 %v1438, %v1565
    %v1599 = vadd.f32 %v1439, %v1567
    %1600 = vset.pattern.permute.xlu0 6
    %1601 = vperm.xlu0 %1600, %v729
    %v1602 = vpop.permute.xlu0 %1601
    %1604 = vset.pattern.permute.xlu0 6
    %1605 = vperm.xlu0 %1604, %v731
    %v1606 = vpop.permute.xlu0 %1605
    %1608 = vset.pattern.permute.xlu0 6
    %1609 = vperm.xlu0 %1608, %v734
    %v1610 = vpop.permute.xlu0 %1609
    %1612 = vset.pattern.permute.xlu0 6
    %1613 = vperm.xlu0 %1612, %v736
    %v1614 = vpop.permute.xlu0 %1613
    %1616 = vset.pattern.permute.xlu0 6
    %1617 = vperm.xlu0 %1616, %v739
    %v1618 = vpop.permute.xlu0 %1617
    %1620 = vset.pattern.permute.xlu0 6
    %1621 = vperm.xlu0 %1620, %v741
    %v1622 = vpop.permute.xlu0 %1621
    %1624 = vset.pattern.permute.xlu0 6
    %1625 = vperm.xlu0 %1624, %v744
    %v1626 = vpop.permute.xlu0 %1625
    %1628 = vset.pattern.permute.xlu0 6
    %1629 = vperm.xlu0 %1628, %v746
    %v1630 = vpop.permute.xlu0 %1629
    %1632 = vset.pattern.permute.xlu0 6
    %1633 = vperm.xlu0 %1632, %v749
    %v1634 = vpop.permute.xlu0 %1633
    %1636 = vset.pattern.permute.xlu0 6
    %1637 = vperm.xlu0 %1636, %v751
    %v1638 = vpop.permute.xlu0 %1637
    %1640 = vset.pattern.permute.xlu0 6
    %1641 = vperm.xlu0 %1640, %v754
    %v1642 = vpop.permute.xlu0 %1641
    %1644 = vset.pattern.permute.xlu0 6
    %1645 = vperm.xlu0 %1644, %v756
    %v1646 = vpop.permute.xlu0 %1645
    %1648 = vset.pattern.permute.xlu0 6
    %1649 = vperm.xlu0 %1648, %v759
    %v1650 = vpop.permute.xlu0 %1649
    %1652 = vset.pattern.permute.xlu0 6
    %1653 = vperm.xlu0 %1652, %v761
    %v1654 = vpop.permute.xlu0 %1653
    %1656 = vset.pattern.permute.xlu0 6
    %1657 = vperm.xlu0 %1656, %v764
    %v1658 = vpop.permute.xlu0 %1657
    %1660 = vset.pattern.permute.xlu0 6
    %1661 = vperm.xlu0 %1660, %v766
    %v1662 = vpop.permute.xlu0 %1661
    %v1664 = vmul.f32 %v1602, %v632
    %v1665 = vmul.f32 %v1606, %v634
    %v1666 = vmul.f32 %v1610, %v637
    %v1667 = vmul.f32 %v1614, %v639
    %v1668 = vmul.f32 %v1618, %v642
    %v1669 = vmul.f32 %v1622, %v644
    %v1670 = vmul.f32 %v1626, %v647
    %v1671 = vmul.f32 %v1630, %v649
    %v1672 = vmul.f32 %v1634, %v652
    %v1673 = vmul.f32 %v1638, %v654
    %v1674 = vmul.f32 %v1642, %v657
    %v1675 = vmul.f32 %v1646, %v659
    %v1676 = vmul.f32 %v1650, %v662
    %v1677 = vmul.f32 %v1654, %v664
    %v1678 = vmul.f32 %v1658, %v667
    %v1679 = vmul.f32 %v1662, %v669
    %1696 = vrot.lane.b32.xlu0 %v1664, 64
    %v1697 = vpop.permute.xlu0 %1696
    %1698 = vrot.lane.b32.xlu0 %v1665, 64
    %v1699 = vpop.permute.xlu0 %1698
    %1700 = vrot.lane.b32.xlu0 %v1666, 64
    %v1701 = vpop.permute.xlu0 %1700
    %1702 = vrot.lane.b32.xlu0 %v1667, 64
    %v1703 = vpop.permute.xlu0 %1702
    %1704 = vrot.lane.b32.xlu0 %v1668, 64
    %v1705 = vpop.permute.xlu0 %1704
    %1706 = vrot.lane.b32.xlu0 %v1669, 64
    %v1707 = vpop.permute.xlu0 %1706
    %1708 = vrot.lane.b32.xlu0 %v1670, 64
    %v1709 = vpop.permute.xlu0 %1708
    %1710 = vrot.lane.b32.xlu0 %v1671, 64
    %v1711 = vpop.permute.xlu0 %1710
    %1712 = vrot.lane.b32.xlu0 %v1672, 64
    %v1713 = vpop.permute.xlu0 %1712
    %1714 = vrot.lane.b32.xlu0 %v1673, 64
    %v1715 = vpop.permute.xlu0 %1714
    %1716 = vrot.lane.b32.xlu0 %v1674, 64
    %v1717 = vpop.permute.xlu0 %1716
    %1718 = vrot.lane.b32.xlu0 %v1675, 64
    %v1719 = vpop.permute.xlu0 %1718
    %1720 = vrot.lane.b32.xlu0 %v1676, 64
    %v1721 = vpop.permute.xlu0 %1720
    %1722 = vrot.lane.b32.xlu0 %v1677, 64
    %v1723 = vpop.permute.xlu0 %1722
    %1724 = vrot.lane.b32.xlu0 %v1678, 64
    %v1725 = vpop.permute.xlu0 %1724
    %1726 = vrot.lane.b32.xlu0 %v1679, 64
    %v1727 = vpop.permute.xlu0 %1726
    %v1744 = vadd.f32 %v1584, %v1697
    %v1745 = vadd.f32 %v1585, %v1699
    %v1746 = vadd.f32 %v1586, %v1701
    %v1747 = vadd.f32 %v1587, %v1703
    %v1748 = vadd.f32 %v1588, %v1705
    %v1749 = vadd.f32 %v1589, %v1707
    %v1750 = vadd.f32 %v1590, %v1709
    %v1751 = vadd.f32 %v1591, %v1711
    %v1752 = vadd.f32 %v1592, %v1713
    %v1753 = vadd.f32 %v1593, %v1715
    %v1754 = vadd.f32 %v1594, %v1717
    %v1755 = vadd.f32 %v1595, %v1719
    %v1756 = vadd.f32 %v1596, %v1721
    %v1757 = vadd.f32 %v1597, %v1723
    %v1758 = vadd.f32 %v1598, %v1725
    %v1759 = vadd.f32 %v1599, %v1727
    %1760 = vset.pattern.permute.xlu0 7
    %1761 = vperm.xlu0 %1760, %v729
    %v1762 = vpop.permute.xlu0 %1761
    %1764 = vset.pattern.permute.xlu0 7
    %1765 = vperm.xlu0 %1764, %v731
    %v1766 = vpop.permute.xlu0 %1765
    %1768 = vset.pattern.permute.xlu0 7
    %1769 = vperm.xlu0 %1768, %v734
    %v1770 = vpop.permute.xlu0 %1769
    %1772 = vset.pattern.permute.xlu0 7
    %1773 = vperm.xlu0 %1772, %v736
    %v1774 = vpop.permute.xlu0 %1773
    %1776 = vset.pattern.permute.xlu0 7
    %1777 = vperm.xlu0 %1776, %v739
    %v1778 = vpop.permute.xlu0 %1777
    %1780 = vset.pattern.permute.xlu0 7
    %1781 = vperm.xlu0 %1780, %v741
    %v1782 = vpop.permute.xlu0 %1781
    %1784 = vset.pattern.permute.xlu0 7
    %1785 = vperm.xlu0 %1784, %v744
    %v1786 = vpop.permute.xlu0 %1785
    %1788 = vset.pattern.permute.xlu0 7
    %1789 = vperm.xlu0 %1788, %v746
    %v1790 = vpop.permute.xlu0 %1789
    %1792 = vset.pattern.permute.xlu0 7
    %1793 = vperm.xlu0 %1792, %v749
    %v1794 = vpop.permute.xlu0 %1793
    %1796 = vset.pattern.permute.xlu0 7
    %1797 = vperm.xlu0 %1796, %v751
    %v1798 = vpop.permute.xlu0 %1797
    %1800 = vset.pattern.permute.xlu0 7
    %1801 = vperm.xlu0 %1800, %v754
    %v1802 = vpop.permute.xlu0 %1801
    %1804 = vset.pattern.permute.xlu0 7
    %1805 = vperm.xlu0 %1804, %v756
    %v1806 = vpop.permute.xlu0 %1805
    %1808 = vset.pattern.permute.xlu0 7
    %1809 = vperm.xlu0 %1808, %v759
    %v1810 = vpop.permute.xlu0 %1809
    %1812 = vset.pattern.permute.xlu0 7
    %1813 = vperm.xlu0 %1812, %v761
    %v1814 = vpop.permute.xlu0 %1813
    %1816 = vset.pattern.permute.xlu0 7
    %1817 = vperm.xlu0 %1816, %v764
    %v1818 = vpop.permute.xlu0 %1817
    %1820 = vset.pattern.permute.xlu0 7
    %1821 = vperm.xlu0 %1820, %v766
    %v1822 = vpop.permute.xlu0 %1821
    %v1824 = vmul.f32 %v1762, %v632
    %v1825 = vmul.f32 %v1766, %v634
    %v1826 = vmul.f32 %v1770, %v637
    %v1827 = vmul.f32 %v1774, %v639
    %v1828 = vmul.f32 %v1778, %v642
    %v1829 = vmul.f32 %v1782, %v644
    %v1830 = vmul.f32 %v1786, %v647
    %v1831 = vmul.f32 %v1790, %v649
    %v1832 = vmul.f32 %v1794, %v652
    %v1833 = vmul.f32 %v1798, %v654
    %v1834 = vmul.f32 %v1802, %v657
    %v1835 = vmul.f32 %v1806, %v659
    %v1836 = vmul.f32 %v1810, %v662
    %v1837 = vmul.f32 %v1814, %v664
    %v1838 = vmul.f32 %v1818, %v667
    %v1839 = vmul.f32 %v1822, %v669
    %1856 = vrot.lane.b32.xlu0 %v1824, 32
    %v1857 = vpop.permute.xlu0 %1856
    %1858 = vrot.lane.b32.xlu0 %v1825, 32
    %v1859 = vpop.permute.xlu0 %1858
    %1860 = vrot.lane.b32.xlu0 %v1826, 32
    %v1861 = vpop.permute.xlu0 %1860
    %1862 = vrot.lane.b32.xlu0 %v1827, 32
    %v1863 = vpop.permute.xlu0 %1862
    %1864 = vrot.lane.b32.xlu0 %v1828, 32
    %v1865 = vpop.permute.xlu0 %1864
    %1866 = vrot.lane.b32.xlu0 %v1829, 32
    %v1867 = vpop.permute.xlu0 %1866
    %1868 = vrot.lane.b32.xlu0 %v1830, 32
    %v1869 = vpop.permute.xlu0 %1868
    %1870 = vrot.lane.b32.xlu0 %v1831, 32
    %v1871 = vpop.permute.xlu0 %1870
    %1872 = vrot.lane.b32.xlu0 %v1832, 32
    %v1873 = vpop.permute.xlu0 %1872
    %1874 = vrot.lane.b32.xlu0 %v1833, 32
    %v1875 = vpop.permute.xlu0 %1874
    %1876 = vrot.lane.b32.xlu0 %v1834, 32
    %v1877 = vpop.permute.xlu0 %1876
    %1878 = vrot.lane.b32.xlu0 %v1835, 32
    %v1879 = vpop.permute.xlu0 %1878
    %1880 = vrot.lane.b32.xlu0 %v1836, 32
    %v1881 = vpop.permute.xlu0 %1880
    %1882 = vrot.lane.b32.xlu0 %v1837, 32
    %v1883 = vpop.permute.xlu0 %1882
    %1884 = vrot.lane.b32.xlu0 %v1838, 32
    %v1885 = vpop.permute.xlu0 %1884
    %1886 = vrot.lane.b32.xlu0 %v1839, 32
    %v1887 = vpop.permute.xlu0 %1886
    %v1904 = vadd.f32 %v1744, %v1857
    %v1905 = vadd.f32 %v1745, %v1859
    %v1906 = vadd.f32 %v1746, %v1861
    %v1907 = vadd.f32 %v1747, %v1863
    %v1908 = vadd.f32 %v1748, %v1865
    %v1909 = vadd.f32 %v1749, %v1867
    %v1910 = vadd.f32 %v1750, %v1869
    %v1911 = vadd.f32 %v1751, %v1871
    %v1912 = vadd.f32 %v1752, %v1873
    %v1913 = vadd.f32 %v1753, %v1875
    %v1914 = vadd.f32 %v1754, %v1877
    %v1915 = vadd.f32 %v1755, %v1879
    %v1916 = vadd.f32 %v1756, %v1881
    %v1917 = vadd.f32 %v1757, %v1883
    %v1918 = vadd.f32 %v1758, %v1885
    %v1919 = vadd.f32 %v1759, %v1887
    %v1920 = vpack.c.bf16 %v1905, %v1904
    %v1921 = vpack.c.bf16 %v1907, %v1906
    %v1922 = vpack.c.bf16 %v1909, %v1908
    %v1923 = vpack.c.bf16 %v1911, %v1910
    %v1924 = vpack.c.bf16 %v1913, %v1912
    %v1925 = vpack.c.bf16 %v1915, %v1914
    %v1926 = vpack.c.bf16 %v1917, %v1916
    %v1927 = vpack.c.bf16 %v1919, %v1918
    %1928 = vmatpush.bf16.msra.mxu0 %v1927
    %1929 = vmatpush.bf16.msra.mxu0 %v1926
    %1930 = vmatpush.bf16.msra.mxu0 %v1925
    %1931 = vmatpush.bf16.msra.mxu0 %v1924
    %1932 = vmatpush.bf16.msra.mxu0 %v1923
    %1933 = vmatpush.bf16.msra.mxu0 %v1922
    %1934 = vmatpush.bf16.msra.mxu0 %v1921
    %1935 = vmatpush.bf16.msra.mxu0 %v1920
    %1936 = vmatmul.bf16.gmra.mxu0 %v260
    %v1937 = vpop.f32.mrf.mxu0
    %v1938 = vadd.f32 0.0, %v1937
    %v1939 = vpop.f32.mrf.mxu0
    %v1940 = vadd.f32 0.0, %v1939
    %1941 = vmatmul.bf16.gmra.mxu0 %v261
    %v1942 = vpop.f32.mrf.mxu0
    %v1943 = vadd.f32 0.0, %v1942
    %v1944 = vpop.f32.mrf.mxu0
    %v1945 = vadd.f32 0.0, %v1944
    %1946 = vmatmul.bf16.gmra.mxu0 %v262
    %v1947 = vpop.f32.mrf.mxu0
    %v1948 = vadd.f32 0.0, %v1947
    %v1949 = vpop.f32.mrf.mxu0
    %v1950 = vadd.f32 0.0, %v1949
    %1951 = vmatmul.bf16.gmra.mxu0 %v263
    %v1952 = vpop.f32.mrf.mxu0
    %v1953 = vadd.f32 0.0, %v1952
    %v1954 = vpop.f32.mrf.mxu0
    %v1955 = vadd.f32 0.0, %v1954
    %1956 = vmatmul.bf16.gmra.mxu0 %v264
    %v1957 = vpop.f32.mrf.mxu0
    %v1958 = vadd.f32 0.0, %v1957
    %v1959 = vpop.f32.mrf.mxu0
    %v1960 = vadd.f32 0.0, %v1959
    %1961 = vmatmul.bf16.gmra.mxu0 %v265
    %v1962 = vpop.f32.mrf.mxu0
    %v1963 = vadd.f32 0.0, %v1962
    %v1964 = vpop.f32.mrf.mxu0
    %v1965 = vadd.f32 0.0, %v1964
    %1966 = vmatmul.bf16.gmra.mxu0 %v266
    %v1967 = vpop.f32.mrf.mxu0
    %v1968 = vadd.f32 0.0, %v1967
    %v1969 = vpop.f32.mrf.mxu0
    %v1970 = vadd.f32 0.0, %v1969
    %1971 = vmatmul.bf16.gmra.mxu0 %v267
    %v1972 = vpop.f32.mrf.mxu0
    %v1973 = vadd.f32 0.0, %v1972
    %v1974 = vpop.f32.mrf.mxu0
    %v1975 = vadd.f32 0.0, %v1974
    %1976 = vdwg.mxu0
    %1978 = vset.pattern.permute.xlu0 0
    %1979 = vperm.xlu0 %1978, %v351
    %v1980 = vpop.permute.xlu0 %1979
    %1983 = vset.pattern.permute.xlu0 0
    %1984 = vperm.xlu0 %1983, %v352
    %v1985 = vpop.permute.xlu0 %1984
    %1988 = vset.pattern.permute.xlu0 0
    %1989 = vperm.xlu0 %1988, %v353
    %v1990 = vpop.permute.xlu0 %1989
    %1993 = vset.pattern.permute.xlu0 0
    %1994 = vperm.xlu0 %1993, %v354
    %v1995 = vpop.permute.xlu0 %1994
    %1998 = vset.pattern.permute.xlu0 0
    %1999 = vperm.xlu0 %1998, %v355
    %v2000 = vpop.permute.xlu0 %1999
    %2003 = vset.pattern.permute.xlu0 0
    %2004 = vperm.xlu0 %2003, %v356
    %v2005 = vpop.permute.xlu0 %2004
    %2008 = vset.pattern.permute.xlu0 0
    %2009 = vperm.xlu0 %2008, %v357
    %v2010 = vpop.permute.xlu0 %2009
    %2013 = vset.pattern.permute.xlu0 0
    %2014 = vperm.xlu0 %2013, %v358
    %v2015 = vpop.permute.xlu0 %2014
    %2018 = vset.pattern.permute.xlu0 0
    %2019 = vperm.xlu0 %2018, %v359
    %v2020 = vpop.permute.xlu0 %2019
    %2023 = vset.pattern.permute.xlu0 0
    %2024 = vperm.xlu0 %2023, %v360
    %v2025 = vpop.permute.xlu0 %2024
    %2028 = vset.pattern.permute.xlu0 0
    %2029 = vperm.xlu0 %2028, %v361
    %v2030 = vpop.permute.xlu0 %2029
    %2033 = vset.pattern.permute.xlu0 0
    %2034 = vperm.xlu0 %2033, %v362
    %v2035 = vpop.permute.xlu0 %2034
    %2038 = vset.pattern.permute.xlu0 0
    %2039 = vperm.xlu0 %2038, %v363
    %v2040 = vpop.permute.xlu0 %2039
    %2043 = vset.pattern.permute.xlu0 0
    %2044 = vperm.xlu0 %2043, %v364
    %v2045 = vpop.permute.xlu0 %2044
    %2048 = vset.pattern.permute.xlu0 0
    %2049 = vperm.xlu0 %2048, %v365
    %v2050 = vpop.permute.xlu0 %2049
    %2053 = vset.pattern.permute.xlu0 0
    %2054 = vperm.xlu0 %2053, %v366
    %v2055 = vpop.permute.xlu0 %2054
    %v2057 = vmul.f32 %v1938, %v1980
    %v2058 = vmul.f32 %v1940, %v1985
    %v2059 = vmul.f32 %v1943, %v1990
    %v2060 = vmul.f32 %v1945, %v1995
    %v2061 = vmul.f32 %v1948, %v2000
    %v2062 = vmul.f32 %v1950, %v2005
    %v2063 = vmul.f32 %v1953, %v2010
    %v2064 = vmul.f32 %v1955, %v2015
    %v2065 = vmul.f32 %v1958, %v2020
    %v2066 = vmul.f32 %v1960, %v2025
    %v2067 = vmul.f32 %v1963, %v2030
    %v2068 = vmul.f32 %v1965, %v2035
    %v2069 = vmul.f32 %v1968, %v2040
    %v2070 = vmul.f32 %v1970, %v2045
    %v2071 = vmul.f32 %v1973, %v2050
    %v2072 = vmul.f32 %v1975, %v2055
    %v2074 = vsel %vm421, %v703, 0
    %v2077 = vsel %vm421, %v704, 0
    %v2080 = vsel %vm421, %v705, 0
    %v2083 = vsel %vm421, %v706, 0
    %v2086 = vsel %vm421, %v707, 0
    %v2089 = vsel %vm421, %v708, 0
    %v2092 = vsel %vm421, %v709, 0
    %v2095 = vsel %vm421, %v710, 0
    %v2098 = vsel %vm446, %v376, 0
    %2100 = vmatpush.bf16.msra.mxu0 0
    %2101 = vmatpush.bf16.msra.mxu0 0
    %2102 = vmatpush.bf16.msra.mxu0 0
    %2103 = vmatpush.bf16.msra.mxu0 0
    %2104 = vmatpush.bf16.msra.mxu0 0
    %2105 = vmatpush.bf16.msra.mxu0 0
    %2106 = vmatpush.bf16.msra.mxu0 0
    %2107 = vmatpush.bf16.msra.mxu0 %v2098
    %2108 = vmatmul.bf16.gmra.mxu0 %v2074
    %v2109 = vpop.f32.mrf.mxu0
    %v2110 = vadd.f32 0.0, %v2109
    %v2111 = vpop.f32.mrf.mxu0
    %v2112 = vadd.f32 0.0, %v2111
    %2113 = vmatmul.bf16.gmra.mxu0 %v2077
    %v2114 = vpop.f32.mrf.mxu0
    %v2115 = vadd.f32 0.0, %v2114
    %v2116 = vpop.f32.mrf.mxu0
    %v2117 = vadd.f32 0.0, %v2116
    %2118 = vmatmul.bf16.gmra.mxu0 %v2080
    %v2119 = vpop.f32.mrf.mxu0
    %v2120 = vadd.f32 0.0, %v2119
    %v2121 = vpop.f32.mrf.mxu0
    %v2122 = vadd.f32 0.0, %v2121
    %2123 = vmatmul.bf16.gmra.mxu0 %v2083
    %v2124 = vpop.f32.mrf.mxu0
    %v2125 = vadd.f32 0.0, %v2124
    %v2126 = vpop.f32.mrf.mxu0
    %v2127 = vadd.f32 0.0, %v2126
    %2128 = vmatmul.bf16.gmra.mxu0 %v2086
    %v2129 = vpop.f32.mrf.mxu0
    %v2130 = vadd.f32 0.0, %v2129
    %v2131 = vpop.f32.mrf.mxu0
    %v2132 = vadd.f32 0.0, %v2131
    %2133 = vmatmul.bf16.gmra.mxu0 %v2089
    %v2134 = vpop.f32.mrf.mxu0
    %v2135 = vadd.f32 0.0, %v2134
    %v2136 = vpop.f32.mrf.mxu0
    %v2137 = vadd.f32 0.0, %v2136
    %2138 = vmatmul.bf16.gmra.mxu0 %v2092
    %v2139 = vpop.f32.mrf.mxu0
    %v2140 = vadd.f32 0.0, %v2139
    %v2141 = vpop.f32.mrf.mxu0
    %v2142 = vadd.f32 0.0, %v2141
    %2143 = vmatmul.bf16.gmra.mxu0 %v2095
    %v2144 = vpop.f32.mrf.mxu0
    %v2145 = vadd.f32 0.0, %v2144
    %v2146 = vpop.f32.mrf.mxu0
    %v2147 = vadd.f32 0.0, %v2146
    %2148 = vdwg.mxu0
    %v2149 = vadd.f32 %v2057, %v2110
    %v2150 = vadd.f32 %v2058, %v2112
    %v2151 = vadd.f32 %v2059, %v2115
    %v2152 = vadd.f32 %v2060, %v2117
    %v2153 = vadd.f32 %v2061, %v2120
    %v2154 = vadd.f32 %v2062, %v2122
    %v2155 = vadd.f32 %v2063, %v2125
    %v2156 = vadd.f32 %v2064, %v2127
    %v2157 = vadd.f32 %v2065, %v2130
    %v2158 = vadd.f32 %v2066, %v2132
    %v2159 = vadd.f32 %v2067, %v2135
    %v2160 = vadd.f32 %v2068, %v2137
    %v2161 = vadd.f32 %v2069, %v2140
    %v2162 = vadd.f32 %v2070, %v2142
    %v2163 = vadd.f32 %v2071, %v2145
    %v2164 = vadd.f32 %v2072, %v2147
    %v2166 = vperm.slane %v377, 0
    %v2168 = vadd.f32 %v2149, %v2166
    %v2169 = vadd.f32 %v2150, %v2166
    %v2170 = vadd.f32 %v2151, %v2166
    %v2171 = vadd.f32 %v2152, %v2166
    %v2172 = vadd.f32 %v2153, %v2166
    %v2173 = vadd.f32 %v2154, %v2166
    %v2174 = vadd.f32 %v2155, %v2166
    %v2175 = vadd.f32 %v2156, %v2166
    %v2176 = vadd.f32 %v2157, %v2166
    %v2177 = vadd.f32 %v2158, %v2166
    %v2178 = vadd.f32 %v2159, %v2166
    %v2179 = vadd.f32 %v2160, %v2166
    %v2180 = vadd.f32 %v2161, %v2166
    %v2181 = vadd.f32 %v2162, %v2166
    %v2182 = vadd.f32 %v2163, %v2166
    %v2183 = vadd.f32 %v2164, %v2166
    %v2184 = vld [vmem:[%s9 + $0x4] sm:$0x1]
    %v2186 = vperm.slane %v2184, 0
    %v2188 = vmul.f32 %v2168, %v2186
    %v2189 = vmul.f32 %v2169, %v2186
    %v2190 = vmul.f32 %v2170, %v2186
    %v2191 = vmul.f32 %v2171, %v2186
    %v2192 = vmul.f32 %v2172, %v2186
    %v2193 = vmul.f32 %v2173, %v2186
    %v2194 = vmul.f32 %v2174, %v2186
    %v2195 = vmul.f32 %v2175, %v2186
    %v2196 = vmul.f32 %v2176, %v2186
    %v2197 = vmul.f32 %v2177, %v2186
    %v2198 = vmul.f32 %v2178, %v2186
    %v2199 = vmul.f32 %v2179, %v2186
    %v2200 = vmul.f32 %v2180, %v2186
    %v2201 = vmul.f32 %v2181, %v2186
    %v2202 = vmul.f32 %v2182, %v2186
    %v2203 = vmul.f32 %v2183, %v2186
    %v2204 = vld [vmem:[%s9 + $0x5] sm:$0x1]
    %v2206 = vperm.slane %v2204, 0
    %v2208 = vadd.f32 %v2188, %v2206
    %v2209 = vadd.f32 %v2189, %v2206
    %v2210 = vadd.f32 %v2190, %v2206
    %v2211 = vadd.f32 %v2191, %v2206
    %v2212 = vadd.f32 %v2192, %v2206
    %v2213 = vadd.f32 %v2193, %v2206
    %v2214 = vadd.f32 %v2194, %v2206
    %v2215 = vadd.f32 %v2195, %v2206
    %v2216 = vadd.f32 %v2196, %v2206
    %v2217 = vadd.f32 %v2197, %v2206
    %v2218 = vadd.f32 %v2198, %v2206
    %v2219 = vadd.f32 %v2199, %v2206
    %v2220 = vadd.f32 %v2200, %v2206
    %v2221 = vadd.f32 %v2201, %v2206
    %v2222 = vadd.f32 %v2202, %v2206
    %v2223 = vadd.f32 %v2203, %v2206
    %v2224 = vmax.f32 %v2208, 0.0
    %v2225 = vmax.f32 %v2209, 0.0
    %v2226 = vmax.f32 %v2210, 0.0
    %v2227 = vmax.f32 %v2211, 0.0
    %v2228 = vmax.f32 %v2212, 0.0
    %v2229 = vmax.f32 %v2213, 0.0
    %v2230 = vmax.f32 %v2214, 0.0
    %v2231 = vmax.f32 %v2215, 0.0
    %v2232 = vmax.f32 %v2216, 0.0
    %v2233 = vmax.f32 %v2217, 0.0
    %v2234 = vmax.f32 %v2218, 0.0
    %v2235 = vmax.f32 %v2219, 0.0
    %v2236 = vmax.f32 %v2220, 0.0
    %v2237 = vmax.f32 %v2221, 0.0
    %v2238 = vmax.f32 %v2222, 0.0
    %v2239 = vmax.f32 %v2223, 0.0
    %v2240 = vpack.c.bf16 %v2225, %v2224
    %v2241 = vpack.c.bf16 %v2227, %v2226
    %v2242 = vpack.c.bf16 %v2229, %v2228
    %v2243 = vpack.c.bf16 %v2231, %v2230
    %v2244 = vpack.c.bf16 %v2233, %v2232
    %v2245 = vpack.c.bf16 %v2235, %v2234
    %v2246 = vpack.c.bf16 %v2237, %v2236
    %v2247 = vpack.c.bf16 %v2239, %v2238
    %v2248 = vld [vmem:[%s6 + $0x4] sm:$0xf]
    %v2249 = vld [vmem:[%s9 + $0x2] sm:$0x1]
    %v2250 = vld [vmem:[%s7 + $0x8] sm:$0xff]
    %v2251 = vld [vmem:[%s7 + $0x10] sm:$0xff]
    %v2252 = vld [vmem:[%s7 + $0x18] sm:$0xff]
    %v2253 = vld [vmem:[%s7 + $0x20] sm:$0xff]
    %v2254 = vld [vmem:[%s7 + $0x30] sm:$0xff]
    %v2255 = vld [vmem:[%s7 + $0x38] sm:$0xff]
    %v2256 = vld [vmem:[%s7 + $0x40] sm:$0xff]
    %v2257 = vld [vmem:[%s7 + $0x48] sm:$0xff]
    %v2258 = vld [vmem:[%s7 + $0x58] sm:$0xff]
    %v2259 = vld [vmem:[%s7 + $0x60] sm:$0xff]
    %v2260 = vld [vmem:[%s7 + $0x68] sm:$0xff]
    %v2261 = vld [vmem:[%s7 + $0x70] sm:$0xff]
    %v2262 = vld [vmem:[%s7 + $0x80] sm:$0xff]
    %v2263 = vld [vmem:[%s7 + $0x88] sm:$0xff]
    %v2264 = vld [vmem:[%s7 + $0x90] sm:$0xff]
    %v2265 = vld [vmem:[%s7 + $0x98] sm:$0xff]
    %v2266 = vld [vmem:[%s9 + $0xc] sm:$0xff]
    %v2267 = vld [vmem:[%s8] sm:$0xf]
    %v2268 = vld [vmem:[%s8 + $0xc] sm:$0xf]
    %v2269 = vld [vmem:[%s8 + $0x18] sm:$0xf]
    %v2270 = vld [vmem:[%s8 + $0x24] sm:$0xf]
    %v2271 = vld [vmem:[%s9 + $0x3] sm:$0x1]
    %v2273 = vperm.slane %v2249, 0
    %v2276 = vsel %vm446, %v2248, 0
    %2278 = vmatpush.bf16.msra.mxu0 0
    %2279 = vmatpush.bf16.msra.mxu0 0
    %2280 = vmatpush.bf16.msra.mxu0 0
    %2281 = vmatpush.bf16.msra.mxu0 0
    %2282 = vmatpush.bf16.msra.mxu0 0
    %2283 = vmatpush.bf16.msra.mxu0 0
    %2284 = vmatpush.bf16.msra.mxu0 0
    %2285 = vmatpush.bf16.msra.mxu0 %v2276
    %2286 = vmatmul.bf16.gmra.mxu0 %v423
    %v2287 = vpop.f32.mrf.mxu0
    %v2288 = vadd.f32 %v2273, %v2287
    %v2289 = vpop.f32.mrf.mxu0
    %v2290 = vadd.f32 %v2273, %v2289
    %2291 = vmatmul.bf16.gmra.mxu0 %v426
    %v2292 = vpop.f32.mrf.mxu0
    %v2293 = vadd.f32 %v2273, %v2292
    %v2294 = vpop.f32.mrf.mxu0
    %v2295 = vadd.f32 %v2273, %v2294
    %2296 = vmatmul.bf16.gmra.mxu0 %v429
    %v2297 = vpop.f32.mrf.mxu0
    %v2298 = vadd.f32 %v2273, %v2297
    %v2299 = vpop.f32.mrf.mxu0
    %v2300 = vadd.f32 %v2273, %v2299
    %2301 = vmatmul.bf16.gmra.mxu0 %v432
    %v2302 = vpop.f32.mrf.mxu0
    %v2303 = vadd.f32 %v2273, %v2302
    %v2304 = vpop.f32.mrf.mxu0
    %v2305 = vadd.f32 %v2273, %v2304
    %2306 = vmatmul.bf16.gmra.mxu0 %v435
    %v2307 = vpop.f32.mrf.mxu0
    %v2308 = vadd.f32 %v2273, %v2307
    %v2309 = vpop.f32.mrf.mxu0
    %v2310 = vadd.f32 %v2273, %v2309
    %2311 = vmatmul.bf16.gmra.mxu0 %v438
    %v2312 = vpop.f32.mrf.mxu0
    %v2313 = vadd.f32 %v2273, %v2312
    %v2314 = vpop.f32.mrf.mxu0
    %v2315 = vadd.f32 %v2273, %v2314
    %2316 = vmatmul.bf16.gmra.mxu0 %v441
    %v2317 = vpop.f32.mrf.mxu0
    %v2318 = vadd.f32 %v2273, %v2317
    %v2319 = vpop.f32.mrf.mxu0
    %v2320 = vadd.f32 %v2273, %v2319
    %2321 = vmatmul.bf16.gmra.mxu0 %v444
    %v2322 = vpop.f32.mrf.mxu0
    %v2323 = vadd.f32 %v2273, %v2322
    %v2324 = vpop.f32.mrf.mxu0
    %v2325 = vadd.f32 %v2273, %v2324
    %2326 = vdwg.mxu0
    %v2327 = vmax.f32 %v2288, 0.0
    %v2328 = vmax.f32 %v2290, 0.0
    %v2329 = vmax.f32 %v2293, 0.0
    %v2330 = vmax.f32 %v2295, 0.0
    %v2331 = vmax.f32 %v2298, 0.0
    %v2332 = vmax.f32 %v2300, 0.0
    %v2333 = vmax.f32 %v2303, 0.0
    %v2334 = vmax.f32 %v2305, 0.0
    %v2335 = vmax.f32 %v2308, 0.0
    %v2336 = vmax.f32 %v2310, 0.0
    %v2337 = vmax.f32 %v2313, 0.0
    %v2338 = vmax.f32 %v2315, 0.0
    %v2339 = vmax.f32 %v2318, 0.0
    %v2340 = vmax.f32 %v2320, 0.0
    %v2341 = vmax.f32 %v2323, 0.0
    %v2342 = vmax.f32 %v2325, 0.0
    %v2343 = vpack.c.bf16 %v2328, %v2327
    %v2344 = vpack.c.bf16 %v2330, %v2329
    %v2345 = vpack.c.bf16 %v2332, %v2331
    %v2346 = vpack.c.bf16 %v2334, %v2333
    %v2347 = vpack.c.bf16 %v2336, %v2335
    %v2348 = vpack.c.bf16 %v2338, %v2337
    %v2349 = vpack.c.bf16 %v2340, %v2339
    %v2350 = vpack.c.bf16 %v2342, %v2341
    %v2352 = vperm.slane %v2266, 0
    %v2353 = vperm.slane %v2266, 1
    %v2354 = vperm.slane %v2266, 2
    %v2355 = vperm.slane %v2266, 3
    %v2356 = vperm.slane %v2266, 4
    %v2357 = vperm.slane %v2266, 5
    %v2358 = vperm.slane %v2266, 6
    %v2359 = vperm.slane %v2266, 7
    %v2384 = vunpack.c.l.b16 %v2250
    %v2385 = vunpack.c.h.b16 %v2250
    %v2386 = vunpack.c.l.b16 %v2251
    %v2387 = vunpack.c.h.b16 %v2251
    %v2388 = vunpack.c.l.b16 %v2252
    %v2389 = vunpack.c.h.b16 %v2252
    %v2390 = vunpack.c.l.b16 %v2253
    %v2391 = vunpack.c.h.b16 %v2253
    %v2392 = vunpack.c.l.b16 %v2254
    %v2393 = vunpack.c.h.b16 %v2254
    %v2394 = vunpack.c.l.b16 %v2255
    %v2395 = vunpack.c.h.b16 %v2255
    %v2396 = vunpack.c.l.b16 %v2256
    %v2397 = vunpack.c.h.b16 %v2256
    %v2398 = vunpack.c.l.b16 %v2257
    %v2399 = vunpack.c.h.b16 %v2257
    %v2400 = vunpack.c.l.b16 %v2258
    %v2401 = vunpack.c.h.b16 %v2258
    %v2402 = vunpack.c.l.b16 %v2259
    %v2403 = vunpack.c.h.b16 %v2259
    %v2404 = vunpack.c.l.b16 %v2260
    %v2405 = vunpack.c.h.b16 %v2260
    %v2406 = vunpack.c.l.b16 %v2261
    %v2407 = vunpack.c.h.b16 %v2261
    %v2408 = vunpack.c.l.b16 %v2262
    %v2409 = vunpack.c.h.b16 %v2262
    %v2410 = vunpack.c.l.b16 %v2263
    %v2411 = vunpack.c.h.b16 %v2263
    %v2412 = vunpack.c.l.b16 %v2264
    %v2413 = vunpack.c.h.b16 %v2264
    %v2414 = vunpack.c.l.b16 %v2265
    %v2415 = vunpack.c.h.b16 %v2265
    %v2416 = vpack.c.b16 %v2392, %v2384
    %v2417 = vpack.c.b16 %v2393, %v2385
    %v2418 = vpack.c.b16 %v2394, %v2386
    %v2419 = vpack.c.b16 %v2395, %v2387
    %v2420 = vpack.c.b16 %v2396, %v2388
    %v2421 = vpack.c.b16 %v2397, %v2389
    %v2422 = vpack.c.b16 %v2398, %v2390
    %v2423 = vpack.c.b16 %v2399, %v2391
    %v2424 = vpack.c.b16 %v2408, %v2400
    %v2425 = vpack.c.b16 %v2409, %v2401
    %v2426 = vpack.c.b16 %v2410, %v2402
    %v2427 = vpack.c.b16 %v2411, %v2403
    %v2428 = vpack.c.b16 %v2412, %v2404
    %v2429 = vpack.c.b16 %v2413, %v2405
    %v2430 = vpack.c.b16 %v2414, %v2406
    %v2431 = vpack.c.b16 %v2415, %v2407
    %v2449 = vsel %vm548, %v2343, 0
    %v2452 = vsel %vm548, %v2344, 0
    %v2455 = vsel %vm548, %v2345, 0
    %v2458 = vsel %vm548, %v2346, 0
    %v2461 = vsel %vm548, %v2347, 0
    %v2464 = vsel %vm548, %v2348, 0
    %v2467 = vsel %vm548, %v2349, 0
    %v2470 = vsel %vm548, %v2350, 0
    %2472 = vmatpush.bf16.msra.mxu0 0
    %2473 = vmatpush.bf16.msra.mxu0 0
    %2474 = vmatpush.bf16.msra.mxu0 0
    %2475 = vmatpush.bf16.msra.mxu0 0
    %2476 = vmatpush.bf16.msra.mxu0 0
    %2477 = vmatpush.bf16.msra.mxu0 0
    %2478 = vmatpush.bf16.msra.mxu0 %v2424
    %2479 = vmatpush.bf16.msra.mxu0 %v2416
    %2480 = vmatmul.bf16.gmra.mxu0 %v2449
    %v2481 = vpop.f32.mrf.mxu0
    %v2482 = vadd.f32 %v2352, %v2481
    %v2483 = vpop.f32.mrf.mxu0
    %v2484 = vadd.f32 %v2352, %v2483
    %2485 = vmatmul.bf16.gmra.mxu0 %v2452
    %v2486 = vpop.f32.mrf.mxu0
    %v2487 = vadd.f32 %v2352, %v2486
    %v2488 = vpop.f32.mrf.mxu0
    %v2489 = vadd.f32 %v2352, %v2488
    %2490 = vmatmul.bf16.gmra.mxu0 %v2455
    %v2491 = vpop.f32.mrf.mxu0
    %v2492 = vadd.f32 %v2352, %v2491
    %v2493 = vpop.f32.mrf.mxu0
    %v2494 = vadd.f32 %v2352, %v2493
    %2495 = vmatmul.bf16.gmra.mxu0 %v2458
    %v2496 = vpop.f32.mrf.mxu0
    %v2497 = vadd.f32 %v2352, %v2496
    %v2498 = vpop.f32.mrf.mxu0
    %v2499 = vadd.f32 %v2352, %v2498
    %2500 = vmatmul.bf16.gmra.mxu0 %v2461
    %v2501 = vpop.f32.mrf.mxu0
    %v2502 = vadd.f32 %v2352, %v2501
    %v2503 = vpop.f32.mrf.mxu0
    %v2504 = vadd.f32 %v2352, %v2503
    %2505 = vmatmul.bf16.gmra.mxu0 %v2464
    %v2506 = vpop.f32.mrf.mxu0
    %v2507 = vadd.f32 %v2352, %v2506
    %v2508 = vpop.f32.mrf.mxu0
    %v2509 = vadd.f32 %v2352, %v2508
    %2510 = vmatmul.bf16.gmra.mxu0 %v2467
    %v2511 = vpop.f32.mrf.mxu0
    %v2512 = vadd.f32 %v2352, %v2511
    %v2513 = vpop.f32.mrf.mxu0
    %v2514 = vadd.f32 %v2352, %v2513
    %2515 = vmatmul.bf16.gmra.mxu0 %v2470
    %v2516 = vpop.f32.mrf.mxu0
    %v2517 = vadd.f32 %v2352, %v2516
    %v2518 = vpop.f32.mrf.mxu0
    %v2519 = vadd.f32 %v2352, %v2518
    %2520 = vdwg.mxu0
    %2521 = vmatpush.bf16.msra.mxu0 0
    %2522 = vmatpush.bf16.msra.mxu0 0
    %2523 = vmatpush.bf16.msra.mxu0 0
    %2524 = vmatpush.bf16.msra.mxu0 0
    %2525 = vmatpush.bf16.msra.mxu0 0
    %2526 = vmatpush.bf16.msra.mxu0 0
    %2527 = vmatpush.bf16.msra.mxu0 %v2425
    %2528 = vmatpush.bf16.msra.mxu0 %v2417
    %2529 = vmatmul.bf16.gmra.mxu0 %v2449
    %v2530 = vpop.f32.mrf.mxu0
    %v2531 = vadd.f32 %v2353, %v2530
    %v2532 = vpop.f32.mrf.mxu0
    %v2533 = vadd.f32 %v2353, %v2532
    %2534 = vmatmul.bf16.gmra.mxu0 %v2452
    %v2535 = vpop.f32.mrf.mxu0
    %v2536 = vadd.f32 %v2353, %v2535
    %v2537 = vpop.f32.mrf.mxu0
    %v2538 = vadd.f32 %v2353, %v2537
    %2539 = vmatmul.bf16.gmra.mxu0 %v2455
    %v2540 = vpop.f32.mrf.mxu0
    %v2541 = vadd.f32 %v2353, %v2540
    %v2542 = vpop.f32.mrf.mxu0
    %v2543 = vadd.f32 %v2353, %v2542
    %2544 = vmatmul.bf16.gmra.mxu0 %v2458
    %v2545 = vpop.f32.mrf.mxu0
    %v2546 = vadd.f32 %v2353, %v2545
    %v2547 = vpop.f32.mrf.mxu0
    %v2548 = vadd.f32 %v2353, %v2547
    %2549 = vmatmul.bf16.gmra.mxu0 %v2461
    %v2550 = vpop.f32.mrf.mxu0
    %v2551 = vadd.f32 %v2353, %v2550
    %v2552 = vpop.f32.mrf.mxu0
    %v2553 = vadd.f32 %v2353, %v2552
    %2554 = vmatmul.bf16.gmra.mxu0 %v2464
    %v2555 = vpop.f32.mrf.mxu0
    %v2556 = vadd.f32 %v2353, %v2555
    %v2557 = vpop.f32.mrf.mxu0
    %v2558 = vadd.f32 %v2353, %v2557
    %2559 = vmatmul.bf16.gmra.mxu0 %v2467
    %v2560 = vpop.f32.mrf.mxu0
    %v2561 = vadd.f32 %v2353, %v2560
    %v2562 = vpop.f32.mrf.mxu0
    %v2563 = vadd.f32 %v2353, %v2562
    %2564 = vmatmul.bf16.gmra.mxu0 %v2470
    %v2565 = vpop.f32.mrf.mxu0
    %v2566 = vadd.f32 %v2353, %v2565
    %v2567 = vpop.f32.mrf.mxu0
    %v2568 = vadd.f32 %v2353, %v2567
    %2569 = vdwg.mxu0
    %2570 = vmatpush.bf16.msra.mxu0 0
    %2571 = vmatpush.bf16.msra.mxu0 0
    %2572 = vmatpush.bf16.msra.mxu0 0
    %2573 = vmatpush.bf16.msra.mxu0 0
    %2574 = vmatpush.bf16.msra.mxu0 0
    %2575 = vmatpush.bf16.msra.mxu0 0
    %2576 = vmatpush.bf16.msra.mxu0 %v2426
    %2577 = vmatpush.bf16.msra.mxu0 %v2418
    %2578 = vmatmul.bf16.gmra.mxu0 %v2449
    %v2579 = vpop.f32.mrf.mxu0
    %v2580 = vadd.f32 %v2354, %v2579
    %v2581 = vpop.f32.mrf.mxu0
    %v2582 = vadd.f32 %v2354, %v2581
    %2583 = vmatmul.bf16.gmra.mxu0 %v2452
    %v2584 = vpop.f32.mrf.mxu0
    %v2585 = vadd.f32 %v2354, %v2584
    %v2586 = vpop.f32.mrf.mxu0
    %v2587 = vadd.f32 %v2354, %v2586
    %2588 = vmatmul.bf16.gmra.mxu0 %v2455
    %v2589 = vpop.f32.mrf.mxu0
    %v2590 = vadd.f32 %v2354, %v2589
    %v2591 = vpop.f32.mrf.mxu0
    %v2592 = vadd.f32 %v2354, %v2591
    %2593 = vmatmul.bf16.gmra.mxu0 %v2458
    %v2594 = vpop.f32.mrf.mxu0
    %v2595 = vadd.f32 %v2354, %v2594
    %v2596 = vpop.f32.mrf.mxu0
    %v2597 = vadd.f32 %v2354, %v2596
    %2598 = vmatmul.bf16.gmra.mxu0 %v2461
    %v2599 = vpop.f32.mrf.mxu0
    %v2600 = vadd.f32 %v2354, %v2599
    %v2601 = vpop.f32.mrf.mxu0
    %v2602 = vadd.f32 %v2354, %v2601
    %2603 = vmatmul.bf16.gmra.mxu0 %v2464
    %v2604 = vpop.f32.mrf.mxu0
    %v2605 = vadd.f32 %v2354, %v2604
    %v2606 = vpop.f32.mrf.mxu0
    %v2607 = vadd.f32 %v2354, %v2606
    %2608 = vmatmul.bf16.gmra.mxu0 %v2467
    %v2609 = vpop.f32.mrf.mxu0
    %v2610 = vadd.f32 %v2354, %v2609
    %v2611 = vpop.f32.mrf.mxu0
    %v2612 = vadd.f32 %v2354, %v2611
    %2613 = vmatmul.bf16.gmra.mxu0 %v2470
    %v2614 = vpop.f32.mrf.mxu0
    %v2615 = vadd.f32 %v2354, %v2614
    %v2616 = vpop.f32.mrf.mxu0
    %v2617 = vadd.f32 %v2354, %v2616
    %2618 = vdwg.mxu0
    %2619 = vmatpush.bf16.msra.mxu0 0
    %2620 = vmatpush.bf16.msra.mxu0 0
    %2621 = vmatpush.bf16.msra.mxu0 0
    %2622 = vmatpush.bf16.msra.mxu0 0
    %2623 = vmatpush.bf16.msra.mxu0 0
    %2624 = vmatpush.bf16.msra.mxu0 0
    %2625 = vmatpush.bf16.msra.mxu0 %v2427
    %2626 = vmatpush.bf16.msra.mxu0 %v2419
    %2627 = vmatmul.bf16.gmra.mxu0 %v2449
    %v2628 = vpop.f32.mrf.mxu0
    %v2629 = vadd.f32 %v2355, %v2628
    %v2630 = vpop.f32.mrf.mxu0
    %v2631 = vadd.f32 %v2355, %v2630
    %2632 = vmatmul.bf16.gmra.mxu0 %v2452
    %v2633 = vpop.f32.mrf.mxu0
    %v2634 = vadd.f32 %v2355, %v2633
    %v2635 = vpop.f32.mrf.mxu0
    %v2636 = vadd.f32 %v2355, %v2635
    %2637 = vmatmul.bf16.gmra.mxu0 %v2455
    %v2638 = vpop.f32.mrf.mxu0
    %v2639 = vadd.f32 %v2355, %v2638
    %v2640 = vpop.f32.mrf.mxu0
    %v2641 = vadd.f32 %v2355, %v2640
    %2642 = vmatmul.bf16.gmra.mxu0 %v2458
    %v2643 = vpop.f32.mrf.mxu0
    %v2644 = vadd.f32 %v2355, %v2643
    %v2645 = vpop.f32.mrf.mxu0
    %v2646 = vadd.f32 %v2355, %v2645
    %2647 = vmatmul.bf16.gmra.mxu0 %v2461
    %v2648 = vpop.f32.mrf.mxu0
    %v2649 = vadd.f32 %v2355, %v2648
    %v2650 = vpop.f32.mrf.mxu0
    %v2651 = vadd.f32 %v2355, %v2650
    %2652 = vmatmul.bf16.gmra.mxu0 %v2464
    %v2653 = vpop.f32.mrf.mxu0
    %v2654 = vadd.f32 %v2355, %v2653
    %v2655 = vpop.f32.mrf.mxu0
    %v2656 = vadd.f32 %v2355, %v2655
    %2657 = vmatmul.bf16.gmra.mxu0 %v2467
    %v2658 = vpop.f32.mrf.mxu0
    %v2659 = vadd.f32 %v2355, %v2658
    %v2660 = vpop.f32.mrf.mxu0
    %v2661 = vadd.f32 %v2355, %v2660
    %2662 = vmatmul.bf16.gmra.mxu0 %v2470
    %v2663 = vpop.f32.mrf.mxu0
    %v2664 = vadd.f32 %v2355, %v2663
    %v2665 = vpop.f32.mrf.mxu0
    %v2666 = vadd.f32 %v2355, %v2665
    %2667 = vdwg.mxu0
    %2668 = vmatpush.bf16.msra.mxu0 0
    %2669 = vmatpush.bf16.msra.mxu0 0
    %2670 = vmatpush.bf16.msra.mxu0 0
    %2671 = vmatpush.bf16.msra.mxu0 0
    %2672 = vmatpush.bf16.msra.mxu0 0
    %2673 = vmatpush.bf16.msra.mxu0 0
    %2674 = vmatpush.bf16.msra.mxu0 %v2428
    %2675 = vmatpush.bf16.msra.mxu0 %v2420
    %2676 = vmatmul.bf16.gmra.mxu0 %v2449
    %v2677 = vpop.f32.mrf.mxu0
    %v2678 = vadd.f32 %v2356, %v2677
    %v2679 = vpop.f32.mrf.mxu0
    %v2680 = vadd.f32 %v2356, %v2679
    %2681 = vmatmul.bf16.gmra.mxu0 %v2452
    %v2682 = vpop.f32.mrf.mxu0
    %v2683 = vadd.f32 %v2356, %v2682
    %v2684 = vpop.f32.mrf.mxu0
    %v2685 = vadd.f32 %v2356, %v2684
    %2686 = vmatmul.bf16.gmra.mxu0 %v2455
    %v2687 = vpop.f32.mrf.mxu0
    %v2688 = vadd.f32 %v2356, %v2687
    %v2689 = vpop.f32.mrf.mxu0
    %v2690 = vadd.f32 %v2356, %v2689
    %2691 = vmatmul.bf16.gmra.mxu0 %v2458
    %v2692 = vpop.f32.mrf.mxu0
    %v2693 = vadd.f32 %v2356, %v2692
    %v2694 = vpop.f32.mrf.mxu0
    %v2695 = vadd.f32 %v2356, %v2694
    %2696 = vmatmul.bf16.gmra.mxu0 %v2461
    %v2697 = vpop.f32.mrf.mxu0
    %v2698 = vadd.f32 %v2356, %v2697
    %v2699 = vpop.f32.mrf.mxu0
    %v2700 = vadd.f32 %v2356, %v2699
    %2701 = vmatmul.bf16.gmra.mxu0 %v2464
    %v2702 = vpop.f32.mrf.mxu0
    %v2703 = vadd.f32 %v2356, %v2702
    %v2704 = vpop.f32.mrf.mxu0
    %v2705 = vadd.f32 %v2356, %v2704
    %2706 = vmatmul.bf16.gmra.mxu0 %v2467
    %v2707 = vpop.f32.mrf.mxu0
    %v2708 = vadd.f32 %v2356, %v2707
    %v2709 = vpop.f32.mrf.mxu0
    %v2710 = vadd.f32 %v2356, %v2709
    %2711 = vmatmul.bf16.gmra.mxu0 %v2470
    %v2712 = vpop.f32.mrf.mxu0
    %v2713 = vadd.f32 %v2356, %v2712
    %v2714 = vpop.f32.mrf.mxu0
    %v2715 = vadd.f32 %v2356, %v2714
    %2716 = vdwg.mxu0
    %2717 = vmatpush.bf16.msra.mxu0 0
    %2718 = vmatpush.bf16.msra.mxu0 0
    %2719 = vmatpush.bf16.msra.mxu0 0
    %2720 = vmatpush.bf16.msra.mxu0 0
    %2721 = vmatpush.bf16.msra.mxu0 0
    %2722 = vmatpush.bf16.msra.mxu0 0
    %2723 = vmatpush.bf16.msra.mxu0 %v2429
    %2724 = vmatpush.bf16.msra.mxu0 %v2421
    %2725 = vmatmul.bf16.gmra.mxu0 %v2449
    %v2726 = vpop.f32.mrf.mxu0
    %v2727 = vadd.f32 %v2357, %v2726
    %v2728 = vpop.f32.mrf.mxu0
    %v2729 = vadd.f32 %v2357, %v2728
    %2730 = vmatmul.bf16.gmra.mxu0 %v2452
    %v2731 = vpop.f32.mrf.mxu0
    %v2732 = vadd.f32 %v2357, %v2731
    %v2733 = vpop.f32.mrf.mxu0
    %v2734 = vadd.f32 %v2357, %v2733
    %2735 = vmatmul.bf16.gmra.mxu0 %v2455
    %v2736 = vpop.f32.mrf.mxu0
    %v2737 = vadd.f32 %v2357, %v2736
    %v2738 = vpop.f32.mrf.mxu0
    %v2739 = vadd.f32 %v2357, %v2738
    %2740 = vmatmul.bf16.gmra.mxu0 %v2458
    %v2741 = vpop.f32.mrf.mxu0
    %v2742 = vadd.f32 %v2357, %v2741
    %v2743 = vpop.f32.mrf.mxu0
    %v2744 = vadd.f32 %v2357, %v2743
    %2745 = vmatmul.bf16.gmra.mxu0 %v2461
    %v2746 = vpop.f32.mrf.mxu0
    %v2747 = vadd.f32 %v2357, %v2746
    %v2748 = vpop.f32.mrf.mxu0
    %v2749 = vadd.f32 %v2357, %v2748
    %2750 = vmatmul.bf16.gmra.mxu0 %v2464
    %v2751 = vpop.f32.mrf.mxu0
    %v2752 = vadd.f32 %v2357, %v2751
    %v2753 = vpop.f32.mrf.mxu0
    %v2754 = vadd.f32 %v2357, %v2753
    %2755 = vmatmul.bf16.gmra.mxu0 %v2467
    %v2756 = vpop.f32.mrf.mxu0
    %v2757 = vadd.f32 %v2357, %v2756
    %v2758 = vpop.f32.mrf.mxu0
    %v2759 = vadd.f32 %v2357, %v2758
    %2760 = vmatmul.bf16.gmra.mxu0 %v2470
    %v2761 = vpop.f32.mrf.mxu0
    %v2762 = vadd.f32 %v2357, %v2761
    %v2763 = vpop.f32.mrf.mxu0
    %v2764 = vadd.f32 %v2357, %v2763
    %2765 = vdwg.mxu0
    %2766 = vmatpush.bf16.msra.mxu0 0
    %2767 = vmatpush.bf16.msra.mxu0 0
    %2768 = vmatpush.bf16.msra.mxu0 0
    %2769 = vmatpush.bf16.msra.mxu0 0
    %2770 = vmatpush.bf16.msra.mxu0 0
    %2771 = vmatpush.bf16.msra.mxu0 0
    %2772 = vmatpush.bf16.msra.mxu0 %v2430
    %2773 = vmatpush.bf16.msra.mxu0 %v2422
    %2774 = vmatmul.bf16.gmra.mxu0 %v2449
    %v2775 = vpop.f32.mrf.mxu0
    %v2776 = vadd.f32 %v2358, %v2775
    %v2777 = vpop.f32.mrf.mxu0
    %v2778 = vadd.f32 %v2358, %v2777
    %2779 = vmatmul.bf16.gmra.mxu0 %v2452
    %v2780 = vpop.f32.mrf.mxu0
    %v2781 = vadd.f32 %v2358, %v2780
    %v2782 = vpop.f32.mrf.mxu0
    %v2783 = vadd.f32 %v2358, %v2782
    %2784 = vmatmul.bf16.gmra.mxu0 %v2455
    %v2785 = vpop.f32.mrf.mxu0
    %v2786 = vadd.f32 %v2358, %v2785
    %v2787 = vpop.f32.mrf.mxu0
    %v2788 = vadd.f32 %v2358, %v2787
    %2789 = vmatmul.bf16.gmra.mxu0 %v2458
    %v2790 = vpop.f32.mrf.mxu0
    %v2791 = vadd.f32 %v2358, %v2790
    %v2792 = vpop.f32.mrf.mxu0
    %v2793 = vadd.f32 %v2358, %v2792
    %2794 = vmatmul.bf16.gmra.mxu0 %v2461
    %v2795 = vpop.f32.mrf.mxu0
    %v2796 = vadd.f32 %v2358, %v2795
    %v2797 = vpop.f32.mrf.mxu0
    %v2798 = vadd.f32 %v2358, %v2797
    %2799 = vmatmul.bf16.gmra.mxu0 %v2464
    %v2800 = vpop.f32.mrf.mxu0
    %v2801 = vadd.f32 %v2358, %v2800
    %v2802 = vpop.f32.mrf.mxu0
    %v2803 = vadd.f32 %v2358, %v2802
    %2804 = vmatmul.bf16.gmra.mxu0 %v2467
    %v2805 = vpop.f32.mrf.mxu0
    %v2806 = vadd.f32 %v2358, %v2805
    %v2807 = vpop.f32.mrf.mxu0
    %v2808 = vadd.f32 %v2358, %v2807
    %2809 = vmatmul.bf16.gmra.mxu0 %v2470
    %v2810 = vpop.f32.mrf.mxu0
    %v2811 = vadd.f32 %v2358, %v2810
    %v2812 = vpop.f32.mrf.mxu0
    %v2813 = vadd.f32 %v2358, %v2812
    %2814 = vdwg.mxu0
    %2815 = vmatpush.bf16.msra.mxu0 0
    %2816 = vmatpush.bf16.msra.mxu0 0
    %2817 = vmatpush.bf16.msra.mxu0 0
    %2818 = vmatpush.bf16.msra.mxu0 0
    %2819 = vmatpush.bf16.msra.mxu0 0
    %2820 = vmatpush.bf16.msra.mxu0 0
    %2821 = vmatpush.bf16.msra.mxu0 %v2431
    %2822 = vmatpush.bf16.msra.mxu0 %v2423
    %2823 = vmatmul.bf16.gmra.mxu0 %v2449
    %v2824 = vpop.f32.mrf.mxu0
    %v2825 = vadd.f32 %v2359, %v2824
    %v2826 = vpop.f32.mrf.mxu0
    %v2827 = vadd.f32 %v2359, %v2826
    %2828 = vmatmul.bf16.gmra.mxu0 %v2452
    %v2829 = vpop.f32.mrf.mxu0
    %v2830 = vadd.f32 %v2359, %v2829
    %v2831 = vpop.f32.mrf.mxu0
    %v2832 = vadd.f32 %v2359, %v2831
    %2833 = vmatmul.bf16.gmra.mxu0 %v2455
    %v2834 = vpop.f32.mrf.mxu0
    %v2835 = vadd.f32 %v2359, %v2834
    %v2836 = vpop.f32.mrf.mxu0
    %v2837 = vadd.f32 %v2359, %v2836
    %2838 = vmatmul.bf16.gmra.mxu0 %v2458
    %v2839 = vpop.f32.mrf.mxu0
    %v2840 = vadd.f32 %v2359, %v2839
    %v2841 = vpop.f32.mrf.mxu0
    %v2842 = vadd.f32 %v2359, %v2841
    %2843 = vmatmul.bf16.gmra.mxu0 %v2461
    %v2844 = vpop.f32.mrf.mxu0
    %v2845 = vadd.f32 %v2359, %v2844
    %v2846 = vpop.f32.mrf.mxu0
    %v2847 = vadd.f32 %v2359, %v2846
    %2848 = vmatmul.bf16.gmra.mxu0 %v2464
    %v2849 = vpop.f32.mrf.mxu0
    %v2850 = vadd.f32 %v2359, %v2849
    %v2851 = vpop.f32.mrf.mxu0
    %v2852 = vadd.f32 %v2359, %v2851
    %2853 = vmatmul.bf16.gmra.mxu0 %v2467
    %v2854 = vpop.f32.mrf.mxu0
    %v2855 = vadd.f32 %v2359, %v2854
    %v2856 = vpop.f32.mrf.mxu0
    %v2857 = vadd.f32 %v2359, %v2856
    %2858 = vmatmul.bf16.gmra.mxu0 %v2470
    %v2859 = vpop.f32.mrf.mxu0
    %v2860 = vadd.f32 %v2359, %v2859
    %v2861 = vpop.f32.mrf.mxu0
    %v2862 = vadd.f32 %v2359, %v2861
    %2863 = vdwg.mxu0
    %2864 = vmatpush.bf16.msra.mxu0 %v2247
    %2865 = vmatpush.bf16.msra.mxu0 %v2246
    %2866 = vmatpush.bf16.msra.mxu0 %v2245
    %2867 = vmatpush.bf16.msra.mxu0 %v2244
    %2868 = vmatpush.bf16.msra.mxu0 %v2243
    %2869 = vmatpush.bf16.msra.mxu0 %v2242
    %2870 = vmatpush.bf16.msra.mxu0 %v2241
    %2871 = vmatpush.bf16.msra.mxu0 %v2240
    %2872 = vmatmul.bf16.gmra.mxu0 %v186
    %v2873 = vpop.f32.mrf.mxu0
    %v2874 = vadd.f32 0.0, %v2873
    %v2875 = vpop.f32.mrf.mxu0
    %v2876 = vadd.f32 0.0, %v2875
    %2877 = vmatmul.bf16.gmra.mxu0 %v187
    %v2878 = vpop.f32.mrf.mxu0
    %v2879 = vadd.f32 0.0, %v2878
    %v2880 = vpop.f32.mrf.mxu0
    %v2881 = vadd.f32 0.0, %v2880
    %2882 = vmatmul.bf16.gmra.mxu0 %v188
    %v2883 = vpop.f32.mrf.mxu0
    %v2884 = vadd.f32 0.0, %v2883
    %v2885 = vpop.f32.mrf.mxu0
    %v2886 = vadd.f32 0.0, %v2885
    %2887 = vmatmul.bf16.gmra.mxu0 %v189
    %v2888 = vpop.f32.mrf.mxu0
    %v2889 = vadd.f32 0.0, %v2888
    %v2890 = vpop.f32.mrf.mxu0
    %v2891 = vadd.f32 0.0, %v2890
    %2892 = vmatmul.bf16.gmra.mxu0 %v190
    %v2893 = vpop.f32.mrf.mxu0
    %v2894 = vadd.f32 0.0, %v2893
    %v2895 = vpop.f32.mrf.mxu0
    %v2896 = vadd.f32 0.0, %v2895
    %2897 = vmatmul.bf16.gmra.mxu0 %v191
    %v2898 = vpop.f32.mrf.mxu0
    %v2899 = vadd.f32 0.0, %v2898
    %v2900 = vpop.f32.mrf.mxu0
    %v2901 = vadd.f32 0.0, %v2900
    %2902 = vmatmul.bf16.gmra.mxu0 %v192
    %v2903 = vpop.f32.mrf.mxu0
    %v2904 = vadd.f32 0.0, %v2903
    %v2905 = vpop.f32.mrf.mxu0
    %v2906 = vadd.f32 0.0, %v2905
    %2907 = vmatmul.bf16.gmra.mxu0 %v193
    %v2908 = vpop.f32.mrf.mxu0
    %v2909 = vadd.f32 0.0, %v2908
    %v2910 = vpop.f32.mrf.mxu0
    %v2911 = vadd.f32 0.0, %v2910
    %2912 = vdwg.mxu0
    %2914 = vset.pattern.permute.xlu0 0
    %2915 = vperm.xlu0 %2914, %v2874
    %v2916 = vpop.permute.xlu0 %2915
    %2919 = vset.pattern.permute.xlu0 0
    %2920 = vperm.xlu0 %2919, %v2876
    %v2921 = vpop.permute.xlu0 %2920
    %2924 = vset.pattern.permute.xlu0 0
    %2925 = vperm.xlu0 %2924, %v2879
    %v2926 = vpop.permute.xlu0 %2925
    %2929 = vset.pattern.permute.xlu0 0
    %2930 = vperm.xlu0 %2929, %v2881
    %v2931 = vpop.permute.xlu0 %2930
    %2934 = vset.pattern.permute.xlu0 0
    %2935 = vperm.xlu0 %2934, %v2884
    %v2936 = vpop.permute.xlu0 %2935
    %2939 = vset.pattern.permute.xlu0 0
    %2940 = vperm.xlu0 %2939, %v2886
    %v2941 = vpop.permute.xlu0 %2940
    %2944 = vset.pattern.permute.xlu0 0
    %2945 = vperm.xlu0 %2944, %v2889
    %v2946 = vpop.permute.xlu0 %2945
    %2949 = vset.pattern.permute.xlu0 0
    %2950 = vperm.xlu0 %2949, %v2891
    %v2951 = vpop.permute.xlu0 %2950
    %2954 = vset.pattern.permute.xlu0 0
    %2955 = vperm.xlu0 %2954, %v2894
    %v2956 = vpop.permute.xlu0 %2955
    %2959 = vset.pattern.permute.xlu0 0
    %2960 = vperm.xlu0 %2959, %v2896
    %v2961 = vpop.permute.xlu0 %2960
    %2964 = vset.pattern.permute.xlu0 0
    %2965 = vperm.xlu0 %2964, %v2899
    %v2966 = vpop.permute.xlu0 %2965
    %2969 = vset.pattern.permute.xlu0 0
    %2970 = vperm.xlu0 %2969, %v2901
    %v2971 = vpop.permute.xlu0 %2970
    %2974 = vset.pattern.permute.xlu0 0
    %2975 = vperm.xlu0 %2974, %v2904
    %v2976 = vpop.permute.xlu0 %2975
    %2979 = vset.pattern.permute.xlu0 0
    %2980 = vperm.xlu0 %2979, %v2906
    %v2981 = vpop.permute.xlu0 %2980
    %2984 = vset.pattern.permute.xlu0 0
    %2985 = vperm.xlu0 %2984, %v2909
    %v2986 = vpop.permute.xlu0 %2985
    %2989 = vset.pattern.permute.xlu0 0
    %2990 = vperm.xlu0 %2989, %v2911
    %v2991 = vpop.permute.xlu0 %2990
    %v2993 = vmul.f32 %v2916, %v2482
    %v2994 = vmul.f32 %v2921, %v2484
    %v2995 = vmul.f32 %v2926, %v2487
    %v2996 = vmul.f32 %v2931, %v2489
    %v2997 = vmul.f32 %v2936, %v2492
    %v2998 = vmul.f32 %v2941, %v2494
    %v2999 = vmul.f32 %v2946, %v2497
    %v3000 = vmul.f32 %v2951, %v2499
    %v3001 = vmul.f32 %v2956, %v2502
    %v3002 = vmul.f32 %v2961, %v2504
    %v3003 = vmul.f32 %v2966, %v2507
    %v3004 = vmul.f32 %v2971, %v2509
    %v3005 = vmul.f32 %v2976, %v2512
    %v3006 = vmul.f32 %v2981, %v2514
    %v3007 = vmul.f32 %v2986, %v2517
    %v3008 = vmul.f32 %v2991, %v2519
    %3009 = vset.pattern.permute.xlu0 1
    %3010 = vperm.xlu0 %3009, %v2874
    %v3011 = vpop.permute.xlu0 %3010
    %3013 = vset.pattern.permute.xlu0 1
    %3014 = vperm.xlu0 %3013, %v2876
    %v3015 = vpop.permute.xlu0 %3014
    %3017 = vset.pattern.permute.xlu0 1
    %3018 = vperm.xlu0 %3017, %v2879
    %v3019 = vpop.permute.xlu0 %3018
    %3021 = vset.pattern.permute.xlu0 1
    %3022 = vperm.xlu0 %3021, %v2881
    %v3023 = vpop.permute.xlu0 %3022
    %3025 = vset.pattern.permute.xlu0 1
    %3026 = vperm.xlu0 %3025, %v2884
    %v3027 = vpop.permute.xlu0 %3026
    %3029 = vset.pattern.permute.xlu0 1
    %3030 = vperm.xlu0 %3029, %v2886
    %v3031 = vpop.permute.xlu0 %3030
    %3033 = vset.pattern.permute.xlu0 1
    %3034 = vperm.xlu0 %3033, %v2889
    %v3035 = vpop.permute.xlu0 %3034
    %3037 = vset.pattern.permute.xlu0 1
    %3038 = vperm.xlu0 %3037, %v2891
    %v3039 = vpop.permute.xlu0 %3038
    %3041 = vset.pattern.permute.xlu0 1
    %3042 = vperm.xlu0 %3041, %v2894
    %v3043 = vpop.permute.xlu0 %3042
    %3045 = vset.pattern.permute.xlu0 1
    %3046 = vperm.xlu0 %3045, %v2896
    %v3047 = vpop.permute.xlu0 %3046
    %3049 = vset.pattern.permute.xlu0 1
    %3050 = vperm.xlu0 %3049, %v2899
    %v3051 = vpop.permute.xlu0 %3050
    %3053 = vset.pattern.permute.xlu0 1
    %3054 = vperm.xlu0 %3053, %v2901
    %v3055 = vpop.permute.xlu0 %3054
    %3057 = vset.pattern.permute.xlu0 1
    %3058 = vperm.xlu0 %3057, %v2904
    %v3059 = vpop.permute.xlu0 %3058
    %3061 = vset.pattern.permute.xlu0 1
    %3062 = vperm.xlu0 %3061, %v2906
    %v3063 = vpop.permute.xlu0 %3062
    %3065 = vset.pattern.permute.xlu0 1
    %3066 = vperm.xlu0 %3065, %v2909
    %v3067 = vpop.permute.xlu0 %3066
    %3069 = vset.pattern.permute.xlu0 1
    %3070 = vperm.xlu0 %3069, %v2911
    %v3071 = vpop.permute.xlu0 %3070
    %v3073 = vmul.f32 %v3011, %v2482
    %v3074 = vmul.f32 %v3015, %v2484
    %v3075 = vmul.f32 %v3019, %v2487
    %v3076 = vmul.f32 %v3023, %v2489
    %v3077 = vmul.f32 %v3027, %v2492
    %v3078 = vmul.f32 %v3031, %v2494
    %v3079 = vmul.f32 %v3035, %v2497
    %v3080 = vmul.f32 %v3039, %v2499
    %v3081 = vmul.f32 %v3043, %v2502
    %v3082 = vmul.f32 %v3047, %v2504
    %v3083 = vmul.f32 %v3051, %v2507
    %v3084 = vmul.f32 %v3055, %v2509
    %v3085 = vmul.f32 %v3059, %v2512
    %v3086 = vmul.f32 %v3063, %v2514
    %v3087 = vmul.f32 %v3067, %v2517
    %v3088 = vmul.f32 %v3071, %v2519
    %3105 = vrot.lane.b32.xlu0 %v3073, 96
    %v3106 = vpop.permute.xlu0 %3105
    %3107 = vrot.lane.b32.xlu0 %v3074, 96
    %v3108 = vpop.permute.xlu0 %3107
    %3109 = vrot.lane.b32.xlu0 %v3075, 96
    %v3110 = vpop.permute.xlu0 %3109
    %3111 = vrot.lane.b32.xlu0 %v3076, 96
    %v3112 = vpop.permute.xlu0 %3111
    %3113 = vrot.lane.b32.xlu0 %v3077, 96
    %v3114 = vpop.permute.xlu0 %3113
    %3115 = vrot.lane.b32.xlu0 %v3078, 96
    %v3116 = vpop.permute.xlu0 %3115
    %3117 = vrot.lane.b32.xlu0 %v3079, 96
    %v3118 = vpop.permute.xlu0 %3117
    %3119 = vrot.lane.b32.xlu0 %v3080, 96
    %v3120 = vpop.permute.xlu0 %3119
    %3121 = vrot.lane.b32.xlu0 %v3081, 96
    %v3122 = vpop.permute.xlu0 %3121
    %3123 = vrot.lane.b32.xlu0 %v3082, 96
    %v3124 = vpop.permute.xlu0 %3123
    %3125 = vrot.lane.b32.xlu0 %v3083, 96
    %v3126 = vpop.permute.xlu0 %3125
    %3127 = vrot.lane.b32.xlu0 %v3084, 96
    %v3128 = vpop.permute.xlu0 %3127
    %3129 = vrot.lane.b32.xlu0 %v3085, 96
    %v3130 = vpop.permute.xlu0 %3129
    %3131 = vrot.lane.b32.xlu0 %v3086, 96
    %v3132 = vpop.permute.xlu0 %3131
    %3133 = vrot.lane.b32.xlu0 %v3087, 96
    %v3134 = vpop.permute.xlu0 %3133
    %3135 = vrot.lane.b32.xlu0 %v3088, 96
    %v3136 = vpop.permute.xlu0 %3135
    %v3153 = vadd.f32 %v2993, %v3106
    %v3154 = vadd.f32 %v2994, %v3108
    %v3155 = vadd.f32 %v2995, %v3110
    %v3156 = vadd.f32 %v2996, %v3112
    %v3157 = vadd.f32 %v2997, %v3114
    %v3158 = vadd.f32 %v2998, %v3116
    %v3159 = vadd.f32 %v2999, %v3118
    %v3160 = vadd.f32 %v3000, %v3120
    %v3161 = vadd.f32 %v3001, %v3122
    %v3162 = vadd.f32 %v3002, %v3124
    %v3163 = vadd.f32 %v3003, %v3126
    %v3164 = vadd.f32 %v3004, %v3128
    %v3165 = vadd.f32 %v3005, %v3130
    %v3166 = vadd.f32 %v3006, %v3132
    %v3167 = vadd.f32 %v3007, %v3134
    %v3168 = vadd.f32 %v3008, %v3136
    %3169 = vset.pattern.permute.xlu0 2
    %3170 = vperm.xlu0 %3169, %v2874
    %v3171 = vpop.permute.xlu0 %3170
    %3173 = vset.pattern.permute.xlu0 2
    %3174 = vperm.xlu0 %3173, %v2876
    %v3175 = vpop.permute.xlu0 %3174
    %3177 = vset.pattern.permute.xlu0 2
    %3178 = vperm.xlu0 %3177, %v2879
    %v3179 = vpop.permute.xlu0 %3178
    %3181 = vset.pattern.permute.xlu0 2
    %3182 = vperm.xlu0 %3181, %v2881
    %v3183 = vpop.permute.xlu0 %3182
    %3185 = vset.pattern.permute.xlu0 2
    %3186 = vperm.xlu0 %3185, %v2884
    %v3187 = vpop.permute.xlu0 %3186
    %3189 = vset.pattern.permute.xlu0 2
    %3190 = vperm.xlu0 %3189, %v2886
    %v3191 = vpop.permute.xlu0 %3190
    %3193 = vset.pattern.permute.xlu0 2
    %3194 = vperm.xlu0 %3193, %v2889
    %v3195 = vpop.permute.xlu0 %3194
    %3197 = vset.pattern.permute.xlu0 2
    %3198 = vperm.xlu0 %3197, %v2891
    %v3199 = vpop.permute.xlu0 %3198
    %3201 = vset.pattern.permute.xlu0 2
    %3202 = vperm.xlu0 %3201, %v2894
    %v3203 = vpop.permute.xlu0 %3202
    %3205 = vset.pattern.permute.xlu0 2
    %3206 = vperm.xlu0 %3205, %v2896
    %v3207 = vpop.permute.xlu0 %3206
    %3209 = vset.pattern.permute.xlu0 2
    %3210 = vperm.xlu0 %3209, %v2899
    %v3211 = vpop.permute.xlu0 %3210
    %3213 = vset.pattern.permute.xlu0 2
    %3214 = vperm.xlu0 %3213, %v2901
    %v3215 = vpop.permute.xlu0 %3214
    %3217 = vset.pattern.permute.xlu0 2
    %3218 = vperm.xlu0 %3217, %v2904
    %v3219 = vpop.permute.xlu0 %3218
    %3221 = vset.pattern.permute.xlu0 2
    %3222 = vperm.xlu0 %3221, %v2906
    %v3223 = vpop.permute.xlu0 %3222
    %3225 = vset.pattern.permute.xlu0 2
    %3226 = vperm.xlu0 %3225, %v2909
    %v3227 = vpop.permute.xlu0 %3226
    %3229 = vset.pattern.permute.xlu0 2
    %3230 = vperm.xlu0 %3229, %v2911
    %v3231 = vpop.permute.xlu0 %3230
    %v3233 = vmul.f32 %v3171, %v2482
    %v3234 = vmul.f32 %v3175, %v2484
    %v3235 = vmul.f32 %v3179, %v2487
    %v3236 = vmul.f32 %v3183, %v2489
    %v3237 = vmul.f32 %v3187, %v2492
    %v3238 = vmul.f32 %v3191, %v2494
    %v3239 = vmul.f32 %v3195, %v2497
    %v3240 = vmul.f32 %v3199, %v2499
    %v3241 = vmul.f32 %v3203, %v2502
    %v3242 = vmul.f32 %v3207, %v2504
    %v3243 = vmul.f32 %v3211, %v2507
    %v3244 = vmul.f32 %v3215, %v2509
    %v3245 = vmul.f32 %v3219, %v2512
    %v3246 = vmul.f32 %v3223, %v2514
    %v3247 = vmul.f32 %v3227, %v2517
    %v3248 = vmul.f32 %v3231, %v2519
    %3265 = vrot.lane.b32.xlu0 %v3233, 64
    %v3266 = vpop.permute.xlu0 %3265
    %3267 = vrot.lane.b32.xlu0 %v3234, 64
    %v3268 = vpop.permute.xlu0 %3267
    %3269 = vrot.lane.b32.xlu0 %v3235, 64
    %v3270 = vpop.permute.xlu0 %3269
    %3271 = vrot.lane.b32.xlu0 %v3236, 64
    %v3272 = vpop.permute.xlu0 %3271
    %3273 = vrot.lane.b32.xlu0 %v3237, 64
    %v3274 = vpop.permute.xlu0 %3273
    %3275 = vrot.lane.b32.xlu0 %v3238, 64
    %v3276 = vpop.permute.xlu0 %3275
    %3277 = vrot.lane.b32.xlu0 %v3239, 64
    %v3278 = vpop.permute.xlu0 %3277
    %3279 = vrot.lane.b32.xlu0 %v3240, 64
    %v3280 = vpop.permute.xlu0 %3279
    %3281 = vrot.lane.b32.xlu0 %v3241, 64
    %v3282 = vpop.permute.xlu0 %3281
    %3283 = vrot.lane.b32.xlu0 %v3242, 64
    %v3284 = vpop.permute.xlu0 %3283
    %3285 = vrot.lane.b32.xlu0 %v3243, 64
    %v3286 = vpop.permute.xlu0 %3285
    %3287 = vrot.lane.b32.xlu0 %v3244, 64
    %v3288 = vpop.permute.xlu0 %3287
    %3289 = vrot.lane.b32.xlu0 %v3245, 64
    %v3290 = vpop.permute.xlu0 %3289
    %3291 = vrot.lane.b32.xlu0 %v3246, 64
    %v3292 = vpop.permute.xlu0 %3291
    %3293 = vrot.lane.b32.xlu0 %v3247, 64
    %v3294 = vpop.permute.xlu0 %3293
    %3295 = vrot.lane.b32.xlu0 %v3248, 64
    %v3296 = vpop.permute.xlu0 %3295
    %v3313 = vadd.f32 %v3153, %v3266
    %v3314 = vadd.f32 %v3154, %v3268
    %v3315 = vadd.f32 %v3155, %v3270
    %v3316 = vadd.f32 %v3156, %v3272
    %v3317 = vadd.f32 %v3157, %v3274
    %v3318 = vadd.f32 %v3158, %v3276
    %v3319 = vadd.f32 %v3159, %v3278
    %v3320 = vadd.f32 %v3160, %v3280
    %v3321 = vadd.f32 %v3161, %v3282
    %v3322 = vadd.f32 %v3162, %v3284
    %v3323 = vadd.f32 %v3163, %v3286
    %v3324 = vadd.f32 %v3164, %v3288
    %v3325 = vadd.f32 %v3165, %v3290
    %v3326 = vadd.f32 %v3166, %v3292
    %v3327 = vadd.f32 %v3167, %v3294
    %v3328 = vadd.f32 %v3168, %v3296
    %3329 = vset.pattern.permute.xlu0 3
    %3330 = vperm.xlu0 %3329, %v2874
    %v3331 = vpop.permute.xlu0 %3330
    %3333 = vset.pattern.permute.xlu0 3
    %3334 = vperm.xlu0 %3333, %v2876
    %v3335 = vpop.permute.xlu0 %3334
    %3337 = vset.pattern.permute.xlu0 3
    %3338 = vperm.xlu0 %3337, %v2879
    %v3339 = vpop.permute.xlu0 %3338
    %3341 = vset.pattern.permute.xlu0 3
    %3342 = vperm.xlu0 %3341, %v2881
    %v3343 = vpop.permute.xlu0 %3342
    %3345 = vset.pattern.permute.xlu0 3
    %3346 = vperm.xlu0 %3345, %v2884
    %v3347 = vpop.permute.xlu0 %3346
    %3349 = vset.pattern.permute.xlu0 3
    %3350 = vperm.xlu0 %3349, %v2886
    %v3351 = vpop.permute.xlu0 %3350
    %3353 = vset.pattern.permute.xlu0 3
    %3354 = vperm.xlu0 %3353, %v2889
    %v3355 = vpop.permute.xlu0 %3354
    %3357 = vset.pattern.permute.xlu0 3
    %3358 = vperm.xlu0 %3357, %v2891
    %v3359 = vpop.permute.xlu0 %3358
    %3361 = vset.pattern.permute.xlu0 3
    %3362 = vperm.xlu0 %3361, %v2894
    %v3363 = vpop.permute.xlu0 %3362
    %3365 = vset.pattern.permute.xlu0 3
    %3366 = vperm.xlu0 %3365, %v2896
    %v3367 = vpop.permute.xlu0 %3366
    %3369 = vset.pattern.permute.xlu0 3
    %3370 = vperm.xlu0 %3369, %v2899
    %v3371 = vpop.permute.xlu0 %3370
    %3373 = vset.pattern.permute.xlu0 3
    %3374 = vperm.xlu0 %3373, %v2901
    %v3375 = vpop.permute.xlu0 %3374
    %3377 = vset.pattern.permute.xlu0 3
    %3378 = vperm.xlu0 %3377, %v2904
    %v3379 = vpop.permute.xlu0 %3378
    %3381 = vset.pattern.permute.xlu0 3
    %3382 = vperm.xlu0 %3381, %v2906
    %v3383 = vpop.permute.xlu0 %3382
    %3385 = vset.pattern.permute.xlu0 3
    %3386 = vperm.xlu0 %3385, %v2909
    %v3387 = vpop.permute.xlu0 %3386
    %3389 = vset.pattern.permute.xlu0 3
    %3390 = vperm.xlu0 %3389, %v2911
    %v3391 = vpop.permute.xlu0 %3390
    %v3393 = vmul.f32 %v3331, %v2482
    %v3394 = vmul.f32 %v3335, %v2484
    %v3395 = vmul.f32 %v3339, %v2487
    %v3396 = vmul.f32 %v3343, %v2489
    %v3397 = vmul.f32 %v3347, %v2492
    %v3398 = vmul.f32 %v3351, %v2494
    %v3399 = vmul.f32 %v3355, %v2497
    %v3400 = vmul.f32 %v3359, %v2499
    %v3401 = vmul.f32 %v3363, %v2502
    %v3402 = vmul.f32 %v3367, %v2504
    %v3403 = vmul.f32 %v3371, %v2507
    %v3404 = vmul.f32 %v3375, %v2509
    %v3405 = vmul.f32 %v3379, %v2512
    %v3406 = vmul.f32 %v3383, %v2514
    %v3407 = vmul.f32 %v3387, %v2517
    %v3408 = vmul.f32 %v3391, %v2519
    %3425 = vrot.lane.b32.xlu0 %v3393, 32
    %v3426 = vpop.permute.xlu0 %3425
    %3427 = vrot.lane.b32.xlu0 %v3394, 32
    %v3428 = vpop.permute.xlu0 %3427
    %3429 = vrot.lane.b32.xlu0 %v3395, 32
    %v3430 = vpop.permute.xlu0 %3429
    %3431 = vrot.lane.b32.xlu0 %v3396, 32
    %v3432 = vpop.permute.xlu0 %3431
    %3433 = vrot.lane.b32.xlu0 %v3397, 32
    %v3434 = vpop.permute.xlu0 %3433
    %3435 = vrot.lane.b32.xlu0 %v3398, 32
    %v3436 = vpop.permute.xlu0 %3435
    %3437 = vrot.lane.b32.xlu0 %v3399, 32
    %v3438 = vpop.permute.xlu0 %3437
    %3439 = vrot.lane.b32.xlu0 %v3400, 32
    %v3440 = vpop.permute.xlu0 %3439
    %3441 = vrot.lane.b32.xlu0 %v3401, 32
    %v3442 = vpop.permute.xlu0 %3441
    %3443 = vrot.lane.b32.xlu0 %v3402, 32
    %v3444 = vpop.permute.xlu0 %3443
    %3445 = vrot.lane.b32.xlu0 %v3403, 32
    %v3446 = vpop.permute.xlu0 %3445
    %3447 = vrot.lane.b32.xlu0 %v3404, 32
    %v3448 = vpop.permute.xlu0 %3447
    %3449 = vrot.lane.b32.xlu0 %v3405, 32
    %v3450 = vpop.permute.xlu0 %3449
    %3451 = vrot.lane.b32.xlu0 %v3406, 32
    %v3452 = vpop.permute.xlu0 %3451
    %3453 = vrot.lane.b32.xlu0 %v3407, 32
    %v3454 = vpop.permute.xlu0 %3453
    %3455 = vrot.lane.b32.xlu0 %v3408, 32
    %v3456 = vpop.permute.xlu0 %3455
    %v3473 = vadd.f32 %v3313, %v3426
    %v3474 = vadd.f32 %v3314, %v3428
    %v3475 = vadd.f32 %v3315, %v3430
    %v3476 = vadd.f32 %v3316, %v3432
    %v3477 = vadd.f32 %v3317, %v3434
    %v3478 = vadd.f32 %v3318, %v3436
    %v3479 = vadd.f32 %v3319, %v3438
    %v3480 = vadd.f32 %v3320, %v3440
    %v3481 = vadd.f32 %v3321, %v3442
    %v3482 = vadd.f32 %v3322, %v3444
    %v3483 = vadd.f32 %v3323, %v3446
    %v3484 = vadd.f32 %v3324, %v3448
    %v3485 = vadd.f32 %v3325, %v3450
    %v3486 = vadd.f32 %v3326, %v3452
    %v3487 = vadd.f32 %v3327, %v3454
    %v3488 = vadd.f32 %v3328, %v3456
    %3489 = vset.pattern.permute.xlu0 4
    %3490 = vperm.xlu0 %3489, %v2874
    %v3491 = vpop.permute.xlu0 %3490
    %3493 = vset.pattern.permute.xlu0 4
    %3494 = vperm.xlu0 %3493, %v2876
    %v3495 = vpop.permute.xlu0 %3494
    %3497 = vset.pattern.permute.xlu0 4
    %3498 = vperm.xlu0 %3497, %v2879
    %v3499 = vpop.permute.xlu0 %3498
    %3501 = vset.pattern.permute.xlu0 4
    %3502 = vperm.xlu0 %3501, %v2881
    %v3503 = vpop.permute.xlu0 %3502
    %3505 = vset.pattern.permute.xlu0 4
    %3506 = vperm.xlu0 %3505, %v2884
    %v3507 = vpop.permute.xlu0 %3506
    %3509 = vset.pattern.permute.xlu0 4
    %3510 = vperm.xlu0 %3509, %v2886
    %v3511 = vpop.permute.xlu0 %3510
    %3513 = vset.pattern.permute.xlu0 4
    %3514 = vperm.xlu0 %3513, %v2889
    %v3515 = vpop.permute.xlu0 %3514
    %3517 = vset.pattern.permute.xlu0 4
    %3518 = vperm.xlu0 %3517, %v2891
    %v3519 = vpop.permute.xlu0 %3518
    %3521 = vset.pattern.permute.xlu0 4
    %3522 = vperm.xlu0 %3521, %v2894
    %v3523 = vpop.permute.xlu0 %3522
    %3525 = vset.pattern.permute.xlu0 4
    %3526 = vperm.xlu0 %3525, %v2896
    %v3527 = vpop.permute.xlu0 %3526
    %3529 = vset.pattern.permute.xlu0 4
    %3530 = vperm.xlu0 %3529, %v2899
    %v3531 = vpop.permute.xlu0 %3530
    %3533 = vset.pattern.permute.xlu0 4
    %3534 = vperm.xlu0 %3533, %v2901
    %v3535 = vpop.permute.xlu0 %3534
    %3537 = vset.pattern.permute.xlu0 4
    %3538 = vperm.xlu0 %3537, %v2904
    %v3539 = vpop.permute.xlu0 %3538
    %3541 = vset.pattern.permute.xlu0 4
    %3542 = vperm.xlu0 %3541, %v2906
    %v3543 = vpop.permute.xlu0 %3542
    %3545 = vset.pattern.permute.xlu0 4
    %3546 = vperm.xlu0 %3545, %v2909
    %v3547 = vpop.permute.xlu0 %3546
    %3549 = vset.pattern.permute.xlu0 4
    %3550 = vperm.xlu0 %3549, %v2911
    %v3551 = vpop.permute.xlu0 %3550
    %v3553 = vmul.f32 %v3491, %v2531
    %v3554 = vmul.f32 %v3495, %v2533
    %v3555 = vmul.f32 %v3499, %v2536
    %v3556 = vmul.f32 %v3503, %v2538
    %v3557 = vmul.f32 %v3507, %v2541
    %v3558 = vmul.f32 %v3511, %v2543
    %v3559 = vmul.f32 %v3515, %v2546
    %v3560 = vmul.f32 %v3519, %v2548
    %v3561 = vmul.f32 %v3523, %v2551
    %v3562 = vmul.f32 %v3527, %v2553
    %v3563 = vmul.f32 %v3531, %v2556
    %v3564 = vmul.f32 %v3535, %v2558
    %v3565 = vmul.f32 %v3539, %v2561
    %v3566 = vmul.f32 %v3543, %v2563
    %v3567 = vmul.f32 %v3547, %v2566
    %v3568 = vmul.f32 %v3551, %v2568
    %v3569 = vadd.f32 %v3473, %v3553
    %v3570 = vadd.f32 %v3474, %v3554
    %v3571 = vadd.f32 %v3475, %v3555
    %v3572 = vadd.f32 %v3476, %v3556
    %v3573 = vadd.f32 %v3477, %v3557
    %v3574 = vadd.f32 %v3478, %v3558
    %v3575 = vadd.f32 %v3479, %v3559
    %v3576 = vadd.f32 %v3480, %v3560
    %v3577 = vadd.f32 %v3481, %v3561
    %v3578 = vadd.f32 %v3482, %v3562
    %v3579 = vadd.f32 %v3483, %v3563
    %v3580 = vadd.f32 %v3484, %v3564
    %v3581 = vadd.f32 %v3485, %v3565
    %v3582 = vadd.f32 %v3486, %v3566
    %v3583 = vadd.f32 %v3487, %v3567
    %v3584 = vadd.f32 %v3488, %v3568
    %3585 = vset.pattern.permute.xlu0 5
    %3586 = vperm.xlu0 %3585, %v2874
    %v3587 = vpop.permute.xlu0 %3586
    %3589 = vset.pattern.permute.xlu0 5
    %3590 = vperm.xlu0 %3589, %v2876
    %v3591 = vpop.permute.xlu0 %3590
    %3593 = vset.pattern.permute.xlu0 5
    %3594 = vperm.xlu0 %3593, %v2879
    %v3595 = vpop.permute.xlu0 %3594
    %3597 = vset.pattern.permute.xlu0 5
    %3598 = vperm.xlu0 %3597, %v2881
    %v3599 = vpop.permute.xlu0 %3598
    %3601 = vset.pattern.permute.xlu0 5
    %3602 = vperm.xlu0 %3601, %v2884
    %v3603 = vpop.permute.xlu0 %3602
    %3605 = vset.pattern.permute.xlu0 5
    %3606 = vperm.xlu0 %3605, %v2886
    %v3607 = vpop.permute.xlu0 %3606
    %3609 = vset.pattern.permute.xlu0 5
    %3610 = vperm.xlu0 %3609, %v2889
    %v3611 = vpop.permute.xlu0 %3610
    %3613 = vset.pattern.permute.xlu0 5
    %3614 = vperm.xlu0 %3613, %v2891
    %v3615 = vpop.permute.xlu0 %3614
    %3617 = vset.pattern.permute.xlu0 5
    %3618 = vperm.xlu0 %3617, %v2894
    %v3619 = vpop.permute.xlu0 %3618
    %3621 = vset.pattern.permute.xlu0 5
    %3622 = vperm.xlu0 %3621, %v2896
    %v3623 = vpop.permute.xlu0 %3622
    %3625 = vset.pattern.permute.xlu0 5
    %3626 = vperm.xlu0 %3625, %v2899
    %v3627 = vpop.permute.xlu0 %3626
    %3629 = vset.pattern.permute.xlu0 5
    %3630 = vperm.xlu0 %3629, %v2901
    %v3631 = vpop.permute.xlu0 %3630
    %3633 = vset.pattern.permute.xlu0 5
    %3634 = vperm.xlu0 %3633, %v2904
    %v3635 = vpop.permute.xlu0 %3634
    %3637 = vset.pattern.permute.xlu0 5
    %3638 = vperm.xlu0 %3637, %v2906
    %v3639 = vpop.permute.xlu0 %3638
    %3641 = vset.pattern.permute.xlu0 5
    %3642 = vperm.xlu0 %3641, %v2909
    %v3643 = vpop.permute.xlu0 %3642
    %3645 = vset.pattern.permute.xlu0 5
    %3646 = vperm.xlu0 %3645, %v2911
    %v3647 = vpop.permute.xlu0 %3646
    %v3649 = vmul.f32 %v3587, %v2531
    %v3650 = vmul.f32 %v3591, %v2533
    %v3651 = vmul.f32 %v3595, %v2536
    %v3652 = vmul.f32 %v3599, %v2538
    %v3653 = vmul.f32 %v3603, %v2541
    %v3654 = vmul.f32 %v3607, %v2543
    %v3655 = vmul.f32 %v3611, %v2546
    %v3656 = vmul.f32 %v3615, %v2548
    %v3657 = vmul.f32 %v3619, %v2551
    %v3658 = vmul.f32 %v3623, %v2553
    %v3659 = vmul.f32 %v3627, %v2556
    %v3660 = vmul.f32 %v3631, %v2558
    %v3661 = vmul.f32 %v3635, %v2561
    %v3662 = vmul.f32 %v3639, %v2563
    %v3663 = vmul.f32 %v3643, %v2566
    %v3664 = vmul.f32 %v3647, %v2568
    %3681 = vrot.lane.b32.xlu0 %v3649, 96
    %v3682 = vpop.permute.xlu0 %3681
    %3683 = vrot.lane.b32.xlu0 %v3650, 96
    %v3684 = vpop.permute.xlu0 %3683
    %3685 = vrot.lane.b32.xlu0 %v3651, 96
    %v3686 = vpop.permute.xlu0 %3685
    %3687 = vrot.lane.b32.xlu0 %v3652, 96
    %v3688 = vpop.permute.xlu0 %3687
    %3689 = vrot.lane.b32.xlu0 %v3653, 96
    %v3690 = vpop.permute.xlu0 %3689
    %3691 = vrot.lane.b32.xlu0 %v3654, 96
    %v3692 = vpop.permute.xlu0 %3691
    %3693 = vrot.lane.b32.xlu0 %v3655, 96
    %v3694 = vpop.permute.xlu0 %3693
    %3695 = vrot.lane.b32.xlu0 %v3656, 96
    %v3696 = vpop.permute.xlu0 %3695
    %3697 = vrot.lane.b32.xlu0 %v3657, 96
    %v3698 = vpop.permute.xlu0 %3697
    %3699 = vrot.lane.b32.xlu0 %v3658, 96
    %v3700 = vpop.permute.xlu0 %3699
    %3701 = vrot.lane.b32.xlu0 %v3659, 96
    %v3702 = vpop.permute.xlu0 %3701
    %3703 = vrot.lane.b32.xlu0 %v3660, 96
    %v3704 = vpop.permute.xlu0 %3703
    %3705 = vrot.lane.b32.xlu0 %v3661, 96
    %v3706 = vpop.permute.xlu0 %3705
    %3707 = vrot.lane.b32.xlu0 %v3662, 96
    %v3708 = vpop.permute.xlu0 %3707
    %3709 = vrot.lane.b32.xlu0 %v3663, 96
    %v3710 = vpop.permute.xlu0 %3709
    %3711 = vrot.lane.b32.xlu0 %v3664, 96
    %v3712 = vpop.permute.xlu0 %3711
    %v3729 = vadd.f32 %v3569, %v3682
    %v3730 = vadd.f32 %v3570, %v3684
    %v3731 = vadd.f32 %v3571, %v3686
    %v3732 = vadd.f32 %v3572, %v3688
    %v3733 = vadd.f32 %v3573, %v3690
    %v3734 = vadd.f32 %v3574, %v3692
    %v3735 = vadd.f32 %v3575, %v3694
    %v3736 = vadd.f32 %v3576, %v3696
    %v3737 = vadd.f32 %v3577, %v3698
    %v3738 = vadd.f32 %v3578, %v3700
    %v3739 = vadd.f32 %v3579, %v3702
    %v3740 = vadd.f32 %v3580, %v3704
    %v3741 = vadd.f32 %v3581, %v3706
    %v3742 = vadd.f32 %v3582, %v3708
    %v3743 = vadd.f32 %v3583, %v3710
    %v3744 = vadd.f32 %v3584, %v3712
    %3745 = vset.pattern.permute.xlu0 6
    %3746 = vperm.xlu0 %3745, %v2874
    %v3747 = vpop.permute.xlu0 %3746
    %3749 = vset.pattern.permute.xlu0 6
    %3750 = vperm.xlu0 %3749, %v2876
    %v3751 = vpop.permute.xlu0 %3750
    %3753 = vset.pattern.permute.xlu0 6
    %3754 = vperm.xlu0 %3753, %v2879
    %v3755 = vpop.permute.xlu0 %3754
    %3757 = vset.pattern.permute.xlu0 6
    %3758 = vperm.xlu0 %3757, %v2881
    %v3759 = vpop.permute.xlu0 %3758
    %3761 = vset.pattern.permute.xlu0 6
    %3762 = vperm.xlu0 %3761, %v2884
    %v3763 = vpop.permute.xlu0 %3762
    %3765 = vset.pattern.permute.xlu0 6
    %3766 = vperm.xlu0 %3765, %v2886
    %v3767 = vpop.permute.xlu0 %3766
    %3769 = vset.pattern.permute.xlu0 6
    %3770 = vperm.xlu0 %3769, %v2889
    %v3771 = vpop.permute.xlu0 %3770
    %3773 = vset.pattern.permute.xlu0 6
    %3774 = vperm.xlu0 %3773, %v2891
    %v3775 = vpop.permute.xlu0 %3774
    %3777 = vset.pattern.permute.xlu0 6
    %3778 = vperm.xlu0 %3777, %v2894
    %v3779 = vpop.permute.xlu0 %3778
    %3781 = vset.pattern.permute.xlu0 6
    %3782 = vperm.xlu0 %3781, %v2896
    %v3783 = vpop.permute.xlu0 %3782
    %3785 = vset.pattern.permute.xlu0 6
    %3786 = vperm.xlu0 %3785, %v2899
    %v3787 = vpop.permute.xlu0 %3786
    %3789 = vset.pattern.permute.xlu0 6
    %3790 = vperm.xlu0 %3789, %v2901
    %v3791 = vpop.permute.xlu0 %3790
    %3793 = vset.pattern.permute.xlu0 6
    %3794 = vperm.xlu0 %3793, %v2904
    %v3795 = vpop.permute.xlu0 %3794
    %3797 = vset.pattern.permute.xlu0 6
    %3798 = vperm.xlu0 %3797, %v2906
    %v3799 = vpop.permute.xlu0 %3798
    %3801 = vset.pattern.permute.xlu0 6
    %3802 = vperm.xlu0 %3801, %v2909
    %v3803 = vpop.permute.xlu0 %3802
    %3805 = vset.pattern.permute.xlu0 6
    %3806 = vperm.xlu0 %3805, %v2911
    %v3807 = vpop.permute.xlu0 %3806
    %v3809 = vmul.f32 %v3747, %v2531
    %v3810 = vmul.f32 %v3751, %v2533
    %v3811 = vmul.f32 %v3755, %v2536
    %v3812 = vmul.f32 %v3759, %v2538
    %v3813 = vmul.f32 %v3763, %v2541
    %v3814 = vmul.f32 %v3767, %v2543
    %v3815 = vmul.f32 %v3771, %v2546
    %v3816 = vmul.f32 %v3775, %v2548
    %v3817 = vmul.f32 %v3779, %v2551
    %v3818 = vmul.f32 %v3783, %v2553
    %v3819 = vmul.f32 %v3787, %v2556
    %v3820 = vmul.f32 %v3791, %v2558
    %v3821 = vmul.f32 %v3795, %v2561
    %v3822 = vmul.f32 %v3799, %v2563
    %v3823 = vmul.f32 %v3803, %v2566
    %v3824 = vmul.f32 %v3807, %v2568
    %3841 = vrot.lane.b32.xlu0 %v3809, 64
    %v3842 = vpop.permute.xlu0 %3841
    %3843 = vrot.lane.b32.xlu0 %v3810, 64
    %v3844 = vpop.permute.xlu0 %3843
    %3845 = vrot.lane.b32.xlu0 %v3811, 64
    %v3846 = vpop.permute.xlu0 %3845
    %3847 = vrot.lane.b32.xlu0 %v3812, 64
    %v3848 = vpop.permute.xlu0 %3847
    %3849 = vrot.lane.b32.xlu0 %v3813, 64
    %v3850 = vpop.permute.xlu0 %3849
    %3851 = vrot.lane.b32.xlu0 %v3814, 64
    %v3852 = vpop.permute.xlu0 %3851
    %3853 = vrot.lane.b32.xlu0 %v3815, 64
    %v3854 = vpop.permute.xlu0 %3853
    %3855 = vrot.lane.b32.xlu0 %v3816, 64
    %v3856 = vpop.permute.xlu0 %3855
    %3857 = vrot.lane.b32.xlu0 %v3817, 64
    %v3858 = vpop.permute.xlu0 %3857
    %3859 = vrot.lane.b32.xlu0 %v3818, 64
    %v3860 = vpop.permute.xlu0 %3859
    %3861 = vrot.lane.b32.xlu0 %v3819, 64
    %v3862 = vpop.permute.xlu0 %3861
    %3863 = vrot.lane.b32.xlu0 %v3820, 64
    %v3864 = vpop.permute.xlu0 %3863
    %3865 = vrot.lane.b32.xlu0 %v3821, 64
    %v3866 = vpop.permute.xlu0 %3865
    %3867 = vrot.lane.b32.xlu0 %v3822, 64
    %v3868 = vpop.permute.xlu0 %3867
    %3869 = vrot.lane.b32.xlu0 %v3823, 64
    %v3870 = vpop.permute.xlu0 %3869
    %3871 = vrot.lane.b32.xlu0 %v3824, 64
    %v3872 = vpop.permute.xlu0 %3871
    %v3889 = vadd.f32 %v3729, %v3842
    %v3890 = vadd.f32 %v3730, %v3844
    %v3891 = vadd.f32 %v3731, %v3846
    %v3892 = vadd.f32 %v3732, %v3848
    %v3893 = vadd.f32 %v3733, %v3850
    %v3894 = vadd.f32 %v3734, %v3852
    %v3895 = vadd.f32 %v3735, %v3854
    %v3896 = vadd.f32 %v3736, %v3856
    %v3897 = vadd.f32 %v3737, %v3858
    %v3898 = vadd.f32 %v3738, %v3860
    %v3899 = vadd.f32 %v3739, %v3862
    %v3900 = vadd.f32 %v3740, %v3864
    %v3901 = vadd.f32 %v3741, %v3866
    %v3902 = vadd.f32 %v3742, %v3868
    %v3903 = vadd.f32 %v3743, %v3870
    %v3904 = vadd.f32 %v3744, %v3872
    %3905 = vset.pattern.permute.xlu0 7
    %3906 = vperm.xlu0 %3905, %v2874
    %v3907 = vpop.permute.xlu0 %3906
    %3909 = vset.pattern.permute.xlu0 7
    %3910 = vperm.xlu0 %3909, %v2876
    %v3911 = vpop.permute.xlu0 %3910
    %3913 = vset.pattern.permute.xlu0 7
    %3914 = vperm.xlu0 %3913, %v2879
    %v3915 = vpop.permute.xlu0 %3914
    %3917 = vset.pattern.permute.xlu0 7
    %3918 = vperm.xlu0 %3917, %v2881
    %v3919 = vpop.permute.xlu0 %3918
    %3921 = vset.pattern.permute.xlu0 7
    %3922 = vperm.xlu0 %3921, %v2884
    %v3923 = vpop.permute.xlu0 %3922
    %3925 = vset.pattern.permute.xlu0 7
    %3926 = vperm.xlu0 %3925, %v2886
    %v3927 = vpop.permute.xlu0 %3926
    %3929 = vset.pattern.permute.xlu0 7
    %3930 = vperm.xlu0 %3929, %v2889
    %v3931 = vpop.permute.xlu0 %3930
    %3933 = vset.pattern.permute.xlu0 7
    %3934 = vperm.xlu0 %3933, %v2891
    %v3935 = vpop.permute.xlu0 %3934
    %3937 = vset.pattern.permute.xlu0 7
    %3938 = vperm.xlu0 %3937, %v2894
    %v3939 = vpop.permute.xlu0 %3938
    %3941 = vset.pattern.permute.xlu0 7
    %3942 = vperm.xlu0 %3941, %v2896
    %v3943 = vpop.permute.xlu0 %3942
    %3945 = vset.pattern.permute.xlu0 7
    %3946 = vperm.xlu0 %3945, %v2899
    %v3947 = vpop.permute.xlu0 %3946
    %3949 = vset.pattern.permute.xlu0 7
    %3950 = vperm.xlu0 %3949, %v2901
    %v3951 = vpop.permute.xlu0 %3950
    %3953 = vset.pattern.permute.xlu0 7
    %3954 = vperm.xlu0 %3953, %v2904
    %v3955 = vpop.permute.xlu0 %3954
    %3957 = vset.pattern.permute.xlu0 7
    %3958 = vperm.xlu0 %3957, %v2906
    %v3959 = vpop.permute.xlu0 %3958
    %3961 = vset.pattern.permute.xlu0 7
    %3962 = vperm.xlu0 %3961, %v2909
    %v3963 = vpop.permute.xlu0 %3962
    %3965 = vset.pattern.permute.xlu0 7
    %3966 = vperm.xlu0 %3965, %v2911
    %v3967 = vpop.permute.xlu0 %3966
    %v3969 = vmul.f32 %v3907, %v2531
    %v3970 = vmul.f32 %v3911, %v2533
    %v3971 = vmul.f32 %v3915, %v2536
    %v3972 = vmul.f32 %v3919, %v2538
    %v3973 = vmul.f32 %v3923, %v2541
    %v3974 = vmul.f32 %v3927, %v2543
    %v3975 = vmul.f32 %v3931, %v2546
    %v3976 = vmul.f32 %v3935, %v2548
    %v3977 = vmul.f32 %v3939, %v2551
    %v3978 = vmul.f32 %v3943, %v2553
    %v3979 = vmul.f32 %v3947, %v2556
    %v3980 = vmul.f32 %v3951, %v2558
    %v3981 = vmul.f32 %v3955, %v2561
    %v3982 = vmul.f32 %v3959, %v2563
    %v3983 = vmul.f32 %v3963, %v2566
    %v3984 = vmul.f32 %v3967, %v2568
    %4001 = vrot.lane.b32.xlu0 %v3969, 32
    %v4002 = vpop.permute.xlu0 %4001
    %4003 = vrot.lane.b32.xlu0 %v3970, 32
    %v4004 = vpop.permute.xlu0 %4003
    %4005 = vrot.lane.b32.xlu0 %v3971, 32
    %v4006 = vpop.permute.xlu0 %4005
    %4007 = vrot.lane.b32.xlu0 %v3972, 32
    %v4008 = vpop.permute.xlu0 %4007
    %4009 = vrot.lane.b32.xlu0 %v3973, 32
    %v4010 = vpop.permute.xlu0 %4009
    %4011 = vrot.lane.b32.xlu0 %v3974, 32
    %v4012 = vpop.permute.xlu0 %4011
    %4013 = vrot.lane.b32.xlu0 %v3975, 32
    %v4014 = vpop.permute.xlu0 %4013
    %4015 = vrot.lane.b32.xlu0 %v3976, 32
    %v4016 = vpop.permute.xlu0 %4015
    %4017 = vrot.lane.b32.xlu0 %v3977, 32
    %v4018 = vpop.permute.xlu0 %4017
    %4019 = vrot.lane.b32.xlu0 %v3978, 32
    %v4020 = vpop.permute.xlu0 %4019
    %4021 = vrot.lane.b32.xlu0 %v3979, 32
    %v4022 = vpop.permute.xlu0 %4021
    %4023 = vrot.lane.b32.xlu0 %v3980, 32
    %v4024 = vpop.permute.xlu0 %4023
    %4025 = vrot.lane.b32.xlu0 %v3981, 32
    %v4026 = vpop.permute.xlu0 %4025
    %4027 = vrot.lane.b32.xlu0 %v3982, 32
    %v4028 = vpop.permute.xlu0 %4027
    %4029 = vrot.lane.b32.xlu0 %v3983, 32
    %v4030 = vpop.permute.xlu0 %4029
    %4031 = vrot.lane.b32.xlu0 %v3984, 32
    %v4032 = vpop.permute.xlu0 %4031
    %v4049 = vadd.f32 %v3889, %v4002
    %v4050 = vadd.f32 %v3890, %v4004
    %v4051 = vadd.f32 %v3891, %v4006
    %v4052 = vadd.f32 %v3892, %v4008
    %v4053 = vadd.f32 %v3893, %v4010
    %v4054 = vadd.f32 %v3894, %v4012
    %v4055 = vadd.f32 %v3895, %v4014
    %v4056 = vadd.f32 %v3896, %v4016
    %v4057 = vadd.f32 %v3897, %v4018
    %v4058 = vadd.f32 %v3898, %v4020
    %v4059 = vadd.f32 %v3899, %v4022
    %v4060 = vadd.f32 %v3900, %v4024
    %v4061 = vadd.f32 %v3901, %v4026
    %v4062 = vadd.f32 %v3902, %v4028
    %v4063 = vadd.f32 %v3903, %v4030
    %v4064 = vadd.f32 %v3904, %v4032
    %4065 = vset.pattern.permute.xlu0 8
    %4066 = vperm.xlu0 %4065, %v2874
    %v4067 = vpop.permute.xlu0 %4066
    %4069 = vset.pattern.permute.xlu0 8
    %4070 = vperm.xlu0 %4069, %v2876
    %v4071 = vpop.permute.xlu0 %4070
    %4073 = vset.pattern.permute.xlu0 8
    %4074 = vperm.xlu0 %4073, %v2879
    %v4075 = vpop.permute.xlu0 %4074
    %4077 = vset.pattern.permute.xlu0 8
    %4078 = vperm.xlu0 %4077, %v2881
    %v4079 = vpop.permute.xlu0 %4078
    %4081 = vset.pattern.permute.xlu0 8
    %4082 = vperm.xlu0 %4081, %v2884
    %v4083 = vpop.permute.xlu0 %4082
    %4085 = vset.pattern.permute.xlu0 8
    %4086 = vperm.xlu0 %4085, %v2886
    %v4087 = vpop.permute.xlu0 %4086
    %4089 = vset.pattern.permute.xlu0 8
    %4090 = vperm.xlu0 %4089, %v2889
    %v4091 = vpop.permute.xlu0 %4090
    %4093 = vset.pattern.permute.xlu0 8
    %4094 = vperm.xlu0 %4093, %v2891
    %v4095 = vpop.permute.xlu0 %4094
    %4097 = vset.pattern.permute.xlu0 8
    %4098 = vperm.xlu0 %4097, %v2894
    %v4099 = vpop.permute.xlu0 %4098
    %4101 = vset.pattern.permute.xlu0 8
    %4102 = vperm.xlu0 %4101, %v2896
    %v4103 = vpop.permute.xlu0 %4102
    %4105 = vset.pattern.permute.xlu0 8
    %4106 = vperm.xlu0 %4105, %v2899
    %v4107 = vpop.permute.xlu0 %4106
    %4109 = vset.pattern.permute.xlu0 8
    %4110 = vperm.xlu0 %4109, %v2901
    %v4111 = vpop.permute.xlu0 %4110
    %4113 = vset.pattern.permute.xlu0 8
    %4114 = vperm.xlu0 %4113, %v2904
    %v4115 = vpop.permute.xlu0 %4114
    %4117 = vset.pattern.permute.xlu0 8
    %4118 = vperm.xlu0 %4117, %v2906
    %v4119 = vpop.permute.xlu0 %4118
    %4121 = vset.pattern.permute.xlu0 8
    %4122 = vperm.xlu0 %4121, %v2909
    %v4123 = vpop.permute.xlu0 %4122
    %4125 = vset.pattern.permute.xlu0 8
    %4126 = vperm.xlu0 %4125, %v2911
    %v4127 = vpop.permute.xlu0 %4126
    %v4129 = vmul.f32 %v4067, %v2580
    %v4130 = vmul.f32 %v4071, %v2582
    %v4131 = vmul.f32 %v4075, %v2585
    %v4132 = vmul.f32 %v4079, %v2587
    %v4133 = vmul.f32 %v4083, %v2590
    %v4134 = vmul.f32 %v4087, %v2592
    %v4135 = vmul.f32 %v4091, %v2595
    %v4136 = vmul.f32 %v4095, %v2597
    %v4137 = vmul.f32 %v4099, %v2600
    %v4138 = vmul.f32 %v4103, %v2602
    %v4139 = vmul.f32 %v4107, %v2605
    %v4140 = vmul.f32 %v4111, %v2607
    %v4141 = vmul.f32 %v4115, %v2610
    %v4142 = vmul.f32 %v4119, %v2612
    %v4143 = vmul.f32 %v4123, %v2615
    %v4144 = vmul.f32 %v4127, %v2617
    %v4145 = vadd.f32 %v4049, %v4129
    %v4146 = vadd.f32 %v4050, %v4130
    %v4147 = vadd.f32 %v4051, %v4131
    %v4148 = vadd.f32 %v4052, %v4132
    %v4149 = vadd.f32 %v4053, %v4133
    %v4150 = vadd.f32 %v4054, %v4134
    %v4151 = vadd.f32 %v4055, %v4135
    %v4152 = vadd.f32 %v4056, %v4136
    %v4153 = vadd.f32 %v4057, %v4137
    %v4154 = vadd.f32 %v4058, %v4138
    %v4155 = vadd.f32 %v4059, %v4139
    %v4156 = vadd.f32 %v4060, %v4140
    %v4157 = vadd.f32 %v4061, %v4141
    %v4158 = vadd.f32 %v4062, %v4142
    %v4159 = vadd.f32 %v4063, %v4143
    %v4160 = vadd.f32 %v4064, %v4144
    %4161 = vset.pattern.permute.xlu0 9
    %4162 = vperm.xlu0 %4161, %v2874
    %v4163 = vpop.permute.xlu0 %4162
    %4165 = vset.pattern.permute.xlu0 9
    %4166 = vperm.xlu0 %4165, %v2876
    %v4167 = vpop.permute.xlu0 %4166
    %4169 = vset.pattern.permute.xlu0 9
    %4170 = vperm.xlu0 %4169, %v2879
    %v4171 = vpop.permute.xlu0 %4170
    %4173 = vset.pattern.permute.xlu0 9
    %4174 = vperm.xlu0 %4173, %v2881
    %v4175 = vpop.permute.xlu0 %4174
    %4177 = vset.pattern.permute.xlu0 9
    %4178 = vperm.xlu0 %4177, %v2884
    %v4179 = vpop.permute.xlu0 %4178
    %4181 = vset.pattern.permute.xlu0 9
    %4182 = vperm.xlu0 %4181, %v2886
    %v4183 = vpop.permute.xlu0 %4182
    %4185 = vset.pattern.permute.xlu0 9
    %4186 = vperm.xlu0 %4185, %v2889
    %v4187 = vpop.permute.xlu0 %4186
    %4189 = vset.pattern.permute.xlu0 9
    %4190 = vperm.xlu0 %4189, %v2891
    %v4191 = vpop.permute.xlu0 %4190
    %4193 = vset.pattern.permute.xlu0 9
    %4194 = vperm.xlu0 %4193, %v2894
    %v4195 = vpop.permute.xlu0 %4194
    %4197 = vset.pattern.permute.xlu0 9
    %4198 = vperm.xlu0 %4197, %v2896
    %v4199 = vpop.permute.xlu0 %4198
    %4201 = vset.pattern.permute.xlu0 9
    %4202 = vperm.xlu0 %4201, %v2899
    %v4203 = vpop.permute.xlu0 %4202
    %4205 = vset.pattern.permute.xlu0 9
    %4206 = vperm.xlu0 %4205, %v2901
    %v4207 = vpop.permute.xlu0 %4206
    %4209 = vset.pattern.permute.xlu0 9
    %4210 = vperm.xlu0 %4209, %v2904
    %v4211 = vpop.permute.xlu0 %4210
    %4213 = vset.pattern.permute.xlu0 9
    %4214 = vperm.xlu0 %4213, %v2906
    %v4215 = vpop.permute.xlu0 %4214
    %4217 = vset.pattern.permute.xlu0 9
    %4218 = vperm.xlu0 %4217, %v2909
    %v4219 = vpop.permute.xlu0 %4218
    %4221 = vset.pattern.permute.xlu0 9
    %4222 = vperm.xlu0 %4221, %v2911
    %v4223 = vpop.permute.xlu0 %4222
    %v4225 = vmul.f32 %v4163, %v2580
    %v4226 = vmul.f32 %v4167, %v2582
    %v4227 = vmul.f32 %v4171, %v2585
    %v4228 = vmul.f32 %v4175, %v2587
    %v4229 = vmul.f32 %v4179, %v2590
    %v4230 = vmul.f32 %v4183, %v2592
    %v4231 = vmul.f32 %v4187, %v2595
    %v4232 = vmul.f32 %v4191, %v2597
    %v4233 = vmul.f32 %v4195, %v2600
    %v4234 = vmul.f32 %v4199, %v2602
    %v4235 = vmul.f32 %v4203, %v2605
    %v4236 = vmul.f32 %v4207, %v2607
    %v4237 = vmul.f32 %v4211, %v2610
    %v4238 = vmul.f32 %v4215, %v2612
    %v4239 = vmul.f32 %v4219, %v2615
    %v4240 = vmul.f32 %v4223, %v2617
    %4257 = vrot.lane.b32.xlu0 %v4225, 96
    %v4258 = vpop.permute.xlu0 %4257
    %4259 = vrot.lane.b32.xlu0 %v4226, 96
    %v4260 = vpop.permute.xlu0 %4259
    %4261 = vrot.lane.b32.xlu0 %v4227, 96
    %v4262 = vpop.permute.xlu0 %4261
    %4263 = vrot.lane.b32.xlu0 %v4228, 96
    %v4264 = vpop.permute.xlu0 %4263
    %4265 = vrot.lane.b32.xlu0 %v4229, 96
    %v4266 = vpop.permute.xlu0 %4265
    %4267 = vrot.lane.b32.xlu0 %v4230, 96
    %v4268 = vpop.permute.xlu0 %4267
    %4269 = vrot.lane.b32.xlu0 %v4231, 96
    %v4270 = vpop.permute.xlu0 %4269
    %4271 = vrot.lane.b32.xlu0 %v4232, 96
    %v4272 = vpop.permute.xlu0 %4271
    %4273 = vrot.lane.b32.xlu0 %v4233, 96
    %v4274 = vpop.permute.xlu0 %4273
    %4275 = vrot.lane.b32.xlu0 %v4234, 96
    %v4276 = vpop.permute.xlu0 %4275
    %4277 = vrot.lane.b32.xlu0 %v4235, 96
    %v4278 = vpop.permute.xlu0 %4277
    %4279 = vrot.lane.b32.xlu0 %v4236, 96
    %v4280 = vpop.permute.xlu0 %4279
    %4281 = vrot.lane.b32.xlu0 %v4237, 96
    %v4282 = vpop.permute.xlu0 %4281
    %4283 = vrot.lane.b32.xlu0 %v4238, 96
    %v4284 = vpop.permute.xlu0 %4283
    %4285 = vrot.lane.b32.xlu0 %v4239, 96
    %v4286 = vpop.permute.xlu0 %4285
    %4287 = vrot.lane.b32.xlu0 %v4240, 96
    %v4288 = vpop.permute.xlu0 %4287
    %v4305 = vadd.f32 %v4145, %v4258
    %v4306 = vadd.f32 %v4146, %v4260
    %v4307 = vadd.f32 %v4147, %v4262
    %v4308 = vadd.f32 %v4148, %v4264
    %v4309 = vadd.f32 %v4149, %v4266
    %v4310 = vadd.f32 %v4150, %v4268
    %v4311 = vadd.f32 %v4151, %v4270
    %v4312 = vadd.f32 %v4152, %v4272
    %v4313 = vadd.f32 %v4153, %v4274
    %v4314 = vadd.f32 %v4154, %v4276
    %v4315 = vadd.f32 %v4155, %v4278
    %v4316 = vadd.f32 %v4156, %v4280
    %v4317 = vadd.f32 %v4157, %v4282
    %v4318 = vadd.f32 %v4158, %v4284
    %v4319 = vadd.f32 %v4159, %v4286
    %v4320 = vadd.f32 %v4160, %v4288
    %4321 = vset.pattern.permute.xlu0 10
    %4322 = vperm.xlu0 %4321, %v2874
    %v4323 = vpop.permute.xlu0 %4322
    %4325 = vset.pattern.permute.xlu0 10
    %4326 = vperm.xlu0 %4325, %v2876
    %v4327 = vpop.permute.xlu0 %4326
    %4329 = vset.pattern.permute.xlu0 10
    %4330 = vperm.xlu0 %4329, %v2879
    %v4331 = vpop.permute.xlu0 %4330
    %4333 = vset.pattern.permute.xlu0 10
    %4334 = vperm.xlu0 %4333, %v2881
    %v4335 = vpop.permute.xlu0 %4334
    %4337 = vset.pattern.permute.xlu0 10
    %4338 = vperm.xlu0 %4337, %v2884
    %v4339 = vpop.permute.xlu0 %4338
    %4341 = vset.pattern.permute.xlu0 10
    %4342 = vperm.xlu0 %4341, %v2886
    %v4343 = vpop.permute.xlu0 %4342
    %4345 = vset.pattern.permute.xlu0 10
    %4346 = vperm.xlu0 %4345, %v2889
    %v4347 = vpop.permute.xlu0 %4346
    %4349 = vset.pattern.permute.xlu0 10
    %4350 = vperm.xlu0 %4349, %v2891
    %v4351 = vpop.permute.xlu0 %4350
    %4353 = vset.pattern.permute.xlu0 10
    %4354 = vperm.xlu0 %4353, %v2894
    %v4355 = vpop.permute.xlu0 %4354
    %4357 = vset.pattern.permute.xlu0 10
    %4358 = vperm.xlu0 %4357, %v2896
    %v4359 = vpop.permute.xlu0 %4358
    %4361 = vset.pattern.permute.xlu0 10
    %4362 = vperm.xlu0 %4361, %v2899
    %v4363 = vpop.permute.xlu0 %4362
    %4365 = vset.pattern.permute.xlu0 10
    %4366 = vperm.xlu0 %4365, %v2901
    %v4367 = vpop.permute.xlu0 %4366
    %4369 = vset.pattern.permute.xlu0 10
    %4370 = vperm.xlu0 %4369, %v2904
    %v4371 = vpop.permute.xlu0 %4370
    %4373 = vset.pattern.permute.xlu0 10
    %4374 = vperm.xlu0 %4373, %v2906
    %v4375 = vpop.permute.xlu0 %4374
    %4377 = vset.pattern.permute.xlu0 10
    %4378 = vperm.xlu0 %4377, %v2909
    %v4379 = vpop.permute.xlu0 %4378
    %4381 = vset.pattern.permute.xlu0 10
    %4382 = vperm.xlu0 %4381, %v2911
    %v4383 = vpop.permute.xlu0 %4382
    %v4385 = vmul.f32 %v4323, %v2580
    %v4386 = vmul.f32 %v4327, %v2582
    %v4387 = vmul.f32 %v4331, %v2585
    %v4388 = vmul.f32 %v4335, %v2587
    %v4389 = vmul.f32 %v4339, %v2590
    %v4390 = vmul.f32 %v4343, %v2592
    %v4391 = vmul.f32 %v4347, %v2595
    %v4392 = vmul.f32 %v4351, %v2597
    %v4393 = vmul.f32 %v4355, %v2600
    %v4394 = vmul.f32 %v4359, %v2602
    %v4395 = vmul.f32 %v4363, %v2605
    %v4396 = vmul.f32 %v4367, %v2607
    %v4397 = vmul.f32 %v4371, %v2610
    %v4398 = vmul.f32 %v4375, %v2612
    %v4399 = vmul.f32 %v4379, %v2615
    %v4400 = vmul.f32 %v4383, %v2617
    %4417 = vrot.lane.b32.xlu0 %v4385, 64
    %v4418 = vpop.permute.xlu0 %4417
    %4419 = vrot.lane.b32.xlu0 %v4386, 64
    %v4420 = vpop.permute.xlu0 %4419
    %4421 = vrot.lane.b32.xlu0 %v4387, 64
    %v4422 = vpop.permute.xlu0 %4421
    %4423 = vrot.lane.b32.xlu0 %v4388, 64
    %v4424 = vpop.permute.xlu0 %4423
    %4425 = vrot.lane.b32.xlu0 %v4389, 64
    %v4426 = vpop.permute.xlu0 %4425
    %4427 = vrot.lane.b32.xlu0 %v4390, 64
    %v4428 = vpop.permute.xlu0 %4427
    %4429 = vrot.lane.b32.xlu0 %v4391, 64
    %v4430 = vpop.permute.xlu0 %4429
    %4431 = vrot.lane.b32.xlu0 %v4392, 64
    %v4432 = vpop.permute.xlu0 %4431
    %4433 = vrot.lane.b32.xlu0 %v4393, 64
    %v4434 = vpop.permute.xlu0 %4433
    %4435 = vrot.lane.b32.xlu0 %v4394, 64
    %v4436 = vpop.permute.xlu0 %4435
    %4437 = vrot.lane.b32.xlu0 %v4395, 64
    %v4438 = vpop.permute.xlu0 %4437
    %4439 = vrot.lane.b32.xlu0 %v4396, 64
    %v4440 = vpop.permute.xlu0 %4439
    %4441 = vrot.lane.b32.xlu0 %v4397, 64
    %v4442 = vpop.permute.xlu0 %4441
    %4443 = vrot.lane.b32.xlu0 %v4398, 64
    %v4444 = vpop.permute.xlu0 %4443
    %4445 = vrot.lane.b32.xlu0 %v4399, 64
    %v4446 = vpop.permute.xlu0 %4445
    %4447 = vrot.lane.b32.xlu0 %v4400, 64
    %v4448 = vpop.permute.xlu0 %4447
    %v4465 = vadd.f32 %v4305, %v4418
    %v4466 = vadd.f32 %v4306, %v4420
    %v4467 = vadd.f32 %v4307, %v4422
    %v4468 = vadd.f32 %v4308, %v4424
    %v4469 = vadd.f32 %v4309, %v4426
    %v4470 = vadd.f32 %v4310, %v4428
    %v4471 = vadd.f32 %v4311, %v4430
    %v4472 = vadd.f32 %v4312, %v4432
    %v4473 = vadd.f32 %v4313, %v4434
    %v4474 = vadd.f32 %v4314, %v4436
    %v4475 = vadd.f32 %v4315, %v4438
    %v4476 = vadd.f32 %v4316, %v4440
    %v4477 = vadd.f32 %v4317, %v4442
    %v4478 = vadd.f32 %v4318, %v4444
    %v4479 = vadd.f32 %v4319, %v4446
    %v4480 = vadd.f32 %v4320, %v4448
    %4481 = vset.pattern.permute.xlu0 11
    %4482 = vperm.xlu0 %4481, %v2874
    %v4483 = vpop.permute.xlu0 %4482
    %4485 = vset.pattern.permute.xlu0 11
    %4486 = vperm.xlu0 %4485, %v2876
    %v4487 = vpop.permute.xlu0 %4486
    %4489 = vset.pattern.permute.xlu0 11
    %4490 = vperm.xlu0 %4489, %v2879
    %v4491 = vpop.permute.xlu0 %4490
    %4493 = vset.pattern.permute.xlu0 11
    %4494 = vperm.xlu0 %4493, %v2881
    %v4495 = vpop.permute.xlu0 %4494
    %4497 = vset.pattern.permute.xlu0 11
    %4498 = vperm.xlu0 %4497, %v2884
    %v4499 = vpop.permute.xlu0 %4498
    %4501 = vset.pattern.permute.xlu0 11
    %4502 = vperm.xlu0 %4501, %v2886
    %v4503 = vpop.permute.xlu0 %4502
    %4505 = vset.pattern.permute.xlu0 11
    %4506 = vperm.xlu0 %4505, %v2889
    %v4507 = vpop.permute.xlu0 %4506
    %4509 = vset.pattern.permute.xlu0 11
    %4510 = vperm.xlu0 %4509, %v2891
    %v4511 = vpop.permute.xlu0 %4510
    %4513 = vset.pattern.permute.xlu0 11
    %4514 = vperm.xlu0 %4513, %v2894
    %v4515 = vpop.permute.xlu0 %4514
    %4517 = vset.pattern.permute.xlu0 11
    %4518 = vperm.xlu0 %4517, %v2896
    %v4519 = vpop.permute.xlu0 %4518
    %4521 = vset.pattern.permute.xlu0 11
    %4522 = vperm.xlu0 %4521, %v2899
    %v4523 = vpop.permute.xlu0 %4522
    %4525 = vset.pattern.permute.xlu0 11
    %4526 = vperm.xlu0 %4525, %v2901
    %v4527 = vpop.permute.xlu0 %4526
    %4529 = vset.pattern.permute.xlu0 11
    %4530 = vperm.xlu0 %4529, %v2904
    %v4531 = vpop.permute.xlu0 %4530
    %4533 = vset.pattern.permute.xlu0 11
    %4534 = vperm.xlu0 %4533, %v2906
    %v4535 = vpop.permute.xlu0 %4534
    %4537 = vset.pattern.permute.xlu0 11
    %4538 = vperm.xlu0 %4537, %v2909
    %v4539 = vpop.permute.xlu0 %4538
    %4541 = vset.pattern.permute.xlu0 11
    %4542 = vperm.xlu0 %4541, %v2911
    %v4543 = vpop.permute.xlu0 %4542
    %v4545 = vmul.f32 %v4483, %v2580
    %v4546 = vmul.f32 %v4487, %v2582
    %v4547 = vmul.f32 %v4491, %v2585
    %v4548 = vmul.f32 %v4495, %v2587
    %v4549 = vmul.f32 %v4499, %v2590
    %v4550 = vmul.f32 %v4503, %v2592
    %v4551 = vmul.f32 %v4507, %v2595
    %v4552 = vmul.f32 %v4511, %v2597
    %v4553 = vmul.f32 %v4515, %v2600
    %v4554 = vmul.f32 %v4519, %v2602
    %v4555 = vmul.f32 %v4523, %v2605
    %v4556 = vmul.f32 %v4527, %v2607
    %v4557 = vmul.f32 %v4531, %v2610
    %v4558 = vmul.f32 %v4535, %v2612
    %v4559 = vmul.f32 %v4539, %v2615
    %v4560 = vmul.f32 %v4543, %v2617
    %4577 = vrot.lane.b32.xlu0 %v4545, 32
    %v4578 = vpop.permute.xlu0 %4577
    %4579 = vrot.lane.b32.xlu0 %v4546, 32
    %v4580 = vpop.permute.xlu0 %4579
    %4581 = vrot.lane.b32.xlu0 %v4547, 32
    %v4582 = vpop.permute.xlu0 %4581
    %4583 = vrot.lane.b32.xlu0 %v4548, 32
    %v4584 = vpop.permute.xlu0 %4583
    %4585 = vrot.lane.b32.xlu0 %v4549, 32
    %v4586 = vpop.permute.xlu0 %4585
    %4587 = vrot.lane.b32.xlu0 %v4550, 32
    %v4588 = vpop.permute.xlu0 %4587
    %4589 = vrot.lane.b32.xlu0 %v4551, 32
    %v4590 = vpop.permute.xlu0 %4589
    %4591 = vrot.lane.b32.xlu0 %v4552, 32
    %v4592 = vpop.permute.xlu0 %4591
    %4593 = vrot.lane.b32.xlu0 %v4553, 32
    %v4594 = vpop.permute.xlu0 %4593
    %4595 = vrot.lane.b32.xlu0 %v4554, 32
    %v4596 = vpop.permute.xlu0 %4595
    %4597 = vrot.lane.b32.xlu0 %v4555, 32
    %v4598 = vpop.permute.xlu0 %4597
    %4599 = vrot.lane.b32.xlu0 %v4556, 32
    %v4600 = vpop.permute.xlu0 %4599
    %4601 = vrot.lane.b32.xlu0 %v4557, 32
    %v4602 = vpop.permute.xlu0 %4601
    %4603 = vrot.lane.b32.xlu0 %v4558, 32
    %v4604 = vpop.permute.xlu0 %4603
    %4605 = vrot.lane.b32.xlu0 %v4559, 32
    %v4606 = vpop.permute.xlu0 %4605
    %4607 = vrot.lane.b32.xlu0 %v4560, 32
    %v4608 = vpop.permute.xlu0 %4607
    %v4625 = vadd.f32 %v4465, %v4578
    %v4626 = vadd.f32 %v4466, %v4580
    %v4627 = vadd.f32 %v4467, %v4582
    %v4628 = vadd.f32 %v4468, %v4584
    %v4629 = vadd.f32 %v4469, %v4586
    %v4630 = vadd.f32 %v4470, %v4588
    %v4631 = vadd.f32 %v4471, %v4590
    %v4632 = vadd.f32 %v4472, %v4592
    %v4633 = vadd.f32 %v4473, %v4594
    %v4634 = vadd.f32 %v4474, %v4596
    %v4635 = vadd.f32 %v4475, %v4598
    %v4636 = vadd.f32 %v4476, %v4600
    %v4637 = vadd.f32 %v4477, %v4602
    %v4638 = vadd.f32 %v4478, %v4604
    %v4639 = vadd.f32 %v4479, %v4606
    %v4640 = vadd.f32 %v4480, %v4608
    %4641 = vset.pattern.permute.xlu0 12
    %4642 = vperm.xlu0 %4641, %v2874
    %v4643 = vpop.permute.xlu0 %4642
    %4645 = vset.pattern.permute.xlu0 12
    %4646 = vperm.xlu0 %4645, %v2876
    %v4647 = vpop.permute.xlu0 %4646
    %4649 = vset.pattern.permute.xlu0 12
    %4650 = vperm.xlu0 %4649, %v2879
    %v4651 = vpop.permute.xlu0 %4650
    %4653 = vset.pattern.permute.xlu0 12
    %4654 = vperm.xlu0 %4653, %v2881
    %v4655 = vpop.permute.xlu0 %4654
    %4657 = vset.pattern.permute.xlu0 12
    %4658 = vperm.xlu0 %4657, %v2884
    %v4659 = vpop.permute.xlu0 %4658
    %4661 = vset.pattern.permute.xlu0 12
    %4662 = vperm.xlu0 %4661, %v2886
    %v4663 = vpop.permute.xlu0 %4662
    %4665 = vset.pattern.permute.xlu0 12
    %4666 = vperm.xlu0 %4665, %v2889
    %v4667 = vpop.permute.xlu0 %4666
    %4669 = vset.pattern.permute.xlu0 12
    %4670 = vperm.xlu0 %4669, %v2891
    %v4671 = vpop.permute.xlu0 %4670
    %4673 = vset.pattern.permute.xlu0 12
    %4674 = vperm.xlu0 %4673, %v2894
    %v4675 = vpop.permute.xlu0 %4674
    %4677 = vset.pattern.permute.xlu0 12
    %4678 = vperm.xlu0 %4677, %v2896
    %v4679 = vpop.permute.xlu0 %4678
    %4681 = vset.pattern.permute.xlu0 12
    %4682 = vperm.xlu0 %4681, %v2899
    %v4683 = vpop.permute.xlu0 %4682
    %4685 = vset.pattern.permute.xlu0 12
    %4686 = vperm.xlu0 %4685, %v2901
    %v4687 = vpop.permute.xlu0 %4686
    %4689 = vset.pattern.permute.xlu0 12
    %4690 = vperm.xlu0 %4689, %v2904
    %v4691 = vpop.permute.xlu0 %4690
    %4693 = vset.pattern.permute.xlu0 12
    %4694 = vperm.xlu0 %4693, %v2906
    %v4695 = vpop.permute.xlu0 %4694
    %4697 = vset.pattern.permute.xlu0 12
    %4698 = vperm.xlu0 %4697, %v2909
    %v4699 = vpop.permute.xlu0 %4698
    %4701 = vset.pattern.permute.xlu0 12
    %4702 = vperm.xlu0 %4701, %v2911
    %v4703 = vpop.permute.xlu0 %4702
    %v4705 = vmul.f32 %v4643, %v2629
    %v4706 = vmul.f32 %v4647, %v2631
    %v4707 = vmul.f32 %v4651, %v2634
    %v4708 = vmul.f32 %v4655, %v2636
    %v4709 = vmul.f32 %v4659, %v2639
    %v4710 = vmul.f32 %v4663, %v2641
    %v4711 = vmul.f32 %v4667, %v2644
    %v4712 = vmul.f32 %v4671, %v2646
    %v4713 = vmul.f32 %v4675, %v2649
    %v4714 = vmul.f32 %v4679, %v2651
    %v4715 = vmul.f32 %v4683, %v2654
    %v4716 = vmul.f32 %v4687, %v2656
    %v4717 = vmul.f32 %v4691, %v2659
    %v4718 = vmul.f32 %v4695, %v2661
    %v4719 = vmul.f32 %v4699, %v2664
    %v4720 = vmul.f32 %v4703, %v2666
    %v4721 = vadd.f32 %v4625, %v4705
    %v4722 = vadd.f32 %v4626, %v4706
    %v4723 = vadd.f32 %v4627, %v4707
    %v4724 = vadd.f32 %v4628, %v4708
    %v4725 = vadd.f32 %v4629, %v4709
    %v4726 = vadd.f32 %v4630, %v4710
    %v4727 = vadd.f32 %v4631, %v4711
    %v4728 = vadd.f32 %v4632, %v4712
    %v4729 = vadd.f32 %v4633, %v4713
    %v4730 = vadd.f32 %v4634, %v4714
    %v4731 = vadd.f32 %v4635, %v4715
    %v4732 = vadd.f32 %v4636, %v4716
    %v4733 = vadd.f32 %v4637, %v4717
    %v4734 = vadd.f32 %v4638, %v4718
    %v4735 = vadd.f32 %v4639, %v4719
    %v4736 = vadd.f32 %v4640, %v4720
    %4737 = vset.pattern.permute.xlu0 13
    %4738 = vperm.xlu0 %4737, %v2874
    %v4739 = vpop.permute.xlu0 %4738
    %4741 = vset.pattern.permute.xlu0 13
    %4742 = vperm.xlu0 %4741, %v2876
    %v4743 = vpop.permute.xlu0 %4742
    %4745 = vset.pattern.permute.xlu0 13
    %4746 = vperm.xlu0 %4745, %v2879
    %v4747 = vpop.permute.xlu0 %4746
    %4749 = vset.pattern.permute.xlu0 13
    %4750 = vperm.xlu0 %4749, %v2881
    %v4751 = vpop.permute.xlu0 %4750
    %4753 = vset.pattern.permute.xlu0 13
    %4754 = vperm.xlu0 %4753, %v2884
    %v4755 = vpop.permute.xlu0 %4754
    %4757 = vset.pattern.permute.xlu0 13
    %4758 = vperm.xlu0 %4757, %v2886
    %v4759 = vpop.permute.xlu0 %4758
    %4761 = vset.pattern.permute.xlu0 13
    %4762 = vperm.xlu0 %4761, %v2889
    %v4763 = vpop.permute.xlu0 %4762
    %4765 = vset.pattern.permute.xlu0 13
    %4766 = vperm.xlu0 %4765, %v2891
    %v4767 = vpop.permute.xlu0 %4766
    %4769 = vset.pattern.permute.xlu0 13
    %4770 = vperm.xlu0 %4769, %v2894
    %v4771 = vpop.permute.xlu0 %4770
    %4773 = vset.pattern.permute.xlu0 13
    %4774 = vperm.xlu0 %4773, %v2896
    %v4775 = vpop.permute.xlu0 %4774
    %4777 = vset.pattern.permute.xlu0 13
    %4778 = vperm.xlu0 %4777, %v2899
    %v4779 = vpop.permute.xlu0 %4778
    %4781 = vset.pattern.permute.xlu0 13
    %4782 = vperm.xlu0 %4781, %v2901
    %v4783 = vpop.permute.xlu0 %4782
    %4785 = vset.pattern.permute.xlu0 13
    %4786 = vperm.xlu0 %4785, %v2904
    %v4787 = vpop.permute.xlu0 %4786
    %4789 = vset.pattern.permute.xlu0 13
    %4790 = vperm.xlu0 %4789, %v2906
    %v4791 = vpop.permute.xlu0 %4790
    %4793 = vset.pattern.permute.xlu0 13
    %4794 = vperm.xlu0 %4793, %v2909
    %v4795 = vpop.permute.xlu0 %4794
    %4797 = vset.pattern.permute.xlu0 13
    %4798 = vperm.xlu0 %4797, %v2911
    %v4799 = vpop.permute.xlu0 %4798
    %v4801 = vmul.f32 %v4739, %v2629
    %v4802 = vmul.f32 %v4743, %v2631
    %v4803 = vmul.f32 %v4747, %v2634
    %v4804 = vmul.f32 %v4751, %v2636
    %v4805 = vmul.f32 %v4755, %v2639
    %v4806 = vmul.f32 %v4759, %v2641
    %v4807 = vmul.f32 %v4763, %v2644
    %v4808 = vmul.f32 %v4767, %v2646
    %v4809 = vmul.f32 %v4771, %v2649
    %v4810 = vmul.f32 %v4775, %v2651
    %v4811 = vmul.f32 %v4779, %v2654
    %v4812 = vmul.f32 %v4783, %v2656
    %v4813 = vmul.f32 %v4787, %v2659
    %v4814 = vmul.f32 %v4791, %v2661
    %v4815 = vmul.f32 %v4795, %v2664
    %v4816 = vmul.f32 %v4799, %v2666
    %4833 = vrot.lane.b32.xlu0 %v4801, 96
    %v4834 = vpop.permute.xlu0 %4833
    %4835 = vrot.lane.b32.xlu0 %v4802, 96
    %v4836 = vpop.permute.xlu0 %4835
    %4837 = vrot.lane.b32.xlu0 %v4803, 96
    %v4838 = vpop.permute.xlu0 %4837
    %4839 = vrot.lane.b32.xlu0 %v4804, 96
    %v4840 = vpop.permute.xlu0 %4839
    %4841 = vrot.lane.b32.xlu0 %v4805, 96
    %v4842 = vpop.permute.xlu0 %4841
    %4843 = vrot.lane.b32.xlu0 %v4806, 96
    %v4844 = vpop.permute.xlu0 %4843
    %4845 = vrot.lane.b32.xlu0 %v4807, 96
    %v4846 = vpop.permute.xlu0 %4845
    %4847 = vrot.lane.b32.xlu0 %v4808, 96
    %v4848 = vpop.permute.xlu0 %4847
    %4849 = vrot.lane.b32.xlu0 %v4809, 96
    %v4850 = vpop.permute.xlu0 %4849
    %4851 = vrot.lane.b32.xlu0 %v4810, 96
    %v4852 = vpop.permute.xlu0 %4851
    %4853 = vrot.lane.b32.xlu0 %v4811, 96
    %v4854 = vpop.permute.xlu0 %4853
    %4855 = vrot.lane.b32.xlu0 %v4812, 96
    %v4856 = vpop.permute.xlu0 %4855
    %4857 = vrot.lane.b32.xlu0 %v4813, 96
    %v4858 = vpop.permute.xlu0 %4857
    %4859 = vrot.lane.b32.xlu0 %v4814, 96
    %v4860 = vpop.permute.xlu0 %4859
    %4861 = vrot.lane.b32.xlu0 %v4815, 96
    %v4862 = vpop.permute.xlu0 %4861
    %4863 = vrot.lane.b32.xlu0 %v4816, 96
    %v4864 = vpop.permute.xlu0 %4863
    %v4881 = vadd.f32 %v4721, %v4834
    %v4882 = vadd.f32 %v4722, %v4836
    %v4883 = vadd.f32 %v4723, %v4838
    %v4884 = vadd.f32 %v4724, %v4840
    %v4885 = vadd.f32 %v4725, %v4842
    %v4886 = vadd.f32 %v4726, %v4844
    %v4887 = vadd.f32 %v4727, %v4846
    %v4888 = vadd.f32 %v4728, %v4848
    %v4889 = vadd.f32 %v4729, %v4850
    %v4890 = vadd.f32 %v4730, %v4852
    %v4891 = vadd.f32 %v4731, %v4854
    %v4892 = vadd.f32 %v4732, %v4856
    %v4893 = vadd.f32 %v4733, %v4858
    %v4894 = vadd.f32 %v4734, %v4860
    %v4895 = vadd.f32 %v4735, %v4862
    %v4896 = vadd.f32 %v4736, %v4864
    %4897 = vset.pattern.permute.xlu0 14
    %4898 = vperm.xlu0 %4897, %v2874
    %v4899 = vpop.permute.xlu0 %4898
    %4901 = vset.pattern.permute.xlu0 14
    %4902 = vperm.xlu0 %4901, %v2876
    %v4903 = vpop.permute.xlu0 %4902
    %4905 = vset.pattern.permute.xlu0 14
    %4906 = vperm.xlu0 %4905, %v2879
    %v4907 = vpop.permute.xlu0 %4906
    %4909 = vset.pattern.permute.xlu0 14
    %4910 = vperm.xlu0 %4909, %v2881
    %v4911 = vpop.permute.xlu0 %4910
    %4913 = vset.pattern.permute.xlu0 14
    %4914 = vperm.xlu0 %4913, %v2884
    %v4915 = vpop.permute.xlu0 %4914
    %4917 = vset.pattern.permute.xlu0 14
    %4918 = vperm.xlu0 %4917, %v2886
    %v4919 = vpop.permute.xlu0 %4918
    %4921 = vset.pattern.permute.xlu0 14
    %4922 = vperm.xlu0 %4921, %v2889
    %v4923 = vpop.permute.xlu0 %4922
    %4925 = vset.pattern.permute.xlu0 14
    %4926 = vperm.xlu0 %4925, %v2891
    %v4927 = vpop.permute.xlu0 %4926
    %4929 = vset.pattern.permute.xlu0 14
    %4930 = vperm.xlu0 %4929, %v2894
    %v4931 = vpop.permute.xlu0 %4930
    %4933 = vset.pattern.permute.xlu0 14
    %4934 = vperm.xlu0 %4933, %v2896
    %v4935 = vpop.permute.xlu0 %4934
    %4937 = vset.pattern.permute.xlu0 14
    %4938 = vperm.xlu0 %4937, %v2899
    %v4939 = vpop.permute.xlu0 %4938
    %4941 = vset.pattern.permute.xlu0 14
    %4942 = vperm.xlu0 %4941, %v2901
    %v4943 = vpop.permute.xlu0 %4942
    %4945 = vset.pattern.permute.xlu0 14
    %4946 = vperm.xlu0 %4945, %v2904
    %v4947 = vpop.permute.xlu0 %4946
    %4949 = vset.pattern.permute.xlu0 14
    %4950 = vperm.xlu0 %4949, %v2906
    %v4951 = vpop.permute.xlu0 %4950
    %4953 = vset.pattern.permute.xlu0 14
    %4954 = vperm.xlu0 %4953, %v2909
    %v4955 = vpop.permute.xlu0 %4954
    %4957 = vset.pattern.permute.xlu0 14
    %4958 = vperm.xlu0 %4957, %v2911
    %v4959 = vpop.permute.xlu0 %4958
    %v4961 = vmul.f32 %v4899, %v2629
    %v4962 = vmul.f32 %v4903, %v2631
    %v4963 = vmul.f32 %v4907, %v2634
    %v4964 = vmul.f32 %v4911, %v2636
    %v4965 = vmul.f32 %v4915, %v2639
    %v4966 = vmul.f32 %v4919, %v2641
    %v4967 = vmul.f32 %v4923, %v2644
    %v4968 = vmul.f32 %v4927, %v2646
    %v4969 = vmul.f32 %v4931, %v2649
    %v4970 = vmul.f32 %v4935, %v2651
    %v4971 = vmul.f32 %v4939, %v2654
    %v4972 = vmul.f32 %v4943, %v2656
    %v4973 = vmul.f32 %v4947, %v2659
    %v4974 = vmul.f32 %v4951, %v2661
    %v4975 = vmul.f32 %v4955, %v2664
    %v4976 = vmul.f32 %v4959, %v2666
    %4993 = vrot.lane.b32.xlu0 %v4961, 64
    %v4994 = vpop.permute.xlu0 %4993
    %4995 = vrot.lane.b32.xlu0 %v4962, 64
    %v4996 = vpop.permute.xlu0 %4995
    %4997 = vrot.lane.b32.xlu0 %v4963, 64
    %v4998 = vpop.permute.xlu0 %4997
    %4999 = vrot.lane.b32.xlu0 %v4964, 64
    %v5000 = vpop.permute.xlu0 %4999
    %5001 = vrot.lane.b32.xlu0 %v4965, 64
    %v5002 = vpop.permute.xlu0 %5001
    %5003 = vrot.lane.b32.xlu0 %v4966, 64
    %v5004 = vpop.permute.xlu0 %5003
    %5005 = vrot.lane.b32.xlu0 %v4967, 64
    %v5006 = vpop.permute.xlu0 %5005
    %5007 = vrot.lane.b32.xlu0 %v4968, 64
    %v5008 = vpop.permute.xlu0 %5007
    %5009 = vrot.lane.b32.xlu0 %v4969, 64
    %v5010 = vpop.permute.xlu0 %5009
    %5011 = vrot.lane.b32.xlu0 %v4970, 64
    %v5012 = vpop.permute.xlu0 %5011
    %5013 = vrot.lane.b32.xlu0 %v4971, 64
    %v5014 = vpop.permute.xlu0 %5013
    %5015 = vrot.lane.b32.xlu0 %v4972, 64
    %v5016 = vpop.permute.xlu0 %5015
    %5017 = vrot.lane.b32.xlu0 %v4973, 64
    %v5018 = vpop.permute.xlu0 %5017
    %5019 = vrot.lane.b32.xlu0 %v4974, 64
    %v5020 = vpop.permute.xlu0 %5019
    %5021 = vrot.lane.b32.xlu0 %v4975, 64
    %v5022 = vpop.permute.xlu0 %5021
    %5023 = vrot.lane.b32.xlu0 %v4976, 64
    %v5024 = vpop.permute.xlu0 %5023
    %v5041 = vadd.f32 %v4881, %v4994
    %v5042 = vadd.f32 %v4882, %v4996
    %v5043 = vadd.f32 %v4883, %v4998
    %v5044 = vadd.f32 %v4884, %v5000
    %v5045 = vadd.f32 %v4885, %v5002
    %v5046 = vadd.f32 %v4886, %v5004
    %v5047 = vadd.f32 %v4887, %v5006
    %v5048 = vadd.f32 %v4888, %v5008
    %v5049 = vadd.f32 %v4889, %v5010
    %v5050 = vadd.f32 %v4890, %v5012
    %v5051 = vadd.f32 %v4891, %v5014
    %v5052 = vadd.f32 %v4892, %v5016
    %v5053 = vadd.f32 %v4893, %v5018
    %v5054 = vadd.f32 %v4894, %v5020
    %v5055 = vadd.f32 %v4895, %v5022
    %v5056 = vadd.f32 %v4896, %v5024
    %5057 = vset.pattern.permute.xlu0 15
    %5058 = vperm.xlu0 %5057, %v2874
    %v5059 = vpop.permute.xlu0 %5058
    %5061 = vset.pattern.permute.xlu0 15
    %5062 = vperm.xlu0 %5061, %v2876
    %v5063 = vpop.permute.xlu0 %5062
    %5065 = vset.pattern.permute.xlu0 15
    %5066 = vperm.xlu0 %5065, %v2879
    %v5067 = vpop.permute.xlu0 %5066
    %5069 = vset.pattern.permute.xlu0 15
    %5070 = vperm.xlu0 %5069, %v2881
    %v5071 = vpop.permute.xlu0 %5070
    %5073 = vset.pattern.permute.xlu0 15
    %5074 = vperm.xlu0 %5073, %v2884
    %v5075 = vpop.permute.xlu0 %5074
    %5077 = vset.pattern.permute.xlu0 15
    %5078 = vperm.xlu0 %5077, %v2886
    %v5079 = vpop.permute.xlu0 %5078
    %5081 = vset.pattern.permute.xlu0 15
    %5082 = vperm.xlu0 %5081, %v2889
    %v5083 = vpop.permute.xlu0 %5082
    %5085 = vset.pattern.permute.xlu0 15
    %5086 = vperm.xlu0 %5085, %v2891
    %v5087 = vpop.permute.xlu0 %5086
    %5089 = vset.pattern.permute.xlu0 15
    %5090 = vperm.xlu0 %5089, %v2894
    %v5091 = vpop.permute.xlu0 %5090
    %5093 = vset.pattern.permute.xlu0 15
    %5094 = vperm.xlu0 %5093, %v2896
    %v5095 = vpop.permute.xlu0 %5094
    %5097 = vset.pattern.permute.xlu0 15
    %5098 = vperm.xlu0 %5097, %v2899
    %v5099 = vpop.permute.xlu0 %5098
    %5101 = vset.pattern.permute.xlu0 15
    %5102 = vperm.xlu0 %5101, %v2901
    %v5103 = vpop.permute.xlu0 %5102
    %5105 = vset.pattern.permute.xlu0 15
    %5106 = vperm.xlu0 %5105, %v2904
    %v5107 = vpop.permute.xlu0 %5106
    %5109 = vset.pattern.permute.xlu0 15
    %5110 = vperm.xlu0 %5109, %v2906
    %v5111 = vpop.permute.xlu0 %5110
    %5113 = vset.pattern.permute.xlu0 15
    %5114 = vperm.xlu0 %5113, %v2909
    %v5115 = vpop.permute.xlu0 %5114
    %5117 = vset.pattern.permute.xlu0 15
    %5118 = vperm.xlu0 %5117, %v2911
    %v5119 = vpop.permute.xlu0 %5118
    %v5121 = vmul.f32 %v5059, %v2629
    %v5122 = vmul.f32 %v5063, %v2631
    %v5123 = vmul.f32 %v5067, %v2634
    %v5124 = vmul.f32 %v5071, %v2636
    %v5125 = vmul.f32 %v5075, %v2639
    %v5126 = vmul.f32 %v5079, %v2641
    %v5127 = vmul.f32 %v5083, %v2644
    %v5128 = vmul.f32 %v5087, %v2646
    %v5129 = vmul.f32 %v5091, %v2649
    %v5130 = vmul.f32 %v5095, %v2651
    %v5131 = vmul.f32 %v5099, %v2654
    %v5132 = vmul.f32 %v5103, %v2656
    %v5133 = vmul.f32 %v5107, %v2659
    %v5134 = vmul.f32 %v5111, %v2661
    %v5135 = vmul.f32 %v5115, %v2664
    %v5136 = vmul.f32 %v5119, %v2666
    %5153 = vrot.lane.b32.xlu0 %v5121, 32
    %v5154 = vpop.permute.xlu0 %5153
    %5155 = vrot.lane.b32.xlu0 %v5122, 32
    %v5156 = vpop.permute.xlu0 %5155
    %5157 = vrot.lane.b32.xlu0 %v5123, 32
    %v5158 = vpop.permute.xlu0 %5157
    %5159 = vrot.lane.b32.xlu0 %v5124, 32
    %v5160 = vpop.permute.xlu0 %5159
    %5161 = vrot.lane.b32.xlu0 %v5125, 32
    %v5162 = vpop.permute.xlu0 %5161
    %5163 = vrot.lane.b32.xlu0 %v5126, 32
    %v5164 = vpop.permute.xlu0 %5163
    %5165 = vrot.lane.b32.xlu0 %v5127, 32
    %v5166 = vpop.permute.xlu0 %5165
    %5167 = vrot.lane.b32.xlu0 %v5128, 32
    %v5168 = vpop.permute.xlu0 %5167
    %5169 = vrot.lane.b32.xlu0 %v5129, 32
    %v5170 = vpop.permute.xlu0 %5169
    %5171 = vrot.lane.b32.xlu0 %v5130, 32
    %v5172 = vpop.permute.xlu0 %5171
    %5173 = vrot.lane.b32.xlu0 %v5131, 32
    %v5174 = vpop.permute.xlu0 %5173
    %5175 = vrot.lane.b32.xlu0 %v5132, 32
    %v5176 = vpop.permute.xlu0 %5175
    %5177 = vrot.lane.b32.xlu0 %v5133, 32
    %v5178 = vpop.permute.xlu0 %5177
    %5179 = vrot.lane.b32.xlu0 %v5134, 32
    %v5180 = vpop.permute.xlu0 %5179
    %5181 = vrot.lane.b32.xlu0 %v5135, 32
    %v5182 = vpop.permute.xlu0 %5181
    %5183 = vrot.lane.b32.xlu0 %v5136, 32
    %v5184 = vpop.permute.xlu0 %5183
    %v5201 = vadd.f32 %v5041, %v5154
    %v5202 = vadd.f32 %v5042, %v5156
    %v5203 = vadd.f32 %v5043, %v5158
    %v5204 = vadd.f32 %v5044, %v5160
    %v5205 = vadd.f32 %v5045, %v5162
    %v5206 = vadd.f32 %v5046, %v5164
    %v5207 = vadd.f32 %v5047, %v5166
    %v5208 = vadd.f32 %v5048, %v5168
    %v5209 = vadd.f32 %v5049, %v5170
    %v5210 = vadd.f32 %v5050, %v5172
    %v5211 = vadd.f32 %v5051, %v5174
    %v5212 = vadd.f32 %v5052, %v5176
    %v5213 = vadd.f32 %v5053, %v5178
    %v5214 = vadd.f32 %v5054, %v5180
    %v5215 = vadd.f32 %v5055, %v5182
    %v5216 = vadd.f32 %v5056, %v5184
    %5217 = vset.pattern.permute.xlu0 16
    %5218 = vperm.xlu0 %5217, %v2874
    %v5219 = vpop.permute.xlu0 %5218
    %5221 = vset.pattern.permute.xlu0 16
    %5222 = vperm.xlu0 %5221, %v2876
    %v5223 = vpop.permute.xlu0 %5222
    %5225 = vset.pattern.permute.xlu0 16
    %5226 = vperm.xlu0 %5225, %v2879
    %v5227 = vpop.permute.xlu0 %5226
    %5229 = vset.pattern.permute.xlu0 16
    %5230 = vperm.xlu0 %5229, %v2881
    %v5231 = vpop.permute.xlu0 %5230
    %5233 = vset.pattern.permute.xlu0 16
    %5234 = vperm.xlu0 %5233, %v2884
    %v5235 = vpop.permute.xlu0 %5234
    %5237 = vset.pattern.permute.xlu0 16
    %5238 = vperm.xlu0 %5237, %v2886
    %v5239 = vpop.permute.xlu0 %5238
    %5241 = vset.pattern.permute.xlu0 16
    %5242 = vperm.xlu0 %5241, %v2889
    %v5243 = vpop.permute.xlu0 %5242
    %5245 = vset.pattern.permute.xlu0 16
    %5246 = vperm.xlu0 %5245, %v2891
    %v5247 = vpop.permute.xlu0 %5246
    %5249 = vset.pattern.permute.xlu0 16
    %5250 = vperm.xlu0 %5249, %v2894
    %v5251 = vpop.permute.xlu0 %5250
    %5253 = vset.pattern.permute.xlu0 16
    %5254 = vperm.xlu0 %5253, %v2896
    %v5255 = vpop.permute.xlu0 %5254
    %5257 = vset.pattern.permute.xlu0 16
    %5258 = vperm.xlu0 %5257, %v2899
    %v5259 = vpop.permute.xlu0 %5258
    %5261 = vset.pattern.permute.xlu0 16
    %5262 = vperm.xlu0 %5261, %v2901
    %v5263 = vpop.permute.xlu0 %5262
    %5265 = vset.pattern.permute.xlu0 16
    %5266 = vperm.xlu0 %5265, %v2904
    %v5267 = vpop.permute.xlu0 %5266
    %5269 = vset.pattern.permute.xlu0 16
    %5270 = vperm.xlu0 %5269, %v2906
    %v5271 = vpop.permute.xlu0 %5270
    %5273 = vset.pattern.permute.xlu0 16
    %5274 = vperm.xlu0 %5273, %v2909
    %v5275 = vpop.permute.xlu0 %5274
    %5277 = vset.pattern.permute.xlu0 16
    %5278 = vperm.xlu0 %5277, %v2911
    %v5279 = vpop.permute.xlu0 %5278
    %v5281 = vmul.f32 %v5219, %v2678
    %v5282 = vmul.f32 %v5223, %v2680
    %v5283 = vmul.f32 %v5227, %v2683
    %v5284 = vmul.f32 %v5231, %v2685
    %v5285 = vmul.f32 %v5235, %v2688
    %v5286 = vmul.f32 %v5239, %v2690
    %v5287 = vmul.f32 %v5243, %v2693
    %v5288 = vmul.f32 %v5247, %v2695
    %v5289 = vmul.f32 %v5251, %v2698
    %v5290 = vmul.f32 %v5255, %v2700
    %v5291 = vmul.f32 %v5259, %v2703
    %v5292 = vmul.f32 %v5263, %v2705
    %v5293 = vmul.f32 %v5267, %v2708
    %v5294 = vmul.f32 %v5271, %v2710
    %v5295 = vmul.f32 %v5275, %v2713
    %v5296 = vmul.f32 %v5279, %v2715
    %v5297 = vadd.f32 %v5201, %v5281
    %v5298 = vadd.f32 %v5202, %v5282
    %v5299 = vadd.f32 %v5203, %v5283
    %v5300 = vadd.f32 %v5204, %v5284
    %v5301 = vadd.f32 %v5205, %v5285
    %v5302 = vadd.f32 %v5206, %v5286
    %v5303 = vadd.f32 %v5207, %v5287
    %v5304 = vadd.f32 %v5208, %v5288
    %v5305 = vadd.f32 %v5209, %v5289
    %v5306 = vadd.f32 %v5210, %v5290
    %v5307 = vadd.f32 %v5211, %v5291
    %v5308 = vadd.f32 %v5212, %v5292
    %v5309 = vadd.f32 %v5213, %v5293
    %v5310 = vadd.f32 %v5214, %v5294
    %v5311 = vadd.f32 %v5215, %v5295
    %v5312 = vadd.f32 %v5216, %v5296
    %5313 = vset.pattern.permute.xlu0 17
    %5314 = vperm.xlu0 %5313, %v2874
    %v5315 = vpop.permute.xlu0 %5314
    %5317 = vset.pattern.permute.xlu0 17
    %5318 = vperm.xlu0 %5317, %v2876
    %v5319 = vpop.permute.xlu0 %5318
    %5321 = vset.pattern.permute.xlu0 17
    %5322 = vperm.xlu0 %5321, %v2879
    %v5323 = vpop.permute.xlu0 %5322
    %5325 = vset.pattern.permute.xlu0 17
    %5326 = vperm.xlu0 %5325, %v2881
    %v5327 = vpop.permute.xlu0 %5326
    %5329 = vset.pattern.permute.xlu0 17
    %5330 = vperm.xlu0 %5329, %v2884
    %v5331 = vpop.permute.xlu0 %5330
    %5333 = vset.pattern.permute.xlu0 17
    %5334 = vperm.xlu0 %5333, %v2886
    %v5335 = vpop.permute.xlu0 %5334
    %5337 = vset.pattern.permute.xlu0 17
    %5338 = vperm.xlu0 %5337, %v2889
    %v5339 = vpop.permute.xlu0 %5338
    %5341 = vset.pattern.permute.xlu0 17
    %5342 = vperm.xlu0 %5341, %v2891
    %v5343 = vpop.permute.xlu0 %5342
    %5345 = vset.pattern.permute.xlu0 17
    %5346 = vperm.xlu0 %5345, %v2894
    %v5347 = vpop.permute.xlu0 %5346
    %5349 = vset.pattern.permute.xlu0 17
    %5350 = vperm.xlu0 %5349, %v2896
    %v5351 = vpop.permute.xlu0 %5350
    %5353 = vset.pattern.permute.xlu0 17
    %5354 = vperm.xlu0 %5353, %v2899
    %v5355 = vpop.permute.xlu0 %5354
    %5357 = vset.pattern.permute.xlu0 17
    %5358 = vperm.xlu0 %5357, %v2901
    %v5359 = vpop.permute.xlu0 %5358
    %5361 = vset.pattern.permute.xlu0 17
    %5362 = vperm.xlu0 %5361, %v2904
    %v5363 = vpop.permute.xlu0 %5362
    %5365 = vset.pattern.permute.xlu0 17
    %5366 = vperm.xlu0 %5365, %v2906
    %v5367 = vpop.permute.xlu0 %5366
    %5369 = vset.pattern.permute.xlu0 17
    %5370 = vperm.xlu0 %5369, %v2909
    %v5371 = vpop.permute.xlu0 %5370
    %5373 = vset.pattern.permute.xlu0 17
    %5374 = vperm.xlu0 %5373, %v2911
    %v5375 = vpop.permute.xlu0 %5374
    %v5377 = vmul.f32 %v5315, %v2678
    %v5378 = vmul.f32 %v5319, %v2680
    %v5379 = vmul.f32 %v5323, %v2683
    %v5380 = vmul.f32 %v5327, %v2685
    %v5381 = vmul.f32 %v5331, %v2688
    %v5382 = vmul.f32 %v5335, %v2690
    %v5383 = vmul.f32 %v5339, %v2693
    %v5384 = vmul.f32 %v5343, %v2695
    %v5385 = vmul.f32 %v5347, %v2698
    %v5386 = vmul.f32 %v5351, %v2700
    %v5387 = vmul.f32 %v5355, %v2703
    %v5388 = vmul.f32 %v5359, %v2705
    %v5389 = vmul.f32 %v5363, %v2708
    %v5390 = vmul.f32 %v5367, %v2710
    %v5391 = vmul.f32 %v5371, %v2713
    %v5392 = vmul.f32 %v5375, %v2715
    %5409 = vrot.lane.b32.xlu0 %v5377, 96
    %v5410 = vpop.permute.xlu0 %5409
    %5411 = vrot.lane.b32.xlu0 %v5378, 96
    %v5412 = vpop.permute.xlu0 %5411
    %5413 = vrot.lane.b32.xlu0 %v5379, 96
    %v5414 = vpop.permute.xlu0 %5413
    %5415 = vrot.lane.b32.xlu0 %v5380, 96
    %v5416 = vpop.permute.xlu0 %5415
    %5417 = vrot.lane.b32.xlu0 %v5381, 96
    %v5418 = vpop.permute.xlu0 %5417
    %5419 = vrot.lane.b32.xlu0 %v5382, 96
    %v5420 = vpop.permute.xlu0 %5419
    %5421 = vrot.lane.b32.xlu0 %v5383, 96
    %v5422 = vpop.permute.xlu0 %5421
    %5423 = vrot.lane.b32.xlu0 %v5384, 96
    %v5424 = vpop.permute.xlu0 %5423
    %5425 = vrot.lane.b32.xlu0 %v5385, 96
    %v5426 = vpop.permute.xlu0 %5425
    %5427 = vrot.lane.b32.xlu0 %v5386, 96
    %v5428 = vpop.permute.xlu0 %5427
    %5429 = vrot.lane.b32.xlu0 %v5387, 96
    %v5430 = vpop.permute.xlu0 %5429
    %5431 = vrot.lane.b32.xlu0 %v5388, 96
    %v5432 = vpop.permute.xlu0 %5431
    %5433 = vrot.lane.b32.xlu0 %v5389, 96
    %v5434 = vpop.permute.xlu0 %5433
    %5435 = vrot.lane.b32.xlu0 %v5390, 96
    %v5436 = vpop.permute.xlu0 %5435
    %5437 = vrot.lane.b32.xlu0 %v5391, 96
    %v5438 = vpop.permute.xlu0 %5437
    %5439 = vrot.lane.b32.xlu0 %v5392, 96
    %v5440 = vpop.permute.xlu0 %5439
    %v5457 = vadd.f32 %v5297, %v5410
    %v5458 = vadd.f32 %v5298, %v5412
    %v5459 = vadd.f32 %v5299, %v5414
    %v5460 = vadd.f32 %v5300, %v5416
    %v5461 = vadd.f32 %v5301, %v5418
    %v5462 = vadd.f32 %v5302, %v5420
    %v5463 = vadd.f32 %v5303, %v5422
    %v5464 = vadd.f32 %v5304, %v5424
    %v5465 = vadd.f32 %v5305, %v5426
    %v5466 = vadd.f32 %v5306, %v5428
    %v5467 = vadd.f32 %v5307, %v5430
    %v5468 = vadd.f32 %v5308, %v5432
    %v5469 = vadd.f32 %v5309, %v5434
    %v5470 = vadd.f32 %v5310, %v5436
    %v5471 = vadd.f32 %v5311, %v5438
    %v5472 = vadd.f32 %v5312, %v5440
    %5473 = vset.pattern.permute.xlu0 18
    %5474 = vperm.xlu0 %5473, %v2874
    %v5475 = vpop.permute.xlu0 %5474
    %5477 = vset.pattern.permute.xlu0 18
    %5478 = vperm.xlu0 %5477, %v2876
    %v5479 = vpop.permute.xlu0 %5478
    %5481 = vset.pattern.permute.xlu0 18
    %5482 = vperm.xlu0 %5481, %v2879
    %v5483 = vpop.permute.xlu0 %5482
    %5485 = vset.pattern.permute.xlu0 18
    %5486 = vperm.xlu0 %5485, %v2881
    %v5487 = vpop.permute.xlu0 %5486
    %5489 = vset.pattern.permute.xlu0 18
    %5490 = vperm.xlu0 %5489, %v2884
    %v5491 = vpop.permute.xlu0 %5490
    %5493 = vset.pattern.permute.xlu0 18
    %5494 = vperm.xlu0 %5493, %v2886
    %v5495 = vpop.permute.xlu0 %5494
    %5497 = vset.pattern.permute.xlu0 18
    %5498 = vperm.xlu0 %5497, %v2889
    %v5499 = vpop.permute.xlu0 %5498
    %5501 = vset.pattern.permute.xlu0 18
    %5502 = vperm.xlu0 %5501, %v2891
    %v5503 = vpop.permute.xlu0 %5502
    %5505 = vset.pattern.permute.xlu0 18
    %5506 = vperm.xlu0 %5505, %v2894
    %v5507 = vpop.permute.xlu0 %5506
    %5509 = vset.pattern.permute.xlu0 18
    %5510 = vperm.xlu0 %5509, %v2896
    %v5511 = vpop.permute.xlu0 %5510
    %5513 = vset.pattern.permute.xlu0 18
    %5514 = vperm.xlu0 %5513, %v2899
    %v5515 = vpop.permute.xlu0 %5514
    %5517 = vset.pattern.permute.xlu0 18
    %5518 = vperm.xlu0 %5517, %v2901
    %v5519 = vpop.permute.xlu0 %5518
    %5521 = vset.pattern.permute.xlu0 18
    %5522 = vperm.xlu0 %5521, %v2904
    %v5523 = vpop.permute.xlu0 %5522
    %5525 = vset.pattern.permute.xlu0 18
    %5526 = vperm.xlu0 %5525, %v2906
    %v5527 = vpop.permute.xlu0 %5526
    %5529 = vset.pattern.permute.xlu0 18
    %5530 = vperm.xlu0 %5529, %v2909
    %v5531 = vpop.permute.xlu0 %5530
    %5533 = vset.pattern.permute.xlu0 18
    %5534 = vperm.xlu0 %5533, %v2911
    %v5535 = vpop.permute.xlu0 %5534
    %v5537 = vmul.f32 %v5475, %v2678
    %v5538 = vmul.f32 %v5479, %v2680
    %v5539 = vmul.f32 %v5483, %v2683
    %v5540 = vmul.f32 %v5487, %v2685
    %v5541 = vmul.f32 %v5491, %v2688
    %v5542 = vmul.f32 %v5495, %v2690
    %v5543 = vmul.f32 %v5499, %v2693
    %v5544 = vmul.f32 %v5503, %v2695
    %v5545 = vmul.f32 %v5507, %v2698
    %v5546 = vmul.f32 %v5511, %v2700
    %v5547 = vmul.f32 %v5515, %v2703
    %v5548 = vmul.f32 %v5519, %v2705
    %v5549 = vmul.f32 %v5523, %v2708
    %v5550 = vmul.f32 %v5527, %v2710
    %v5551 = vmul.f32 %v5531, %v2713
    %v5552 = vmul.f32 %v5535, %v2715
    %5569 = vrot.lane.b32.xlu0 %v5537, 64
    %v5570 = vpop.permute.xlu0 %5569
    %5571 = vrot.lane.b32.xlu0 %v5538, 64
    %v5572 = vpop.permute.xlu0 %5571
    %5573 = vrot.lane.b32.xlu0 %v5539, 64
    %v5574 = vpop.permute.xlu0 %5573
    %5575 = vrot.lane.b32.xlu0 %v5540, 64
    %v5576 = vpop.permute.xlu0 %5575
    %5577 = vrot.lane.b32.xlu0 %v5541, 64
    %v5578 = vpop.permute.xlu0 %5577
    %5579 = vrot.lane.b32.xlu0 %v5542, 64
    %v5580 = vpop.permute.xlu0 %5579
    %5581 = vrot.lane.b32.xlu0 %v5543, 64
    %v5582 = vpop.permute.xlu0 %5581
    %5583 = vrot.lane.b32.xlu0 %v5544, 64
    %v5584 = vpop.permute.xlu0 %5583
    %5585 = vrot.lane.b32.xlu0 %v5545, 64
    %v5586 = vpop.permute.xlu0 %5585
    %5587 = vrot.lane.b32.xlu0 %v5546, 64
    %v5588 = vpop.permute.xlu0 %5587
    %5589 = vrot.lane.b32.xlu0 %v5547, 64
    %v5590 = vpop.permute.xlu0 %5589
    %5591 = vrot.lane.b32.xlu0 %v5548, 64
    %v5592 = vpop.permute.xlu0 %5591
    %5593 = vrot.lane.b32.xlu0 %v5549, 64
    %v5594 = vpop.permute.xlu0 %5593
    %5595 = vrot.lane.b32.xlu0 %v5550, 64
    %v5596 = vpop.permute.xlu0 %5595
    %5597 = vrot.lane.b32.xlu0 %v5551, 64
    %v5598 = vpop.permute.xlu0 %5597
    %5599 = vrot.lane.b32.xlu0 %v5552, 64
    %v5600 = vpop.permute.xlu0 %5599
    %v5617 = vadd.f32 %v5457, %v5570
    %v5618 = vadd.f32 %v5458, %v5572
    %v5619 = vadd.f32 %v5459, %v5574
    %v5620 = vadd.f32 %v5460, %v5576
    %v5621 = vadd.f32 %v5461, %v5578
    %v5622 = vadd.f32 %v5462, %v5580
    %v5623 = vadd.f32 %v5463, %v5582
    %v5624 = vadd.f32 %v5464, %v5584
    %v5625 = vadd.f32 %v5465, %v5586
    %v5626 = vadd.f32 %v5466, %v5588
    %v5627 = vadd.f32 %v5467, %v5590
    %v5628 = vadd.f32 %v5468, %v5592
    %v5629 = vadd.f32 %v5469, %v5594
    %v5630 = vadd.f32 %v5470, %v5596
    %v5631 = vadd.f32 %v5471, %v5598
    %v5632 = vadd.f32 %v5472, %v5600
    %5633 = vset.pattern.permute.xlu0 19
    %5634 = vperm.xlu0 %5633, %v2874
    %v5635 = vpop.permute.xlu0 %5634
    %5637 = vset.pattern.permute.xlu0 19
    %5638 = vperm.xlu0 %5637, %v2876
    %v5639 = vpop.permute.xlu0 %5638
    %5641 = vset.pattern.permute.xlu0 19
    %5642 = vperm.xlu0 %5641, %v2879
    %v5643 = vpop.permute.xlu0 %5642
    %5645 = vset.pattern.permute.xlu0 19
    %5646 = vperm.xlu0 %5645, %v2881
    %v5647 = vpop.permute.xlu0 %5646
    %5649 = vset.pattern.permute.xlu0 19
    %5650 = vperm.xlu0 %5649, %v2884
    %v5651 = vpop.permute.xlu0 %5650
    %5653 = vset.pattern.permute.xlu0 19
    %5654 = vperm.xlu0 %5653, %v2886
    %v5655 = vpop.permute.xlu0 %5654
    %5657 = vset.pattern.permute.xlu0 19
    %5658 = vperm.xlu0 %5657, %v2889
    %v5659 = vpop.permute.xlu0 %5658
    %5661 = vset.pattern.permute.xlu0 19
    %5662 = vperm.xlu0 %5661, %v2891
    %v5663 = vpop.permute.xlu0 %5662
    %5665 = vset.pattern.permute.xlu0 19
    %5666 = vperm.xlu0 %5665, %v2894
    %v5667 = vpop.permute.xlu0 %5666
    %5669 = vset.pattern.permute.xlu0 19
    %5670 = vperm.xlu0 %5669, %v2896
    %v5671 = vpop.permute.xlu0 %5670
    %5673 = vset.pattern.permute.xlu0 19
    %5674 = vperm.xlu0 %5673, %v2899
    %v5675 = vpop.permute.xlu0 %5674
    %5677 = vset.pattern.permute.xlu0 19
    %5678 = vperm.xlu0 %5677, %v2901
    %v5679 = vpop.permute.xlu0 %5678
    %5681 = vset.pattern.permute.xlu0 19
    %5682 = vperm.xlu0 %5681, %v2904
    %v5683 = vpop.permute.xlu0 %5682
    %5685 = vset.pattern.permute.xlu0 19
    %5686 = vperm.xlu0 %5685, %v2906
    %v5687 = vpop.permute.xlu0 %5686
    %5689 = vset.pattern.permute.xlu0 19
    %5690 = vperm.xlu0 %5689, %v2909
    %v5691 = vpop.permute.xlu0 %5690
    %5693 = vset.pattern.permute.xlu0 19
    %5694 = vperm.xlu0 %5693, %v2911
    %v5695 = vpop.permute.xlu0 %5694
    %v5697 = vmul.f32 %v5635, %v2678
    %v5698 = vmul.f32 %v5639, %v2680
    %v5699 = vmul.f32 %v5643, %v2683
    %v5700 = vmul.f32 %v5647, %v2685
    %v5701 = vmul.f32 %v5651, %v2688
    %v5702 = vmul.f32 %v5655, %v2690
    %v5703 = vmul.f32 %v5659, %v2693
    %v5704 = vmul.f32 %v5663, %v2695
    %v5705 = vmul.f32 %v5667, %v2698
    %v5706 = vmul.f32 %v5671, %v2700
    %v5707 = vmul.f32 %v5675, %v2703
    %v5708 = vmul.f32 %v5679, %v2705
    %v5709 = vmul.f32 %v5683, %v2708
    %v5710 = vmul.f32 %v5687, %v2710
    %v5711 = vmul.f32 %v5691, %v2713
    %v5712 = vmul.f32 %v5695, %v2715
    %5729 = vrot.lane.b32.xlu0 %v5697, 32
    %v5730 = vpop.permute.xlu0 %5729
    %5731 = vrot.lane.b32.xlu0 %v5698, 32
    %v5732 = vpop.permute.xlu0 %5731
    %5733 = vrot.lane.b32.xlu0 %v5699, 32
    %v5734 = vpop.permute.xlu0 %5733
    %5735 = vrot.lane.b32.xlu0 %v5700, 32
    %v5736 = vpop.permute.xlu0 %5735
    %5737 = vrot.lane.b32.xlu0 %v5701, 32
    %v5738 = vpop.permute.xlu0 %5737
    %5739 = vrot.lane.b32.xlu0 %v5702, 32
    %v5740 = vpop.permute.xlu0 %5739
    %5741 = vrot.lane.b32.xlu0 %v5703, 32
    %v5742 = vpop.permute.xlu0 %5741
    %5743 = vrot.lane.b32.xlu0 %v5704, 32
    %v5744 = vpop.permute.xlu0 %5743
    %5745 = vrot.lane.b32.xlu0 %v5705, 32
    %v5746 = vpop.permute.xlu0 %5745
    %5747 = vrot.lane.b32.xlu0 %v5706, 32
    %v5748 = vpop.permute.xlu0 %5747
    %5749 = vrot.lane.b32.xlu0 %v5707, 32
    %v5750 = vpop.permute.xlu0 %5749
    %5751 = vrot.lane.b32.xlu0 %v5708, 32
    %v5752 = vpop.permute.xlu0 %5751
    %5753 = vrot.lane.b32.xlu0 %v5709, 32
    %v5754 = vpop.permute.xlu0 %5753
    %5755 = vrot.lane.b32.xlu0 %v5710, 32
    %v5756 = vpop.permute.xlu0 %5755
    %5757 = vrot.lane.b32.xlu0 %v5711, 32
    %v5758 = vpop.permute.xlu0 %5757
    %5759 = vrot.lane.b32.xlu0 %v5712, 32
    %v5760 = vpop.permute.xlu0 %5759
    %v5777 = vadd.f32 %v5617, %v5730
    %v5778 = vadd.f32 %v5618, %v5732
    %v5779 = vadd.f32 %v5619, %v5734
    %v5780 = vadd.f32 %v5620, %v5736
    %v5781 = vadd.f32 %v5621, %v5738
    %v5782 = vadd.f32 %v5622, %v5740
    %v5783 = vadd.f32 %v5623, %v5742
    %v5784 = vadd.f32 %v5624, %v5744
    %v5785 = vadd.f32 %v5625, %v5746
    %v5786 = vadd.f32 %v5626, %v5748
    %v5787 = vadd.f32 %v5627, %v5750
    %v5788 = vadd.f32 %v5628, %v5752
    %v5789 = vadd.f32 %v5629, %v5754
    %v5790 = vadd.f32 %v5630, %v5756
    %v5791 = vadd.f32 %v5631, %v5758
    %v5792 = vadd.f32 %v5632, %v5760
    %5793 = vset.pattern.permute.xlu0 20
    %5794 = vperm.xlu0 %5793, %v2874
    %v5795 = vpop.permute.xlu0 %5794
    %5797 = vset.pattern.permute.xlu0 20
    %5798 = vperm.xlu0 %5797, %v2876
    %v5799 = vpop.permute.xlu0 %5798
    %5801 = vset.pattern.permute.xlu0 20
    %5802 = vperm.xlu0 %5801, %v2879
    %v5803 = vpop.permute.xlu0 %5802
    %5805 = vset.pattern.permute.xlu0 20
    %5806 = vperm.xlu0 %5805, %v2881
    %v5807 = vpop.permute.xlu0 %5806
    %5809 = vset.pattern.permute.xlu0 20
    %5810 = vperm.xlu0 %5809, %v2884
    %v5811 = vpop.permute.xlu0 %5810
    %5813 = vset.pattern.permute.xlu0 20
    %5814 = vperm.xlu0 %5813, %v2886
    %v5815 = vpop.permute.xlu0 %5814
    %5817 = vset.pattern.permute.xlu0 20
    %5818 = vperm.xlu0 %5817, %v2889
    %v5819 = vpop.permute.xlu0 %5818
    %5821 = vset.pattern.permute.xlu0 20
    %5822 = vperm.xlu0 %5821, %v2891
    %v5823 = vpop.permute.xlu0 %5822
    %5825 = vset.pattern.permute.xlu0 20
    %5826 = vperm.xlu0 %5825, %v2894
    %v5827 = vpop.permute.xlu0 %5826
    %5829 = vset.pattern.permute.xlu0 20
    %5830 = vperm.xlu0 %5829, %v2896
    %v5831 = vpop.permute.xlu0 %5830
    %5833 = vset.pattern.permute.xlu0 20
    %5834 = vperm.xlu0 %5833, %v2899
    %v5835 = vpop.permute.xlu0 %5834
    %5837 = vset.pattern.permute.xlu0 20
    %5838 = vperm.xlu0 %5837, %v2901
    %v5839 = vpop.permute.xlu0 %5838
    %5841 = vset.pattern.permute.xlu0 20
    %5842 = vperm.xlu0 %5841, %v2904
    %v5843 = vpop.permute.xlu0 %5842
    %5845 = vset.pattern.permute.xlu0 20
    %5846 = vperm.xlu0 %5845, %v2906
    %v5847 = vpop.permute.xlu0 %5846
    %5849 = vset.pattern.permute.xlu0 20
    %5850 = vperm.xlu0 %5849, %v2909
    %v5851 = vpop.permute.xlu0 %5850
    %5853 = vset.pattern.permute.xlu0 20
    %5854 = vperm.xlu0 %5853, %v2911
    %v5855 = vpop.permute.xlu0 %5854
    %v5857 = vmul.f32 %v5795, %v2727
    %v5858 = vmul.f32 %v5799, %v2729
    %v5859 = vmul.f32 %v5803, %v2732
    %v5860 = vmul.f32 %v5807, %v2734
    %v5861 = vmul.f32 %v5811, %v2737
    %v5862 = vmul.f32 %v5815, %v2739
    %v5863 = vmul.f32 %v5819, %v2742
    %v5864 = vmul.f32 %v5823, %v2744
    %v5865 = vmul.f32 %v5827, %v2747
    %v5866 = vmul.f32 %v5831, %v2749
    %v5867 = vmul.f32 %v5835, %v2752
    %v5868 = vmul.f32 %v5839, %v2754
    %v5869 = vmul.f32 %v5843, %v2757
    %v5870 = vmul.f32 %v5847, %v2759
    %v5871 = vmul.f32 %v5851, %v2762
    %v5872 = vmul.f32 %v5855, %v2764
    %v5873 = vadd.f32 %v5777, %v5857
    %v5874 = vadd.f32 %v5778, %v5858
    %v5875 = vadd.f32 %v5779, %v5859
    %v5876 = vadd.f32 %v5780, %v5860
    %v5877 = vadd.f32 %v5781, %v5861
    %v5878 = vadd.f32 %v5782, %v5862
    %v5879 = vadd.f32 %v5783, %v5863
    %v5880 = vadd.f32 %v5784, %v5864
    %v5881 = vadd.f32 %v5785, %v5865
    %v5882 = vadd.f32 %v5786, %v5866
    %v5883 = vadd.f32 %v5787, %v5867
    %v5884 = vadd.f32 %v5788, %v5868
    %v5885 = vadd.f32 %v5789, %v5869
    %v5886 = vadd.f32 %v5790, %v5870
    %v5887 = vadd.f32 %v5791, %v5871
    %v5888 = vadd.f32 %v5792, %v5872
    %5889 = vset.pattern.permute.xlu0 21
    %5890 = vperm.xlu0 %5889, %v2874
    %v5891 = vpop.permute.xlu0 %5890
    %5893 = vset.pattern.permute.xlu0 21
    %5894 = vperm.xlu0 %5893, %v2876
    %v5895 = vpop.permute.xlu0 %5894
    %5897 = vset.pattern.permute.xlu0 21
    %5898 = vperm.xlu0 %5897, %v2879
    %v5899 = vpop.permute.xlu0 %5898
    %5901 = vset.pattern.permute.xlu0 21
    %5902 = vperm.xlu0 %5901, %v2881
    %v5903 = vpop.permute.xlu0 %5902
    %5905 = vset.pattern.permute.xlu0 21
    %5906 = vperm.xlu0 %5905, %v2884
    %v5907 = vpop.permute.xlu0 %5906
    %5909 = vset.pattern.permute.xlu0 21
    %5910 = vperm.xlu0 %5909, %v2886
    %v5911 = vpop.permute.xlu0 %5910
    %5913 = vset.pattern.permute.xlu0 21
    %5914 = vperm.xlu0 %5913, %v2889
    %v5915 = vpop.permute.xlu0 %5914
    %5917 = vset.pattern.permute.xlu0 21
    %5918 = vperm.xlu0 %5917, %v2891
    %v5919 = vpop.permute.xlu0 %5918
    %5921 = vset.pattern.permute.xlu0 21
    %5922 = vperm.xlu0 %5921, %v2894
    %v5923 = vpop.permute.xlu0 %5922
    %5925 = vset.pattern.permute.xlu0 21
    %5926 = vperm.xlu0 %5925, %v2896
    %v5927 = vpop.permute.xlu0 %5926
    %5929 = vset.pattern.permute.xlu0 21
    %5930 = vperm.xlu0 %5929, %v2899
    %v5931 = vpop.permute.xlu0 %5930
    %5933 = vset.pattern.permute.xlu0 21
    %5934 = vperm.xlu0 %5933, %v2901
    %v5935 = vpop.permute.xlu0 %5934
    %5937 = vset.pattern.permute.xlu0 21
    %5938 = vperm.xlu0 %5937, %v2904
    %v5939 = vpop.permute.xlu0 %5938
    %5941 = vset.pattern.permute.xlu0 21
    %5942 = vperm.xlu0 %5941, %v2906
    %v5943 = vpop.permute.xlu0 %5942
    %5945 = vset.pattern.permute.xlu0 21
    %5946 = vperm.xlu0 %5945, %v2909
    %v5947 = vpop.permute.xlu0 %5946
    %5949 = vset.pattern.permute.xlu0 21
    %5950 = vperm.xlu0 %5949, %v2911
    %v5951 = vpop.permute.xlu0 %5950
    %v5953 = vmul.f32 %v5891, %v2727
    %v5954 = vmul.f32 %v5895, %v2729
    %v5955 = vmul.f32 %v5899, %v2732
    %v5956 = vmul.f32 %v5903, %v2734
    %v5957 = vmul.f32 %v5907, %v2737
    %v5958 = vmul.f32 %v5911, %v2739
    %v5959 = vmul.f32 %v5915, %v2742
    %v5960 = vmul.f32 %v5919, %v2744
    %v5961 = vmul.f32 %v5923, %v2747
    %v5962 = vmul.f32 %v5927, %v2749
    %v5963 = vmul.f32 %v5931, %v2752
    %v5964 = vmul.f32 %v5935, %v2754
    %v5965 = vmul.f32 %v5939, %v2757
    %v5966 = vmul.f32 %v5943, %v2759
    %v5967 = vmul.f32 %v5947, %v2762
    %v5968 = vmul.f32 %v5951, %v2764
    %5985 = vrot.lane.b32.xlu0 %v5953, 96
    %v5986 = vpop.permute.xlu0 %5985
    %5987 = vrot.lane.b32.xlu0 %v5954, 96
    %v5988 = vpop.permute.xlu0 %5987
    %5989 = vrot.lane.b32.xlu0 %v5955, 96
    %v5990 = vpop.permute.xlu0 %5989
    %5991 = vrot.lane.b32.xlu0 %v5956, 96
    %v5992 = vpop.permute.xlu0 %5991
    %5993 = vrot.lane.b32.xlu0 %v5957, 96
    %v5994 = vpop.permute.xlu0 %5993
    %5995 = vrot.lane.b32.xlu0 %v5958, 96
    %v5996 = vpop.permute.xlu0 %5995
    %5997 = vrot.lane.b32.xlu0 %v5959, 96
    %v5998 = vpop.permute.xlu0 %5997
    %5999 = vrot.lane.b32.xlu0 %v5960, 96
    %v6000 = vpop.permute.xlu0 %5999
    %6001 = vrot.lane.b32.xlu0 %v5961, 96
    %v6002 = vpop.permute.xlu0 %6001
    %6003 = vrot.lane.b32.xlu0 %v5962, 96
    %v6004 = vpop.permute.xlu0 %6003
    %6005 = vrot.lane.b32.xlu0 %v5963, 96
    %v6006 = vpop.permute.xlu0 %6005
    %6007 = vrot.lane.b32.xlu0 %v5964, 96
    %v6008 = vpop.permute.xlu0 %6007
    %6009 = vrot.lane.b32.xlu0 %v5965, 96
    %v6010 = vpop.permute.xlu0 %6009
    %6011 = vrot.lane.b32.xlu0 %v5966, 96
    %v6012 = vpop.permute.xlu0 %6011
    %6013 = vrot.lane.b32.xlu0 %v5967, 96
    %v6014 = vpop.permute.xlu0 %6013
    %6015 = vrot.lane.b32.xlu0 %v5968, 96
    %v6016 = vpop.permute.xlu0 %6015
    %v6033 = vadd.f32 %v5873, %v5986
    %v6034 = vadd.f32 %v5874, %v5988
    %v6035 = vadd.f32 %v5875, %v5990
    %v6036 = vadd.f32 %v5876, %v5992
    %v6037 = vadd.f32 %v5877, %v5994
    %v6038 = vadd.f32 %v5878, %v5996
    %v6039 = vadd.f32 %v5879, %v5998
    %v6040 = vadd.f32 %v5880, %v6000
    %v6041 = vadd.f32 %v5881, %v6002
    %v6042 = vadd.f32 %v5882, %v6004
    %v6043 = vadd.f32 %v5883, %v6006
    %v6044 = vadd.f32 %v5884, %v6008
    %v6045 = vadd.f32 %v5885, %v6010
    %v6046 = vadd.f32 %v5886, %v6012
    %v6047 = vadd.f32 %v5887, %v6014
    %v6048 = vadd.f32 %v5888, %v6016
    %6049 = vset.pattern.permute.xlu0 22
    %6050 = vperm.xlu0 %6049, %v2874
    %v6051 = vpop.permute.xlu0 %6050
    %6053 = vset.pattern.permute.xlu0 22
    %6054 = vperm.xlu0 %6053, %v2876
    %v6055 = vpop.permute.xlu0 %6054
    %6057 = vset.pattern.permute.xlu0 22
    %6058 = vperm.xlu0 %6057, %v2879
    %v6059 = vpop.permute.xlu0 %6058
    %6061 = vset.pattern.permute.xlu0 22
    %6062 = vperm.xlu0 %6061, %v2881
    %v6063 = vpop.permute.xlu0 %6062
    %6065 = vset.pattern.permute.xlu0 22
    %6066 = vperm.xlu0 %6065, %v2884
    %v6067 = vpop.permute.xlu0 %6066
    %6069 = vset.pattern.permute.xlu0 22
    %6070 = vperm.xlu0 %6069, %v2886
    %v6071 = vpop.permute.xlu0 %6070
    %6073 = vset.pattern.permute.xlu0 22
    %6074 = vperm.xlu0 %6073, %v2889
    %v6075 = vpop.permute.xlu0 %6074
    %6077 = vset.pattern.permute.xlu0 22
    %6078 = vperm.xlu0 %6077, %v2891
    %v6079 = vpop.permute.xlu0 %6078
    %6081 = vset.pattern.permute.xlu0 22
    %6082 = vperm.xlu0 %6081, %v2894
    %v6083 = vpop.permute.xlu0 %6082
    %6085 = vset.pattern.permute.xlu0 22
    %6086 = vperm.xlu0 %6085, %v2896
    %v6087 = vpop.permute.xlu0 %6086
    %6089 = vset.pattern.permute.xlu0 22
    %6090 = vperm.xlu0 %6089, %v2899
    %v6091 = vpop.permute.xlu0 %6090
    %6093 = vset.pattern.permute.xlu0 22
    %6094 = vperm.xlu0 %6093, %v2901
    %v6095 = vpop.permute.xlu0 %6094
    %6097 = vset.pattern.permute.xlu0 22
    %6098 = vperm.xlu0 %6097, %v2904
    %v6099 = vpop.permute.xlu0 %6098
    %6101 = vset.pattern.permute.xlu0 22
    %6102 = vperm.xlu0 %6101, %v2906
    %v6103 = vpop.permute.xlu0 %6102
    %6105 = vset.pattern.permute.xlu0 22
    %6106 = vperm.xlu0 %6105, %v2909
    %v6107 = vpop.permute.xlu0 %6106
    %6109 = vset.pattern.permute.xlu0 22
    %6110 = vperm.xlu0 %6109, %v2911
    %v6111 = vpop.permute.xlu0 %6110
    %v6113 = vmul.f32 %v6051, %v2727
    %v6114 = vmul.f32 %v6055, %v2729
    %v6115 = vmul.f32 %v6059, %v2732
    %v6116 = vmul.f32 %v6063, %v2734
    %v6117 = vmul.f32 %v6067, %v2737
    %v6118 = vmul.f32 %v6071, %v2739
    %v6119 = vmul.f32 %v6075, %v2742
    %v6120 = vmul.f32 %v6079, %v2744
    %v6121 = vmul.f32 %v6083, %v2747
    %v6122 = vmul.f32 %v6087, %v2749
    %v6123 = vmul.f32 %v6091, %v2752
    %v6124 = vmul.f32 %v6095, %v2754
    %v6125 = vmul.f32 %v6099, %v2757
    %v6126 = vmul.f32 %v6103, %v2759
    %v6127 = vmul.f32 %v6107, %v2762
    %v6128 = vmul.f32 %v6111, %v2764
    %6145 = vrot.lane.b32.xlu0 %v6113, 64
    %v6146 = vpop.permute.xlu0 %6145
    %6147 = vrot.lane.b32.xlu0 %v6114, 64
    %v6148 = vpop.permute.xlu0 %6147
    %6149 = vrot.lane.b32.xlu0 %v6115, 64
    %v6150 = vpop.permute.xlu0 %6149
    %6151 = vrot.lane.b32.xlu0 %v6116, 64
    %v6152 = vpop.permute.xlu0 %6151
    %6153 = vrot.lane.b32.xlu0 %v6117, 64
    %v6154 = vpop.permute.xlu0 %6153
    %6155 = vrot.lane.b32.xlu0 %v6118, 64
    %v6156 = vpop.permute.xlu0 %6155
    %6157 = vrot.lane.b32.xlu0 %v6119, 64
    %v6158 = vpop.permute.xlu0 %6157
    %6159 = vrot.lane.b32.xlu0 %v6120, 64
    %v6160 = vpop.permute.xlu0 %6159
    %6161 = vrot.lane.b32.xlu0 %v6121, 64
    %v6162 = vpop.permute.xlu0 %6161
    %6163 = vrot.lane.b32.xlu0 %v6122, 64
    %v6164 = vpop.permute.xlu0 %6163
    %6165 = vrot.lane.b32.xlu0 %v6123, 64
    %v6166 = vpop.permute.xlu0 %6165
    %6167 = vrot.lane.b32.xlu0 %v6124, 64
    %v6168 = vpop.permute.xlu0 %6167
    %6169 = vrot.lane.b32.xlu0 %v6125, 64
    %v6170 = vpop.permute.xlu0 %6169
    %6171 = vrot.lane.b32.xlu0 %v6126, 64
    %v6172 = vpop.permute.xlu0 %6171
    %6173 = vrot.lane.b32.xlu0 %v6127, 64
    %v6174 = vpop.permute.xlu0 %6173
    %6175 = vrot.lane.b32.xlu0 %v6128, 64
    %v6176 = vpop.permute.xlu0 %6175
    %v6193 = vadd.f32 %v6033, %v6146
    %v6194 = vadd.f32 %v6034, %v6148
    %v6195 = vadd.f32 %v6035, %v6150
    %v6196 = vadd.f32 %v6036, %v6152
    %v6197 = vadd.f32 %v6037, %v6154
    %v6198 = vadd.f32 %v6038, %v6156
    %v6199 = vadd.f32 %v6039, %v6158
    %v6200 = vadd.f32 %v6040, %v6160
    %v6201 = vadd.f32 %v6041, %v6162
    %v6202 = vadd.f32 %v6042, %v6164
    %v6203 = vadd.f32 %v6043, %v6166
    %v6204 = vadd.f32 %v6044, %v6168
    %v6205 = vadd.f32 %v6045, %v6170
    %v6206 = vadd.f32 %v6046, %v6172
    %v6207 = vadd.f32 %v6047, %v6174
    %v6208 = vadd.f32 %v6048, %v6176
    %6209 = vset.pattern.permute.xlu0 23
    %6210 = vperm.xlu0 %6209, %v2874
    %v6211 = vpop.permute.xlu0 %6210
    %6213 = vset.pattern.permute.xlu0 23
    %6214 = vperm.xlu0 %6213, %v2876
    %v6215 = vpop.permute.xlu0 %6214
    %6217 = vset.pattern.permute.xlu0 23
    %6218 = vperm.xlu0 %6217, %v2879
    %v6219 = vpop.permute.xlu0 %6218
    %6221 = vset.pattern.permute.xlu0 23
    %6222 = vperm.xlu0 %6221, %v2881
    %v6223 = vpop.permute.xlu0 %6222
    %6225 = vset.pattern.permute.xlu0 23
    %6226 = vperm.xlu0 %6225, %v2884
    %v6227 = vpop.permute.xlu0 %6226
    %6229 = vset.pattern.permute.xlu0 23
    %6230 = vperm.xlu0 %6229, %v2886
    %v6231 = vpop.permute.xlu0 %6230
    %6233 = vset.pattern.permute.xlu0 23
    %6234 = vperm.xlu0 %6233, %v2889
    %v6235 = vpop.permute.xlu0 %6234
    %6237 = vset.pattern.permute.xlu0 23
    %6238 = vperm.xlu0 %6237, %v2891
    %v6239 = vpop.permute.xlu0 %6238
    %6241 = vset.pattern.permute.xlu0 23
    %6242 = vperm.xlu0 %6241, %v2894
    %v6243 = vpop.permute.xlu0 %6242
    %6245 = vset.pattern.permute.xlu0 23
    %6246 = vperm.xlu0 %6245, %v2896
    %v6247 = vpop.permute.xlu0 %6246
    %6249 = vset.pattern.permute.xlu0 23
    %6250 = vperm.xlu0 %6249, %v2899
    %v6251 = vpop.permute.xlu0 %6250
    %6253 = vset.pattern.permute.xlu0 23
    %6254 = vperm.xlu0 %6253, %v2901
    %v6255 = vpop.permute.xlu0 %6254
    %6257 = vset.pattern.permute.xlu0 23
    %6258 = vperm.xlu0 %6257, %v2904
    %v6259 = vpop.permute.xlu0 %6258
    %6261 = vset.pattern.permute.xlu0 23
    %6262 = vperm.xlu0 %6261, %v2906
    %v6263 = vpop.permute.xlu0 %6262
    %6265 = vset.pattern.permute.xlu0 23
    %6266 = vperm.xlu0 %6265, %v2909
    %v6267 = vpop.permute.xlu0 %6266
    %6269 = vset.pattern.permute.xlu0 23
    %6270 = vperm.xlu0 %6269, %v2911
    %v6271 = vpop.permute.xlu0 %6270
    %v6273 = vmul.f32 %v6211, %v2727
    %v6274 = vmul.f32 %v6215, %v2729
    %v6275 = vmul.f32 %v6219, %v2732
    %v6276 = vmul.f32 %v6223, %v2734
    %v6277 = vmul.f32 %v6227, %v2737
    %v6278 = vmul.f32 %v6231, %v2739
    %v6279 = vmul.f32 %v6235, %v2742
    %v6280 = vmul.f32 %v6239, %v2744
    %v6281 = vmul.f32 %v6243, %v2747
    %v6282 = vmul.f32 %v6247, %v2749
    %v6283 = vmul.f32 %v6251, %v2752
    %v6284 = vmul.f32 %v6255, %v2754
    %v6285 = vmul.f32 %v6259, %v2757
    %v6286 = vmul.f32 %v6263, %v2759
    %v6287 = vmul.f32 %v6267, %v2762
    %v6288 = vmul.f32 %v6271, %v2764
    %6305 = vrot.lane.b32.xlu0 %v6273, 32
    %v6306 = vpop.permute.xlu0 %6305
    %6307 = vrot.lane.b32.xlu0 %v6274, 32
    %v6308 = vpop.permute.xlu0 %6307
    %6309 = vrot.lane.b32.xlu0 %v6275, 32
    %v6310 = vpop.permute.xlu0 %6309
    %6311 = vrot.lane.b32.xlu0 %v6276, 32
    %v6312 = vpop.permute.xlu0 %6311
    %6313 = vrot.lane.b32.xlu0 %v6277, 32
    %v6314 = vpop.permute.xlu0 %6313
    %6315 = vrot.lane.b32.xlu0 %v6278, 32
    %v6316 = vpop.permute.xlu0 %6315
    %6317 = vrot.lane.b32.xlu0 %v6279, 32
    %v6318 = vpop.permute.xlu0 %6317
    %6319 = vrot.lane.b32.xlu0 %v6280, 32
    %v6320 = vpop.permute.xlu0 %6319
    %6321 = vrot.lane.b32.xlu0 %v6281, 32
    %v6322 = vpop.permute.xlu0 %6321
    %6323 = vrot.lane.b32.xlu0 %v6282, 32
    %v6324 = vpop.permute.xlu0 %6323
    %6325 = vrot.lane.b32.xlu0 %v6283, 32
    %v6326 = vpop.permute.xlu0 %6325
    %6327 = vrot.lane.b32.xlu0 %v6284, 32
    %v6328 = vpop.permute.xlu0 %6327
    %6329 = vrot.lane.b32.xlu0 %v6285, 32
    %v6330 = vpop.permute.xlu0 %6329
    %6331 = vrot.lane.b32.xlu0 %v6286, 32
    %v6332 = vpop.permute.xlu0 %6331
    %6333 = vrot.lane.b32.xlu0 %v6287, 32
    %v6334 = vpop.permute.xlu0 %6333
    %6335 = vrot.lane.b32.xlu0 %v6288, 32
    %v6336 = vpop.permute.xlu0 %6335
    %v6353 = vadd.f32 %v6193, %v6306
    %v6354 = vadd.f32 %v6194, %v6308
    %v6355 = vadd.f32 %v6195, %v6310
    %v6356 = vadd.f32 %v6196, %v6312
    %v6357 = vadd.f32 %v6197, %v6314
    %v6358 = vadd.f32 %v6198, %v6316
    %v6359 = vadd.f32 %v6199, %v6318
    %v6360 = vadd.f32 %v6200, %v6320
    %v6361 = vadd.f32 %v6201, %v6322
    %v6362 = vadd.f32 %v6202, %v6324
    %v6363 = vadd.f32 %v6203, %v6326
    %v6364 = vadd.f32 %v6204, %v6328
    %v6365 = vadd.f32 %v6205, %v6330
    %v6366 = vadd.f32 %v6206, %v6332
    %v6367 = vadd.f32 %v6207, %v6334
    %v6368 = vadd.f32 %v6208, %v6336
    %6369 = vset.pattern.permute.xlu0 24
    %6370 = vperm.xlu0 %6369, %v2874
    %v6371 = vpop.permute.xlu0 %6370
    %6373 = vset.pattern.permute.xlu0 24
    %6374 = vperm.xlu0 %6373, %v2876
    %v6375 = vpop.permute.xlu0 %6374
    %6377 = vset.pattern.permute.xlu0 24
    %6378 = vperm.xlu0 %6377, %v2879
    %v6379 = vpop.permute.xlu0 %6378
    %6381 = vset.pattern.permute.xlu0 24
    %6382 = vperm.xlu0 %6381, %v2881
    %v6383 = vpop.permute.xlu0 %6382
    %6385 = vset.pattern.permute.xlu0 24
    %6386 = vperm.xlu0 %6385, %v2884
    %v6387 = vpop.permute.xlu0 %6386
    %6389 = vset.pattern.permute.xlu0 24
    %6390 = vperm.xlu0 %6389, %v2886
    %v6391 = vpop.permute.xlu0 %6390
    %6393 = vset.pattern.permute.xlu0 24
    %6394 = vperm.xlu0 %6393, %v2889
    %v6395 = vpop.permute.xlu0 %6394
    %6397 = vset.pattern.permute.xlu0 24
    %6398 = vperm.xlu0 %6397, %v2891
    %v6399 = vpop.permute.xlu0 %6398
    %6401 = vset.pattern.permute.xlu0 24
    %6402 = vperm.xlu0 %6401, %v2894
    %v6403 = vpop.permute.xlu0 %6402
    %6405 = vset.pattern.permute.xlu0 24
    %6406 = vperm.xlu0 %6405, %v2896
    %v6407 = vpop.permute.xlu0 %6406
    %6409 = vset.pattern.permute.xlu0 24
    %6410 = vperm.xlu0 %6409, %v2899
    %v6411 = vpop.permute.xlu0 %6410
    %6413 = vset.pattern.permute.xlu0 24
    %6414 = vperm.xlu0 %6413, %v2901
    %v6415 = vpop.permute.xlu0 %6414
    %6417 = vset.pattern.permute.xlu0 24
    %6418 = vperm.xlu0 %6417, %v2904
    %v6419 = vpop.permute.xlu0 %6418
    %6421 = vset.pattern.permute.xlu0 24
    %6422 = vperm.xlu0 %6421, %v2906
    %v6423 = vpop.permute.xlu0 %6422
    %6425 = vset.pattern.permute.xlu0 24
    %6426 = vperm.xlu0 %6425, %v2909
    %v6427 = vpop.permute.xlu0 %6426
    %6429 = vset.pattern.permute.xlu0 24
    %6430 = vperm.xlu0 %6429, %v2911
    %v6431 = vpop.permute.xlu0 %6430
    %v6433 = vmul.f32 %v6371, %v2776
    %v6434 = vmul.f32 %v6375, %v2778
    %v6435 = vmul.f32 %v6379, %v2781
    %v6436 = vmul.f32 %v6383, %v2783
    %v6437 = vmul.f32 %v6387, %v2786
    %v6438 = vmul.f32 %v6391, %v2788
    %v6439 = vmul.f32 %v6395, %v2791
    %v6440 = vmul.f32 %v6399, %v2793
    %v6441 = vmul.f32 %v6403, %v2796
    %v6442 = vmul.f32 %v6407, %v2798
    %v6443 = vmul.f32 %v6411, %v2801
    %v6444 = vmul.f32 %v6415, %v2803
    %v6445 = vmul.f32 %v6419, %v2806
    %v6446 = vmul.f32 %v6423, %v2808
    %v6447 = vmul.f32 %v6427, %v2811
    %v6448 = vmul.f32 %v6431, %v2813
    %v6449 = vadd.f32 %v6353, %v6433
    %v6450 = vadd.f32 %v6354, %v6434
    %v6451 = vadd.f32 %v6355, %v6435
    %v6452 = vadd.f32 %v6356, %v6436
    %v6453 = vadd.f32 %v6357, %v6437
    %v6454 = vadd.f32 %v6358, %v6438
    %v6455 = vadd.f32 %v6359, %v6439
    %v6456 = vadd.f32 %v6360, %v6440
    %v6457 = vadd.f32 %v6361, %v6441
    %v6458 = vadd.f32 %v6362, %v6442
    %v6459 = vadd.f32 %v6363, %v6443
    %v6460 = vadd.f32 %v6364, %v6444
    %v6461 = vadd.f32 %v6365, %v6445
    %v6462 = vadd.f32 %v6366, %v6446
    %v6463 = vadd.f32 %v6367, %v6447
    %v6464 = vadd.f32 %v6368, %v6448
    %6465 = vset.pattern.permute.xlu0 25
    %6466 = vperm.xlu0 %6465, %v2874
    %v6467 = vpop.permute.xlu0 %6466
    %6469 = vset.pattern.permute.xlu0 25
    %6470 = vperm.xlu0 %6469, %v2876
    %v6471 = vpop.permute.xlu0 %6470
    %6473 = vset.pattern.permute.xlu0 25
    %6474 = vperm.xlu0 %6473, %v2879
    %v6475 = vpop.permute.xlu0 %6474
    %6477 = vset.pattern.permute.xlu0 25
    %6478 = vperm.xlu0 %6477, %v2881
    %v6479 = vpop.permute.xlu0 %6478
    %6481 = vset.pattern.permute.xlu0 25
    %6482 = vperm.xlu0 %6481, %v2884
    %v6483 = vpop.permute.xlu0 %6482
    %6485 = vset.pattern.permute.xlu0 25
    %6486 = vperm.xlu0 %6485, %v2886
    %v6487 = vpop.permute.xlu0 %6486
    %6489 = vset.pattern.permute.xlu0 25
    %6490 = vperm.xlu0 %6489, %v2889
    %v6491 = vpop.permute.xlu0 %6490
    %6493 = vset.pattern.permute.xlu0 25
    %6494 = vperm.xlu0 %6493, %v2891
    %v6495 = vpop.permute.xlu0 %6494
    %6497 = vset.pattern.permute.xlu0 25
    %6498 = vperm.xlu0 %6497, %v2894
    %v6499 = vpop.permute.xlu0 %6498
    %6501 = vset.pattern.permute.xlu0 25
    %6502 = vperm.xlu0 %6501, %v2896
    %v6503 = vpop.permute.xlu0 %6502
    %6505 = vset.pattern.permute.xlu0 25
    %6506 = vperm.xlu0 %6505, %v2899
    %v6507 = vpop.permute.xlu0 %6506
    %6509 = vset.pattern.permute.xlu0 25
    %6510 = vperm.xlu0 %6509, %v2901
    %v6511 = vpop.permute.xlu0 %6510
    %6513 = vset.pattern.permute.xlu0 25
    %6514 = vperm.xlu0 %6513, %v2904
    %v6515 = vpop.permute.xlu0 %6514
    %6517 = vset.pattern.permute.xlu0 25
    %6518 = vperm.xlu0 %6517, %v2906
    %v6519 = vpop.permute.xlu0 %6518
    %6521 = vset.pattern.permute.xlu0 25
    %6522 = vperm.xlu0 %6521, %v2909
    %v6523 = vpop.permute.xlu0 %6522
    %6525 = vset.pattern.permute.xlu0 25
    %6526 = vperm.xlu0 %6525, %v2911
    %v6527 = vpop.permute.xlu0 %6526
    %v6529 = vmul.f32 %v6467, %v2776
    %v6530 = vmul.f32 %v6471, %v2778
    %v6531 = vmul.f32 %v6475, %v2781
    %v6532 = vmul.f32 %v6479, %v2783
    %v6533 = vmul.f32 %v6483, %v2786
    %v6534 = vmul.f32 %v6487, %v2788
    %v6535 = vmul.f32 %v6491, %v2791
    %v6536 = vmul.f32 %v6495, %v2793
    %v6537 = vmul.f32 %v6499, %v2796
    %v6538 = vmul.f32 %v6503, %v2798
    %v6539 = vmul.f32 %v6507, %v2801
    %v6540 = vmul.f32 %v6511, %v2803
    %v6541 = vmul.f32 %v6515, %v2806
    %v6542 = vmul.f32 %v6519, %v2808
    %v6543 = vmul.f32 %v6523, %v2811
    %v6544 = vmul.f32 %v6527, %v2813
    %6561 = vrot.lane.b32.xlu0 %v6529, 96
    %v6562 = vpop.permute.xlu0 %6561
    %6563 = vrot.lane.b32.xlu0 %v6530, 96
    %v6564 = vpop.permute.xlu0 %6563
    %6565 = vrot.lane.b32.xlu0 %v6531, 96
    %v6566 = vpop.permute.xlu0 %6565
    %6567 = vrot.lane.b32.xlu0 %v6532, 96
    %v6568 = vpop.permute.xlu0 %6567
    %6569 = vrot.lane.b32.xlu0 %v6533, 96
    %v6570 = vpop.permute.xlu0 %6569
    %6571 = vrot.lane.b32.xlu0 %v6534, 96
    %v6572 = vpop.permute.xlu0 %6571
    %6573 = vrot.lane.b32.xlu0 %v6535, 96
    %v6574 = vpop.permute.xlu0 %6573
    %6575 = vrot.lane.b32.xlu0 %v6536, 96
    %v6576 = vpop.permute.xlu0 %6575
    %6577 = vrot.lane.b32.xlu0 %v6537, 96
    %v6578 = vpop.permute.xlu0 %6577
    %6579 = vrot.lane.b32.xlu0 %v6538, 96
    %v6580 = vpop.permute.xlu0 %6579
    %6581 = vrot.lane.b32.xlu0 %v6539, 96
    %v6582 = vpop.permute.xlu0 %6581
    %6583 = vrot.lane.b32.xlu0 %v6540, 96
    %v6584 = vpop.permute.xlu0 %6583
    %6585 = vrot.lane.b32.xlu0 %v6541, 96
    %v6586 = vpop.permute.xlu0 %6585
    %6587 = vrot.lane.b32.xlu0 %v6542, 96
    %v6588 = vpop.permute.xlu0 %6587
    %6589 = vrot.lane.b32.xlu0 %v6543, 96
    %v6590 = vpop.permute.xlu0 %6589
    %6591 = vrot.lane.b32.xlu0 %v6544, 96
    %v6592 = vpop.permute.xlu0 %6591
    %v6609 = vadd.f32 %v6449, %v6562
    %v6610 = vadd.f32 %v6450, %v6564
    %v6611 = vadd.f32 %v6451, %v6566
    %v6612 = vadd.f32 %v6452, %v6568
    %v6613 = vadd.f32 %v6453, %v6570
    %v6614 = vadd.f32 %v6454, %v6572
    %v6615 = vadd.f32 %v6455, %v6574
    %v6616 = vadd.f32 %v6456, %v6576
    %v6617 = vadd.f32 %v6457, %v6578
    %v6618 = vadd.f32 %v6458, %v6580
    %v6619 = vadd.f32 %v6459, %v6582
    %v6620 = vadd.f32 %v6460, %v6584
    %v6621 = vadd.f32 %v6461, %v6586
    %v6622 = vadd.f32 %v6462, %v6588
    %v6623 = vadd.f32 %v6463, %v6590
    %v6624 = vadd.f32 %v6464, %v6592
    %6625 = vset.pattern.permute.xlu0 26
    %6626 = vperm.xlu0 %6625, %v2874
    %v6627 = vpop.permute.xlu0 %6626
    %6629 = vset.pattern.permute.xlu0 26
    %6630 = vperm.xlu0 %6629, %v2876
    %v6631 = vpop.permute.xlu0 %6630
    %6633 = vset.pattern.permute.xlu0 26
    %6634 = vperm.xlu0 %6633, %v2879
    %v6635 = vpop.permute.xlu0 %6634
    %6637 = vset.pattern.permute.xlu0 26
    %6638 = vperm.xlu0 %6637, %v2881
    %v6639 = vpop.permute.xlu0 %6638
    %6641 = vset.pattern.permute.xlu0 26
    %6642 = vperm.xlu0 %6641, %v2884
    %v6643 = vpop.permute.xlu0 %6642
    %6645 = vset.pattern.permute.xlu0 26
    %6646 = vperm.xlu0 %6645, %v2886
    %v6647 = vpop.permute.xlu0 %6646
    %6649 = vset.pattern.permute.xlu0 26
    %6650 = vperm.xlu0 %6649, %v2889
    %v6651 = vpop.permute.xlu0 %6650
    %6653 = vset.pattern.permute.xlu0 26
    %6654 = vperm.xlu0 %6653, %v2891
    %v6655 = vpop.permute.xlu0 %6654
    %6657 = vset.pattern.permute.xlu0 26
    %6658 = vperm.xlu0 %6657, %v2894
    %v6659 = vpop.permute.xlu0 %6658
    %6661 = vset.pattern.permute.xlu0 26
    %6662 = vperm.xlu0 %6661, %v2896
    %v6663 = vpop.permute.xlu0 %6662
    %6665 = vset.pattern.permute.xlu0 26
    %6666 = vperm.xlu0 %6665, %v2899
    %v6667 = vpop.permute.xlu0 %6666
    %6669 = vset.pattern.permute.xlu0 26
    %6670 = vperm.xlu0 %6669, %v2901
    %v6671 = vpop.permute.xlu0 %6670
    %6673 = vset.pattern.permute.xlu0 26
    %6674 = vperm.xlu0 %6673, %v2904
    %v6675 = vpop.permute.xlu0 %6674
    %6677 = vset.pattern.permute.xlu0 26
    %6678 = vperm.xlu0 %6677, %v2906
    %v6679 = vpop.permute.xlu0 %6678
    %6681 = vset.pattern.permute.xlu0 26
    %6682 = vperm.xlu0 %6681, %v2909
    %v6683 = vpop.permute.xlu0 %6682
    %6685 = vset.pattern.permute.xlu0 26
    %6686 = vperm.xlu0 %6685, %v2911
    %v6687 = vpop.permute.xlu0 %6686
    %v6689 = vmul.f32 %v6627, %v2776
    %v6690 = vmul.f32 %v6631, %v2778
    %v6691 = vmul.f32 %v6635, %v2781
    %v6692 = vmul.f32 %v6639, %v2783
    %v6693 = vmul.f32 %v6643, %v2786
    %v6694 = vmul.f32 %v6647, %v2788
    %v6695 = vmul.f32 %v6651, %v2791
    %v6696 = vmul.f32 %v6655, %v2793
    %v6697 = vmul.f32 %v6659, %v2796
    %v6698 = vmul.f32 %v6663, %v2798
    %v6699 = vmul.f32 %v6667, %v2801
    %v6700 = vmul.f32 %v6671, %v2803
    %v6701 = vmul.f32 %v6675, %v2806
    %v6702 = vmul.f32 %v6679, %v2808
    %v6703 = vmul.f32 %v6683, %v2811
    %v6704 = vmul.f32 %v6687, %v2813
    %6721 = vrot.lane.b32.xlu0 %v6689, 64
    %v6722 = vpop.permute.xlu0 %6721
    %6723 = vrot.lane.b32.xlu0 %v6690, 64
    %v6724 = vpop.permute.xlu0 %6723
    %6725 = vrot.lane.b32.xlu0 %v6691, 64
    %v6726 = vpop.permute.xlu0 %6725
    %6727 = vrot.lane.b32.xlu0 %v6692, 64
    %v6728 = vpop.permute.xlu0 %6727
    %6729 = vrot.lane.b32.xlu0 %v6693, 64
    %v6730 = vpop.permute.xlu0 %6729
    %6731 = vrot.lane.b32.xlu0 %v6694, 64
    %v6732 = vpop.permute.xlu0 %6731
    %6733 = vrot.lane.b32.xlu0 %v6695, 64
    %v6734 = vpop.permute.xlu0 %6733
    %6735 = vrot.lane.b32.xlu0 %v6696, 64
    %v6736 = vpop.permute.xlu0 %6735
    %6737 = vrot.lane.b32.xlu0 %v6697, 64
    %v6738 = vpop.permute.xlu0 %6737
    %6739 = vrot.lane.b32.xlu0 %v6698, 64
    %v6740 = vpop.permute.xlu0 %6739
    %6741 = vrot.lane.b32.xlu0 %v6699, 64
    %v6742 = vpop.permute.xlu0 %6741
    %6743 = vrot.lane.b32.xlu0 %v6700, 64
    %v6744 = vpop.permute.xlu0 %6743
    %6745 = vrot.lane.b32.xlu0 %v6701, 64
    %v6746 = vpop.permute.xlu0 %6745
    %6747 = vrot.lane.b32.xlu0 %v6702, 64
    %v6748 = vpop.permute.xlu0 %6747
    %6749 = vrot.lane.b32.xlu0 %v6703, 64
    %v6750 = vpop.permute.xlu0 %6749
    %6751 = vrot.lane.b32.xlu0 %v6704, 64
    %v6752 = vpop.permute.xlu0 %6751
    %v6769 = vadd.f32 %v6609, %v6722
    %v6770 = vadd.f32 %v6610, %v6724
    %v6771 = vadd.f32 %v6611, %v6726
    %v6772 = vadd.f32 %v6612, %v6728
    %v6773 = vadd.f32 %v6613, %v6730
    %v6774 = vadd.f32 %v6614, %v6732
    %v6775 = vadd.f32 %v6615, %v6734
    %v6776 = vadd.f32 %v6616, %v6736
    %v6777 = vadd.f32 %v6617, %v6738
    %v6778 = vadd.f32 %v6618, %v6740
    %v6779 = vadd.f32 %v6619, %v6742
    %v6780 = vadd.f32 %v6620, %v6744
    %v6781 = vadd.f32 %v6621, %v6746
    %v6782 = vadd.f32 %v6622, %v6748
    %v6783 = vadd.f32 %v6623, %v6750
    %v6784 = vadd.f32 %v6624, %v6752
    %6785 = vset.pattern.permute.xlu0 27
    %6786 = vperm.xlu0 %6785, %v2874
    %v6787 = vpop.permute.xlu0 %6786
    %6789 = vset.pattern.permute.xlu0 27
    %6790 = vperm.xlu0 %6789, %v2876
    %v6791 = vpop.permute.xlu0 %6790
    %6793 = vset.pattern.permute.xlu0 27
    %6794 = vperm.xlu0 %6793, %v2879
    %v6795 = vpop.permute.xlu0 %6794
    %6797 = vset.pattern.permute.xlu0 27
    %6798 = vperm.xlu0 %6797, %v2881
    %v6799 = vpop.permute.xlu0 %6798
    %6801 = vset.pattern.permute.xlu0 27
    %6802 = vperm.xlu0 %6801, %v2884
    %v6803 = vpop.permute.xlu0 %6802
    %6805 = vset.pattern.permute.xlu0 27
    %6806 = vperm.xlu0 %6805, %v2886
    %v6807 = vpop.permute.xlu0 %6806
    %6809 = vset.pattern.permute.xlu0 27
    %6810 = vperm.xlu0 %6809, %v2889
    %v6811 = vpop.permute.xlu0 %6810
    %6813 = vset.pattern.permute.xlu0 27
    %6814 = vperm.xlu0 %6813, %v2891
    %v6815 = vpop.permute.xlu0 %6814
    %6817 = vset.pattern.permute.xlu0 27
    %6818 = vperm.xlu0 %6817, %v2894
    %v6819 = vpop.permute.xlu0 %6818
    %6821 = vset.pattern.permute.xlu0 27
    %6822 = vperm.xlu0 %6821, %v2896
    %v6823 = vpop.permute.xlu0 %6822
    %6825 = vset.pattern.permute.xlu0 27
    %6826 = vperm.xlu0 %6825, %v2899
    %v6827 = vpop.permute.xlu0 %6826
    %6829 = vset.pattern.permute.xlu0 27
    %6830 = vperm.xlu0 %6829, %v2901
    %v6831 = vpop.permute.xlu0 %6830
    %6833 = vset.pattern.permute.xlu0 27
    %6834 = vperm.xlu0 %6833, %v2904
    %v6835 = vpop.permute.xlu0 %6834
    %6837 = vset.pattern.permute.xlu0 27
    %6838 = vperm.xlu0 %6837, %v2906
    %v6839 = vpop.permute.xlu0 %6838
    %6841 = vset.pattern.permute.xlu0 27
    %6842 = vperm.xlu0 %6841, %v2909
    %v6843 = vpop.permute.xlu0 %6842
    %6845 = vset.pattern.permute.xlu0 27
    %6846 = vperm.xlu0 %6845, %v2911
    %v6847 = vpop.permute.xlu0 %6846
    %v6849 = vmul.f32 %v6787, %v2776
    %v6850 = vmul.f32 %v6791, %v2778
    %v6851 = vmul.f32 %v6795, %v2781
    %v6852 = vmul.f32 %v6799, %v2783
    %v6853 = vmul.f32 %v6803, %v2786
    %v6854 = vmul.f32 %v6807, %v2788
    %v6855 = vmul.f32 %v6811, %v2791
    %v6856 = vmul.f32 %v6815, %v2793
    %v6857 = vmul.f32 %v6819, %v2796
    %v6858 = vmul.f32 %v6823, %v2798
    %v6859 = vmul.f32 %v6827, %v2801
    %v6860 = vmul.f32 %v6831, %v2803
    %v6861 = vmul.f32 %v6835, %v2806
    %v6862 = vmul.f32 %v6839, %v2808
    %v6863 = vmul.f32 %v6843, %v2811
    %v6864 = vmul.f32 %v6847, %v2813
    %6881 = vrot.lane.b32.xlu0 %v6849, 32
    %v6882 = vpop.permute.xlu0 %6881
    %6883 = vrot.lane.b32.xlu0 %v6850, 32
    %v6884 = vpop.permute.xlu0 %6883
    %6885 = vrot.lane.b32.xlu0 %v6851, 32
    %v6886 = vpop.permute.xlu0 %6885
    %6887 = vrot.lane.b32.xlu0 %v6852, 32
    %v6888 = vpop.permute.xlu0 %6887
    %6889 = vrot.lane.b32.xlu0 %v6853, 32
    %v6890 = vpop.permute.xlu0 %6889
    %6891 = vrot.lane.b32.xlu0 %v6854, 32
    %v6892 = vpop.permute.xlu0 %6891
    %6893 = vrot.lane.b32.xlu0 %v6855, 32
    %v6894 = vpop.permute.xlu0 %6893
    %6895 = vrot.lane.b32.xlu0 %v6856, 32
    %v6896 = vpop.permute.xlu0 %6895
    %6897 = vrot.lane.b32.xlu0 %v6857, 32
    %v6898 = vpop.permute.xlu0 %6897
    %6899 = vrot.lane.b32.xlu0 %v6858, 32
    %v6900 = vpop.permute.xlu0 %6899
    %6901 = vrot.lane.b32.xlu0 %v6859, 32
    %v6902 = vpop.permute.xlu0 %6901
    %6903 = vrot.lane.b32.xlu0 %v6860, 32
    %v6904 = vpop.permute.xlu0 %6903
    %6905 = vrot.lane.b32.xlu0 %v6861, 32
    %v6906 = vpop.permute.xlu0 %6905
    %6907 = vrot.lane.b32.xlu0 %v6862, 32
    %v6908 = vpop.permute.xlu0 %6907
    %6909 = vrot.lane.b32.xlu0 %v6863, 32
    %v6910 = vpop.permute.xlu0 %6909
    %6911 = vrot.lane.b32.xlu0 %v6864, 32
    %v6912 = vpop.permute.xlu0 %6911
    %v6929 = vadd.f32 %v6769, %v6882
    %v6930 = vadd.f32 %v6770, %v6884
    %v6931 = vadd.f32 %v6771, %v6886
    %v6932 = vadd.f32 %v6772, %v6888
    %v6933 = vadd.f32 %v6773, %v6890
    %v6934 = vadd.f32 %v6774, %v6892
    %v6935 = vadd.f32 %v6775, %v6894
    %v6936 = vadd.f32 %v6776, %v6896
    %v6937 = vadd.f32 %v6777, %v6898
    %v6938 = vadd.f32 %v6778, %v6900
    %v6939 = vadd.f32 %v6779, %v6902
    %v6940 = vadd.f32 %v6780, %v6904
    %v6941 = vadd.f32 %v6781, %v6906
    %v6942 = vadd.f32 %v6782, %v6908
    %v6943 = vadd.f32 %v6783, %v6910
    %v6944 = vadd.f32 %v6784, %v6912
    %6945 = vset.pattern.permute.xlu0 28
    %6946 = vperm.xlu0 %6945, %v2874
    %v6947 = vpop.permute.xlu0 %6946
    %6949 = vset.pattern.permute.xlu0 28
    %6950 = vperm.xlu0 %6949, %v2876
    %v6951 = vpop.permute.xlu0 %6950
    %6953 = vset.pattern.permute.xlu0 28
    %6954 = vperm.xlu0 %6953, %v2879
    %v6955 = vpop.permute.xlu0 %6954
    %6957 = vset.pattern.permute.xlu0 28
    %6958 = vperm.xlu0 %6957, %v2881
    %v6959 = vpop.permute.xlu0 %6958
    %6961 = vset.pattern.permute.xlu0 28
    %6962 = vperm.xlu0 %6961, %v2884
    %v6963 = vpop.permute.xlu0 %6962
    %6965 = vset.pattern.permute.xlu0 28
    %6966 = vperm.xlu0 %6965, %v2886
    %v6967 = vpop.permute.xlu0 %6966
    %6969 = vset.pattern.permute.xlu0 28
    %6970 = vperm.xlu0 %6969, %v2889
    %v6971 = vpop.permute.xlu0 %6970
    %6973 = vset.pattern.permute.xlu0 28
    %6974 = vperm.xlu0 %6973, %v2891
    %v6975 = vpop.permute.xlu0 %6974
    %6977 = vset.pattern.permute.xlu0 28
    %6978 = vperm.xlu0 %6977, %v2894
    %v6979 = vpop.permute.xlu0 %6978
    %6981 = vset.pattern.permute.xlu0 28
    %6982 = vperm.xlu0 %6981, %v2896
    %v6983 = vpop.permute.xlu0 %6982
    %6985 = vset.pattern.permute.xlu0 28
    %6986 = vperm.xlu0 %6985, %v2899
    %v6987 = vpop.permute.xlu0 %6986
    %6989 = vset.pattern.permute.xlu0 28
    %6990 = vperm.xlu0 %6989, %v2901
    %v6991 = vpop.permute.xlu0 %6990
    %6993 = vset.pattern.permute.xlu0 28
    %6994 = vperm.xlu0 %6993, %v2904
    %v6995 = vpop.permute.xlu0 %6994
    %6997 = vset.pattern.permute.xlu0 28
    %6998 = vperm.xlu0 %6997, %v2906
    %v6999 = vpop.permute.xlu0 %6998
    %7001 = vset.pattern.permute.xlu0 28
    %7002 = vperm.xlu0 %7001, %v2909
    %v7003 = vpop.permute.xlu0 %7002
    %7005 = vset.pattern.permute.xlu0 28
    %7006 = vperm.xlu0 %7005, %v2911
    %v7007 = vpop.permute.xlu0 %7006
    %v7009 = vmul.f32 %v6947, %v2825
    %v7010 = vmul.f32 %v6951, %v2827
    %v7011 = vmul.f32 %v6955, %v2830
    %v7012 = vmul.f32 %v6959, %v2832
    %v7013 = vmul.f32 %v6963, %v2835
    %v7014 = vmul.f32 %v6967, %v2837
    %v7015 = vmul.f32 %v6971, %v2840
    %v7016 = vmul.f32 %v6975, %v2842
    %v7017 = vmul.f32 %v6979, %v2845
    %v7018 = vmul.f32 %v6983, %v2847
    %v7019 = vmul.f32 %v6987, %v2850
    %v7020 = vmul.f32 %v6991, %v2852
    %v7021 = vmul.f32 %v6995, %v2855
    %v7022 = vmul.f32 %v6999, %v2857
    %v7023 = vmul.f32 %v7003, %v2860
    %v7024 = vmul.f32 %v7007, %v2862
    %v7025 = vadd.f32 %v6929, %v7009
    %v7026 = vadd.f32 %v6930, %v7010
    %v7027 = vadd.f32 %v6931, %v7011
    %v7028 = vadd.f32 %v6932, %v7012
    %v7029 = vadd.f32 %v6933, %v7013
    %v7030 = vadd.f32 %v6934, %v7014
    %v7031 = vadd.f32 %v6935, %v7015
    %v7032 = vadd.f32 %v6936, %v7016
    %v7033 = vadd.f32 %v6937, %v7017
    %v7034 = vadd.f32 %v6938, %v7018
    %v7035 = vadd.f32 %v6939, %v7019
    %v7036 = vadd.f32 %v6940, %v7020
    %v7037 = vadd.f32 %v6941, %v7021
    %v7038 = vadd.f32 %v6942, %v7022
    %v7039 = vadd.f32 %v6943, %v7023
    %v7040 = vadd.f32 %v6944, %v7024
    %7041 = vset.pattern.permute.xlu0 29
    %7042 = vperm.xlu0 %7041, %v2874
    %v7043 = vpop.permute.xlu0 %7042
    %7045 = vset.pattern.permute.xlu0 29
    %7046 = vperm.xlu0 %7045, %v2876
    %v7047 = vpop.permute.xlu0 %7046
    %7049 = vset.pattern.permute.xlu0 29
    %7050 = vperm.xlu0 %7049, %v2879
    %v7051 = vpop.permute.xlu0 %7050
    %7053 = vset.pattern.permute.xlu0 29
    %7054 = vperm.xlu0 %7053, %v2881
    %v7055 = vpop.permute.xlu0 %7054
    %7057 = vset.pattern.permute.xlu0 29
    %7058 = vperm.xlu0 %7057, %v2884
    %v7059 = vpop.permute.xlu0 %7058
    %7061 = vset.pattern.permute.xlu0 29
    %7062 = vperm.xlu0 %7061, %v2886
    %v7063 = vpop.permute.xlu0 %7062
    %7065 = vset.pattern.permute.xlu0 29
    %7066 = vperm.xlu0 %7065, %v2889
    %v7067 = vpop.permute.xlu0 %7066
    %7069 = vset.pattern.permute.xlu0 29
    %7070 = vperm.xlu0 %7069, %v2891
    %v7071 = vpop.permute.xlu0 %7070
    %7073 = vset.pattern.permute.xlu0 29
    %7074 = vperm.xlu0 %7073, %v2894
    %v7075 = vpop.permute.xlu0 %7074
    %7077 = vset.pattern.permute.xlu0 29
    %7078 = vperm.xlu0 %7077, %v2896
    %v7079 = vpop.permute.xlu0 %7078
    %7081 = vset.pattern.permute.xlu0 29
    %7082 = vperm.xlu0 %7081, %v2899
    %v7083 = vpop.permute.xlu0 %7082
    %7085 = vset.pattern.permute.xlu0 29
    %7086 = vperm.xlu0 %7085, %v2901
    %v7087 = vpop.permute.xlu0 %7086
    %7089 = vset.pattern.permute.xlu0 29
    %7090 = vperm.xlu0 %7089, %v2904
    %v7091 = vpop.permute.xlu0 %7090
    %7093 = vset.pattern.permute.xlu0 29
    %7094 = vperm.xlu0 %7093, %v2906
    %v7095 = vpop.permute.xlu0 %7094
    %7097 = vset.pattern.permute.xlu0 29
    %7098 = vperm.xlu0 %7097, %v2909
    %v7099 = vpop.permute.xlu0 %7098
    %7101 = vset.pattern.permute.xlu0 29
    %7102 = vperm.xlu0 %7101, %v2911
    %v7103 = vpop.permute.xlu0 %7102
    %v7105 = vmul.f32 %v7043, %v2825
    %v7106 = vmul.f32 %v7047, %v2827
    %v7107 = vmul.f32 %v7051, %v2830
    %v7108 = vmul.f32 %v7055, %v2832
    %v7109 = vmul.f32 %v7059, %v2835
    %v7110 = vmul.f32 %v7063, %v2837
    %v7111 = vmul.f32 %v7067, %v2840
    %v7112 = vmul.f32 %v7071, %v2842
    %v7113 = vmul.f32 %v7075, %v2845
    %v7114 = vmul.f32 %v7079, %v2847
    %v7115 = vmul.f32 %v7083, %v2850
    %v7116 = vmul.f32 %v7087, %v2852
    %v7117 = vmul.f32 %v7091, %v2855
    %v7118 = vmul.f32 %v7095, %v2857
    %v7119 = vmul.f32 %v7099, %v2860
    %v7120 = vmul.f32 %v7103, %v2862
    %7137 = vrot.lane.b32.xlu0 %v7105, 96
    %v7138 = vpop.permute.xlu0 %7137
    %7139 = vrot.lane.b32.xlu0 %v7106, 96
    %v7140 = vpop.permute.xlu0 %7139
    %7141 = vrot.lane.b32.xlu0 %v7107, 96
    %v7142 = vpop.permute.xlu0 %7141
    %7143 = vrot.lane.b32.xlu0 %v7108, 96
    %v7144 = vpop.permute.xlu0 %7143
    %7145 = vrot.lane.b32.xlu0 %v7109, 96
    %v7146 = vpop.permute.xlu0 %7145
    %7147 = vrot.lane.b32.xlu0 %v7110, 96
    %v7148 = vpop.permute.xlu0 %7147
    %7149 = vrot.lane.b32.xlu0 %v7111, 96
    %v7150 = vpop.permute.xlu0 %7149
    %7151 = vrot.lane.b32.xlu0 %v7112, 96
    %v7152 = vpop.permute.xlu0 %7151
    %7153 = vrot.lane.b32.xlu0 %v7113, 96
    %v7154 = vpop.permute.xlu0 %7153
    %7155 = vrot.lane.b32.xlu0 %v7114, 96
    %v7156 = vpop.permute.xlu0 %7155
    %7157 = vrot.lane.b32.xlu0 %v7115, 96
    %v7158 = vpop.permute.xlu0 %7157
    %7159 = vrot.lane.b32.xlu0 %v7116, 96
    %v7160 = vpop.permute.xlu0 %7159
    %7161 = vrot.lane.b32.xlu0 %v7117, 96
    %v7162 = vpop.permute.xlu0 %7161
    %7163 = vrot.lane.b32.xlu0 %v7118, 96
    %v7164 = vpop.permute.xlu0 %7163
    %7165 = vrot.lane.b32.xlu0 %v7119, 96
    %v7166 = vpop.permute.xlu0 %7165
    %7167 = vrot.lane.b32.xlu0 %v7120, 96
    %v7168 = vpop.permute.xlu0 %7167
    %v7185 = vadd.f32 %v7025, %v7138
    %v7186 = vadd.f32 %v7026, %v7140
    %v7187 = vadd.f32 %v7027, %v7142
    %v7188 = vadd.f32 %v7028, %v7144
    %v7189 = vadd.f32 %v7029, %v7146
    %v7190 = vadd.f32 %v7030, %v7148
    %v7191 = vadd.f32 %v7031, %v7150
    %v7192 = vadd.f32 %v7032, %v7152
    %v7193 = vadd.f32 %v7033, %v7154
    %v7194 = vadd.f32 %v7034, %v7156
    %v7195 = vadd.f32 %v7035, %v7158
    %v7196 = vadd.f32 %v7036, %v7160
    %v7197 = vadd.f32 %v7037, %v7162
    %v7198 = vadd.f32 %v7038, %v7164
    %v7199 = vadd.f32 %v7039, %v7166
    %v7200 = vadd.f32 %v7040, %v7168
    %7201 = vset.pattern.permute.xlu0 30
    %7202 = vperm.xlu0 %7201, %v2874
    %v7203 = vpop.permute.xlu0 %7202
    %7205 = vset.pattern.permute.xlu0 30
    %7206 = vperm.xlu0 %7205, %v2876
    %v7207 = vpop.permute.xlu0 %7206
    %7209 = vset.pattern.permute.xlu0 30
    %7210 = vperm.xlu0 %7209, %v2879
    %v7211 = vpop.permute.xlu0 %7210
    %7213 = vset.pattern.permute.xlu0 30
    %7214 = vperm.xlu0 %7213, %v2881
    %v7215 = vpop.permute.xlu0 %7214
    %7217 = vset.pattern.permute.xlu0 30
    %7218 = vperm.xlu0 %7217, %v2884
    %v7219 = vpop.permute.xlu0 %7218
    %7221 = vset.pattern.permute.xlu0 30
    %7222 = vperm.xlu0 %7221, %v2886
    %v7223 = vpop.permute.xlu0 %7222
    %7225 = vset.pattern.permute.xlu0 30
    %7226 = vperm.xlu0 %7225, %v2889
    %v7227 = vpop.permute.xlu0 %7226
    %7229 = vset.pattern.permute.xlu0 30
    %7230 = vperm.xlu0 %7229, %v2891
    %v7231 = vpop.permute.xlu0 %7230
    %7233 = vset.pattern.permute.xlu0 30
    %7234 = vperm.xlu0 %7233, %v2894
    %v7235 = vpop.permute.xlu0 %7234
    %7237 = vset.pattern.permute.xlu0 30
    %7238 = vperm.xlu0 %7237, %v2896
    %v7239 = vpop.permute.xlu0 %7238
    %7241 = vset.pattern.permute.xlu0 30
    %7242 = vperm.xlu0 %7241, %v2899
    %v7243 = vpop.permute.xlu0 %7242
    %7245 = vset.pattern.permute.xlu0 30
    %7246 = vperm.xlu0 %7245, %v2901
    %v7247 = vpop.permute.xlu0 %7246
    %7249 = vset.pattern.permute.xlu0 30
    %7250 = vperm.xlu0 %7249, %v2904
    %v7251 = vpop.permute.xlu0 %7250
    %7253 = vset.pattern.permute.xlu0 30
    %7254 = vperm.xlu0 %7253, %v2906
    %v7255 = vpop.permute.xlu0 %7254
    %7257 = vset.pattern.permute.xlu0 30
    %7258 = vperm.xlu0 %7257, %v2909
    %v7259 = vpop.permute.xlu0 %7258
    %7261 = vset.pattern.permute.xlu0 30
    %7262 = vperm.xlu0 %7261, %v2911
    %v7263 = vpop.permute.xlu0 %7262
    %v7265 = vmul.f32 %v7203, %v2825
    %v7266 = vmul.f32 %v7207, %v2827
    %v7267 = vmul.f32 %v7211, %v2830
    %v7268 = vmul.f32 %v7215, %v2832
    %v7269 = vmul.f32 %v7219, %v2835
    %v7270 = vmul.f32 %v7223, %v2837
    %v7271 = vmul.f32 %v7227, %v2840
    %v7272 = vmul.f32 %v7231, %v2842
    %v7273 = vmul.f32 %v7235, %v2845
    %v7274 = vmul.f32 %v7239, %v2847
    %v7275 = vmul.f32 %v7243, %v2850
    %v7276 = vmul.f32 %v7247, %v2852
    %v7277 = vmul.f32 %v7251, %v2855
    %v7278 = vmul.f32 %v7255, %v2857
    %v7279 = vmul.f32 %v7259, %v2860
    %v7280 = vmul.f32 %v7263, %v2862
    %7297 = vrot.lane.b32.xlu0 %v7265, 64
    %v7298 = vpop.permute.xlu0 %7297
    %7299 = vrot.lane.b32.xlu0 %v7266, 64
    %v7300 = vpop.permute.xlu0 %7299
    %7301 = vrot.lane.b32.xlu0 %v7267, 64
    %v7302 = vpop.permute.xlu0 %7301
    %7303 = vrot.lane.b32.xlu0 %v7268, 64
    %v7304 = vpop.permute.xlu0 %7303
    %7305 = vrot.lane.b32.xlu0 %v7269, 64
    %v7306 = vpop.permute.xlu0 %7305
    %7307 = vrot.lane.b32.xlu0 %v7270, 64
    %v7308 = vpop.permute.xlu0 %7307
    %7309 = vrot.lane.b32.xlu0 %v7271, 64
    %v7310 = vpop.permute.xlu0 %7309
    %7311 = vrot.lane.b32.xlu0 %v7272, 64
    %v7312 = vpop.permute.xlu0 %7311
    %7313 = vrot.lane.b32.xlu0 %v7273, 64
    %v7314 = vpop.permute.xlu0 %7313
    %7315 = vrot.lane.b32.xlu0 %v7274, 64
    %v7316 = vpop.permute.xlu0 %7315
    %7317 = vrot.lane.b32.xlu0 %v7275, 64
    %v7318 = vpop.permute.xlu0 %7317
    %7319 = vrot.lane.b32.xlu0 %v7276, 64
    %v7320 = vpop.permute.xlu0 %7319
    %7321 = vrot.lane.b32.xlu0 %v7277, 64
    %v7322 = vpop.permute.xlu0 %7321
    %7323 = vrot.lane.b32.xlu0 %v7278, 64
    %v7324 = vpop.permute.xlu0 %7323
    %7325 = vrot.lane.b32.xlu0 %v7279, 64
    %v7326 = vpop.permute.xlu0 %7325
    %7327 = vrot.lane.b32.xlu0 %v7280, 64
    %v7328 = vpop.permute.xlu0 %7327
    %v7345 = vadd.f32 %v7185, %v7298
    %v7346 = vadd.f32 %v7186, %v7300
    %v7347 = vadd.f32 %v7187, %v7302
    %v7348 = vadd.f32 %v7188, %v7304
    %v7349 = vadd.f32 %v7189, %v7306
    %v7350 = vadd.f32 %v7190, %v7308
    %v7351 = vadd.f32 %v7191, %v7310
    %v7352 = vadd.f32 %v7192, %v7312
    %v7353 = vadd.f32 %v7193, %v7314
    %v7354 = vadd.f32 %v7194, %v7316
    %v7355 = vadd.f32 %v7195, %v7318
    %v7356 = vadd.f32 %v7196, %v7320
    %v7357 = vadd.f32 %v7197, %v7322
    %v7358 = vadd.f32 %v7198, %v7324
    %v7359 = vadd.f32 %v7199, %v7326
    %v7360 = vadd.f32 %v7200, %v7328
    %7361 = vset.pattern.permute.xlu0 31
    %7362 = vperm.xlu0 %7361, %v2874
    %v7363 = vpop.permute.xlu0 %7362
    %7365 = vset.pattern.permute.xlu0 31
    %7366 = vperm.xlu0 %7365, %v2876
    %v7367 = vpop.permute.xlu0 %7366
    %7369 = vset.pattern.permute.xlu0 31
    %7370 = vperm.xlu0 %7369, %v2879
    %v7371 = vpop.permute.xlu0 %7370
    %7373 = vset.pattern.permute.xlu0 31
    %7374 = vperm.xlu0 %7373, %v2881
    %v7375 = vpop.permute.xlu0 %7374
    %7377 = vset.pattern.permute.xlu0 31
    %7378 = vperm.xlu0 %7377, %v2884
    %v7379 = vpop.permute.xlu0 %7378
    %7381 = vset.pattern.permute.xlu0 31
    %7382 = vperm.xlu0 %7381, %v2886
    %v7383 = vpop.permute.xlu0 %7382
    %7385 = vset.pattern.permute.xlu0 31
    %7386 = vperm.xlu0 %7385, %v2889
    %v7387 = vpop.permute.xlu0 %7386
    %7389 = vset.pattern.permute.xlu0 31
    %7390 = vperm.xlu0 %7389, %v2891
    %v7391 = vpop.permute.xlu0 %7390
    %7393 = vset.pattern.permute.xlu0 31
    %7394 = vperm.xlu0 %7393, %v2894
    %v7395 = vpop.permute.xlu0 %7394
    %7397 = vset.pattern.permute.xlu0 31
    %7398 = vperm.xlu0 %7397, %v2896
    %v7399 = vpop.permute.xlu0 %7398
    %7401 = vset.pattern.permute.xlu0 31
    %7402 = vperm.xlu0 %7401, %v2899
    %v7403 = vpop.permute.xlu0 %7402
    %7405 = vset.pattern.permute.xlu0 31
    %7406 = vperm.xlu0 %7405, %v2901
    %v7407 = vpop.permute.xlu0 %7406
    %7409 = vset.pattern.permute.xlu0 31
    %7410 = vperm.xlu0 %7409, %v2904
    %v7411 = vpop.permute.xlu0 %7410
    %7413 = vset.pattern.permute.xlu0 31
    %7414 = vperm.xlu0 %7413, %v2906
    %v7415 = vpop.permute.xlu0 %7414
    %7417 = vset.pattern.permute.xlu0 31
    %7418 = vperm.xlu0 %7417, %v2909
    %v7419 = vpop.permute.xlu0 %7418
    %7421 = vset.pattern.permute.xlu0 31
    %7422 = vperm.xlu0 %7421, %v2911
    %v7423 = vpop.permute.xlu0 %7422
    %v7425 = vmul.f32 %v7363, %v2825
    %v7426 = vmul.f32 %v7367, %v2827
    %v7427 = vmul.f32 %v7371, %v2830
    %v7428 = vmul.f32 %v7375, %v2832
    %v7429 = vmul.f32 %v7379, %v2835
    %v7430 = vmul.f32 %v7383, %v2837
    %v7431 = vmul.f32 %v7387, %v2840
    %v7432 = vmul.f32 %v7391, %v2842
    %v7433 = vmul.f32 %v7395, %v2845
    %v7434 = vmul.f32 %v7399, %v2847
    %v7435 = vmul.f32 %v7403, %v2850
    %v7436 = vmul.f32 %v7407, %v2852
    %v7437 = vmul.f32 %v7411, %v2855
    %v7438 = vmul.f32 %v7415, %v2857
    %v7439 = vmul.f32 %v7419, %v2860
    %v7440 = vmul.f32 %v7423, %v2862
    %7457 = vrot.lane.b32.xlu0 %v7425, 32
    %v7458 = vpop.permute.xlu0 %7457
    %7459 = vrot.lane.b32.xlu0 %v7426, 32
    %v7460 = vpop.permute.xlu0 %7459
    %7461 = vrot.lane.b32.xlu0 %v7427, 32
    %v7462 = vpop.permute.xlu0 %7461
    %7463 = vrot.lane.b32.xlu0 %v7428, 32
    %v7464 = vpop.permute.xlu0 %7463
    %7465 = vrot.lane.b32.xlu0 %v7429, 32
    %v7466 = vpop.permute.xlu0 %7465
    %7467 = vrot.lane.b32.xlu0 %v7430, 32
    %v7468 = vpop.permute.xlu0 %7467
    %7469 = vrot.lane.b32.xlu0 %v7431, 32
    %v7470 = vpop.permute.xlu0 %7469
    %7471 = vrot.lane.b32.xlu0 %v7432, 32
    %v7472 = vpop.permute.xlu0 %7471
    %7473 = vrot.lane.b32.xlu0 %v7433, 32
    %v7474 = vpop.permute.xlu0 %7473
    %7475 = vrot.lane.b32.xlu0 %v7434, 32
    %v7476 = vpop.permute.xlu0 %7475
    %7477 = vrot.lane.b32.xlu0 %v7435, 32
    %v7478 = vpop.permute.xlu0 %7477
    %7479 = vrot.lane.b32.xlu0 %v7436, 32
    %v7480 = vpop.permute.xlu0 %7479
    %7481 = vrot.lane.b32.xlu0 %v7437, 32
    %v7482 = vpop.permute.xlu0 %7481
    %7483 = vrot.lane.b32.xlu0 %v7438, 32
    %v7484 = vpop.permute.xlu0 %7483
    %7485 = vrot.lane.b32.xlu0 %v7439, 32
    %v7486 = vpop.permute.xlu0 %7485
    %7487 = vrot.lane.b32.xlu0 %v7440, 32
    %v7488 = vpop.permute.xlu0 %7487
    %v7505 = vadd.f32 %v7345, %v7458
    %v7506 = vadd.f32 %v7346, %v7460
    %v7507 = vadd.f32 %v7347, %v7462
    %v7508 = vadd.f32 %v7348, %v7464
    %v7509 = vadd.f32 %v7349, %v7466
    %v7510 = vadd.f32 %v7350, %v7468
    %v7511 = vadd.f32 %v7351, %v7470
    %v7512 = vadd.f32 %v7352, %v7472
    %v7513 = vadd.f32 %v7353, %v7474
    %v7514 = vadd.f32 %v7354, %v7476
    %v7515 = vadd.f32 %v7355, %v7478
    %v7516 = vadd.f32 %v7356, %v7480
    %v7517 = vadd.f32 %v7357, %v7482
    %v7518 = vadd.f32 %v7358, %v7484
    %v7519 = vadd.f32 %v7359, %v7486
    %v7520 = vadd.f32 %v7360, %v7488
    %v7521 = vpack.c.bf16 %v7506, %v7505
    %v7522 = vpack.c.bf16 %v7508, %v7507
    %v7523 = vpack.c.bf16 %v7510, %v7509
    %v7524 = vpack.c.bf16 %v7512, %v7511
    %v7525 = vpack.c.bf16 %v7514, %v7513
    %v7526 = vpack.c.bf16 %v7516, %v7515
    %v7527 = vpack.c.bf16 %v7518, %v7517
    %v7528 = vpack.c.bf16 %v7520, %v7519
    %7529 = vmatpush.bf16.msra.mxu0 %v7528
    %7530 = vmatpush.bf16.msra.mxu0 %v7527
    %7531 = vmatpush.bf16.msra.mxu0 %v7526
    %7532 = vmatpush.bf16.msra.mxu0 %v7525
    %7533 = vmatpush.bf16.msra.mxu0 %v7524
    %7534 = vmatpush.bf16.msra.mxu0 %v7523
    %7535 = vmatpush.bf16.msra.mxu0 %v7522
    %7536 = vmatpush.bf16.msra.mxu0 %v7521
    %7537 = vmatmul.bf16.gmra.mxu0 %v260
    %v7538 = vpop.f32.mrf.mxu0
    %v7539 = vadd.f32 0.0, %v7538
    %v7540 = vpop.f32.mrf.mxu0
    %v7541 = vadd.f32 0.0, %v7540
    %7542 = vmatmul.bf16.gmra.mxu0 %v261
    %v7543 = vpop.f32.mrf.mxu0
    %v7544 = vadd.f32 0.0, %v7543
    %v7545 = vpop.f32.mrf.mxu0
    %v7546 = vadd.f32 0.0, %v7545
    %7547 = vmatmul.bf16.gmra.mxu0 %v262
    %v7548 = vpop.f32.mrf.mxu0
    %v7549 = vadd.f32 0.0, %v7548
    %v7550 = vpop.f32.mrf.mxu0
    %v7551 = vadd.f32 0.0, %v7550
    %7552 = vmatmul.bf16.gmra.mxu0 %v263
    %v7553 = vpop.f32.mrf.mxu0
    %v7554 = vadd.f32 0.0, %v7553
    %v7555 = vpop.f32.mrf.mxu0
    %v7556 = vadd.f32 0.0, %v7555
    %7557 = vmatmul.bf16.gmra.mxu0 %v264
    %v7558 = vpop.f32.mrf.mxu0
    %v7559 = vadd.f32 0.0, %v7558
    %v7560 = vpop.f32.mrf.mxu0
    %v7561 = vadd.f32 0.0, %v7560
    %7562 = vmatmul.bf16.gmra.mxu0 %v265
    %v7563 = vpop.f32.mrf.mxu0
    %v7564 = vadd.f32 0.0, %v7563
    %v7565 = vpop.f32.mrf.mxu0
    %v7566 = vadd.f32 0.0, %v7565
    %7567 = vmatmul.bf16.gmra.mxu0 %v266
    %v7568 = vpop.f32.mrf.mxu0
    %v7569 = vadd.f32 0.0, %v7568
    %v7570 = vpop.f32.mrf.mxu0
    %v7571 = vadd.f32 0.0, %v7570
    %7572 = vmatmul.bf16.gmra.mxu0 %v267
    %v7573 = vpop.f32.mrf.mxu0
    %v7574 = vadd.f32 0.0, %v7573
    %v7575 = vpop.f32.mrf.mxu0
    %v7576 = vadd.f32 0.0, %v7575
    %7577 = vdwg.mxu0
    %v7578 = vmul.f32 %v7539, %v1980
    %v7579 = vmul.f32 %v7541, %v1985
    %v7580 = vmul.f32 %v7544, %v1990
    %v7581 = vmul.f32 %v7546, %v1995
    %v7582 = vmul.f32 %v7549, %v2000
    %v7583 = vmul.f32 %v7551, %v2005
    %v7584 = vmul.f32 %v7554, %v2010
    %v7585 = vmul.f32 %v7556, %v2015
    %v7586 = vmul.f32 %v7559, %v2020
    %v7587 = vmul.f32 %v7561, %v2025
    %v7588 = vmul.f32 %v7564, %v2030
    %v7589 = vmul.f32 %v7566, %v2035
    %v7590 = vmul.f32 %v7569, %v2040
    %v7591 = vmul.f32 %v7571, %v2045
    %v7592 = vmul.f32 %v7574, %v2050
    %v7593 = vmul.f32 %v7576, %v2055
    %v7598 = vunpack.c.l.b16 %v2267
    %v7599 = vunpack.c.l.b16 %v2268
    %v7600 = vunpack.c.l.b16 %v2269
    %v7601 = vunpack.c.l.b16 %v2270
    %v7602 = vpack.c.b16 %v7599, %v7598
    %v7603 = vpack.c.b16 %v7601, %v7600
    %v7607 = vsel %vm548, %v2240, 0
    %v7610 = vsel %vm548, %v2241, 0
    %v7613 = vsel %vm548, %v2242, 0
    %v7616 = vsel %vm548, %v2243, 0
    %v7619 = vsel %vm548, %v2244, 0
    %v7622 = vsel %vm548, %v2245, 0
    %v7625 = vsel %vm548, %v2246, 0
    %v7628 = vsel %vm548, %v2247, 0
    %7630 = vmatpush.bf16.msra.mxu0 0
    %7631 = vmatpush.bf16.msra.mxu0 0
    %7632 = vmatpush.bf16.msra.mxu0 0
    %7633 = vmatpush.bf16.msra.mxu0 0
    %7634 = vmatpush.bf16.msra.mxu0 0
    %7635 = vmatpush.bf16.msra.mxu0 0
    %7636 = vmatpush.bf16.msra.mxu0 %v7603
    %7637 = vmatpush.bf16.msra.mxu0 %v7602
    %7638 = vmatmul.bf16.gmra.mxu0 %v7607
    %v7639 = vpop.f32.mrf.mxu0
    %v7640 = vadd.f32 0.0, %v7639
    %v7641 = vpop.f32.mrf.mxu0
    %v7642 = vadd.f32 0.0, %v7641
    %7643 = vmatmul.bf16.gmra.mxu0 %v7610
    %v7644 = vpop.f32.mrf.mxu0
    %v7645 = vadd.f32 0.0, %v7644
    %v7646 = vpop.f32.mrf.mxu0
    %v7647 = vadd.f32 0.0, %v7646
    %7648 = vmatmul.bf16.gmra.mxu0 %v7613
    %v7649 = vpop.f32.mrf.mxu0
    %v7650 = vadd.f32 0.0, %v7649
    %v7651 = vpop.f32.mrf.mxu0
    %v7652 = vadd.f32 0.0, %v7651
    %7653 = vmatmul.bf16.gmra.mxu0 %v7616
    %v7654 = vpop.f32.mrf.mxu0
    %v7655 = vadd.f32 0.0, %v7654
    %v7656 = vpop.f32.mrf.mxu0
    %v7657 = vadd.f32 0.0, %v7656
    %7658 = vmatmul.bf16.gmra.mxu0 %v7619
    %v7659 = vpop.f32.mrf.mxu0
    %v7660 = vadd.f32 0.0, %v7659
    %v7661 = vpop.f32.mrf.mxu0
    %v7662 = vadd.f32 0.0, %v7661
    %7663 = vmatmul.bf16.gmra.mxu0 %v7622
    %v7664 = vpop.f32.mrf.mxu0
    %v7665 = vadd.f32 0.0, %v7664
    %v7666 = vpop.f32.mrf.mxu0
    %v7667 = vadd.f32 0.0, %v7666
    %7668 = vmatmul.bf16.gmra.mxu0 %v7625
    %v7669 = vpop.f32.mrf.mxu0
    %v7670 = vadd.f32 0.0, %v7669
    %v7671 = vpop.f32.mrf.mxu0
    %v7672 = vadd.f32 0.0, %v7671
    %7673 = vmatmul.bf16.gmra.mxu0 %v7628
    %v7674 = vpop.f32.mrf.mxu0
    %v7675 = vadd.f32 0.0, %v7674
    %v7676 = vpop.f32.mrf.mxu0
    %v7677 = vadd.f32 0.0, %v7676
    %7678 = vdwg.mxu0
    %v7679 = vadd.f32 %v7578, %v7640
    %v7680 = vadd.f32 %v7579, %v7642
    %v7681 = vadd.f32 %v7580, %v7645
    %v7682 = vadd.f32 %v7581, %v7647
    %v7683 = vadd.f32 %v7582, %v7650
    %v7684 = vadd.f32 %v7583, %v7652
    %v7685 = vadd.f32 %v7584, %v7655
    %v7686 = vadd.f32 %v7585, %v7657
    %v7687 = vadd.f32 %v7586, %v7660
    %v7688 = vadd.f32 %v7587, %v7662
    %v7689 = vadd.f32 %v7588, %v7665
    %v7690 = vadd.f32 %v7589, %v7667
    %v7691 = vadd.f32 %v7590, %v7670
    %v7692 = vadd.f32 %v7591, %v7672
    %v7693 = vadd.f32 %v7592, %v7675
    %v7694 = vadd.f32 %v7593, %v7677
    %v7696 = vperm.slane %v2271, 0
    %v7698 = vadd.f32 %v7679, %v7696
    %v7699 = vadd.f32 %v7680, %v7696
    %v7700 = vadd.f32 %v7681, %v7696
    %v7701 = vadd.f32 %v7682, %v7696
    %v7702 = vadd.f32 %v7683, %v7696
    %v7703 = vadd.f32 %v7684, %v7696
    %v7704 = vadd.f32 %v7685, %v7696
    %v7705 = vadd.f32 %v7686, %v7696
    %v7706 = vadd.f32 %v7687, %v7696
    %v7707 = vadd.f32 %v7688, %v7696
    %v7708 = vadd.f32 %v7689, %v7696
    %v7709 = vadd.f32 %v7690, %v7696
    %v7710 = vadd.f32 %v7691, %v7696
    %v7711 = vadd.f32 %v7692, %v7696
    %v7712 = vadd.f32 %v7693, %v7696
    %v7713 = vadd.f32 %v7694, %v7696
    %v7714 = vld [vmem:[%s9 + $0x6] sm:$0x1]
    %v7716 = vperm.slane %v7714, 0
    %v7718 = vmul.f32 %v7698, %v7716
    %v7719 = vmul.f32 %v7699, %v7716
    %v7720 = vmul.f32 %v7700, %v7716
    %v7721 = vmul.f32 %v7701, %v7716
    %v7722 = vmul.f32 %v7702, %v7716
    %v7723 = vmul.f32 %v7703, %v7716
    %v7724 = vmul.f32 %v7704, %v7716
    %v7725 = vmul.f32 %v7705, %v7716
    %v7726 = vmul.f32 %v7706, %v7716
    %v7727 = vmul.f32 %v7707, %v7716
    %v7728 = vmul.f32 %v7708, %v7716
    %v7729 = vmul.f32 %v7709, %v7716
    %v7730 = vmul.f32 %v7710, %v7716
    %v7731 = vmul.f32 %v7711, %v7716
    %v7732 = vmul.f32 %v7712, %v7716
    %v7733 = vmul.f32 %v7713, %v7716
    %v7734 = vld [vmem:[%s9 + $0x7] sm:$0x1]
    %v7736 = vperm.slane %v7734, 0
    %v7738 = vadd.f32 %v7718, %v7736
    %v7739 = vadd.f32 %v7719, %v7736
    %v7740 = vadd.f32 %v7720, %v7736
    %v7741 = vadd.f32 %v7721, %v7736
    %v7742 = vadd.f32 %v7722, %v7736
    %v7743 = vadd.f32 %v7723, %v7736
    %v7744 = vadd.f32 %v7724, %v7736
    %v7745 = vadd.f32 %v7725, %v7736
    %v7746 = vadd.f32 %v7726, %v7736
    %v7747 = vadd.f32 %v7727, %v7736
    %v7748 = vadd.f32 %v7728, %v7736
    %v7749 = vadd.f32 %v7729, %v7736
    %v7750 = vadd.f32 %v7730, %v7736
    %v7751 = vadd.f32 %v7731, %v7736
    %v7752 = vadd.f32 %v7732, %v7736
    %v7753 = vadd.f32 %v7733, %v7736
    %v7754 = vmax.f32 %v7738, 0.0
    %v7755 = vmax.f32 %v7739, 0.0
    %v7756 = vmax.f32 %v7740, 0.0
    %v7757 = vmax.f32 %v7741, 0.0
    %v7758 = vmax.f32 %v7742, 0.0
    %v7759 = vmax.f32 %v7743, 0.0
    %v7760 = vmax.f32 %v7744, 0.0
    %v7761 = vmax.f32 %v7745, 0.0
    %v7762 = vmax.f32 %v7746, 0.0
    %v7763 = vmax.f32 %v7747, 0.0
    %v7764 = vmax.f32 %v7748, 0.0
    %v7765 = vmax.f32 %v7749, 0.0
    %v7766 = vmax.f32 %v7750, 0.0
    %v7767 = vmax.f32 %v7751, 0.0
    %v7768 = vmax.f32 %v7752, 0.0
    %v7769 = vmax.f32 %v7753, 0.0
    %v7770 = vpack.c.bf16 %v7755, %v7754
    %v7771 = vpack.c.bf16 %v7757, %v7756
    %v7772 = vpack.c.bf16 %v7759, %v7758
    %v7773 = vpack.c.bf16 %v7761, %v7760
    %v7774 = vpack.c.bf16 %v7763, %v7762
    %v7775 = vpack.c.bf16 %v7765, %v7764
    %v7776 = vpack.c.bf16 %v7767, %v7766
    %v7777 = vpack.c.bf16 %v7769, %v7768
    %7778 = vmatpush.bf16.msra.mxu0 %v7777
    %7779 = vmatpush.bf16.msra.mxu0 %v7776
    %7780 = vmatpush.bf16.msra.mxu0 %v7775
    %7781 = vmatpush.bf16.msra.mxu0 %v7774
    %7782 = vmatpush.bf16.msra.mxu0 %v7773
    %7783 = vmatpush.bf16.msra.mxu0 %v7772
    %7784 = vmatpush.bf16.msra.mxu0 %v7771
    %7785 = vmatpush.bf16.msra.mxu0 %v7770
    %7786 = vmatmul.bf16.gmra.mxu0 %v272
    %v7787 = vpop.f32.mrf.mxu0
    %v7788 = vadd.f32 0.0, %v7787
    %v7789 = vpop.f32.mrf.mxu0
    %7790 = vdwg.mxu0
    %7792 = vset.pattern.permute.xlu0 0
    %7793 = vperm.xlu0 %7792, %v368
    %v7794 = vpop.permute.xlu0 %7793
    %v7796 = vmul.f32 %v7788, %v7794
    %v7797 = vpack.c.bf16 %v7796, %v7796
    %v7798 = vld [vmem:[%s8 + $0x4] sm:$0xf]
    %v7799 = vld [vmem:[%s8 + $0x10] sm:$0xf]
    %v7800 = vld [vmem:[%s8 + $0x1c] sm:$0xf]
    %v7801 = vld [vmem:[%s8 + $0x28] sm:$0xf]
    %v7802 = vld [vmem:[%s9 + $0x8] sm:$0x1]
    %v7804 = vperm.slane %v7802, 0
    %v7810 = vunpack.c.l.b16 %v7798
    %v7811 = vunpack.c.l.b16 %v7799
    %v7812 = vunpack.c.l.b16 %v7800
    %v7813 = vunpack.c.l.b16 %v7801
    %v7814 = vpack.c.b16 %v7811, %v7810
    %v7815 = vpack.c.b16 %v7813, %v7812
    %v7819 = vsel %vm548, %v7797, 0
    %7821 = vmatpush.bf16.msra.mxu0 0
    %7822 = vmatpush.bf16.msra.mxu0 0
    %7823 = vmatpush.bf16.msra.mxu0 0
    %7824 = vmatpush.bf16.msra.mxu0 0
    %7825 = vmatpush.bf16.msra.mxu0 0
    %7826 = vmatpush.bf16.msra.mxu0 0
    %7827 = vmatpush.bf16.msra.mxu0 %v7815
    %7828 = vmatpush.bf16.msra.mxu0 %v7814
    %7829 = vmatmul.bf16.gmra.mxu0 %v7819
    %v7830 = vpop.f32.mrf.mxu0
    %v7831 = vadd.f32 %v7804, %v7830
    %v7832 = vpop.f32.mrf.mxu0
    %7833 = vdwg.mxu0
    %v7834 = vmax.f32 %v7831, 0.0
    %v7835 = vpack.c.bf16 %v7834, %v7834
    %v7836 = vld [vmem:[%s8 + $0x8] sm:$0xf]
    %v7837 = vld [vmem:[%s8 + $0x14] sm:$0xf]
    %v7838 = vld [vmem:[%s8 + $0x20] sm:$0xf]
    %v7839 = vld [vmem:[%s8 + $0x2c] sm:$0xf]
    %v7840 = vld [vmem:[%s9 + $0x9] sm:$0x1]
    %v7842 = vperm.slane %v7840, 0
    %v7848 = vunpack.c.l.b16 %v7836
    %v7849 = vunpack.c.l.b16 %v7837
    %v7850 = vunpack.c.l.b16 %v7838
    %v7851 = vunpack.c.l.b16 %v7839
    %v7852 = vpack.c.b16 %v7849, %v7848
    %v7853 = vpack.c.b16 %v7851, %v7850
    %v7857 = vsel %vm548, %v7835, 0
    %7859 = vmatpush.bf16.msra.mxu0 0
    %7860 = vmatpush.bf16.msra.mxu0 0
    %7861 = vmatpush.bf16.msra.mxu0 0
    %7862 = vmatpush.bf16.msra.mxu0 0
    %7863 = vmatpush.bf16.msra.mxu0 0
    %7864 = vmatpush.bf16.msra.mxu0 0
    %7865 = vmatpush.bf16.msra.mxu0 %v7853
    %7866 = vmatpush.bf16.msra.mxu0 %v7852
    %7867 = vmatmul.bf16.gmra.mxu0 %v7857
    %v7868 = vpop.f32.mrf.mxu0
    %v7869 = vadd.f32 %v7842, %v7868
    %v7870 = vpop.f32.mrf.mxu0
    %7871 = vdwg.mxu0
    %7872 = vst [vmem:[#allocation2] sm:$0x3] %v7869
    // Predicated region
    $region42: #{tpu_custom_call.1} parent=1 // pred_check
      _
    $region43: #{tpu_custom_call.1} parent=1 // pred_check_branch
      %7874 = sbr.rel (0) target = $region45
    $region44: #{tpu_custom_call.1} parent=1 // pred_region
      %7876 = vsyncadd [#allocation3], 0
      %s7878 = sshll.u32 [#allocation2], 4
      %s7879 = int_to_ptr.vmem [resolvable:$true] %s7878
      %s7880 = sshll.u32 %s10, 4
      %s7881 = int_to_ptr.hbm [resolvable:$true] %s7880
      %7883 = dma.vmem_to_hbm [thread:$0]  %s7879, 32, %s7881, [#allocation3]
    $region45: #{tpu_custom_call.1} parent=1 // pred_fallthru
      _
    // Predicated region
    $region46: #{tpu_custom_call.1} parent=1 // pred_check
      _
    $region47: #{tpu_custom_call.1} parent=1 // pred_check_branch
      %7885 = sbr.rel (0) target = $region49
    $region48: #{tpu_custom_call.1} parent=1 // pred_region
      %7887 = dma.done [#allocation3], 32
    $region49: #{tpu_custom_call.1} parent=1 // pred_fallthru
      _
    %7888 = vsyncpa [#allocation3], 1

</llo_original>
